<compile_context>
chip_gen: v7x
topology: tpu7x:2x2x1
jax: 0.10.0
libtpu: 0.0.40
codegen_flags: <defaults>
</compile_context>

<pallas_src>
import numpy as np
import jax
import jax.numpy as jnp
from jax import lax
from jax.experimental import pallas as pl
from jax.experimental.pallas import tpu as pltpu  # noqa: F401  (TPU backend)


# ----------------------------------------------------------------------------
# helpers
# ----------------------------------------------------------------------------
def conv2d_size_out(size, kernel_size=5, stride=2):
    return (size - (kernel_size - 1) - 1) // stride + 1


def _round_up(x, m):
    return ((x + m - 1) // m) * m


def _full_block(shape):
    # Full-array block (allowed even when not (8,128)-divisible), no grid.
    return pl.BlockSpec(shape, lambda *_: (0,) * len(shape))


# ----------------------------------------------------------------------------
# Fused Pallas kernel (entire DQN forward)
# ----------------------------------------------------------------------------
def _conv_block(act, s_ref, w_ref, shift_ref):
    """One conv(k=5, s=2, valid) + folded-BN shift + ReLU for a single image.

    act       : (H_in, W_in*C_in)              bf16 value (VMEM resident)
    s_ref     : (5*HoP, H_in)                  bf16 0/1 row-selection matrix
    w_ref     : (5, W_in*C_in, W_out*C_out)    bf16 width-combined, BN-folded W
    shift_ref : (1, W_out*C_out)               f32 folded conv-bias/BN shift
    returns   : (HoP, W_out*C_out)             bf16
    """
    kh = w_ref.shape[0]
    hop = s_ref.shape[0] // kh
    n = w_ref.shape[2]
    # One MXU op gathers all 5 stride-2 row shifts:
    #   stacked[i*HoP + r, :] == act[2*r + i, :]
    stacked = jnp.dot(s_ref[...], act, preferred_element_type=jnp.float32)
    stacked = stacked.astype(jnp.bfloat16)     # exact (0/1 selection of bf16)
    acc = jnp.zeros((hop, n), jnp.float32)
    for i in range(kh):                        # static unroll: 5 MXU matmuls
        acc = acc + jnp.dot(stacked[i * hop:(i + 1) * hop, :], w_ref[i],
                            preferred_element_type=jnp.float32)
    y = jnp.maximum(acc + shift_ref[...], 0.0)  # f32 epilogue (v5e-safe)
    return y.astype(jnp.bfloat16)


def _dqn_kernel(x_ref, s1, w1, sh1, s2, w2, sh2, s3, w3, sh3, wh, bh, o_ref):
    batch = x_ref.shape[0]
    n_head_rows = wh.shape[0]          # true conv3 output height
    for b in range(batch):             # static unroll over the (small) batch
        act = x_ref[b]                              # (H, W*3)    bf16
        act = _conv_block(act, s1, w1, sh1)         # conv1+bn1+relu
        act = _conv_block(act, s2, w2, sh2)         # conv2+bn2+relu
        act = _conv_block(act, s3, w3, sh3)         # conv3+bn3+relu
        y = bh[...]                                 # (1, n_actions) f32
        for r in range(n_head_rows):                # linear head (no ReLU)
            y = y + jnp.dot(act[r:r + 1, :], wh[r],
                            preferred_element_type=jnp.float32)
        o_ref[b:b + 1, :] = y


def dqn_forward(prep, x_nchw):
    """x_nchw: (B, 3, H, W) float32  ->  (B, n_actions) float32."""
    b, c, h, w = x_nchw.shape
    # Only per-forward glue: NCHW -> (B, H, W*C) in bf16. Everything else is a
    # constant prepared once in prepare_params().
    x = jnp.transpose(x_nchw, (0, 2, 3, 1)).reshape(b, h, w * c)
    x = x.astype(jnp.bfloat16)
    n_act = prep["bh"].shape[1]
    inputs = (x, prep["s1"], prep["w1"], prep["sh1"],
              prep["s2"], prep["w2"], prep["sh2"],
              prep["s3"], prep["w3"], prep["sh3"],
              prep["wh"], prep["bh"])
    return pl.pallas_call(
        _dqn_kernel,
        out_shape=jax.ShapeDtypeStruct((b, n_act), jnp.float32),
        in_specs=[_full_block(a.shape) for a in inputs],
        out_specs=_full_block((b, n_act)),
    )(*inputs)


# ----------------------------------------------------------------------------
# One-time weight preparation (hoisted out of the hot path)
# ----------------------------------------------------------------------------
def prepare_params(params, h, w, eps=1e-5):
    cs = conv2d_size_out
    h1, w1 = h, w
    h2, w2 = cs(h1), cs(w1)          # conv1 output spatial
    h3, w3 = cs(h2), cs(w2)          # conv2 output spatial
    h4, w4 = cs(h3), cs(w3)          # conv3 output spatial
    hp2, hp3, hp4 = _round_up(h2, 8), _round_up(h3, 8), _round_up(h4, 8)

    def fold(wk, bk, bnk):
        wc = np.asarray(params[wk], np.float32)
        bc = np.asarray(params[bk], np.float32)
        bn = params[bnk]
        scale = np.asarray(bn["gamma"], np.float32) / np.sqrt(
            np.asarray(bn["var"], np.float32) + eps)
        shift = np.asarray(bn["beta"], np.float32) + (
            bc - np.asarray(bn["mean"], np.float32)) * scale
        return wc * scale[:, None, None, None], shift

    def combined(w_folded, wi, wo):
        # (Co,Ci,5,5) -> per kernel-row i a (Wi*Ci, Wo*Co) matrix that also
        # performs the stride-2 column gather of the convolution.
        co, ci, kh, kw = w_folded.shape
        wt = np.transpose(w_folded, (2, 3, 1, 0))          # (kh, kw, ci, co)
        out = np.zeros((kh, wi * ci, wo * co), np.float32)
        for ow in range(wo):
            for j in range(kw):
                win = 2 * ow + j
                out[:, win * ci:(win + 1) * ci, ow * co:(ow + 1) * co] = wt[:, j]
        return out

    def selection(hin, ho, hop, kh=5):
        # stacked = S @ act puts input row (2r+i) at stacked row (i*hop + r).
        s = np.zeros((kh * hop, hin), np.float32)
        for i in range(kh):
            for r in range(ho):
                s[i * hop + r, 2 * r + i] = 1.0
        return s

    def tiled_shift(sv, wo):
        return np.tile(sv, wo)[None, :].astype(np.float32)

    w1f, b1s = fold("conv1_w", "conv1_b", "bn1")
    w2f, b2s = fold("conv2_w", "conv2_b", "bn2")
    w3f, b3s = fold("conv3_w", "conv3_b", "bn3")

    # Head: PyTorch flattens NCHW (c, h, w); permute once into the kernel's
    # (row h, column = w*C + c) layout so no transpose is needed at runtime.
    hw = np.asarray(params["head_w"], np.float32)
    n_act = hw.shape[0]
    c4 = w3f.shape[0]
    hw4 = hw.reshape(n_act, c4, h4, w4)                     # (o, c, h, w)
    wh = np.transpose(hw4, (2, 3, 1, 0)).reshape(h4, w4 * c4, n_act)
    bh = np.asarray(params["head_b"], np.float32)[None, :]

    bf16, f32 = jnp.bfloat16, jnp.float32
    return {
        "s1": jnp.asarray(selection(h1, h2, hp2), bf16),
        "w1": jnp.asarray(combined(w1f, w1, w2), bf16),
        "sh1": jnp.asarray(tiled_shift(b1s, w2), f32),
        "s2": jnp.asarray(selection(hp2, h3, hp3), bf16),
        "w2": jnp.asarray(combined(w2f, w2, w3), bf16),
        "sh2": jnp.asarray(tiled_shift(b2s, w3), f32),
        "s3": jnp.asarray(selection(hp3, h4, hp4), bf16),
        "w3": jnp.asarray(combined(w3f, w3, w4), bf16),
        "sh3": jnp.asarray(tiled_shift(b3s, w4), f32),
        "wh": jnp.asarray(wh, bf16),
        "bh": jnp.asarray(bh, f32),
    }


# ----------------------------------------------------------------------------
# Parameter construction (deterministic, shapes match the PyTorch module)
# ----------------------------------------------------------------------------
def init_params(h, w, key):
    convw = conv2d_size_out(conv2d_size_out(conv2d_size_out(w)))
    convh = conv2d_size_out(conv2d_size_out(conv2d_size_out(h)))
    linear_input_size = convw * convh * 32

    ks = jax.random.split(key, 8)

    def conv_init(k, co, ci, kk):
        fan_in = ci * kk * kk
        bound = 1.0 / float(np.sqrt(fan_in))
        kw_, kb_ = jax.random.split(k)
        return (jax.random.uniform(kw_, (co, ci, kk, kk), jnp.float32, -bound, bound),
                jax.random.uniform(kb_, (co,), jnp.float32, -bound, bound))

    c1w, c1b = conv_init(ks[0], 16, 3, 5)
    c2w, c2b = conv_init(ks[1], 32, 16, 5)
    c3w, c3b = conv_init(ks[2], 32, 32, 5)

    def bn_init(c):
        return dict(gamma=jnp.ones((c,), jnp.float32),
                    beta=jnp.zeros((c,), jnp.float32),
                    mean=jnp.zeros((c,), jnp.float32),
                    var=jnp.ones((c,), jnp.float32))

    bound_h = 1.0 / float(np.sqrt(linear_input_size))
    head_w = jax.random.uniform(ks[3], (18, linear_input_size), jnp.float32,
                                -bound_h, bound_h)
    head_b = jax.random.uniform(ks[4], (18,), jnp.float32, -bound_h, bound_h)

    return dict(conv1_w=c1w, conv1_b=c1b, bn1=bn_init(16),
                conv2_w=c2w, conv2_b=c2b, bn2=bn_init(32),
                conv3_w=c3w, conv3_b=c3b, bn3=bn_init(32),
                head_w=head_w, head_b=head_b)


# ----------------------------------------------------------------------------
# Pure-JAX f32 reference (PyTorch semantics, BN eval mode) for validation
# ----------------------------------------------------------------------------
def dqn_reference(params, x):
    def conv(x, w, b):
        y = lax.conv_general_dilated(
            x, w, window_strides=(2, 2), padding="VALID",
            dimension_numbers=("NCHW", "OIHW", "NCHW"),
            precision=lax.Precision.HIGHEST)
        return y + b[None, :, None, None]

    def bn(x, p, eps=1e-5):
        scale = p["gamma"] / jnp.sqrt(p["var"] + eps)
        return ((x - p["mean"][None, :, None, None]) * scale[None, :, None, None]
                + p["beta"][None, :, None, None])

    x = jax.nn.relu(bn(conv(x, params["conv1_w"], params["conv1_b"]), params["bn1"]))
    x = jax.nn.relu(bn(conv(x, params["conv2_w"], params["conv2_b"]), params["bn2"]))
    x = jax.nn.relu(bn(conv(x, params["conv3_w"], params["conv3_b"]), params["bn3"]))
    flat = x.reshape(x.shape[0], -1)                      # NCHW flatten, like view(B,-1)
    return jnp.dot(flat, params["head_w"].T,
                   precision=lax.Precision.HIGHEST) + params["head_b"]


# ----------------------------------------------------------------------------
# main
# ----------------------------------------------------------------------------
if __name__ == "__main__":
    H = W = 40          # gives a 2x2x32 feature map before the head
    B = 2
    key = jax.random.PRNGKey(0)
    pkey, xkey = jax.random.split(key)

    params = init_params(H, W, pkey)
    prep = prepare_params(params, H, W)
    x = jax.random.normal(xkey, (B, 3, H, W), jnp.float32)

    out = jax.block_until_ready(jax.jit(dqn_forward)(prep, x))

    assert out.shape == (B, 18), out.shape
    assert bool(jnp.all(jnp.isfinite(out)))

    # Validate against the f32 XLA reference (kernel uses bf16 MXU inputs).
    ref = dqn_reference(params, x)
    max_err = float(jnp.max(jnp.abs(out - ref)))
    assert max_err < 3e-2, f"mismatch vs reference: max_err={max_err}"

    print("KERNEL_OK")
</pallas_src>

<mosaic_0001>
module attributes {stable_mosaic.version = 11 : i64} {
  func.func @_dqn_kernel(%arg0: memref<2x40x120xbf16, #tpu.memory_space<vmem>>, %arg1: memref<120x40xbf16, #tpu.memory_space<vmem>>, %arg2: memref<5x120x288xbf16, #tpu.memory_space<vmem>>, %arg3: memref<1x288xf32, #tpu.memory_space<vmem>>, %arg4: memref<40x24xbf16, #tpu.memory_space<vmem>>, %arg5: memref<5x288x224xbf16, #tpu.memory_space<vmem>>, %arg6: memref<1x224xf32, #tpu.memory_space<vmem>>, %arg7: memref<40x8xbf16, #tpu.memory_space<vmem>>, %arg8: memref<5x224x64xbf16, #tpu.memory_space<vmem>>, %arg9: memref<1x64xf32, #tpu.memory_space<vmem>>, %arg10: memref<2x64x18xbf16, #tpu.memory_space<vmem>>, %arg11: memref<1x18xf32, #tpu.memory_space<vmem>>, %arg12: memref<2x18xf32, #tpu.memory_space<vmem>>) attributes {dimension_semantics = [], scalar_prefetch = 0 : i64, scratch_operands = 0 : i64, tpu.core_type = #tpu.core_type<tc>} {
    %c0 = arith.constant 0 : index
    %c0_0 = arith.constant 0 : index
    %c0_1 = arith.constant 0 : index
    %0 = vector.load %arg0[%c0, %c0_0, %c0_1] : memref<2x40x120xbf16, #tpu.memory_space<vmem>>, vector<1x40x120xbf16>
    %1 = vector.shape_cast %0 : vector<1x40x120xbf16> to vector<40x120xbf16>
    %c0_2 = arith.constant 0 : index
    %c0_3 = arith.constant 0 : index
    %2 = vector.load %arg1[%c0_2, %c0_3] : memref<120x40xbf16, #tpu.memory_space<vmem>>, vector<120x40xbf16>
    %cst = arith.constant dense<0.000000e+00> : vector<120x120xf32>
    %3 = tpu.matmul %2, %1, %cst {dimension_numbers = #tpu.dot_dimension_numbers<[1], [0], [0], [1], [0, 0, 1, 1], [], []>} : vector<120x40xbf16>, vector<40x120xbf16>, vector<120x120xf32> -> vector<120x120xf32>
    %4 = arith.truncf %3 : vector<120x120xf32> to vector<120x120xbf16>
    %cst_4 = arith.constant 0.000000e+00 : f32
    %5 = vector.broadcast %cst_4 : f32 to vector<24x288xf32>
    %6 = vector.extract_strided_slice %4 {offsets = [0, 0], sizes = [24, 120], strides = [1, 1]} : vector<120x120xbf16> to vector<24x120xbf16>
    %c0_5 = arith.constant 0 : index
    %c0_6 = arith.constant 0 : index
    %c0_7 = arith.constant 0 : index
    %7 = vector.load %arg2[%c0_5, %c0_6, %c0_7] : memref<5x120x288xbf16, #tpu.memory_space<vmem>>, vector<1x120x288xbf16>
    %8 = vector.shape_cast %7 : vector<1x120x288xbf16> to vector<120x288xbf16>
    %cst_8 = arith.constant dense<0.000000e+00> : vector<24x288xf32>
    %9 = tpu.matmul %6, %8, %cst_8 {dimension_numbers = #tpu.dot_dimension_numbers<[1], [0], [0], [1], [0, 0, 1, 1], [], []>} : vector<24x120xbf16>, vector<120x288xbf16>, vector<24x288xf32> -> vector<24x288xf32>
    %10 = arith.addf %5, %9 : vector<24x288xf32>
    %11 = vector.extract_strided_slice %4 {offsets = [24, 0], sizes = [24, 120], strides = [1, 1]} : vector<120x120xbf16> to vector<24x120xbf16>
    %c1 = arith.constant 1 : index
    %c0_9 = arith.constant 0 : index
    %c0_10 = arith.constant 0 : index
    %12 = vector.load %arg2[%c1, %c0_9, %c0_10] : memref<5x120x288xbf16, #tpu.memory_space<vmem>>, vector<1x120x288xbf16>
    %13 = vector.shape_cast %12 : vector<1x120x288xbf16> to vector<120x288xbf16>
    %cst_11 = arith.constant dense<0.000000e+00> : vector<24x288xf32>
    %14 = tpu.matmul %11, %13, %cst_11 {dimension_numbers = #tpu.dot_dimension_numbers<[1], [0], [0], [1], [0, 0, 1, 1], [], []>} : vector<24x120xbf16>, vector<120x288xbf16>, vector<24x288xf32> -> vector<24x288xf32>
    %15 = arith.addf %10, %14 : vector<24x288xf32>
    %16 = vector.extract_strided_slice %4 {offsets = [48, 0], sizes = [24, 120], strides = [1, 1]} : vector<120x120xbf16> to vector<24x120xbf16>
    %c2 = arith.constant 2 : index
    %c0_12 = arith.constant 0 : index
    %c0_13 = arith.constant 0 : index
    %17 = vector.load %arg2[%c2, %c0_12, %c0_13] : memref<5x120x288xbf16, #tpu.memory_space<vmem>>, vector<1x120x288xbf16>
    %18 = vector.shape_cast %17 : vector<1x120x288xbf16> to vector<120x288xbf16>
    %cst_14 = arith.constant dense<0.000000e+00> : vector<24x288xf32>
    %19 = tpu.matmul %16, %18, %cst_14 {dimension_numbers = #tpu.dot_dimension_numbers<[1], [0], [0], [1], [0, 0, 1, 1], [], []>} : vector<24x120xbf16>, vector<120x288xbf16>, vector<24x288xf32> -> vector<24x288xf32>
    %20 = arith.addf %15, %19 : vector<24x288xf32>
    %21 = vector.extract_strided_slice %4 {offsets = [72, 0], sizes = [24, 120], strides = [1, 1]} : vector<120x120xbf16> to vector<24x120xbf16>
    %c3 = arith.constant 3 : index
    %c0_15 = arith.constant 0 : index
    %c0_16 = arith.constant 0 : index
    %22 = vector.load %arg2[%c3, %c0_15, %c0_16] : memref<5x120x288xbf16, #tpu.memory_space<vmem>>, vector<1x120x288xbf16>
    %23 = vector.shape_cast %22 : vector<1x120x288xbf16> to vector<120x288xbf16>
    %cst_17 = arith.constant dense<0.000000e+00> : vector<24x288xf32>
    %24 = tpu.matmul %21, %23, %cst_17 {dimension_numbers = #tpu.dot_dimension_numbers<[1], [0], [0], [1], [0, 0, 1, 1], [], []>} : vector<24x120xbf16>, vector<120x288xbf16>, vector<24x288xf32> -> vector<24x288xf32>
    %25 = arith.addf %20, %24 : vector<24x288xf32>
    %26 = vector.extract_strided_slice %4 {offsets = [96, 0], sizes = [24, 120], strides = [1, 1]} : vector<120x120xbf16> to vector<24x120xbf16>
    %c4 = arith.constant 4 : index
    %c0_18 = arith.constant 0 : index
    %c0_19 = arith.constant 0 : index
    %27 = vector.load %arg2[%c4, %c0_18, %c0_19] : memref<5x120x288xbf16, #tpu.memory_space<vmem>>, vector<1x120x288xbf16>
    %28 = vector.shape_cast %27 : vector<1x120x288xbf16> to vector<120x288xbf16>
    %cst_20 = arith.constant dense<0.000000e+00> : vector<24x288xf32>
    %29 = tpu.matmul %26, %28, %cst_20 {dimension_numbers = #tpu.dot_dimension_numbers<[1], [0], [0], [1], [0, 0, 1, 1], [], []>} : vector<24x120xbf16>, vector<120x288xbf16>, vector<24x288xf32> -> vector<24x288xf32>
    %30 = arith.addf %25, %29 : vector<24x288xf32>
    %c0_21 = arith.constant 0 : index
    %c0_22 = arith.constant 0 : index
    %31 = vector.load %arg3[%c0_21, %c0_22] : memref<1x288xf32, #tpu.memory_space<vmem>>, vector<1x288xf32>
    %32 = vector.broadcast %31 : vector<1x288xf32> to vector<24x288xf32>
    %33 = arith.addf %30, %32 : vector<24x288xf32>
    %cst_23 = arith.constant 0.000000e+00 : f32
    %34 = vector.broadcast %cst_23 : f32 to vector<24x288xf32>
    %35 = arith.maximumf %33, %34 : vector<24x288xf32>
    %36 = arith.truncf %35 : vector<24x288xf32> to vector<24x288xbf16>
    %c0_24 = arith.constant 0 : index
    %c0_25 = arith.constant 0 : index
    %37 = vector.load %arg4[%c0_24, %c0_25] : memref<40x24xbf16, #tpu.memory_space<vmem>>, vector<40x24xbf16>
    %cst_26 = arith.constant dense<0.000000e+00> : vector<40x288xf32>
    %38 = tpu.matmul %37, %36, %cst_26 {dimension_numbers = #tpu.dot_dimension_numbers<[1], [0], [0], [1], [0, 0, 1, 1], [], []>} : vector<40x24xbf16>, vector<24x288xbf16>, vector<40x288xf32> -> vector<40x288xf32>
    %39 = arith.truncf %38 : vector<40x288xf32> to vector<40x288xbf16>
    %cst_27 = arith.constant 0.000000e+00 : f32
    %40 = vector.broadcast %cst_27 : f32 to vector<8x224xf32>
    %41 = vector.extract_strided_slice %39 {offsets = [0, 0], sizes = [8, 288], strides = [1, 1]} : vector<40x288xbf16> to vector<8x288xbf16>
    %c0_28 = arith.constant 0 : index
    %c0_29 = arith.constant 0 : index
    %c0_30 = arith.constant 0 : index
    %42 = vector.load %arg5[%c0_28, %c0_29, %c0_30] : memref<5x288x224xbf16, #tpu.memory_space<vmem>>, vector<1x288x224xbf16>
    %43 = vector.shape_cast %42 : vector<1x288x224xbf16> to vector<288x224xbf16>
    %cst_31 = arith.constant dense<0.000000e+00> : vector<8x224xf32>
    %44 = tpu.matmul %41, %43, %cst_31 {dimension_numbers = #tpu.dot_dimension_numbers<[1], [0], [0], [1], [0, 0, 1, 1], [], []>} : vector<8x288xbf16>, vector<288x224xbf16>, vector<8x224xf32> -> vector<8x224xf32>
    %45 = arith.addf %40, %44 : vector<8x224xf32>
    %46 = vector.extract_strided_slice %39 {offsets = [8, 0], sizes = [8, 288], strides = [1, 1]} : vector<40x288xbf16> to vector<8x288xbf16>
    %c1_32 = arith.constant 1 : index
    %c0_33 = arith.constant 0 : index
    %c0_34 = arith.constant 0 : index
    %47 = vector.load %arg5[%c1_32, %c0_33, %c0_34] : memref<5x288x224xbf16, #tpu.memory_space<vmem>>, vector<1x288x224xbf16>
    %48 = vector.shape_cast %47 : vector<1x288x224xbf16> to vector<288x224xbf16>
    %cst_35 = arith.constant dense<0.000000e+00> : vector<8x224xf32>
    %49 = tpu.matmul %46, %48, %cst_35 {dimension_numbers = #tpu.dot_dimension_numbers<[1], [0], [0], [1], [0, 0, 1, 1], [], []>} : vector<8x288xbf16>, vector<288x224xbf16>, vector<8x224xf32> -> vector<8x224xf32>
    %50 = arith.addf %45, %49 : vector<8x224xf32>
    %51 = vector.extract_strided_slice %39 {offsets = [16, 0], sizes = [8, 288], strides = [1, 1]} : vector<40x288xbf16> to vector<8x288xbf16>
    %c2_36 = arith.constant 2 : index
    %c0_37 = arith.constant 0 : index
    %c0_38 = arith.constant 0 : index
    %52 = vector.load %arg5[%c2_36, %c0_37, %c0_38] : memref<5x288x224xbf16, #tpu.memory_space<vmem>>, vector<1x288x224xbf16>
    %53 = vector.shape_cast %52 : vector<1x288x224xbf16> to vector<288x224xbf16>
    %cst_39 = arith.constant dense<0.000000e+00> : vector<8x224xf32>
    %54 = tpu.matmul %51, %53, %cst_39 {dimension_numbers = #tpu.dot_dimension_numbers<[1], [0], [0], [1], [0, 0, 1, 1], [], []>} : vector<8x288xbf16>, vector<288x224xbf16>, vector<8x224xf32> -> vector<8x224xf32>
    %55 = arith.addf %50, %54 : vector<8x224xf32>
    %56 = vector.extract_strided_slice %39 {offsets = [24, 0], sizes = [8, 288], strides = [1, 1]} : vector<40x288xbf16> to vector<8x288xbf16>
    %c3_40 = arith.constant 3 : index
    %c0_41 = arith.constant 0 : index
    %c0_42 = arith.constant 0 : index
    %57 = vector.load %arg5[%c3_40, %c0_41, %c0_42] : memref<5x288x224xbf16, #tpu.memory_space<vmem>>, vector<1x288x224xbf16>
    %58 = vector.shape_cast %57 : vector<1x288x224xbf16> to vector<288x224xbf16>
    %cst_43 = arith.constant dense<0.000000e+00> : vector<8x224xf32>
    %59 = tpu.matmul %56, %58, %cst_43 {dimension_numbers = #tpu.dot_dimension_numbers<[1], [0], [0], [1], [0, 0, 1, 1], [], []>} : vector<8x288xbf16>, vector<288x224xbf16>, vector<8x224xf32> -> vector<8x224xf32>
    %60 = arith.addf %55, %59 : vector<8x224xf32>
    %61 = vector.extract_strided_slice %39 {offsets = [32, 0], sizes = [8, 288], strides = [1, 1]} : vector<40x288xbf16> to vector<8x288xbf16>
    %c4_44 = arith.constant 4 : index
    %c0_45 = arith.constant 0 : index
    %c0_46 = arith.constant 0 : index
    %62 = vector.load %arg5[%c4_44, %c0_45, %c0_46] : memref<5x288x224xbf16, #tpu.memory_space<vmem>>, vector<1x288x224xbf16>
    %63 = vector.shape_cast %62 : vector<1x288x224xbf16> to vector<288x224xbf16>
    %cst_47 = arith.constant dense<0.000000e+00> : vector<8x224xf32>
    %64 = tpu.matmul %61, %63, %cst_47 {dimension_numbers = #tpu.dot_dimension_numbers<[1], [0], [0], [1], [0, 0, 1, 1], [], []>} : vector<8x288xbf16>, vector<288x224xbf16>, vector<8x224xf32> -> vector<8x224xf32>
    %65 = arith.addf %60, %64 : vector<8x224xf32>
    %c0_48 = arith.constant 0 : index
    %c0_49 = arith.constant 0 : index
    %66 = vector.load %arg6[%c0_48, %c0_49] : memref<1x224xf32, #tpu.memory_space<vmem>>, vector<1x224xf32>
    %67 = vector.broadcast %66 : vector<1x224xf32> to vector<8x224xf32>
    %68 = arith.addf %65, %67 : vector<8x224xf32>
    %cst_50 = arith.constant 0.000000e+00 : f32
    %69 = vector.broadcast %cst_50 : f32 to vector<8x224xf32>
    %70 = arith.maximumf %68, %69 : vector<8x224xf32>
    %71 = arith.truncf %70 : vector<8x224xf32> to vector<8x224xbf16>
    %c0_51 = arith.constant 0 : index
    %c0_52 = arith.constant 0 : index
    %72 = vector.load %arg7[%c0_51, %c0_52] : memref<40x8xbf16, #tpu.memory_space<vmem>>, vector<40x8xbf16>
    %cst_53 = arith.constant dense<0.000000e+00> : vector<40x224xf32>
    %73 = tpu.matmul %72, %71, %cst_53 {dimension_numbers = #tpu.dot_dimension_numbers<[1], [0], [0], [1], [0, 0, 1, 1], [], []>} : vector<40x8xbf16>, vector<8x224xbf16>, vector<40x224xf32> -> vector<40x224xf32>
    %74 = arith.truncf %73 : vector<40x224xf32> to vector<40x224xbf16>
    %cst_54 = arith.constant 0.000000e+00 : f32
    %75 = vector.broadcast %cst_54 : f32 to vector<8x64xf32>
    %76 = vector.extract_strided_slice %74 {offsets = [0, 0], sizes = [8, 224], strides = [1, 1]} : vector<40x224xbf16> to vector<8x224xbf16>
    %c0_55 = arith.constant 0 : index
    %c0_56 = arith.constant 0 : index
    %c0_57 = arith.constant 0 : index
    %77 = vector.load %arg8[%c0_55, %c0_56, %c0_57] : memref<5x224x64xbf16, #tpu.memory_space<vmem>>, vector<1x224x64xbf16>
    %78 = vector.shape_cast %77 : vector<1x224x64xbf16> to vector<224x64xbf16>
    %cst_58 = arith.constant dense<0.000000e+00> : vector<8x64xf32>
    %79 = tpu.matmul %76, %78, %cst_58 {dimension_numbers = #tpu.dot_dimension_numbers<[1], [0], [0], [1], [0, 0, 1, 1], [], []>} : vector<8x224xbf16>, vector<224x64xbf16>, vector<8x64xf32> -> vector<8x64xf32>
    %80 = arith.addf %75, %79 : vector<8x64xf32>
    %81 = vector.extract_strided_slice %74 {offsets = [8, 0], sizes = [8, 224], strides = [1, 1]} : vector<40x224xbf16> to vector<8x224xbf16>
    %c1_59 = arith.constant 1 : index
    %c0_60 = arith.constant 0 : index
    %c0_61 = arith.constant 0 : index
    %82 = vector.load %arg8[%c1_59, %c0_60, %c0_61] : memref<5x224x64xbf16, #tpu.memory_space<vmem>>, vector<1x224x64xbf16>
    %83 = vector.shape_cast %82 : vector<1x224x64xbf16> to vector<224x64xbf16>
    %cst_62 = arith.constant dense<0.000000e+00> : vector<8x64xf32>
    %84 = tpu.matmul %81, %83, %cst_62 {dimension_numbers = #tpu.dot_dimension_numbers<[1], [0], [0], [1], [0, 0, 1, 1], [], []>} : vector<8x224xbf16>, vector<224x64xbf16>, vector<8x64xf32> -> vector<8x64xf32>
    %85 = arith.addf %80, %84 : vector<8x64xf32>
    %86 = vector.extract_strided_slice %74 {offsets = [16, 0], sizes = [8, 224], strides = [1, 1]} : vector<40x224xbf16> to vector<8x224xbf16>
    %c2_63 = arith.constant 2 : index
    %c0_64 = arith.constant 0 : index
    %c0_65 = arith.constant 0 : index
    %87 = vector.load %arg8[%c2_63, %c0_64, %c0_65] : memref<5x224x64xbf16, #tpu.memory_space<vmem>>, vector<1x224x64xbf16>
    %88 = vector.shape_cast %87 : vector<1x224x64xbf16> to vector<224x64xbf16>
    %cst_66 = arith.constant dense<0.000000e+00> : vector<8x64xf32>
    %89 = tpu.matmul %86, %88, %cst_66 {dimension_numbers = #tpu.dot_dimension_numbers<[1], [0], [0], [1], [0, 0, 1, 1], [], []>} : vector<8x224xbf16>, vector<224x64xbf16>, vector<8x64xf32> -> vector<8x64xf32>
    %90 = arith.addf %85, %89 : vector<8x64xf32>
    %91 = vector.extract_strided_slice %74 {offsets = [24, 0], sizes = [8, 224], strides = [1, 1]} : vector<40x224xbf16> to vector<8x224xbf16>
    %c3_67 = arith.constant 3 : index
    %c0_68 = arith.constant 0 : index
    %c0_69 = arith.constant 0 : index
    %92 = vector.load %arg8[%c3_67, %c0_68, %c0_69] : memref<5x224x64xbf16, #tpu.memory_space<vmem>>, vector<1x224x64xbf16>
    %93 = vector.shape_cast %92 : vector<1x224x64xbf16> to vector<224x64xbf16>
    %cst_70 = arith.constant dense<0.000000e+00> : vector<8x64xf32>
    %94 = tpu.matmul %91, %93, %cst_70 {dimension_numbers = #tpu.dot_dimension_numbers<[1], [0], [0], [1], [0, 0, 1, 1], [], []>} : vector<8x224xbf16>, vector<224x64xbf16>, vector<8x64xf32> -> vector<8x64xf32>
    %95 = arith.addf %90, %94 : vector<8x64xf32>
    %96 = vector.extract_strided_slice %74 {offsets = [32, 0], sizes = [8, 224], strides = [1, 1]} : vector<40x224xbf16> to vector<8x224xbf16>
    %c4_71 = arith.constant 4 : index
    %c0_72 = arith.constant 0 : index
    %c0_73 = arith.constant 0 : index
    %97 = vector.load %arg8[%c4_71, %c0_72, %c0_73] : memref<5x224x64xbf16, #tpu.memory_space<vmem>>, vector<1x224x64xbf16>
    %98 = vector.shape_cast %97 : vector<1x224x64xbf16> to vector<224x64xbf16>
    %cst_74 = arith.constant dense<0.000000e+00> : vector<8x64xf32>
    %99 = tpu.matmul %96, %98, %cst_74 {dimension_numbers = #tpu.dot_dimension_numbers<[1], [0], [0], [1], [0, 0, 1, 1], [], []>} : vector<8x224xbf16>, vector<224x64xbf16>, vector<8x64xf32> -> vector<8x64xf32>
    %100 = arith.addf %95, %99 : vector<8x64xf32>
    %c0_75 = arith.constant 0 : index
    %c0_76 = arith.constant 0 : index
    %101 = vector.load %arg9[%c0_75, %c0_76] : memref<1x64xf32, #tpu.memory_space<vmem>>, vector<1x64xf32>
    %102 = vector.broadcast %101 : vector<1x64xf32> to vector<8x64xf32>
    %103 = arith.addf %100, %102 : vector<8x64xf32>
    %cst_77 = arith.constant 0.000000e+00 : f32
    %104 = vector.broadcast %cst_77 : f32 to vector<8x64xf32>
    %105 = arith.maximumf %103, %104 : vector<8x64xf32>
    %106 = arith.truncf %105 : vector<8x64xf32> to vector<8x64xbf16>
    %c0_78 = arith.constant 0 : index
    %c0_79 = arith.constant 0 : index
    %107 = vector.load %arg11[%c0_78, %c0_79] : memref<1x18xf32, #tpu.memory_space<vmem>>, vector<1x18xf32>
    %108 = vector.extract_strided_slice %106 {offsets = [0, 0], sizes = [1, 64], strides = [1, 1]} : vector<8x64xbf16> to vector<1x64xbf16>
    %c0_80 = arith.constant 0 : index
    %c0_81 = arith.constant 0 : index
    %c0_82 = arith.constant 0 : index
    %109 = vector.load %arg10[%c0_80, %c0_81, %c0_82] : memref<2x64x18xbf16, #tpu.memory_space<vmem>>, vector<1x64x18xbf16>
    %110 = vector.shape_cast %109 : vector<1x64x18xbf16> to vector<64x18xbf16>
    %cst_83 = arith.constant dense<0.000000e+00> : vector<1x18xf32>
    %111 = tpu.matmul %108, %110, %cst_83 {dimension_numbers = #tpu.dot_dimension_numbers<[1], [0], [0], [1], [0, 0, 1, 1], [], []>} : vector<1x64xbf16>, vector<64x18xbf16>, vector<1x18xf32> -> vector<1x18xf32>
    %112 = arith.addf %107, %111 : vector<1x18xf32>
    %113 = vector.extract_strided_slice %106 {offsets = [1, 0], sizes = [1, 64], strides = [1, 1]} : vector<8x64xbf16> to vector<1x64xbf16>
    %c1_84 = arith.constant 1 : index
    %c0_85 = arith.constant 0 : index
    %c0_86 = arith.constant 0 : index
    %114 = vector.load %arg10[%c1_84, %c0_85, %c0_86] : memref<2x64x18xbf16, #tpu.memory_space<vmem>>, vector<1x64x18xbf16>
    %115 = vector.shape_cast %114 : vector<1x64x18xbf16> to vector<64x18xbf16>
    %cst_87 = arith.constant dense<0.000000e+00> : vector<1x18xf32>
    %116 = tpu.matmul %113, %115, %cst_87 {dimension_numbers = #tpu.dot_dimension_numbers<[1], [0], [0], [1], [0, 0, 1, 1], [], []>} : vector<1x64xbf16>, vector<64x18xbf16>, vector<1x18xf32> -> vector<1x18xf32>
    %117 = arith.addf %112, %116 : vector<1x18xf32>
    %c0_88 = arith.constant 0 : index
    %c0_89 = arith.constant 0 : index
    %118 = vector.load %arg12[%c0_88, %c0_89] : memref<2x18xf32, #tpu.memory_space<vmem>>, vector<1x18xf32>
    tpu.vector_store %arg12[%c0_88, %c0_89], %117 {strides = array<i32>} : memref<2x18xf32, #tpu.memory_space<vmem>>, vector<1x18xf32>,
    %c1_90 = arith.constant 1 : index
    %c0_91 = arith.constant 0 : index
    %c0_92 = arith.constant 0 : index
    %119 = vector.load %arg0[%c1_90, %c0_91, %c0_92] : memref<2x40x120xbf16, #tpu.memory_space<vmem>>, vector<1x40x120xbf16>
    %120 = vector.shape_cast %119 : vector<1x40x120xbf16> to vector<40x120xbf16>
    %c0_93 = arith.constant 0 : index
    %c0_94 = arith.constant 0 : index
    %121 = vector.load %arg1[%c0_93, %c0_94] : memref<120x40xbf16, #tpu.memory_space<vmem>>, vector<120x40xbf16>
    %cst_95 = arith.constant dense<0.000000e+00> : vector<120x120xf32>
    %122 = tpu.matmul %121, %120, %cst_95 {dimension_numbers = #tpu.dot_dimension_numbers<[1], [0], [0], [1], [0, 0, 1, 1], [], []>} : vector<120x40xbf16>, vector<40x120xbf16>, vector<120x120xf32> -> vector<120x120xf32>
    %123 = arith.truncf %122 : vector<120x120xf32> to vector<120x120xbf16>
    %cst_96 = arith.constant 0.000000e+00 : f32
    %124 = vector.broadcast %cst_96 : f32 to vector<24x288xf32>
    %125 = vector.extract_strided_slice %123 {offsets = [0, 0], sizes = [24, 120], strides = [1, 1]} : vector<120x120xbf16> to vector<24x120xbf16>
    %c0_97 = arith.constant 0 : index
    %c0_98 = arith.constant 0 : index
    %c0_99 = arith.constant 0 : index
    %126 = vector.load %arg2[%c0_97, %c0_98, %c0_99] : memref<5x120x288xbf16, #tpu.memory_space<vmem>>, vector<1x120x288xbf16>
    %127 = vector.shape_cast %126 : vector<1x120x288xbf16> to vector<120x288xbf16>
    %cst_100 = arith.constant dense<0.000000e+00> : vector<24x288xf32>
    %128 = tpu.matmul %125, %127, %cst_100 {dimension_numbers = #tpu.dot_dimension_numbers<[1], [0], [0], [1], [0, 0, 1, 1], [], []>} : vector<24x120xbf16>, vector<120x288xbf16>, vector<24x288xf32> -> vector<24x288xf32>
    %129 = arith.addf %124, %128 : vector<24x288xf32>
    %130 = vector.extract_strided_slice %123 {offsets = [24, 0], sizes = [24, 120], strides = [1, 1]} : vector<120x120xbf16> to vector<24x120xbf16>
    %c1_101 = arith.constant 1 : index
    %c0_102 = arith.constant 0 : index
    %c0_103 = arith.constant 0 : index
    %131 = vector.load %arg2[%c1_101, %c0_102, %c0_103] : memref<5x120x288xbf16, #tpu.memory_space<vmem>>, vector<1x120x288xbf16>
    %132 = vector.shape_cast %131 : vector<1x120x288xbf16> to vector<120x288xbf16>
    %cst_104 = arith.constant dense<0.000000e+00> : vector<24x288xf32>
    %133 = tpu.matmul %130, %132, %cst_104 {dimension_numbers = #tpu.dot_dimension_numbers<[1], [0], [0], [1], [0, 0, 1, 1], [], []>} : vector<24x120xbf16>, vector<120x288xbf16>, vector<24x288xf32> -> vector<24x288xf32>
    %134 = arith.addf %129, %133 : vector<24x288xf32>
    %135 = vector.extract_strided_slice %123 {offsets = [48, 0], sizes = [24, 120], strides = [1, 1]} : vector<120x120xbf16> to vector<24x120xbf16>
    %c2_105 = arith.constant 2 : index
    %c0_106 = arith.constant 0 : index
    %c0_107 = arith.constant 0 : index
    %136 = vector.load %arg2[%c2_105, %c0_106, %c0_107] : memref<5x120x288xbf16, #tpu.memory_space<vmem>>, vector<1x120x288xbf16>
    %137 = vector.shape_cast %136 : vector<1x120x288xbf16> to vector<120x288xbf16>
    %cst_108 = arith.constant dense<0.000000e+00> : vector<24x288xf32>
    %138 = tpu.matmul %135, %137, %cst_108 {dimension_numbers = #tpu.dot_dimension_numbers<[1], [0], [0], [1], [0, 0, 1, 1], [], []>} : vector<24x120xbf16>, vector<120x288xbf16>, vector<24x288xf32> -> vector<24x288xf32>
    %139 = arith.addf %134, %138 : vector<24x288xf32>
    %140 = vector.extract_strided_slice %123 {offsets = [72, 0], sizes = [24, 120], strides = [1, 1]} : vector<120x120xbf16> to vector<24x120xbf16>
    %c3_109 = arith.constant 3 : index
    %c0_110 = arith.constant 0 : index
    %c0_111 = arith.constant 0 : index
    %141 = vector.load %arg2[%c3_109, %c0_110, %c0_111] : memref<5x120x288xbf16, #tpu.memory_space<vmem>>, vector<1x120x288xbf16>
    %142 = vector.shape_cast %141 : vector<1x120x288xbf16> to vector<120x288xbf16>
    %cst_112 = arith.constant dense<0.000000e+00> : vector<24x288xf32>
    %143 = tpu.matmul %140, %142, %cst_112 {dimension_numbers = #tpu.dot_dimension_numbers<[1], [0], [0], [1], [0, 0, 1, 1], [], []>} : vector<24x120xbf16>, vector<120x288xbf16>, vector<24x288xf32> -> vector<24x288xf32>
    %144 = arith.addf %139, %143 : vector<24x288xf32>
    %145 = vector.extract_strided_slice %123 {offsets = [96, 0], sizes = [24, 120], strides = [1, 1]} : vector<120x120xbf16> to vector<24x120xbf16>
    %c4_113 = arith.constant 4 : index
    %c0_114 = arith.constant 0 : index
    %c0_115 = arith.constant 0 : index
    %146 = vector.load %arg2[%c4_113, %c0_114, %c0_115] : memref<5x120x288xbf16, #tpu.memory_space<vmem>>, vector<1x120x288xbf16>
    %147 = vector.shape_cast %146 : vector<1x120x288xbf16> to vector<120x288xbf16>
    %cst_116 = arith.constant dense<0.000000e+00> : vector<24x288xf32>
    %148 = tpu.matmul %145, %147, %cst_116 {dimension_numbers = #tpu.dot_dimension_numbers<[1], [0], [0], [1], [0, 0, 1, 1], [], []>} : vector<24x120xbf16>, vector<120x288xbf16>, vector<24x288xf32> -> vector<24x288xf32>
    %149 = arith.addf %144, %148 : vector<24x288xf32>
    %c0_117 = arith.constant 0 : index
    %c0_118 = arith.constant 0 : index
    %150 = vector.load %arg3[%c0_117, %c0_118] : memref<1x288xf32, #tpu.memory_space<vmem>>, vector<1x288xf32>
    %151 = vector.broadcast %150 : vector<1x288xf32> to vector<24x288xf32>
    %152 = arith.addf %149, %151 : vector<24x288xf32>
    %cst_119 = arith.constant 0.000000e+00 : f32
    %153 = vector.broadcast %cst_119 : f32 to vector<24x288xf32>
    %154 = arith.maximumf %152, %153 : vector<24x288xf32>
    %155 = arith.truncf %154 : vector<24x288xf32> to vector<24x288xbf16>
    %c0_120 = arith.constant 0 : index
    %c0_121 = arith.constant 0 : index
    %156 = vector.load %arg4[%c0_120, %c0_121] : memref<40x24xbf16, #tpu.memory_space<vmem>>, vector<40x24xbf16>
    %cst_122 = arith.constant dense<0.000000e+00> : vector<40x288xf32>
    %157 = tpu.matmul %156, %155, %cst_122 {dimension_numbers = #tpu.dot_dimension_numbers<[1], [0], [0], [1], [0, 0, 1, 1], [], []>} : vector<40x24xbf16>, vector<24x288xbf16>, vector<40x288xf32> -> vector<40x288xf32>
    %158 = arith.truncf %157 : vector<40x288xf32> to vector<40x288xbf16>
    %cst_123 = arith.constant 0.000000e+00 : f32
    %159 = vector.broadcast %cst_123 : f32 to vector<8x224xf32>
    %160 = vector.extract_strided_slice %158 {offsets = [0, 0], sizes = [8, 288], strides = [1, 1]} : vector<40x288xbf16> to vector<8x288xbf16>
    %c0_124 = arith.constant 0 : index
    %c0_125 = arith.constant 0 : index
    %c0_126 = arith.constant 0 : index
    %161 = vector.load %arg5[%c0_124, %c0_125, %c0_126] : memref<5x288x224xbf16, #tpu.memory_space<vmem>>, vector<1x288x224xbf16>
    %162 = vector.shape_cast %161 : vector<1x288x224xbf16> to vector<288x224xbf16>
    %cst_127 = arith.constant dense<0.000000e+00> : vector<8x224xf32>
    %163 = tpu.matmul %160, %162, %cst_127 {dimension_numbers = #tpu.dot_dimension_numbers<[1], [0], [0], [1], [0, 0, 1, 1], [], []>} : vector<8x288xbf16>, vector<288x224xbf16>, vector<8x224xf32> -> vector<8x224xf32>
    %164 = arith.addf %159, %163 : vector<8x224xf32>
    %165 = vector.extract_strided_slice %158 {offsets = [8, 0], sizes = [8, 288], strides = [1, 1]} : vector<40x288xbf16> to vector<8x288xbf16>
    %c1_128 = arith.constant 1 : index
    %c0_129 = arith.constant 0 : index
    %c0_130 = arith.constant 0 : index
    %166 = vector.load %arg5[%c1_128, %c0_129, %c0_130] : memref<5x288x224xbf16, #tpu.memory_space<vmem>>, vector<1x288x224xbf16>
    %167 = vector.shape_cast %166 : vector<1x288x224xbf16> to vector<288x224xbf16>
    %cst_131 = arith.constant dense<0.000000e+00> : vector<8x224xf32>
    %168 = tpu.matmul %165, %167, %cst_131 {dimension_numbers = #tpu.dot_dimension_numbers<[1], [0], [0], [1], [0, 0, 1, 1], [], []>} : vector<8x288xbf16>, vector<288x224xbf16>, vector<8x224xf32> -> vector<8x224xf32>
    %169 = arith.addf %164, %168 : vector<8x224xf32>
    %170 = vector.extract_strided_slice %158 {offsets = [16, 0], sizes = [8, 288], strides = [1, 1]} : vector<40x288xbf16> to vector<8x288xbf16>
    %c2_132 = arith.constant 2 : index
    %c0_133 = arith.constant 0 : index
    %c0_134 = arith.constant 0 : index
    %171 = vector.load %arg5[%c2_132, %c0_133, %c0_134] : memref<5x288x224xbf16, #tpu.memory_space<vmem>>, vector<1x288x224xbf16>
    %172 = vector.shape_cast %171 : vector<1x288x224xbf16> to vector<288x224xbf16>
    %cst_135 = arith.constant dense<0.000000e+00> : vector<8x224xf32>
    %173 = tpu.matmul %170, %172, %cst_135 {dimension_numbers = #tpu.dot_dimension_numbers<[1], [0], [0], [1], [0, 0, 1, 1], [], []>} : vector<8x288xbf16>, vector<288x224xbf16>, vector<8x224xf32> -> vector<8x224xf32>
    %174 = arith.addf %169, %173 : vector<8x224xf32>
    %175 = vector.extract_strided_slice %158 {offsets = [24, 0], sizes = [8, 288], strides = [1, 1]} : vector<40x288xbf16> to vector<8x288xbf16>
    %c3_136 = arith.constant 3 : index
    %c0_137 = arith.constant 0 : index
    %c0_138 = arith.constant 0 : index
    %176 = vector.load %arg5[%c3_136, %c0_137, %c0_138] : memref<5x288x224xbf16, #tpu.memory_space<vmem>>, vector<1x288x224xbf16>
    %177 = vector.shape_cast %176 : vector<1x288x224xbf16> to vector<288x224xbf16>
    %cst_139 = arith.constant dense<0.000000e+00> : vector<8x224xf32>
    %178 = tpu.matmul %175, %177, %cst_139 {dimension_numbers = #tpu.dot_dimension_numbers<[1], [0], [0], [1], [0, 0, 1, 1], [], []>} : vector<8x288xbf16>, vector<288x224xbf16>, vector<8x224xf32> -> vector<8x224xf32>
    %179 = arith.addf %174, %178 : vector<8x224xf32>
    %180 = vector.extract_strided_slice %158 {offsets = [32, 0], sizes = [8, 288], strides = [1, 1]} : vector<40x288xbf16> to vector<8x288xbf16>
    %c4_140 = arith.constant 4 : index
    %c0_141 = arith.constant 0 : index
    %c0_142 = arith.constant 0 : index
    %181 = vector.load %arg5[%c4_140, %c0_141, %c0_142] : memref<5x288x224xbf16, #tpu.memory_space<vmem>>, vector<1x288x224xbf16>
    %182 = vector.shape_cast %181 : vector<1x288x224xbf16> to vector<288x224xbf16>
    %cst_143 = arith.constant dense<0.000000e+00> : vector<8x224xf32>
    %183 = tpu.matmul %180, %182, %cst_143 {dimension_numbers = #tpu.dot_dimension_numbers<[1], [0], [0], [1], [0, 0, 1, 1], [], []>} : vector<8x288xbf16>, vector<288x224xbf16>, vector<8x224xf32> -> vector<8x224xf32>
    %184 = arith.addf %179, %183 : vector<8x224xf32>
    %c0_144 = arith.constant 0 : index
    %c0_145 = arith.constant 0 : index
    %185 = vector.load %arg6[%c0_144, %c0_145] : memref<1x224xf32, #tpu.memory_space<vmem>>, vector<1x224xf32>
    %186 = vector.broadcast %185 : vector<1x224xf32> to vector<8x224xf32>
    %187 = arith.addf %184, %186 : vector<8x224xf32>
    %cst_146 = arith.constant 0.000000e+00 : f32
    %188 = vector.broadcast %cst_146 : f32 to vector<8x224xf32>
    %189 = arith.maximumf %187, %188 : vector<8x224xf32>
    %190 = arith.truncf %189 : vector<8x224xf32> to vector<8x224xbf16>
    %c0_147 = arith.constant 0 : index
    %c0_148 = arith.constant 0 : index
    %191 = vector.load %arg7[%c0_147, %c0_148] : memref<40x8xbf16, #tpu.memory_space<vmem>>, vector<40x8xbf16>
    %cst_149 = arith.constant dense<0.000000e+00> : vector<40x224xf32>
    %192 = tpu.matmul %191, %190, %cst_149 {dimension_numbers = #tpu.dot_dimension_numbers<[1], [0], [0], [1], [0, 0, 1, 1], [], []>} : vector<40x8xbf16>, vector<8x224xbf16>, vector<40x224xf32> -> vector<40x224xf32>
    %193 = arith.truncf %192 : vector<40x224xf32> to vector<40x224xbf16>
    %cst_150 = arith.constant 0.000000e+00 : f32
    %194 = vector.broadcast %cst_150 : f32 to vector<8x64xf32>
    %195 = vector.extract_strided_slice %193 {offsets = [0, 0], sizes = [8, 224], strides = [1, 1]} : vector<40x224xbf16> to vector<8x224xbf16>
    %c0_151 = arith.constant 0 : index
    %c0_152 = arith.constant 0 : index
    %c0_153 = arith.constant 0 : index
    %196 = vector.load %arg8[%c0_151, %c0_152, %c0_153] : memref<5x224x64xbf16, #tpu.memory_space<vmem>>, vector<1x224x64xbf16>
    %197 = vector.shape_cast %196 : vector<1x224x64xbf16> to vector<224x64xbf16>
    %cst_154 = arith.constant dense<0.000000e+00> : vector<8x64xf32>
    %198 = tpu.matmul %195, %197, %cst_154 {dimension_numbers = #tpu.dot_dimension_numbers<[1], [0], [0], [1], [0, 0, 1, 1], [], []>} : vector<8x224xbf16>, vector<224x64xbf16>, vector<8x64xf32> -> vector<8x64xf32>
    %199 = arith.addf %194, %198 : vector<8x64xf32>
    %200 = vector.extract_strided_slice %193 {offsets = [8, 0], sizes = [8, 224], strides = [1, 1]} : vector<40x224xbf16> to vector<8x224xbf16>
    %c1_155 = arith.constant 1 : index
    %c0_156 = arith.constant 0 : index
    %c0_157 = arith.constant 0 : index
    %201 = vector.load %arg8[%c1_155, %c0_156, %c0_157] : memref<5x224x64xbf16, #tpu.memory_space<vmem>>, vector<1x224x64xbf16>
    %202 = vector.shape_cast %201 : vector<1x224x64xbf16> to vector<224x64xbf16>
    %cst_158 = arith.constant dense<0.000000e+00> : vector<8x64xf32>
    %203 = tpu.matmul %200, %202, %cst_158 {dimension_numbers = #tpu.dot_dimension_numbers<[1], [0], [0], [1], [0, 0, 1, 1], [], []>} : vector<8x224xbf16>, vector<224x64xbf16>, vector<8x64xf32> -> vector<8x64xf32>
    %204 = arith.addf %199, %203 : vector<8x64xf32>
    %205 = vector.extract_strided_slice %193 {offsets = [16, 0], sizes = [8, 224], strides = [1, 1]} : vector<40x224xbf16> to vector<8x224xbf16>
    %c2_159 = arith.constant 2 : index
    %c0_160 = arith.constant 0 : index
    %c0_161 = arith.constant 0 : index
    %206 = vector.load %arg8[%c2_159, %c0_160, %c0_161] : memref<5x224x64xbf16, #tpu.memory_space<vmem>>, vector<1x224x64xbf16>
    %207 = vector.shape_cast %206 : vector<1x224x64xbf16> to vector<224x64xbf16>
    %cst_162 = arith.constant dense<0.000000e+00> : vector<8x64xf32>
    %208 = tpu.matmul %205, %207, %cst_162 {dimension_numbers = #tpu.dot_dimension_numbers<[1], [0], [0], [1], [0, 0, 1, 1], [], []>} : vector<8x224xbf16>, vector<224x64xbf16>, vector<8x64xf32> -> vector<8x64xf32>
    %209 = arith.addf %204, %208 : vector<8x64xf32>
    %210 = vector.extract_strided_slice %193 {offsets = [24, 0], sizes = [8, 224], strides = [1, 1]} : vector<40x224xbf16> to vector<8x224xbf16>
    %c3_163 = arith.constant 3 : index
    %c0_164 = arith.constant 0 : index
    %c0_165 = arith.constant 0 : index
    %211 = vector.load %arg8[%c3_163, %c0_164, %c0_165] : memref<5x224x64xbf16, #tpu.memory_space<vmem>>, vector<1x224x64xbf16>
    %212 = vector.shape_cast %211 : vector<1x224x64xbf16> to vector<224x64xbf16>
    %cst_166 = arith.constant dense<0.000000e+00> : vector<8x64xf32>
    %213 = tpu.matmul %210, %212, %cst_166 {dimension_numbers = #tpu.dot_dimension_numbers<[1], [0], [0], [1], [0, 0, 1, 1], [], []>} : vector<8x224xbf16>, vector<224x64xbf16>, vector<8x64xf32> -> vector<8x64xf32>
    %214 = arith.addf %209, %213 : vector<8x64xf32>
    %215 = vector.extract_strided_slice %193 {offsets = [32, 0], sizes = [8, 224], strides = [1, 1]} : vector<40x224xbf16> to vector<8x224xbf16>
    %c4_167 = arith.constant 4 : index
    %c0_168 = arith.constant 0 : index
    %c0_169 = arith.constant 0 : index
    %216 = vector.load %arg8[%c4_167, %c0_168, %c0_169] : memref<5x224x64xbf16, #tpu.memory_space<vmem>>, vector<1x224x64xbf16>
    %217 = vector.shape_cast %216 : vector<1x224x64xbf16> to vector<224x64xbf16>
    %cst_170 = arith.constant dense<0.000000e+00> : vector<8x64xf32>
    %218 = tpu.matmul %215, %217, %cst_170 {dimension_numbers = #tpu.dot_dimension_numbers<[1], [0], [0], [1], [0, 0, 1, 1], [], []>} : vector<8x224xbf16>, vector<224x64xbf16>, vector<8x64xf32> -> vector<8x64xf32>
    %219 = arith.addf %214, %218 : vector<8x64xf32>
    %c0_171 = arith.constant 0 : index
    %c0_172 = arith.constant 0 : index
    %220 = vector.load %arg9[%c0_171, %c0_172] : memref<1x64xf32, #tpu.memory_space<vmem>>, vector<1x64xf32>
    %221 = vector.broadcast %220 : vector<1x64xf32> to vector<8x64xf32>
    %222 = arith.addf %219, %221 : vector<8x64xf32>
    %cst_173 = arith.constant 0.000000e+00 : f32
    %223 = vector.broadcast %cst_173 : f32 to vector<8x64xf32>
    %224 = arith.maximumf %222, %223 : vector<8x64xf32>
    %225 = arith.truncf %224 : vector<8x64xf32> to vector<8x64xbf16>
    %c0_174 = arith.constant 0 : index
    %c0_175 = arith.constant 0 : index
    %226 = vector.load %arg11[%c0_174, %c0_175] : memref<1x18xf32, #tpu.memory_space<vmem>>, vector<1x18xf32>
    %227 = vector.extract_strided_slice %225 {offsets = [0, 0], sizes = [1, 64], strides = [1, 1]} : vector<8x64xbf16> to vector<1x64xbf16>
    %c0_176 = arith.constant 0 : index
    %c0_177 = arith.constant 0 : index
    %c0_178 = arith.constant 0 : index
    %228 = vector.load %arg10[%c0_176, %c0_177, %c0_178] : memref<2x64x18xbf16, #tpu.memory_space<vmem>>, vector<1x64x18xbf16>
    %229 = vector.shape_cast %228 : vector<1x64x18xbf16> to vector<64x18xbf16>
    %cst_179 = arith.constant dense<0.000000e+00> : vector<1x18xf32>
    %230 = tpu.matmul %227, %229, %cst_179 {dimension_numbers = #tpu.dot_dimension_numbers<[1], [0], [0], [1], [0, 0, 1, 1], [], []>} : vector<1x64xbf16>, vector<64x18xbf16>, vector<1x18xf32> -> vector<1x18xf32>
    %231 = arith.addf %226, %230 : vector<1x18xf32>
    %232 = vector.extract_strided_slice %225 {offsets = [1, 0], sizes = [1, 64], strides = [1, 1]} : vector<8x64xbf16> to vector<1x64xbf16>
    %c1_180 = arith.constant 1 : index
    %c0_181 = arith.constant 0 : index
    %c0_182 = arith.constant 0 : index
    %233 = vector.load %arg10[%c1_180, %c0_181, %c0_182] : memref<2x64x18xbf16, #tpu.memory_space<vmem>>, vector<1x64x18xbf16>
    %234 = vector.shape_cast %233 : vector<1x64x18xbf16> to vector<64x18xbf16>
    %cst_183 = arith.constant dense<0.000000e+00> : vector<1x18xf32>
    %235 = tpu.matmul %232, %234, %cst_183 {dimension_numbers = #tpu.dot_dimension_numbers<[1], [0], [0], [1], [0, 0, 1, 1], [], []>} : vector<1x64xbf16>, vector<64x18xbf16>, vector<1x18xf32> -> vector<1x18xf32>
    %236 = arith.addf %231, %235 : vector<1x18xf32>
    %c1_184 = arith.constant 1 : index
    %c0_185 = arith.constant 0 : index
    %237 = vector.load %arg12[%c1_184, %c0_185] : memref<2x18xf32, #tpu.memory_space<vmem>>, vector<1x18xf32>
    tpu.vector_store %arg12[%c1_184, %c0_185], %236 {strides = array<i32>} : memref<2x18xf32, #tpu.memory_space<vmem>>, vector<1x18xf32>,
    return
  }
}

</mosaic_0001>

<llo_original>
// kernel: dqn_forward.1
$region0: #{dqn_forward.1}
  #allocation0 [shape = 'u32[]', space=smem, size = 0x4, offset = 0x4, fixed_abs, tag = 'smem constant byte address 0x4 - core index']
  #allocation1 [shape = 'u32[144,128]{1,0:T(1,128)}', space=vmem, size = 0x12000, scoped, tag = 'internal scratch']
  %s0 = inlined_call_operand.vmem [shape: bf16[2,40,120], index: 0, kind: input, shape index: {}]
  %s1 = inlined_call_operand.vmem [shape: bf16[120,40], index: 1, kind: input, shape index: {}]
  %s2 = inlined_call_operand.vmem [shape: bf16[5,120,288], index: 2, kind: input, shape index: {}]
  %s3 = inlined_call_operand.vmem [shape: f32[1,288], index: 3, kind: input, shape index: {}]
  %s4 = inlined_call_operand.vmem [shape: bf16[40,24], index: 4, kind: input, shape index: {}]
  %s5 = inlined_call_operand.vmem [shape: bf16[5,288,224], index: 5, kind: input, shape index: {}]
  %s6 = inlined_call_operand.vmem [shape: f32[1,224], index: 6, kind: input, shape index: {}]
  %s7 = inlined_call_operand.vmem [shape: bf16[40,8], index: 7, kind: input, shape index: {}]
  %s8 = inlined_call_operand.vmem [shape: bf16[5,224,64], index: 8, kind: input, shape index: {}]
  %s9 = inlined_call_operand.vmem [shape: f32[1,64], index: 9, kind: input, shape index: {}]
  %s10 = inlined_call_operand.vmem [shape: bf16[2,64,18], index: 10, kind: input, shape index: {}]
  %s11 = inlined_call_operand.vmem [shape: f32[1,18], index: 11, kind: input, shape index: {}]
  %s12 = inlined_call_operand.hbm [shape: f32[2,18], index: 12, kind: output, shape index: {}]
  %s13 = sld [smem:[#allocation0]]
  $region58: #{dqn_forward.1} parent=0
    _
  %s15 = ssub.s32 1, %s13
  %s16 = scalar_select 0, %s15, %s13
  $region1: #{dqn_forward.1} parent=0
    #allocation2 [shape = 'u8[1024]{0}', space=vmem, size = 0x400, scoped, tag = 'output window, operand 0, single buffered']
    #allocation3 [shape = 's32[1]{0}', space=sflag, size = 0x4, scoped, tag = 'scoped memory for dqn_forward.1']
    %17 = vsyncpa [#allocation3], 0
    // Predicated region
    $region2: #{dqn_forward.1} parent=1 // pred_check
      _
    $region3: #{dqn_forward.1} parent=1 // pred_check_branch
      %19 = sbr.rel (0) target = $region5
    $region4: #{dqn_forward.1} parent=1 // pred_region
      _
    $region5: #{dqn_forward.1} parent=1 // pred_fallthru
      _
    // Predicated region
    $region6: #{dqn_forward.1} parent=1 // pred_check
      _
    $region7: #{dqn_forward.1} parent=1 // pred_check_branch
      %21 = sbr.rel (0) target = $region9
    $region8: #{dqn_forward.1} parent=1 // pred_region
      _
    $region9: #{dqn_forward.1} parent=1 // pred_fallthru
      _
    // Predicated region
    $region10: #{dqn_forward.1} parent=1 // pred_check
      _
    $region11: #{dqn_forward.1} parent=1 // pred_check_branch
      %23 = sbr.rel (0) target = $region13
    $region12: #{dqn_forward.1} parent=1 // pred_region
      _
    $region13: #{dqn_forward.1} parent=1 // pred_fallthru
      _
    // Predicated region
    $region14: #{dqn_forward.1} parent=1 // pred_check
      _
    $region15: #{dqn_forward.1} parent=1 // pred_check_branch
      %25 = sbr.rel (0) target = $region17
    $region16: #{dqn_forward.1} parent=1 // pred_region
      _
    $region17: #{dqn_forward.1} parent=1 // pred_fallthru
      _
    // Predicated region
    $region18: #{dqn_forward.1} parent=1 // pred_check
      _
    $region19: #{dqn_forward.1} parent=1 // pred_check_branch
      %27 = sbr.rel (0) target = $region21
    $region20: #{dqn_forward.1} parent=1 // pred_region
      _
    $region21: #{dqn_forward.1} parent=1 // pred_fallthru
      _
    // Predicated region
    $region22: #{dqn_forward.1} parent=1 // pred_check
      _
    $region23: #{dqn_forward.1} parent=1 // pred_check_branch
      %29 = sbr.rel (0) target = $region25
    $region24: #{dqn_forward.1} parent=1 // pred_region
      _
    $region25: #{dqn_forward.1} parent=1 // pred_fallthru
      _
    // Predicated region
    $region26: #{dqn_forward.1} parent=1 // pred_check
      _
    $region27: #{dqn_forward.1} parent=1 // pred_check_branch
      %31 = sbr.rel (0) target = $region29
    $region28: #{dqn_forward.1} parent=1 // pred_region
      _
    $region29: #{dqn_forward.1} parent=1 // pred_fallthru
      _
    // Predicated region
    $region30: #{dqn_forward.1} parent=1 // pred_check
      _
    $region31: #{dqn_forward.1} parent=1 // pred_check_branch
      %33 = sbr.rel (0) target = $region33
    $region32: #{dqn_forward.1} parent=1 // pred_region
      _
    $region33: #{dqn_forward.1} parent=1 // pred_fallthru
      _
    // Predicated region
    $region34: #{dqn_forward.1} parent=1 // pred_check
      _
    $region35: #{dqn_forward.1} parent=1 // pred_check_branch
      %35 = sbr.rel (0) target = $region37
    $region36: #{dqn_forward.1} parent=1 // pred_region
      _
    $region37: #{dqn_forward.1} parent=1 // pred_fallthru
      _
    // Predicated region
    $region38: #{dqn_forward.1} parent=1 // pred_check
      _
    $region39: #{dqn_forward.1} parent=1 // pred_check_branch
      %37 = sbr.rel (0) target = $region41
    $region40: #{dqn_forward.1} parent=1 // pred_region
      _
    $region41: #{dqn_forward.1} parent=1 // pred_fallthru
      _
    // Predicated region
    $region42: #{dqn_forward.1} parent=1 // pred_check
      _
    $region43: #{dqn_forward.1} parent=1 // pred_check_branch
      %39 = sbr.rel (0) target = $region45
    $region44: #{dqn_forward.1} parent=1 // pred_region
      _
    $region45: #{dqn_forward.1} parent=1 // pred_fallthru
      _
    // Predicated region
    $region46: #{dqn_forward.1} parent=1 // pred_check
      _
    $region47: #{dqn_forward.1} parent=1 // pred_check_branch
      %41 = sbr.rel (0) target = $region49
    $region48: #{dqn_forward.1} parent=1 // pred_region
      _
    $region49: #{dqn_forward.1} parent=1 // pred_fallthru
      _
    %v43 = vld [vmem:[%s0] sm:$0xf]
    %v44 = vld [vmem:[%s0 + $0x4] sm:$0xf]
    %v45 = vld [vmem:[%s0 + $0x8] sm:$0xf]
    %v46 = vld [vmem:[%s0 + $0xc] sm:$0xf]
    %v47 = vld [vmem:[%s0 + $0x10] sm:$0xf]
    %v48 = vld [vmem:[%s1] sm:$0xf]
    %v49 = vld [vmem:[%s1 + $0x4] sm:$0xf]
    %v50 = vld [vmem:[%s1 + $0x8] sm:$0xf]
    %v51 = vld [vmem:[%s1 + $0xc] sm:$0xf]
    %v52 = vld [vmem:[%s1 + $0x10] sm:$0xf]
    %v53 = vld [vmem:[%s1 + $0x14] sm:$0xf]
    %v54 = vld [vmem:[%s1 + $0x18] sm:$0xf]
    %v55 = vld [vmem:[%s1 + $0x1c] sm:$0xf]
    %v56 = vld [vmem:[%s1 + $0x20] sm:$0xf]
    %v57 = vld [vmem:[%s1 + $0x24] sm:$0xf]
    %v58 = vld [vmem:[%s1 + $0x28] sm:$0xf]
    %v59 = vld [vmem:[%s1 + $0x2c] sm:$0xf]
    %v60 = vld [vmem:[%s1 + $0x30] sm:$0xf]
    %v61 = vld [vmem:[%s1 + $0x34] sm:$0xf]
    %v62 = vld [vmem:[%s1 + $0x38] sm:$0xf]
    %v78 = vunpack.c.l.b16 %v48
    %v79 = vunpack.c.l.b16 %v49
    %v80 = vunpack.c.l.b16 %v50
    %v81 = vunpack.c.l.b16 %v51
    %v82 = vunpack.c.l.b16 %v52
    %v83 = vunpack.c.l.b16 %v53
    %v84 = vunpack.c.l.b16 %v54
    %v85 = vunpack.c.l.b16 %v55
    %v86 = vunpack.c.l.b16 %v56
    %v87 = vunpack.c.l.b16 %v57
    %v88 = vunpack.c.l.b16 %v58
    %v89 = vunpack.c.l.b16 %v59
    %v90 = vunpack.c.l.b16 %v60
    %v91 = vunpack.c.l.b16 %v61
    %v92 = vunpack.c.l.b16 %v62
    %v93 = vpack.c.b16 %v79, %v78
    %v94 = vpack.c.b16 %v81, %v80
    %v95 = vpack.c.b16 %v83, %v82
    %v96 = vpack.c.b16 %v85, %v84
    %v97 = vpack.c.b16 %v87, %v86
    %v98 = vpack.c.b16 %v89, %v88
    %v99 = vpack.c.b16 %v91, %v90
    %v100 = vpack.c.b16 %v92, %v92
    %v106 = vunpack.c.l.b16 %v43
    %v107 = vunpack.c.l.b16 %v44
    %v108 = vunpack.c.l.b16 %v45
    %v109 = vunpack.c.l.b16 %v46
    %v110 = vunpack.c.l.b16 %v47
    %v111 = vpack.c.b16 %v107, %v106
    %v112 = vpack.c.b16 %v109, %v108
    %v113 = vpack.c.b16 %v110, %v110
    %vm116 = vcmask 326656
    %v118 = vsel %vm116, %v93, 0
    %v121 = vsel %vm116, %v94, 0
    %v124 = vsel %vm116, %v95, 0
    %v127 = vsel %vm116, %v96, 0
    %v130 = vsel %vm116, %v97, 0
    %v133 = vsel %vm116, %v98, 0
    %v136 = vsel %vm116, %v99, 0
    %v139 = vsel %vm116, %v100, 0
    %vm141 = vcmask 1043456
    %v143 = vsel %vm141, %v113, 0
    %145 = vmatprep.subr.bf16.mxu0 0
    %146 = vmatpush1.bf16.msra.mxu0 %v111
    %147 = vmatprep.subr.bf16.mxu0 0
    %148 = vmatpush1.bf16.msra.mxu0 %v112
    %149 = vmatprep.subr.bf16.mxu0 0
    %150 = vmatpush1.bf16.msra.mxu0 %v143
    %151 = vmatprep.subr.bf16.mxu0 0
    %152 = vmatpush1.bf16.msra.mxu0 0
    %153 = vmatprep.subr.bf16.mxu0 0
    %154 = vmatpush1.bf16.msra.mxu0 0
    %155 = vmatprep.subr.bf16.mxu0 0
    %156 = vmatpush1.bf16.msra.mxu0 0
    %157 = vmatprep.subr.bf16.mxu0 0
    %158 = vmatpush1.bf16.msra.mxu0 0
    %159 = vmatprep.subr.bf16.mxu0 0
    %160 = vmatpush1.bf16.msra.mxu0 0
    %161 = vmatprep.subr.bf16.mxu0 0
    %162 = vmatpush1.bf16.msra.mxu0 0
    %163 = vmatprep.subr.bf16.mxu0 0
    %164 = vmatpush1.bf16.msra.mxu0 0
    %165 = vmatprep.subr.bf16.mxu0 0
    %166 = vmatpush1.bf16.msra.mxu0 0
    %167 = vmatprep.subr.bf16.mxu0 0
    %168 = vmatpush1.bf16.msra.mxu0 0
    %169 = vmatprep.subr.bf16.mxu0 0
    %170 = vmatpush1.bf16.msra.mxu0 0
    %171 = vmatprep.subr.bf16.mxu0 0
    %172 = vmatpush1.bf16.msra.mxu0 0
    %173 = vmatprep.subr.bf16.mxu0 0
    %174 = vmatpush1.bf16.msra.mxu0 0
    %175 = vmatprep.subr.bf16.mxu0 0
    %176 = vmatpush1.bf16.msra.mxu0 0
    %177 = vmatprep.mubr.bf16.mxu0 0
    %178 = vmatmul.mubr.bf16.gmra.mrb[0].mxu0 %v118
    %v179 = vpop.f32.mrb[0].mxu0
    %v180 = vadd.f32 0.0, %v179
    %v181 = vpop.f32.mrb[0].mxu0
    %v182 = vpop.f32.mrb[0].mxu0
    %v183 = vadd.f32 0.0, %v182
    %v184 = vpop.f32.mrb[0].mxu0
    %185 = vmatprep.mubr.bf16.mxu0 0
    %186 = vmatmul.mubr.bf16.gmra.mrb[0].mxu0 %v121
    %v187 = vpop.f32.mrb[0].mxu0
    %v188 = vadd.f32 0.0, %v187
    %v189 = vpop.f32.mrb[0].mxu0
    %v190 = vpop.f32.mrb[0].mxu0
    %v191 = vadd.f32 0.0, %v190
    %v192 = vpop.f32.mrb[0].mxu0
    %193 = vmatprep.mubr.bf16.mxu0 0
    %194 = vmatmul.mubr.bf16.gmra.mrb[0].mxu0 %v124
    %v195 = vpop.f32.mrb[0].mxu0
    %v196 = vadd.f32 0.0, %v195
    %v197 = vpop.f32.mrb[0].mxu0
    %v198 = vpop.f32.mrb[0].mxu0
    %v199 = vadd.f32 0.0, %v198
    %v200 = vpop.f32.mrb[0].mxu0
    %201 = vmatprep.mubr.bf16.mxu0 0
    %202 = vmatmul.mubr.bf16.gmra.mrb[0].mxu0 %v127
    %v203 = vpop.f32.mrb[0].mxu0
    %v204 = vadd.f32 0.0, %v203
    %v205 = vpop.f32.mrb[0].mxu0
    %v206 = vpop.f32.mrb[0].mxu0
    %v207 = vadd.f32 0.0, %v206
    %v208 = vpop.f32.mrb[0].mxu0
    %209 = vmatprep.mubr.bf16.mxu0 0
    %210 = vmatmul.mubr.bf16.gmra.mrb[0].mxu0 %v130
    %v211 = vpop.f32.mrb[0].mxu0
    %v212 = vadd.f32 0.0, %v211
    %v213 = vpop.f32.mrb[0].mxu0
    %v214 = vpop.f32.mrb[0].mxu0
    %v215 = vadd.f32 0.0, %v214
    %v216 = vpop.f32.mrb[0].mxu0
    %217 = vmatprep.mubr.bf16.mxu0 0
    %218 = vmatmul.mubr.bf16.gmra.mrb[0].mxu0 %v133
    %v219 = vpop.f32.mrb[0].mxu0
    %v220 = vadd.f32 0.0, %v219
    %v221 = vpop.f32.mrb[0].mxu0
    %v222 = vpop.f32.mrb[0].mxu0
    %v223 = vadd.f32 0.0, %v222
    %v224 = vpop.f32.mrb[0].mxu0
    %225 = vmatprep.mubr.bf16.mxu0 0
    %226 = vmatmul.mubr.bf16.gmra.mrb[0].mxu0 %v136
    %v227 = vpop.f32.mrb[0].mxu0
    %v228 = vadd.f32 0.0, %v227
    %v229 = vpop.f32.mrb[0].mxu0
    %v230 = vpop.f32.mrb[0].mxu0
    %v231 = vadd.f32 0.0, %v230
    %v232 = vpop.f32.mrb[0].mxu0
    %233 = vmatprep.mubr.bf16.mxu0 0
    %234 = vmatmul.mubr.bf16.gmra.mrb[0].mxu0 %v139
    %v235 = vpop.f32.mrb[0].mxu0
    %v236 = vadd.f32 0.0, %v235
    %v237 = vpop.f32.mrb[0].mxu0
    %v238 = vpop.f32.mrb[0].mxu0
    %v239 = vpop.f32.mrb[0].mxu0
    %240 = vdwg.mxu0
    %v241 = vpack.c.bf16 %v183, %v180
    %v242 = vpack.c.bf16 %v191, %v188
    %v243 = vpack.c.bf16 %v199, %v196
    %v244 = vpack.c.bf16 %v207, %v204
    %v245 = vpack.c.bf16 %v215, %v212
    %v246 = vpack.c.bf16 %v223, %v220
    %v247 = vpack.c.bf16 %v231, %v228
    %v248 = vpack.c.bf16 %v236, %v236
    %v249 = vld [vmem:[%s2] sm:$0xff]
    %v250 = vld [vmem:[%s2 + $0x8] sm:$0xf]
    %v251 = vld [vmem:[%s2 + $0xc] sm:$0xff]
    %v252 = vld [vmem:[%s2 + $0x14] sm:$0xf]
    %v253 = vld [vmem:[%s2 + $0x18] sm:$0xff]
    %v254 = vld [vmem:[%s2 + $0x20] sm:$0xf]
    %v255 = vld [vmem:[%s2 + $0x24] sm:$0xff]
    %v256 = vld [vmem:[%s2 + $0x2c] sm:$0xf]
    %v257 = vld [vmem:[%s2 + $0x30] sm:$0xff]
    %v258 = vld [vmem:[%s2 + $0x38] sm:$0xf]
    %v259 = vld [vmem:[%s2 + $0x3c] sm:$0xff]
    %v260 = vld [vmem:[%s2 + $0x44] sm:$0xf]
    %v261 = vld [vmem:[%s2 + $0x48] sm:$0xff]
    %v262 = vld [vmem:[%s2 + $0x50] sm:$0xf]
    %v263 = vld [vmem:[%s2 + $0x54] sm:$0xff]
    %v264 = vld [vmem:[%s2 + $0x5c] sm:$0xf]
    %v265 = vld [vmem:[%s2 + $0x60] sm:$0xff]
    %v266 = vld [vmem:[%s2 + $0x68] sm:$0xf]
    %v267 = vld [vmem:[%s2 + $0x6c] sm:$0xff]
    %v268 = vld [vmem:[%s2 + $0x74] sm:$0xf]
    %v269 = vld [vmem:[%s2 + $0x78] sm:$0xff]
    %v270 = vld [vmem:[%s2 + $0x80] sm:$0xf]
    %v271 = vld [vmem:[%s2 + $0x84] sm:$0xff]
    %v272 = vld [vmem:[%s2 + $0x8c] sm:$0xf]
    %v273 = vld [vmem:[%s2 + $0x90] sm:$0xff]
    %v274 = vld [vmem:[%s2 + $0x98] sm:$0xf]
    %v275 = vld [vmem:[%s2 + $0x9c] sm:$0xff]
    %v276 = vld [vmem:[%s2 + $0xa4] sm:$0xf]
    %v277 = vld [vmem:[%s2 + $0xa8] sm:$0xff]
    %v278 = vld [vmem:[%s2 + $0xb0] sm:$0xf]
    %s279 = scalar_lea.vmem %s2, 180
    %v280 = vld [vmem:[%s279] sm:$0xff]
    %v281 = vld [vmem:[%s279 + $0x8] sm:$0xf]
    %v282 = vld [vmem:[%s279 + $0xc] sm:$0xff]
    %v283 = vld [vmem:[%s279 + $0x14] sm:$0xf]
    %v284 = vld [vmem:[%s279 + $0x18] sm:$0xff]
    %v285 = vld [vmem:[%s279 + $0x20] sm:$0xf]
    %v286 = vld [vmem:[%s279 + $0x24] sm:$0xff]
    %v287 = vld [vmem:[%s279 + $0x2c] sm:$0xf]
    %v288 = vld [vmem:[%s279 + $0x30] sm:$0xff]
    %v289 = vld [vmem:[%s279 + $0x38] sm:$0xf]
    %v290 = vld [vmem:[%s279 + $0x3c] sm:$0xff]
    %v291 = vld [vmem:[%s279 + $0x44] sm:$0xf]
    %v292 = vld [vmem:[%s279 + $0x48] sm:$0xff]
    %v293 = vld [vmem:[%s279 + $0x50] sm:$0xf]
    %v294 = vld [vmem:[%s279 + $0x54] sm:$0xff]
    %v295 = vld [vmem:[%s279 + $0x5c] sm:$0xf]
    %v296 = vld [vmem:[%s279 + $0x60] sm:$0xff]
    %v297 = vld [vmem:[%s279 + $0x68] sm:$0xf]
    %v298 = vld [vmem:[%s279 + $0x6c] sm:$0xff]
    %v299 = vld [vmem:[%s279 + $0x74] sm:$0xf]
    %v300 = vld [vmem:[%s279 + $0x78] sm:$0xff]
    %v301 = vld [vmem:[%s279 + $0x80] sm:$0xf]
    %v302 = vld [vmem:[%s279 + $0x84] sm:$0xff]
    %v303 = vld [vmem:[%s279 + $0x8c] sm:$0xf]
    %v304 = vld [vmem:[%s279 + $0x90] sm:$0xff]
    %v305 = vld [vmem:[%s279 + $0x98] sm:$0xf]
    %v306 = vld [vmem:[%s279 + $0x9c] sm:$0xff]
    %v307 = vld [vmem:[%s279 + $0xa4] sm:$0xf]
    %v308 = vld [vmem:[%s279 + $0xa8] sm:$0xff]
    %v309 = vld [vmem:[%s279 + $0xb0] sm:$0xf]
    %vm312 = vcmask 1043456
    %v313 = vrot.slane %v242, 4
    %v314 = vrot.slane %v243, 4
    %v315 = vsel %vm312, %v313, %v314
    %v346 = vunpack.c.l.b16 %v280
    %v347 = vunpack.c.h.b16 %v280
    %v348 = vunpack.c.l.b16 %v281
    %v349 = vunpack.c.l.b16 %v282
    %v350 = vunpack.c.h.b16 %v282
    %v351 = vunpack.c.l.b16 %v283
    %v352 = vunpack.c.l.b16 %v284
    %v353 = vunpack.c.h.b16 %v284
    %v354 = vunpack.c.l.b16 %v285
    %v355 = vunpack.c.l.b16 %v286
    %v356 = vunpack.c.h.b16 %v286
    %v357 = vunpack.c.l.b16 %v287
    %v358 = vunpack.c.l.b16 %v288
    %v359 = vunpack.c.h.b16 %v288
    %v360 = vunpack.c.l.b16 %v289
    %v361 = vunpack.c.l.b16 %v290
    %v362 = vunpack.c.h.b16 %v290
    %v363 = vunpack.c.l.b16 %v291
    %v364 = vunpack.c.l.b16 %v292
    %v365 = vunpack.c.h.b16 %v292
    %v366 = vunpack.c.l.b16 %v293
    %v367 = vunpack.c.l.b16 %v294
    %v368 = vunpack.c.h.b16 %v294
    %v369 = vunpack.c.l.b16 %v295
    %v370 = vunpack.c.l.b16 %v296
    %v371 = vunpack.c.h.b16 %v296
    %v372 = vunpack.c.l.b16 %v297
    %v373 = vunpack.c.l.b16 %v298
    %v374 = vunpack.c.h.b16 %v298
    %v375 = vunpack.c.l.b16 %v299
    %v376 = vunpack.c.l.b16 %v300
    %v377 = vunpack.c.h.b16 %v300
    %v378 = vunpack.c.l.b16 %v301
    %v379 = vunpack.c.l.b16 %v302
    %v380 = vunpack.c.h.b16 %v302
    %v381 = vunpack.c.l.b16 %v303
    %v382 = vunpack.c.l.b16 %v304
    %v383 = vunpack.c.h.b16 %v304
    %v384 = vunpack.c.l.b16 %v305
    %v385 = vunpack.c.l.b16 %v306
    %v386 = vunpack.c.h.b16 %v306
    %v387 = vunpack.c.l.b16 %v307
    %v388 = vunpack.c.l.b16 %v308
    %v389 = vunpack.c.h.b16 %v308
    %v390 = vunpack.c.l.b16 %v309
    %v391 = vpack.c.b16 %v349, %v346
    %v392 = vpack.c.b16 %v350, %v347
    %v393 = vpack.c.b16 %v351, %v348
    %v394 = vpack.c.b16 %v355, %v352
    %v395 = vpack.c.b16 %v356, %v353
    %v396 = vpack.c.b16 %v357, %v354
    %v397 = vpack.c.b16 %v361, %v358
    %v398 = vpack.c.b16 %v362, %v359
    %v399 = vpack.c.b16 %v363, %v360
    %v400 = vpack.c.b16 %v367, %v364
    %v401 = vpack.c.b16 %v368, %v365
    %v402 = vpack.c.b16 %v369, %v366
    %v403 = vpack.c.b16 %v373, %v370
    %v404 = vpack.c.b16 %v374, %v371
    %v405 = vpack.c.b16 %v375, %v372
    %v406 = vpack.c.b16 %v379, %v376
    %v407 = vpack.c.b16 %v380, %v377
    %v408 = vpack.c.b16 %v381, %v378
    %v409 = vpack.c.b16 %v385, %v382
    %v410 = vpack.c.b16 %v386, %v383
    %v411 = vpack.c.b16 %v387, %v384
    %v412 = vpack.c.b16 %v388, %v388
    %v413 = vpack.c.b16 %v389, %v389
    %v414 = vpack.c.b16 %v390, %v390
    %vm436 = vcmask 982016
    %v438 = vsel %vm436, %v315, 0
    %v441 = vsel %vm436, %v314, 0
    %v444 = vsel %vm141, %v412, 0
    %v447 = vsel %vm141, %v413, 0
    %v450 = vsel %vm141, %v414, 0
    %452 = vmatprep.subr.bf16.mxu0 %v392
    %453 = vmatpush1.bf16.msra.mxu0 %v391
    %454 = vmatprep.subr.bf16.mxu0 %v395
    %455 = vmatpush1.bf16.msra.mxu0 %v394
    %456 = vmatprep.subr.bf16.mxu0 %v398
    %457 = vmatpush1.bf16.msra.mxu0 %v397
    %458 = vmatprep.subr.bf16.mxu0 %v401
    %459 = vmatpush1.bf16.msra.mxu0 %v400
    %460 = vmatprep.subr.bf16.mxu0 %v404
    %461 = vmatpush1.bf16.msra.mxu0 %v403
    %462 = vmatprep.subr.bf16.mxu0 %v407
    %463 = vmatpush1.bf16.msra.mxu0 %v406
    %464 = vmatprep.subr.bf16.mxu0 %v410
    %465 = vmatpush1.bf16.msra.mxu0 %v409
    %466 = vmatprep.subr.bf16.mxu0 %v447
    %467 = vmatpush1.bf16.msra.mxu0 %v444
    %468 = vmatprep.subr.bf16.mxu0 0
    %469 = vmatpush1.bf16.msra.mxu0 0
    %470 = vmatprep.subr.bf16.mxu0 0
    %471 = vmatpush1.bf16.msra.mxu0 0
    %472 = vmatprep.subr.bf16.mxu0 0
    %473 = vmatpush1.bf16.msra.mxu0 0
    %474 = vmatprep.subr.bf16.mxu0 0
    %475 = vmatpush1.bf16.msra.mxu0 0
    %476 = vmatprep.subr.bf16.mxu0 0
    %477 = vmatpush1.bf16.msra.mxu0 0
    %478 = vmatprep.subr.bf16.mxu0 0
    %479 = vmatpush1.bf16.msra.mxu0 0
    %480 = vmatprep.subr.bf16.mxu0 0
    %481 = vmatpush1.bf16.msra.mxu0 0
    %482 = vmatprep.subr.bf16.mxu0 0
    %483 = vmatpush1.bf16.msra.mxu0 0
    %484 = vmatprep.mubr.bf16.mxu0 0
    %485 = vmatmul.mubr.bf16.gmra.mrb[0].mxu0 %v438
    %v486 = vpop.f32.mrb[0].mxu0
    %v487 = vadd.f32 0.0, %v486
    %v488 = vpop.f32.mrb[0].mxu0
    %v489 = vadd.f32 0.0, %v488
    %v490 = vpop.f32.mrb[0].mxu0
    %v491 = vadd.f32 0.0, %v490
    %v492 = vpop.f32.mrb[0].mxu0
    %v493 = vadd.f32 0.0, %v492
    %494 = vmatprep.mubr.bf16.mxu0 0
    %495 = vmatmul.mubr.bf16.gmra.mrb[0].mxu0 %v441
    %v496 = vpop.f32.mrb[0].mxu0
    %v497 = vadd.f32 0.0, %v496
    %v498 = vpop.f32.mrb[0].mxu0
    %v499 = vadd.f32 0.0, %v498
    %v500 = vpop.f32.mrb[0].mxu0
    %v501 = vpop.f32.mrb[0].mxu0
    %502 = vdwg.mxu0
    %503 = vmatprep.subr.bf16.mxu0 0
    %504 = vmatpush1.bf16.msra.mxu0 %v393
    %505 = vmatprep.subr.bf16.mxu0 0
    %506 = vmatpush1.bf16.msra.mxu0 %v396
    %507 = vmatprep.subr.bf16.mxu0 0
    %508 = vmatpush1.bf16.msra.mxu0 %v399
    %509 = vmatprep.subr.bf16.mxu0 0
    %510 = vmatpush1.bf16.msra.mxu0 %v402
    %511 = vmatprep.subr.bf16.mxu0 0
    %512 = vmatpush1.bf16.msra.mxu0 %v405
    %513 = vmatprep.subr.bf16.mxu0 0
    %514 = vmatpush1.bf16.msra.mxu0 %v408
    %515 = vmatprep.subr.bf16.mxu0 0
    %516 = vmatpush1.bf16.msra.mxu0 %v411
    %517 = vmatprep.subr.bf16.mxu0 0
    %518 = vmatpush1.bf16.msra.mxu0 %v450
    %519 = vmatprep.subr.bf16.mxu0 0
    %520 = vmatpush1.bf16.msra.mxu0 0
    %521 = vmatprep.subr.bf16.mxu0 0
    %522 = vmatpush1.bf16.msra.mxu0 0
    %523 = vmatprep.subr.bf16.mxu0 0
    %524 = vmatpush1.bf16.msra.mxu0 0
    %525 = vmatprep.subr.bf16.mxu0 0
    %526 = vmatpush1.bf16.msra.mxu0 0
    %527 = vmatprep.subr.bf16.mxu0 0
    %528 = vmatpush1.bf16.msra.mxu0 0
    %529 = vmatprep.subr.bf16.mxu0 0
    %530 = vmatpush1.bf16.msra.mxu0 0
    %531 = vmatprep.subr.bf16.mxu0 0
    %532 = vmatpush1.bf16.msra.mxu0 0
    %533 = vmatprep.subr.bf16.mxu0 0
    %534 = vmatpush1.bf16.msra.mxu0 0
    %535 = vmatprep.mubr.bf16.mxu0 0
    %536 = vmatmul.mubr.bf16.gmra.mrb[0].mxu0 %v438
    %v537 = vpop.f32.mrb[0].mxu0
    %v538 = vadd.f32 0.0, %v537
    %v539 = vpop.f32.mrb[0].mxu0
    %v540 = vpop.f32.mrb[0].mxu0
    %v541 = vadd.f32 0.0, %v540
    %v542 = vpop.f32.mrb[0].mxu0
    %543 = vmatprep.mubr.bf16.mxu0 0
    %544 = vmatmul.mubr.bf16.gmra.mrb[0].mxu0 %v441
    %v545 = vpop.f32.mrb[0].mxu0
    %v546 = vadd.f32 0.0, %v545
    %v547 = vpop.f32.mrb[0].mxu0
    %v548 = vpop.f32.mrb[0].mxu0
    %v549 = vpop.f32.mrb[0].mxu0
    %550 = vdwg.mxu0
    %v581 = vunpack.c.l.b16 %v249
    %v582 = vunpack.c.h.b16 %v249
    %v583 = vunpack.c.l.b16 %v250
    %v584 = vunpack.c.l.b16 %v251
    %v585 = vunpack.c.h.b16 %v251
    %v586 = vunpack.c.l.b16 %v252
    %v587 = vunpack.c.l.b16 %v253
    %v588 = vunpack.c.h.b16 %v253
    %v589 = vunpack.c.l.b16 %v254
    %v590 = vunpack.c.l.b16 %v255
    %v591 = vunpack.c.h.b16 %v255
    %v592 = vunpack.c.l.b16 %v256
    %v593 = vunpack.c.l.b16 %v257
    %v594 = vunpack.c.h.b16 %v257
    %v595 = vunpack.c.l.b16 %v258
    %v596 = vunpack.c.l.b16 %v259
    %v597 = vunpack.c.h.b16 %v259
    %v598 = vunpack.c.l.b16 %v260
    %v599 = vunpack.c.l.b16 %v261
    %v600 = vunpack.c.h.b16 %v261
    %v601 = vunpack.c.l.b16 %v262
    %v602 = vunpack.c.l.b16 %v263
    %v603 = vunpack.c.h.b16 %v263
    %v604 = vunpack.c.l.b16 %v264
    %v605 = vunpack.c.l.b16 %v265
    %v606 = vunpack.c.h.b16 %v265
    %v607 = vunpack.c.l.b16 %v266
    %v608 = vunpack.c.l.b16 %v267
    %v609 = vunpack.c.h.b16 %v267
    %v610 = vunpack.c.l.b16 %v268
    %v611 = vunpack.c.l.b16 %v269
    %v612 = vunpack.c.h.b16 %v269
    %v613 = vunpack.c.l.b16 %v270
    %v614 = vunpack.c.l.b16 %v271
    %v615 = vunpack.c.h.b16 %v271
    %v616 = vunpack.c.l.b16 %v272
    %v617 = vunpack.c.l.b16 %v273
    %v618 = vunpack.c.h.b16 %v273
    %v619 = vunpack.c.l.b16 %v274
    %v620 = vunpack.c.l.b16 %v275
    %v621 = vunpack.c.h.b16 %v275
    %v622 = vunpack.c.l.b16 %v276
    %v623 = vunpack.c.l.b16 %v277
    %v624 = vunpack.c.h.b16 %v277
    %v625 = vunpack.c.l.b16 %v278
    %v626 = vpack.c.b16 %v584, %v581
    %v627 = vpack.c.b16 %v585, %v582
    %v628 = vpack.c.b16 %v586, %v583
    %v629 = vpack.c.b16 %v590, %v587
    %v630 = vpack.c.b16 %v591, %v588
    %v631 = vpack.c.b16 %v592, %v589
    %v632 = vpack.c.b16 %v596, %v593
    %v633 = vpack.c.b16 %v597, %v594
    %v634 = vpack.c.b16 %v598, %v595
    %v635 = vpack.c.b16 %v602, %v599
    %v636 = vpack.c.b16 %v603, %v600
    %v637 = vpack.c.b16 %v604, %v601
    %v638 = vpack.c.b16 %v608, %v605
    %v639 = vpack.c.b16 %v609, %v606
    %v640 = vpack.c.b16 %v610, %v607
    %v641 = vpack.c.b16 %v614, %v611
    %v642 = vpack.c.b16 %v615, %v612
    %v643 = vpack.c.b16 %v616, %v613
    %v644 = vpack.c.b16 %v620, %v617
    %v645 = vpack.c.b16 %v621, %v618
    %v646 = vpack.c.b16 %v622, %v619
    %v647 = vpack.c.b16 %v623, %v623
    %v648 = vpack.c.b16 %v624, %v624
    %v649 = vpack.c.b16 %v625, %v625
    %v672 = vsel %vm436, %v241, 0
    %v675 = vsel %vm436, %v242, 0
    %v678 = vsel %vm141, %v647, 0
    %v681 = vsel %vm141, %v648, 0
    %v684 = vsel %vm141, %v649, 0
    %686 = vmatprep.subr.bf16.mxu0 %v627
    %687 = vmatpush1.bf16.msra.mxu0 %v626
    %688 = vmatprep.subr.bf16.mxu0 %v630
    %689 = vmatpush1.bf16.msra.mxu0 %v629
    %690 = vmatprep.subr.bf16.mxu0 %v633
    %691 = vmatpush1.bf16.msra.mxu0 %v632
    %692 = vmatprep.subr.bf16.mxu0 %v636
    %693 = vmatpush1.bf16.msra.mxu0 %v635
    %694 = vmatprep.subr.bf16.mxu0 %v639
    %695 = vmatpush1.bf16.msra.mxu0 %v638
    %696 = vmatprep.subr.bf16.mxu0 %v642
    %697 = vmatpush1.bf16.msra.mxu0 %v641
    %698 = vmatprep.subr.bf16.mxu0 %v645
    %699 = vmatpush1.bf16.msra.mxu0 %v644
    %700 = vmatprep.subr.bf16.mxu0 %v681
    %701 = vmatpush1.bf16.msra.mxu0 %v678
    %702 = vmatprep.subr.bf16.mxu0 0
    %703 = vmatpush1.bf16.msra.mxu0 0
    %704 = vmatprep.subr.bf16.mxu0 0
    %705 = vmatpush1.bf16.msra.mxu0 0
    %706 = vmatprep.subr.bf16.mxu0 0
    %707 = vmatpush1.bf16.msra.mxu0 0
    %708 = vmatprep.subr.bf16.mxu0 0
    %709 = vmatpush1.bf16.msra.mxu0 0
    %710 = vmatprep.subr.bf16.mxu0 0
    %711 = vmatpush1.bf16.msra.mxu0 0
    %712 = vmatprep.subr.bf16.mxu0 0
    %713 = vmatpush1.bf16.msra.mxu0 0
    %714 = vmatprep.subr.bf16.mxu0 0
    %715 = vmatpush1.bf16.msra.mxu0 0
    %716 = vmatprep.subr.bf16.mxu0 0
    %717 = vmatpush1.bf16.msra.mxu0 0
    %718 = vmatprep.mubr.bf16.mxu0 0
    %719 = vmatmul.mubr.bf16.gmra.mrb[0].mxu0 %v672
    %v720 = vpop.f32.mrb[0].mxu0
    %v721 = vadd.f32 %v487, %v720
    %v722 = vpop.f32.mrb[0].mxu0
    %v723 = vadd.f32 %v489, %v722
    %v724 = vpop.f32.mrb[0].mxu0
    %v725 = vadd.f32 %v491, %v724
    %v726 = vpop.f32.mrb[0].mxu0
    %v727 = vadd.f32 %v493, %v726
    %728 = vmatprep.mubr.bf16.mxu0 0
    %729 = vmatmul.mubr.bf16.gmra.mrb[0].mxu0 %v675
    %v730 = vpop.f32.mrb[0].mxu0
    %v731 = vadd.f32 %v497, %v730
    %v732 = vpop.f32.mrb[0].mxu0
    %v733 = vadd.f32 %v499, %v732
    %v734 = vpop.f32.mrb[0].mxu0
    %v735 = vpop.f32.mrb[0].mxu0
    %736 = vdwg.mxu0
    %737 = vmatprep.subr.bf16.mxu0 0
    %738 = vmatpush1.bf16.msra.mxu0 %v628
    %739 = vmatprep.subr.bf16.mxu0 0
    %740 = vmatpush1.bf16.msra.mxu0 %v631
    %741 = vmatprep.subr.bf16.mxu0 0
    %742 = vmatpush1.bf16.msra.mxu0 %v634
    %743 = vmatprep.subr.bf16.mxu0 0
    %744 = vmatpush1.bf16.msra.mxu0 %v637
    %745 = vmatprep.subr.bf16.mxu0 0
    %746 = vmatpush1.bf16.msra.mxu0 %v640
    %747 = vmatprep.subr.bf16.mxu0 0
    %748 = vmatpush1.bf16.msra.mxu0 %v643
    %749 = vmatprep.subr.bf16.mxu0 0
    %750 = vmatpush1.bf16.msra.mxu0 %v646
    %751 = vmatprep.subr.bf16.mxu0 0
    %752 = vmatpush1.bf16.msra.mxu0 %v684
    %753 = vmatprep.subr.bf16.mxu0 0
    %754 = vmatpush1.bf16.msra.mxu0 0
    %755 = vmatprep.subr.bf16.mxu0 0
    %756 = vmatpush1.bf16.msra.mxu0 0
    %757 = vmatprep.subr.bf16.mxu0 0
    %758 = vmatpush1.bf16.msra.mxu0 0
    %759 = vmatprep.subr.bf16.mxu0 0
    %760 = vmatpush1.bf16.msra.mxu0 0
    %761 = vmatprep.subr.bf16.mxu0 0
    %762 = vmatpush1.bf16.msra.mxu0 0
    %763 = vmatprep.subr.bf16.mxu0 0
    %764 = vmatpush1.bf16.msra.mxu0 0
    %765 = vmatprep.subr.bf16.mxu0 0
    %766 = vmatpush1.bf16.msra.mxu0 0
    %767 = vmatprep.subr.bf16.mxu0 0
    %768 = vmatpush1.bf16.msra.mxu0 0
    %769 = vmatprep.mubr.bf16.mxu0 0
    %770 = vmatmul.mubr.bf16.gmra.mrb[0].mxu0 %v672
    %v771 = vpop.f32.mrb[0].mxu0
    %v772 = vadd.f32 %v538, %v771
    %v773 = vpop.f32.mrb[0].mxu0
    %v774 = vpop.f32.mrb[0].mxu0
    %v775 = vadd.f32 %v541, %v774
    %v776 = vpop.f32.mrb[0].mxu0
    %777 = vmatprep.mubr.bf16.mxu0 0
    %778 = vmatmul.mubr.bf16.gmra.mrb[0].mxu0 %v675
    %v779 = vpop.f32.mrb[0].mxu0
    %v780 = vadd.f32 %v546, %v779
    %v781 = vpop.f32.mrb[0].mxu0
    %v782 = vpop.f32.mrb[0].mxu0
    %v783 = vpop.f32.mrb[0].mxu0
    %784 = vdwg.mxu0
    %s785 = scalar_lea.vmem %s2, 360
    %v786 = vld [vmem:[%s785] sm:$0xff]
    %v787 = vld [vmem:[%s785 + $0x8] sm:$0xf]
    %v788 = vld [vmem:[%s785 + $0xc] sm:$0xff]
    %v789 = vld [vmem:[%s785 + $0x14] sm:$0xf]
    %v790 = vld [vmem:[%s785 + $0x18] sm:$0xff]
    %v791 = vld [vmem:[%s785 + $0x20] sm:$0xf]
    %v792 = vld [vmem:[%s785 + $0x24] sm:$0xff]
    %v793 = vld [vmem:[%s785 + $0x2c] sm:$0xf]
    %v794 = vld [vmem:[%s785 + $0x30] sm:$0xff]
    %v795 = vld [vmem:[%s785 + $0x38] sm:$0xf]
    %v796 = vld [vmem:[%s785 + $0x3c] sm:$0xff]
    %v797 = vld [vmem:[%s785 + $0x44] sm:$0xf]
    %v798 = vld [vmem:[%s785 + $0x48] sm:$0xff]
    %v799 = vld [vmem:[%s785 + $0x50] sm:$0xf]
    %v800 = vld [vmem:[%s785 + $0x54] sm:$0xff]
    %v801 = vld [vmem:[%s785 + $0x5c] sm:$0xf]
    %v802 = vld [vmem:[%s785 + $0x60] sm:$0xff]
    %v803 = vld [vmem:[%s785 + $0x68] sm:$0xf]
    %v804 = vld [vmem:[%s785 + $0x6c] sm:$0xff]
    %v805 = vld [vmem:[%s785 + $0x74] sm:$0xf]
    %v806 = vld [vmem:[%s785 + $0x78] sm:$0xff]
    %v807 = vld [vmem:[%s785 + $0x80] sm:$0xf]
    %v808 = vld [vmem:[%s785 + $0x84] sm:$0xff]
    %v809 = vld [vmem:[%s785 + $0x8c] sm:$0xf]
    %v810 = vld [vmem:[%s785 + $0x90] sm:$0xff]
    %v811 = vld [vmem:[%s785 + $0x98] sm:$0xf]
    %v812 = vld [vmem:[%s785 + $0x9c] sm:$0xff]
    %v813 = vld [vmem:[%s785 + $0xa4] sm:$0xf]
    %v814 = vld [vmem:[%s785 + $0xa8] sm:$0xff]
    %v815 = vld [vmem:[%s785 + $0xb0] sm:$0xf]
    %v846 = vunpack.c.l.b16 %v786
    %v847 = vunpack.c.h.b16 %v786
    %v848 = vunpack.c.l.b16 %v787
    %v849 = vunpack.c.l.b16 %v788
    %v850 = vunpack.c.h.b16 %v788
    %v851 = vunpack.c.l.b16 %v789
    %v852 = vunpack.c.l.b16 %v790
    %v853 = vunpack.c.h.b16 %v790
    %v854 = vunpack.c.l.b16 %v791
    %v855 = vunpack.c.l.b16 %v792
    %v856 = vunpack.c.h.b16 %v792
    %v857 = vunpack.c.l.b16 %v793
    %v858 = vunpack.c.l.b16 %v794
    %v859 = vunpack.c.h.b16 %v794
    %v860 = vunpack.c.l.b16 %v795
    %v861 = vunpack.c.l.b16 %v796
    %v862 = vunpack.c.h.b16 %v796
    %v863 = vunpack.c.l.b16 %v797
    %v864 = vunpack.c.l.b16 %v798
    %v865 = vunpack.c.h.b16 %v798
    %v866 = vunpack.c.l.b16 %v799
    %v867 = vunpack.c.l.b16 %v800
    %v868 = vunpack.c.h.b16 %v800
    %v869 = vunpack.c.l.b16 %v801
    %v870 = vunpack.c.l.b16 %v802
    %v871 = vunpack.c.h.b16 %v802
    %v872 = vunpack.c.l.b16 %v803
    %v873 = vunpack.c.l.b16 %v804
    %v874 = vunpack.c.h.b16 %v804
    %v875 = vunpack.c.l.b16 %v805
    %v876 = vunpack.c.l.b16 %v806
    %v877 = vunpack.c.h.b16 %v806
    %v878 = vunpack.c.l.b16 %v807
    %v879 = vunpack.c.l.b16 %v808
    %v880 = vunpack.c.h.b16 %v808
    %v881 = vunpack.c.l.b16 %v809
    %v882 = vunpack.c.l.b16 %v810
    %v883 = vunpack.c.h.b16 %v810
    %v884 = vunpack.c.l.b16 %v811
    %v885 = vunpack.c.l.b16 %v812
    %v886 = vunpack.c.h.b16 %v812
    %v887 = vunpack.c.l.b16 %v813
    %v888 = vunpack.c.l.b16 %v814
    %v889 = vunpack.c.h.b16 %v814
    %v890 = vunpack.c.l.b16 %v815
    %v891 = vpack.c.b16 %v849, %v846
    %v892 = vpack.c.b16 %v850, %v847
    %v893 = vpack.c.b16 %v851, %v848
    %v894 = vpack.c.b16 %v855, %v852
    %v895 = vpack.c.b16 %v856, %v853
    %v896 = vpack.c.b16 %v857, %v854
    %v897 = vpack.c.b16 %v861, %v858
    %v898 = vpack.c.b16 %v862, %v859
    %v899 = vpack.c.b16 %v863, %v860
    %v900 = vpack.c.b16 %v867, %v864
    %v901 = vpack.c.b16 %v868, %v865
    %v902 = vpack.c.b16 %v869, %v866
    %v903 = vpack.c.b16 %v873, %v870
    %v904 = vpack.c.b16 %v874, %v871
    %v905 = vpack.c.b16 %v875, %v872
    %v906 = vpack.c.b16 %v879, %v876
    %v907 = vpack.c.b16 %v880, %v877
    %v908 = vpack.c.b16 %v881, %v878
    %v909 = vpack.c.b16 %v885, %v882
    %v910 = vpack.c.b16 %v886, %v883
    %v911 = vpack.c.b16 %v887, %v884
    %v912 = vpack.c.b16 %v888, %v888
    %v913 = vpack.c.b16 %v889, %v889
    %v914 = vpack.c.b16 %v890, %v890
    %v937 = vsel %vm436, %v244, 0
    %v940 = vsel %vm436, %v245, 0
    %v943 = vsel %vm141, %v912, 0
    %v946 = vsel %vm141, %v913, 0
    %v949 = vsel %vm141, %v914, 0
    %951 = vmatprep.subr.bf16.mxu0 %v892
    %952 = vmatpush1.bf16.msra.mxu0 %v891
    %953 = vmatprep.subr.bf16.mxu0 %v895
    %954 = vmatpush1.bf16.msra.mxu0 %v894
    %955 = vmatprep.subr.bf16.mxu0 %v898
    %956 = vmatpush1.bf16.msra.mxu0 %v897
    %957 = vmatprep.subr.bf16.mxu0 %v901
    %958 = vmatpush1.bf16.msra.mxu0 %v900
    %959 = vmatprep.subr.bf16.mxu0 %v904
    %960 = vmatpush1.bf16.msra.mxu0 %v903
    %961 = vmatprep.subr.bf16.mxu0 %v907
    %962 = vmatpush1.bf16.msra.mxu0 %v906
    %963 = vmatprep.subr.bf16.mxu0 %v910
    %964 = vmatpush1.bf16.msra.mxu0 %v909
    %965 = vmatprep.subr.bf16.mxu0 %v946
    %966 = vmatpush1.bf16.msra.mxu0 %v943
    %967 = vmatprep.subr.bf16.mxu0 0
    %968 = vmatpush1.bf16.msra.mxu0 0
    %969 = vmatprep.subr.bf16.mxu0 0
    %970 = vmatpush1.bf16.msra.mxu0 0
    %971 = vmatprep.subr.bf16.mxu0 0
    %972 = vmatpush1.bf16.msra.mxu0 0
    %973 = vmatprep.subr.bf16.mxu0 0
    %974 = vmatpush1.bf16.msra.mxu0 0
    %975 = vmatprep.subr.bf16.mxu0 0
    %976 = vmatpush1.bf16.msra.mxu0 0
    %977 = vmatprep.subr.bf16.mxu0 0
    %978 = vmatpush1.bf16.msra.mxu0 0
    %979 = vmatprep.subr.bf16.mxu0 0
    %980 = vmatpush1.bf16.msra.mxu0 0
    %981 = vmatprep.subr.bf16.mxu0 0
    %982 = vmatpush1.bf16.msra.mxu0 0
    %983 = vmatprep.mubr.bf16.mxu0 0
    %984 = vmatmul.mubr.bf16.gmra.mrb[0].mxu0 %v937
    %v985 = vpop.f32.mrb[0].mxu0
    %v986 = vadd.f32 0.0, %v985
    %v987 = vpop.f32.mrb[0].mxu0
    %v988 = vadd.f32 0.0, %v987
    %v989 = vpop.f32.mrb[0].mxu0
    %v990 = vadd.f32 0.0, %v989
    %v991 = vpop.f32.mrb[0].mxu0
    %v992 = vadd.f32 0.0, %v991
    %993 = vmatprep.mubr.bf16.mxu0 0
    %994 = vmatmul.mubr.bf16.gmra.mrb[0].mxu0 %v940
    %v995 = vpop.f32.mrb[0].mxu0
    %v996 = vadd.f32 0.0, %v995
    %v997 = vpop.f32.mrb[0].mxu0
    %v998 = vadd.f32 0.0, %v997
    %v999 = vpop.f32.mrb[0].mxu0
    %v1000 = vpop.f32.mrb[0].mxu0
    %1001 = vdwg.mxu0
    %1002 = vmatprep.subr.bf16.mxu0 0
    %1003 = vmatpush1.bf16.msra.mxu0 %v893
    %1004 = vmatprep.subr.bf16.mxu0 0
    %1005 = vmatpush1.bf16.msra.mxu0 %v896
    %1006 = vmatprep.subr.bf16.mxu0 0
    %1007 = vmatpush1.bf16.msra.mxu0 %v899
    %1008 = vmatprep.subr.bf16.mxu0 0
    %1009 = vmatpush1.bf16.msra.mxu0 %v902
    %1010 = vmatprep.subr.bf16.mxu0 0
    %1011 = vmatpush1.bf16.msra.mxu0 %v905
    %1012 = vmatprep.subr.bf16.mxu0 0
    %1013 = vmatpush1.bf16.msra.mxu0 %v908
    %1014 = vmatprep.subr.bf16.mxu0 0
    %1015 = vmatpush1.bf16.msra.mxu0 %v911
    %1016 = vmatprep.subr.bf16.mxu0 0
    %1017 = vmatpush1.bf16.msra.mxu0 %v949
    %1018 = vmatprep.subr.bf16.mxu0 0
    %1019 = vmatpush1.bf16.msra.mxu0 0
    %1020 = vmatprep.subr.bf16.mxu0 0
    %1021 = vmatpush1.bf16.msra.mxu0 0
    %1022 = vmatprep.subr.bf16.mxu0 0
    %1023 = vmatpush1.bf16.msra.mxu0 0
    %1024 = vmatprep.subr.bf16.mxu0 0
    %1025 = vmatpush1.bf16.msra.mxu0 0
    %1026 = vmatprep.subr.bf16.mxu0 0
    %1027 = vmatpush1.bf16.msra.mxu0 0
    %1028 = vmatprep.subr.bf16.mxu0 0
    %1029 = vmatpush1.bf16.msra.mxu0 0
    %1030 = vmatprep.subr.bf16.mxu0 0
    %1031 = vmatpush1.bf16.msra.mxu0 0
    %1032 = vmatprep.subr.bf16.mxu0 0
    %1033 = vmatpush1.bf16.msra.mxu0 0
    %1034 = vmatprep.mubr.bf16.mxu0 0
    %1035 = vmatmul.mubr.bf16.gmra.mrb[0].mxu0 %v937
    %v1036 = vpop.f32.mrb[0].mxu0
    %v1037 = vadd.f32 0.0, %v1036
    %v1038 = vpop.f32.mrb[0].mxu0
    %v1039 = vpop.f32.mrb[0].mxu0
    %v1040 = vadd.f32 0.0, %v1039
    %v1041 = vpop.f32.mrb[0].mxu0
    %1042 = vmatprep.mubr.bf16.mxu0 0
    %1043 = vmatmul.mubr.bf16.gmra.mrb[0].mxu0 %v940
    %v1044 = vpop.f32.mrb[0].mxu0
    %v1045 = vadd.f32 0.0, %v1044
    %v1046 = vpop.f32.mrb[0].mxu0
    %v1047 = vpop.f32.mrb[0].mxu0
    %v1048 = vpop.f32.mrb[0].mxu0
    %1049 = vdwg.mxu0
    %v1050 = vadd.f32 %v721, %v986
    %v1051 = vadd.f32 %v723, %v988
    %v1052 = vadd.f32 %v772, %v1037
    %v1053 = vadd.f32 %v725, %v990
    %v1054 = vadd.f32 %v727, %v992
    %v1055 = vadd.f32 %v775, %v1040
    %v1056 = vadd.f32 %v731, %v996
    %v1057 = vadd.f32 %v733, %v998
    %v1058 = vadd.f32 %v780, %v1045
    %s1059 = scalar_lea.vmem %s2, 540
    %v1060 = vld [vmem:[%s1059] sm:$0xff]
    %v1061 = vld [vmem:[%s1059 + $0x8] sm:$0xf]
    %v1062 = vld [vmem:[%s1059 + $0xc] sm:$0xff]
    %v1063 = vld [vmem:[%s1059 + $0x14] sm:$0xf]
    %v1064 = vld [vmem:[%s1059 + $0x18] sm:$0xff]
    %v1065 = vld [vmem:[%s1059 + $0x20] sm:$0xf]
    %v1066 = vld [vmem:[%s1059 + $0x24] sm:$0xff]
    %v1067 = vld [vmem:[%s1059 + $0x2c] sm:$0xf]
    %v1068 = vld [vmem:[%s1059 + $0x30] sm:$0xff]
    %v1069 = vld [vmem:[%s1059 + $0x38] sm:$0xf]
    %v1070 = vld [vmem:[%s1059 + $0x3c] sm:$0xff]
    %v1071 = vld [vmem:[%s1059 + $0x44] sm:$0xf]
    %v1072 = vld [vmem:[%s1059 + $0x48] sm:$0xff]
    %v1073 = vld [vmem:[%s1059 + $0x50] sm:$0xf]
    %v1074 = vld [vmem:[%s1059 + $0x54] sm:$0xff]
    %v1075 = vld [vmem:[%s1059 + $0x5c] sm:$0xf]
    %v1076 = vld [vmem:[%s1059 + $0x60] sm:$0xff]
    %v1077 = vld [vmem:[%s1059 + $0x68] sm:$0xf]
    %v1078 = vld [vmem:[%s1059 + $0x6c] sm:$0xff]
    %v1079 = vld [vmem:[%s1059 + $0x74] sm:$0xf]
    %v1080 = vld [vmem:[%s1059 + $0x78] sm:$0xff]
    %v1081 = vld [vmem:[%s1059 + $0x80] sm:$0xf]
    %v1082 = vld [vmem:[%s1059 + $0x84] sm:$0xff]
    %v1083 = vld [vmem:[%s1059 + $0x8c] sm:$0xf]
    %v1084 = vld [vmem:[%s1059 + $0x90] sm:$0xff]
    %v1085 = vld [vmem:[%s1059 + $0x98] sm:$0xf]
    %v1086 = vld [vmem:[%s1059 + $0x9c] sm:$0xff]
    %v1087 = vld [vmem:[%s1059 + $0xa4] sm:$0xf]
    %v1088 = vld [vmem:[%s1059 + $0xa8] sm:$0xff]
    %v1089 = vld [vmem:[%s1059 + $0xb0] sm:$0xf]
    %v1092 = vrot.slane %v245, 4
    %v1093 = vrot.slane %v246, 4
    %v1094 = vsel %vm312, %v1092, %v1093
    %v1125 = vunpack.c.l.b16 %v1060
    %v1126 = vunpack.c.h.b16 %v1060
    %v1127 = vunpack.c.l.b16 %v1061
    %v1128 = vunpack.c.l.b16 %v1062
    %v1129 = vunpack.c.h.b16 %v1062
    %v1130 = vunpack.c.l.b16 %v1063
    %v1131 = vunpack.c.l.b16 %v1064
    %v1132 = vunpack.c.h.b16 %v1064
    %v1133 = vunpack.c.l.b16 %v1065
    %v1134 = vunpack.c.l.b16 %v1066
    %v1135 = vunpack.c.h.b16 %v1066
    %v1136 = vunpack.c.l.b16 %v1067
    %v1137 = vunpack.c.l.b16 %v1068
    %v1138 = vunpack.c.h.b16 %v1068
    %v1139 = vunpack.c.l.b16 %v1069
    %v1140 = vunpack.c.l.b16 %v1070
    %v1141 = vunpack.c.h.b16 %v1070
    %v1142 = vunpack.c.l.b16 %v1071
    %v1143 = vunpack.c.l.b16 %v1072
    %v1144 = vunpack.c.h.b16 %v1072
    %v1145 = vunpack.c.l.b16 %v1073
    %v1146 = vunpack.c.l.b16 %v1074
    %v1147 = vunpack.c.h.b16 %v1074
    %v1148 = vunpack.c.l.b16 %v1075
    %v1149 = vunpack.c.l.b16 %v1076
    %v1150 = vunpack.c.h.b16 %v1076
    %v1151 = vunpack.c.l.b16 %v1077
    %v1152 = vunpack.c.l.b16 %v1078
    %v1153 = vunpack.c.h.b16 %v1078
    %v1154 = vunpack.c.l.b16 %v1079
    %v1155 = vunpack.c.l.b16 %v1080
    %v1156 = vunpack.c.h.b16 %v1080
    %v1157 = vunpack.c.l.b16 %v1081
    %v1158 = vunpack.c.l.b16 %v1082
    %v1159 = vunpack.c.h.b16 %v1082
    %v1160 = vunpack.c.l.b16 %v1083
    %v1161 = vunpack.c.l.b16 %v1084
    %v1162 = vunpack.c.h.b16 %v1084
    %v1163 = vunpack.c.l.b16 %v1085
    %v1164 = vunpack.c.l.b16 %v1086
    %v1165 = vunpack.c.h.b16 %v1086
    %v1166 = vunpack.c.l.b16 %v1087
    %v1167 = vunpack.c.l.b16 %v1088
    %v1168 = vunpack.c.h.b16 %v1088
    %v1169 = vunpack.c.l.b16 %v1089
    %v1170 = vpack.c.b16 %v1128, %v1125
    %v1171 = vpack.c.b16 %v1129, %v1126
    %v1172 = vpack.c.b16 %v1130, %v1127
    %v1173 = vpack.c.b16 %v1134, %v1131
    %v1174 = vpack.c.b16 %v1135, %v1132
    %v1175 = vpack.c.b16 %v1136, %v1133
    %v1176 = vpack.c.b16 %v1140, %v1137
    %v1177 = vpack.c.b16 %v1141, %v1138
    %v1178 = vpack.c.b16 %v1142, %v1139
    %v1179 = vpack.c.b16 %v1146, %v1143
    %v1180 = vpack.c.b16 %v1147, %v1144
    %v1181 = vpack.c.b16 %v1148, %v1145
    %v1182 = vpack.c.b16 %v1152, %v1149
    %v1183 = vpack.c.b16 %v1153, %v1150
    %v1184 = vpack.c.b16 %v1154, %v1151
    %v1185 = vpack.c.b16 %v1158, %v1155
    %v1186 = vpack.c.b16 %v1159, %v1156
    %v1187 = vpack.c.b16 %v1160, %v1157
    %v1188 = vpack.c.b16 %v1164, %v1161
    %v1189 = vpack.c.b16 %v1165, %v1162
    %v1190 = vpack.c.b16 %v1166, %v1163
    %v1191 = vpack.c.b16 %v1167, %v1167
    %v1192 = vpack.c.b16 %v1168, %v1168
    %v1193 = vpack.c.b16 %v1169, %v1169
    %v1216 = vsel %vm436, %v1094, 0
    %v1219 = vsel %vm436, %v1093, 0
    %v1222 = vsel %vm141, %v1191, 0
    %v1225 = vsel %vm141, %v1192, 0
    %v1228 = vsel %vm141, %v1193, 0
    %1230 = vmatprep.subr.bf16.mxu0 %v1171
    %1231 = vmatpush1.bf16.msra.mxu0 %v1170
    %1232 = vmatprep.subr.bf16.mxu0 %v1174
    %1233 = vmatpush1.bf16.msra.mxu0 %v1173
    %1234 = vmatprep.subr.bf16.mxu0 %v1177
    %1235 = vmatpush1.bf16.msra.mxu0 %v1176
    %1236 = vmatprep.subr.bf16.mxu0 %v1180
    %1237 = vmatpush1.bf16.msra.mxu0 %v1179
    %1238 = vmatprep.subr.bf16.mxu0 %v1183
    %1239 = vmatpush1.bf16.msra.mxu0 %v1182
    %1240 = vmatprep.subr.bf16.mxu0 %v1186
    %1241 = vmatpush1.bf16.msra.mxu0 %v1185
    %1242 = vmatprep.subr.bf16.mxu0 %v1189
    %1243 = vmatpush1.bf16.msra.mxu0 %v1188
    %1244 = vmatprep.subr.bf16.mxu0 %v1225
    %1245 = vmatpush1.bf16.msra.mxu0 %v1222
    %1246 = vmatprep.subr.bf16.mxu0 0
    %1247 = vmatpush1.bf16.msra.mxu0 0
    %1248 = vmatprep.subr.bf16.mxu0 0
    %1249 = vmatpush1.bf16.msra.mxu0 0
    %1250 = vmatprep.subr.bf16.mxu0 0
    %1251 = vmatpush1.bf16.msra.mxu0 0
    %1252 = vmatprep.subr.bf16.mxu0 0
    %1253 = vmatpush1.bf16.msra.mxu0 0
    %1254 = vmatprep.subr.bf16.mxu0 0
    %1255 = vmatpush1.bf16.msra.mxu0 0
    %1256 = vmatprep.subr.bf16.mxu0 0
    %1257 = vmatpush1.bf16.msra.mxu0 0
    %1258 = vmatprep.subr.bf16.mxu0 0
    %1259 = vmatpush1.bf16.msra.mxu0 0
    %1260 = vmatprep.subr.bf16.mxu0 0
    %1261 = vmatpush1.bf16.msra.mxu0 0
    %1262 = vmatprep.mubr.bf16.mxu0 0
    %1263 = vmatmul.mubr.bf16.gmra.mrb[0].mxu0 %v1216
    %v1264 = vpop.f32.mrb[0].mxu0
    %v1265 = vadd.f32 0.0, %v1264
    %v1266 = vpop.f32.mrb[0].mxu0
    %v1267 = vadd.f32 0.0, %v1266
    %v1268 = vpop.f32.mrb[0].mxu0
    %v1269 = vadd.f32 0.0, %v1268
    %v1270 = vpop.f32.mrb[0].mxu0
    %v1271 = vadd.f32 0.0, %v1270
    %1272 = vmatprep.mubr.bf16.mxu0 0
    %1273 = vmatmul.mubr.bf16.gmra.mrb[0].mxu0 %v1219
    %v1274 = vpop.f32.mrb[0].mxu0
    %v1275 = vadd.f32 0.0, %v1274
    %v1276 = vpop.f32.mrb[0].mxu0
    %v1277 = vadd.f32 0.0, %v1276
    %v1278 = vpop.f32.mrb[0].mxu0
    %v1279 = vpop.f32.mrb[0].mxu0
    %1280 = vdwg.mxu0
    %1281 = vmatprep.subr.bf16.mxu0 0
    %1282 = vmatpush1.bf16.msra.mxu0 %v1172
    %1283 = vmatprep.subr.bf16.mxu0 0
    %1284 = vmatpush1.bf16.msra.mxu0 %v1175
    %1285 = vmatprep.subr.bf16.mxu0 0
    %1286 = vmatpush1.bf16.msra.mxu0 %v1178
    %1287 = vmatprep.subr.bf16.mxu0 0
    %1288 = vmatpush1.bf16.msra.mxu0 %v1181
    %1289 = vmatprep.subr.bf16.mxu0 0
    %1290 = vmatpush1.bf16.msra.mxu0 %v1184
    %1291 = vmatprep.subr.bf16.mxu0 0
    %1292 = vmatpush1.bf16.msra.mxu0 %v1187
    %1293 = vmatprep.subr.bf16.mxu0 0
    %1294 = vmatpush1.bf16.msra.mxu0 %v1190
    %1295 = vmatprep.subr.bf16.mxu0 0
    %1296 = vmatpush1.bf16.msra.mxu0 %v1228
    %1297 = vmatprep.subr.bf16.mxu0 0
    %1298 = vmatpush1.bf16.msra.mxu0 0
    %1299 = vmatprep.subr.bf16.mxu0 0
    %1300 = vmatpush1.bf16.msra.mxu0 0
    %1301 = vmatprep.subr.bf16.mxu0 0
    %1302 = vmatpush1.bf16.msra.mxu0 0
    %1303 = vmatprep.subr.bf16.mxu0 0
    %1304 = vmatpush1.bf16.msra.mxu0 0
    %1305 = vmatprep.subr.bf16.mxu0 0
    %1306 = vmatpush1.bf16.msra.mxu0 0
    %1307 = vmatprep.subr.bf16.mxu0 0
    %1308 = vmatpush1.bf16.msra.mxu0 0
    %1309 = vmatprep.subr.bf16.mxu0 0
    %1310 = vmatpush1.bf16.msra.mxu0 0
    %1311 = vmatprep.subr.bf16.mxu0 0
    %1312 = vmatpush1.bf16.msra.mxu0 0
    %1313 = vmatprep.mubr.bf16.mxu0 0
    %1314 = vmatmul.mubr.bf16.gmra.mrb[0].mxu0 %v1216
    %v1315 = vpop.f32.mrb[0].mxu0
    %v1316 = vadd.f32 0.0, %v1315
    %v1317 = vpop.f32.mrb[0].mxu0
    %v1318 = vpop.f32.mrb[0].mxu0
    %v1319 = vadd.f32 0.0, %v1318
    %v1320 = vpop.f32.mrb[0].mxu0
    %1321 = vmatprep.mubr.bf16.mxu0 0
    %1322 = vmatmul.mubr.bf16.gmra.mrb[0].mxu0 %v1219
    %v1323 = vpop.f32.mrb[0].mxu0
    %v1324 = vadd.f32 0.0, %v1323
    %v1325 = vpop.f32.mrb[0].mxu0
    %v1326 = vpop.f32.mrb[0].mxu0
    %v1327 = vpop.f32.mrb[0].mxu0
    %1328 = vdwg.mxu0
    %v1329 = vadd.f32 %v1050, %v1265
    %v1330 = vadd.f32 %v1051, %v1267
    %v1331 = vadd.f32 %v1052, %v1316
    %v1332 = vadd.f32 %v1053, %v1269
    %v1333 = vadd.f32 %v1054, %v1271
    %v1334 = vadd.f32 %v1055, %v1319
    %v1335 = vadd.f32 %v1056, %v1275
    %v1336 = vadd.f32 %v1057, %v1277
    %v1337 = vadd.f32 %v1058, %v1324
    %s1338 = scalar_lea.vmem %s2, 720
    %v1339 = vld [vmem:[%s1338] sm:$0xff]
    %v1340 = vld [vmem:[%s1338 + $0x8] sm:$0xf]
    %v1341 = vld [vmem:[%s1338 + $0xc] sm:$0xff]
    %v1342 = vld [vmem:[%s1338 + $0x14] sm:$0xf]
    %v1343 = vld [vmem:[%s1338 + $0x18] sm:$0xff]
    %v1344 = vld [vmem:[%s1338 + $0x20] sm:$0xf]
    %v1345 = vld [vmem:[%s1338 + $0x24] sm:$0xff]
    %v1346 = vld [vmem:[%s1338 + $0x2c] sm:$0xf]
    %v1347 = vld [vmem:[%s1338 + $0x30] sm:$0xff]
    %v1348 = vld [vmem:[%s1338 + $0x38] sm:$0xf]
    %v1349 = vld [vmem:[%s1338 + $0x3c] sm:$0xff]
    %v1350 = vld [vmem:[%s1338 + $0x44] sm:$0xf]
    %v1351 = vld [vmem:[%s1338 + $0x48] sm:$0xff]
    %v1352 = vld [vmem:[%s1338 + $0x50] sm:$0xf]
    %v1353 = vld [vmem:[%s1338 + $0x54] sm:$0xff]
    %v1354 = vld [vmem:[%s1338 + $0x5c] sm:$0xf]
    %v1355 = vld [vmem:[%s1338 + $0x60] sm:$0xff]
    %v1356 = vld [vmem:[%s1338 + $0x68] sm:$0xf]
    %v1357 = vld [vmem:[%s1338 + $0x6c] sm:$0xff]
    %v1358 = vld [vmem:[%s1338 + $0x74] sm:$0xf]
    %v1359 = vld [vmem:[%s1338 + $0x78] sm:$0xff]
    %v1360 = vld [vmem:[%s1338 + $0x80] sm:$0xf]
    %v1361 = vld [vmem:[%s1338 + $0x84] sm:$0xff]
    %v1362 = vld [vmem:[%s1338 + $0x8c] sm:$0xf]
    %v1363 = vld [vmem:[%s1338 + $0x90] sm:$0xff]
    %v1364 = vld [vmem:[%s1338 + $0x98] sm:$0xf]
    %v1365 = vld [vmem:[%s1338 + $0x9c] sm:$0xff]
    %v1366 = vld [vmem:[%s1338 + $0xa4] sm:$0xf]
    %v1367 = vld [vmem:[%s1338 + $0xa8] sm:$0xff]
    %v1368 = vld [vmem:[%s1338 + $0xb0] sm:$0xf]
    %v1399 = vunpack.c.l.b16 %v1339
    %v1400 = vunpack.c.h.b16 %v1339
    %v1401 = vunpack.c.l.b16 %v1340
    %v1402 = vunpack.c.l.b16 %v1341
    %v1403 = vunpack.c.h.b16 %v1341
    %v1404 = vunpack.c.l.b16 %v1342
    %v1405 = vunpack.c.l.b16 %v1343
    %v1406 = vunpack.c.h.b16 %v1343
    %v1407 = vunpack.c.l.b16 %v1344
    %v1408 = vunpack.c.l.b16 %v1345
    %v1409 = vunpack.c.h.b16 %v1345
    %v1410 = vunpack.c.l.b16 %v1346
    %v1411 = vunpack.c.l.b16 %v1347
    %v1412 = vunpack.c.h.b16 %v1347
    %v1413 = vunpack.c.l.b16 %v1348
    %v1414 = vunpack.c.l.b16 %v1349
    %v1415 = vunpack.c.h.b16 %v1349
    %v1416 = vunpack.c.l.b16 %v1350
    %v1417 = vunpack.c.l.b16 %v1351
    %v1418 = vunpack.c.h.b16 %v1351
    %v1419 = vunpack.c.l.b16 %v1352
    %v1420 = vunpack.c.l.b16 %v1353
    %v1421 = vunpack.c.h.b16 %v1353
    %v1422 = vunpack.c.l.b16 %v1354
    %v1423 = vunpack.c.l.b16 %v1355
    %v1424 = vunpack.c.h.b16 %v1355
    %v1425 = vunpack.c.l.b16 %v1356
    %v1426 = vunpack.c.l.b16 %v1357
    %v1427 = vunpack.c.h.b16 %v1357
    %v1428 = vunpack.c.l.b16 %v1358
    %v1429 = vunpack.c.l.b16 %v1359
    %v1430 = vunpack.c.h.b16 %v1359
    %v1431 = vunpack.c.l.b16 %v1360
    %v1432 = vunpack.c.l.b16 %v1361
    %v1433 = vunpack.c.h.b16 %v1361
    %v1434 = vunpack.c.l.b16 %v1362
    %v1435 = vunpack.c.l.b16 %v1363
    %v1436 = vunpack.c.h.b16 %v1363
    %v1437 = vunpack.c.l.b16 %v1364
    %v1438 = vunpack.c.l.b16 %v1365
    %v1439 = vunpack.c.h.b16 %v1365
    %v1440 = vunpack.c.l.b16 %v1366
    %v1441 = vunpack.c.l.b16 %v1367
    %v1442 = vunpack.c.h.b16 %v1367
    %v1443 = vunpack.c.l.b16 %v1368
    %v1444 = vpack.c.b16 %v1402, %v1399
    %v1445 = vpack.c.b16 %v1403, %v1400
    %v1446 = vpack.c.b16 %v1404, %v1401
    %v1447 = vpack.c.b16 %v1408, %v1405
    %v1448 = vpack.c.b16 %v1409, %v1406
    %v1449 = vpack.c.b16 %v1410, %v1407
    %v1450 = vpack.c.b16 %v1414, %v1411
    %v1451 = vpack.c.b16 %v1415, %v1412
    %v1452 = vpack.c.b16 %v1416, %v1413
    %v1453 = vpack.c.b16 %v1420, %v1417
    %v1454 = vpack.c.b16 %v1421, %v1418
    %v1455 = vpack.c.b16 %v1422, %v1419
    %v1456 = vpack.c.b16 %v1426, %v1423
    %v1457 = vpack.c.b16 %v1427, %v1424
    %v1458 = vpack.c.b16 %v1428, %v1425
    %v1459 = vpack.c.b16 %v1432, %v1429
    %v1460 = vpack.c.b16 %v1433, %v1430
    %v1461 = vpack.c.b16 %v1434, %v1431
    %v1462 = vpack.c.b16 %v1438, %v1435
    %v1463 = vpack.c.b16 %v1439, %v1436
    %v1464 = vpack.c.b16 %v1440, %v1437
    %v1465 = vpack.c.b16 %v1441, %v1441
    %v1466 = vpack.c.b16 %v1442, %v1442
    %v1467 = vpack.c.b16 %v1443, %v1443
    %v1490 = vsel %vm436, %v247, 0
    %v1493 = vsel %vm436, %v248, 0
    %v1496 = vsel %vm141, %v1465, 0
    %v1499 = vsel %vm141, %v1466, 0
    %v1502 = vsel %vm141, %v1467, 0
    %1504 = vmatprep.subr.bf16.mxu0 %v1445
    %1505 = vmatpush1.bf16.msra.mxu0 %v1444
    %1506 = vmatprep.subr.bf16.mxu0 %v1448
    %1507 = vmatpush1.bf16.msra.mxu0 %v1447
    %1508 = vmatprep.subr.bf16.mxu0 %v1451
    %1509 = vmatpush1.bf16.msra.mxu0 %v1450
    %1510 = vmatprep.subr.bf16.mxu0 %v1454
    %1511 = vmatpush1.bf16.msra.mxu0 %v1453
    %1512 = vmatprep.subr.bf16.mxu0 %v1457
    %1513 = vmatpush1.bf16.msra.mxu0 %v1456
    %1514 = vmatprep.subr.bf16.mxu0 %v1460
    %1515 = vmatpush1.bf16.msra.mxu0 %v1459
    %1516 = vmatprep.subr.bf16.mxu0 %v1463
    %1517 = vmatpush1.bf16.msra.mxu0 %v1462
    %1518 = vmatprep.subr.bf16.mxu0 %v1499
    %1519 = vmatpush1.bf16.msra.mxu0 %v1496
    %1520 = vmatprep.subr.bf16.mxu0 0
    %1521 = vmatpush1.bf16.msra.mxu0 0
    %1522 = vmatprep.subr.bf16.mxu0 0
    %1523 = vmatpush1.bf16.msra.mxu0 0
    %1524 = vmatprep.subr.bf16.mxu0 0
    %1525 = vmatpush1.bf16.msra.mxu0 0
    %1526 = vmatprep.subr.bf16.mxu0 0
    %1527 = vmatpush1.bf16.msra.mxu0 0
    %1528 = vmatprep.subr.bf16.mxu0 0
    %1529 = vmatpush1.bf16.msra.mxu0 0
    %1530 = vmatprep.subr.bf16.mxu0 0
    %1531 = vmatpush1.bf16.msra.mxu0 0
    %1532 = vmatprep.subr.bf16.mxu0 0
    %1533 = vmatpush1.bf16.msra.mxu0 0
    %1534 = vmatprep.subr.bf16.mxu0 0
    %1535 = vmatpush1.bf16.msra.mxu0 0
    %1536 = vmatprep.mubr.bf16.mxu0 0
    %1537 = vmatmul.mubr.bf16.gmra.mrb[0].mxu0 %v1490
    %v1538 = vpop.f32.mrb[0].mxu0
    %v1539 = vadd.f32 0.0, %v1538
    %v1540 = vpop.f32.mrb[0].mxu0
    %v1541 = vadd.f32 0.0, %v1540
    %v1542 = vpop.f32.mrb[0].mxu0
    %v1543 = vadd.f32 0.0, %v1542
    %v1544 = vpop.f32.mrb[0].mxu0
    %v1545 = vadd.f32 0.0, %v1544
    %1546 = vmatprep.mubr.bf16.mxu0 0
    %1547 = vmatmul.mubr.bf16.gmra.mrb[0].mxu0 %v1493
    %v1548 = vpop.f32.mrb[0].mxu0
    %v1549 = vadd.f32 0.0, %v1548
    %v1550 = vpop.f32.mrb[0].mxu0
    %v1551 = vadd.f32 0.0, %v1550
    %v1552 = vpop.f32.mrb[0].mxu0
    %v1553 = vpop.f32.mrb[0].mxu0
    %1554 = vdwg.mxu0
    %1555 = vmatprep.subr.bf16.mxu0 0
    %1556 = vmatpush1.bf16.msra.mxu0 %v1446
    %1557 = vmatprep.subr.bf16.mxu0 0
    %1558 = vmatpush1.bf16.msra.mxu0 %v1449
    %1559 = vmatprep.subr.bf16.mxu0 0
    %1560 = vmatpush1.bf16.msra.mxu0 %v1452
    %1561 = vmatprep.subr.bf16.mxu0 0
    %1562 = vmatpush1.bf16.msra.mxu0 %v1455
    %1563 = vmatprep.subr.bf16.mxu0 0
    %1564 = vmatpush1.bf16.msra.mxu0 %v1458
    %1565 = vmatprep.subr.bf16.mxu0 0
    %1566 = vmatpush1.bf16.msra.mxu0 %v1461
    %1567 = vmatprep.subr.bf16.mxu0 0
    %1568 = vmatpush1.bf16.msra.mxu0 %v1464
    %1569 = vmatprep.subr.bf16.mxu0 0
    %1570 = vmatpush1.bf16.msra.mxu0 %v1502
    %1571 = vmatprep.subr.bf16.mxu0 0
    %1572 = vmatpush1.bf16.msra.mxu0 0
    %1573 = vmatprep.subr.bf16.mxu0 0
    %1574 = vmatpush1.bf16.msra.mxu0 0
    %1575 = vmatprep.subr.bf16.mxu0 0
    %1576 = vmatpush1.bf16.msra.mxu0 0
    %1577 = vmatprep.subr.bf16.mxu0 0
    %1578 = vmatpush1.bf16.msra.mxu0 0
    %1579 = vmatprep.subr.bf16.mxu0 0
    %1580 = vmatpush1.bf16.msra.mxu0 0
    %1581 = vmatprep.subr.bf16.mxu0 0
    %1582 = vmatpush1.bf16.msra.mxu0 0
    %1583 = vmatprep.subr.bf16.mxu0 0
    %1584 = vmatpush1.bf16.msra.mxu0 0
    %1585 = vmatprep.subr.bf16.mxu0 0
    %1586 = vmatpush1.bf16.msra.mxu0 0
    %1587 = vmatprep.mubr.bf16.mxu0 0
    %1588 = vmatmul.mubr.bf16.gmra.mrb[0].mxu0 %v1490
    %v1589 = vpop.f32.mrb[0].mxu0
    %v1590 = vadd.f32 0.0, %v1589
    %v1591 = vpop.f32.mrb[0].mxu0
    %v1592 = vpop.f32.mrb[0].mxu0
    %v1593 = vadd.f32 0.0, %v1592
    %v1594 = vpop.f32.mrb[0].mxu0
    %1595 = vmatprep.mubr.bf16.mxu0 0
    %1596 = vmatmul.mubr.bf16.gmra.mrb[0].mxu0 %v1493
    %v1597 = vpop.f32.mrb[0].mxu0
    %v1598 = vadd.f32 0.0, %v1597
    %v1599 = vpop.f32.mrb[0].mxu0
    %v1600 = vpop.f32.mrb[0].mxu0
    %v1601 = vpop.f32.mrb[0].mxu0
    %1602 = vdwg.mxu0
    %v1603 = vadd.f32 %v1329, %v1539
    %v1604 = vadd.f32 %v1330, %v1541
    %v1605 = vadd.f32 %v1331, %v1590
    %v1606 = vadd.f32 %v1332, %v1543
    %v1607 = vadd.f32 %v1333, %v1545
    %v1608 = vadd.f32 %v1334, %v1593
    %v1609 = vadd.f32 %v1335, %v1549
    %v1610 = vadd.f32 %v1336, %v1551
    %v1611 = vadd.f32 %v1337, %v1598
    %v1612 = vld [vmem:[%s3] sm:$0x7]
    %v1614 = vlaneseq
    %v1615 = vshrl.u32 %v1614, 7
    %v1616 = vsub.s32 0, %v1615
    %v1617 = vrot.slane %v1612, %v1616
    %v1618 = vlaneseq
    %v1619 = vshrl.u32 %v1618, 7
    %v1620 = vsub.s32 1, %v1619
    %v1621 = vrot.slane %v1612, %v1620
    %v1622 = vlaneseq
    %v1623 = vshrl.u32 %v1622, 7
    %v1624 = vsub.s32 2, %v1623
    %v1625 = vrot.slane %v1612, %v1624
    %v1629 = vadd.f32 %v1603, %v1617
    %v1630 = vadd.f32 %v1604, %v1621
    %v1631 = vadd.f32 %v1605, %v1625
    %v1632 = vadd.f32 %v1606, %v1617
    %v1633 = vadd.f32 %v1607, %v1621
    %v1634 = vadd.f32 %v1608, %v1625
    %v1635 = vadd.f32 %v1609, %v1617
    %v1636 = vadd.f32 %v1610, %v1621
    %v1637 = vadd.f32 %v1611, %v1625
    %v1638 = vmax.f32 %v1629, 0.0
    %v1639 = vmax.f32 %v1630, 0.0
    %v1640 = vmax.f32 %v1631, 0.0
    %v1641 = vmax.f32 %v1632, 0.0
    %v1642 = vmax.f32 %v1633, 0.0
    %v1643 = vmax.f32 %v1634, 0.0
    %v1644 = vmax.f32 %v1635, 0.0
    %v1645 = vmax.f32 %v1636, 0.0
    %v1646 = vmax.f32 %v1637, 0.0
    %v1647 = vpack.c.bf16 %v1641, %v1638
    %v1648 = vpack.c.bf16 %v1642, %v1639
    %v1649 = vpack.c.bf16 %v1643, %v1640
    %v1650 = vpack.c.bf16 %v1644, %v1644
    %v1651 = vpack.c.bf16 %v1645, %v1645
    %v1652 = vpack.c.bf16 %v1646, %v1646
    %v1653 = vld [vmem:[%s4] sm:$0xf]
    %v1654 = vld [vmem:[%s4 + $0x4] sm:$0xf]
    %v1655 = vld [vmem:[%s4 + $0x8] sm:$0xf]
    %v1656 = vld [vmem:[%s4 + $0xc] sm:$0xf]
    %v1657 = vld [vmem:[%s4 + $0x10] sm:$0xf]
    %v1663 = vunpack.c.l.b16 %v1653
    %v1664 = vunpack.c.l.b16 %v1654
    %v1665 = vunpack.c.l.b16 %v1655
    %v1666 = vunpack.c.l.b16 %v1656
    %v1667 = vunpack.c.l.b16 %v1657
    %v1668 = vpack.c.b16 %v1664, %v1663
    %v1669 = vpack.c.b16 %v1666, %v1665
    %v1670 = vpack.c.b16 %v1667, %v1667
    %vm1671 = vcmask 195584
    %v1673 = vsel %vm1671, %v1668, 0
    %v1676 = vsel %vm1671, %v1669, 0
    %v1679 = vsel %vm1671, %v1670, 0
    %v1682 = vsel %vm141, %v1650, 0
    %v1685 = vsel %vm141, %v1651, 0
    %v1688 = vsel %vm141, %v1652, 0
    %1690 = vmatprep.subr.bf16.mxu0 %v1648
    %1691 = vmatpush1.bf16.msra.mxu0 %v1647
    %1692 = vmatprep.subr.bf16.mxu0 %v1685
    %1693 = vmatpush1.bf16.msra.mxu0 %v1682
    %1694 = vmatprep.subr.bf16.mxu0 0
    %1695 = vmatpush1.bf16.msra.mxu0 0
    %1696 = vmatprep.subr.bf16.mxu0 0
    %1697 = vmatpush1.bf16.msra.mxu0 0
    %1698 = vmatprep.subr.bf16.mxu0 0
    %1699 = vmatpush1.bf16.msra.mxu0 0
    %1700 = vmatprep.subr.bf16.mxu0 0
    %1701 = vmatpush1.bf16.msra.mxu0 0
    %1702 = vmatprep.subr.bf16.mxu0 0
    %1703 = vmatpush1.bf16.msra.mxu0 0
    %1704 = vmatprep.subr.bf16.mxu0 0
    %1705 = vmatpush1.bf16.msra.mxu0 0
    %1706 = vmatprep.subr.bf16.mxu0 0
    %1707 = vmatpush1.bf16.msra.mxu0 0
    %1708 = vmatprep.subr.bf16.mxu0 0
    %1709 = vmatpush1.bf16.msra.mxu0 0
    %1710 = vmatprep.subr.bf16.mxu0 0
    %1711 = vmatpush1.bf16.msra.mxu0 0
    %1712 = vmatprep.subr.bf16.mxu0 0
    %1713 = vmatpush1.bf16.msra.mxu0 0
    %1714 = vmatprep.subr.bf16.mxu0 0
    %1715 = vmatpush1.bf16.msra.mxu0 0
    %1716 = vmatprep.subr.bf16.mxu0 0
    %1717 = vmatpush1.bf16.msra.mxu0 0
    %1718 = vmatprep.subr.bf16.mxu0 0
    %1719 = vmatpush1.bf16.msra.mxu0 0
    %1720 = vmatprep.subr.bf16.mxu0 0
    %1721 = vmatpush1.bf16.msra.mxu0 0
    %1722 = vmatprep.mubr.bf16.mxu0 0
    %1723 = vmatmul.mubr.bf16.gmra.mrb[0].mxu0 %v1673
    %v1724 = vpop.f32.mrb[0].mxu0
    %v1725 = vadd.f32 0.0, %v1724
    %v1726 = vpop.f32.mrb[0].mxu0
    %v1727 = vadd.f32 0.0, %v1726
    %v1728 = vpop.f32.mrb[0].mxu0
    %v1729 = vadd.f32 0.0, %v1728
    %v1730 = vpop.f32.mrb[0].mxu0
    %v1731 = vadd.f32 0.0, %v1730
    %1732 = vmatprep.mubr.bf16.mxu0 0
    %1733 = vmatmul.mubr.bf16.gmra.mrb[0].mxu0 %v1676
    %v1734 = vpop.f32.mrb[0].mxu0
    %v1735 = vadd.f32 0.0, %v1734
    %v1736 = vpop.f32.mrb[0].mxu0
    %v1737 = vadd.f32 0.0, %v1736
    %v1738 = vpop.f32.mrb[0].mxu0
    %v1739 = vadd.f32 0.0, %v1738
    %v1740 = vpop.f32.mrb[0].mxu0
    %v1741 = vadd.f32 0.0, %v1740
    %1742 = vmatprep.mubr.bf16.mxu0 0
    %1743 = vmatmul.mubr.bf16.gmra.mrb[0].mxu0 %v1679
    %v1744 = vpop.f32.mrb[0].mxu0
    %v1745 = vadd.f32 0.0, %v1744
    %v1746 = vpop.f32.mrb[0].mxu0
    %v1747 = vadd.f32 0.0, %v1746
    %v1748 = vpop.f32.mrb[0].mxu0
    %v1749 = vpop.f32.mrb[0].mxu0
    %1750 = vdwg.mxu0
    %1751 = vmatprep.subr.bf16.mxu0 0
    %1752 = vmatpush1.bf16.msra.mxu0 %v1649
    %1753 = vmatprep.subr.bf16.mxu0 0
    %1754 = vmatpush1.bf16.msra.mxu0 %v1688
    %1755 = vmatprep.subr.bf16.mxu0 0
    %1756 = vmatpush1.bf16.msra.mxu0 0
    %1757 = vmatprep.subr.bf16.mxu0 0
    %1758 = vmatpush1.bf16.msra.mxu0 0
    %1759 = vmatprep.subr.bf16.mxu0 0
    %1760 = vmatpush1.bf16.msra.mxu0 0
    %1761 = vmatprep.subr.bf16.mxu0 0
    %1762 = vmatpush1.bf16.msra.mxu0 0
    %1763 = vmatprep.subr.bf16.mxu0 0
    %1764 = vmatpush1.bf16.msra.mxu0 0
    %1765 = vmatprep.subr.bf16.mxu0 0
    %1766 = vmatpush1.bf16.msra.mxu0 0
    %1767 = vmatprep.subr.bf16.mxu0 0
    %1768 = vmatpush1.bf16.msra.mxu0 0
    %1769 = vmatprep.subr.bf16.mxu0 0
    %1770 = vmatpush1.bf16.msra.mxu0 0
    %1771 = vmatprep.subr.bf16.mxu0 0
    %1772 = vmatpush1.bf16.msra.mxu0 0
    %1773 = vmatprep.subr.bf16.mxu0 0
    %1774 = vmatpush1.bf16.msra.mxu0 0
    %1775 = vmatprep.subr.bf16.mxu0 0
    %1776 = vmatpush1.bf16.msra.mxu0 0
    %1777 = vmatprep.subr.bf16.mxu0 0
    %1778 = vmatpush1.bf16.msra.mxu0 0
    %1779 = vmatprep.subr.bf16.mxu0 0
    %1780 = vmatpush1.bf16.msra.mxu0 0
    %1781 = vmatprep.subr.bf16.mxu0 0
    %1782 = vmatpush1.bf16.msra.mxu0 0
    %1783 = vmatprep.mubr.bf16.mxu0 0
    %1784 = vmatmul.mubr.bf16.gmra.mrb[0].mxu0 %v1673
    %v1785 = vpop.f32.mrb[0].mxu0
    %v1786 = vadd.f32 0.0, %v1785
    %v1787 = vpop.f32.mrb[0].mxu0
    %v1788 = vpop.f32.mrb[0].mxu0
    %v1789 = vadd.f32 0.0, %v1788
    %v1790 = vpop.f32.mrb[0].mxu0
    %1791 = vmatprep.mubr.bf16.mxu0 0
    %1792 = vmatmul.mubr.bf16.gmra.mrb[0].mxu0 %v1676
    %v1793 = vpop.f32.mrb[0].mxu0
    %v1794 = vadd.f32 0.0, %v1793
    %v1795 = vpop.f32.mrb[0].mxu0
    %v1796 = vpop.f32.mrb[0].mxu0
    %v1797 = vadd.f32 0.0, %v1796
    %v1798 = vpop.f32.mrb[0].mxu0
    %1799 = vmatprep.mubr.bf16.mxu0 0
    %1800 = vmatmul.mubr.bf16.gmra.mrb[0].mxu0 %v1679
    %v1801 = vpop.f32.mrb[0].mxu0
    %v1802 = vadd.f32 0.0, %v1801
    %v1803 = vpop.f32.mrb[0].mxu0
    %v1804 = vpop.f32.mrb[0].mxu0
    %v1805 = vpop.f32.mrb[0].mxu0
    %1806 = vdwg.mxu0
    %v1807 = vpack.c.bf16 %v1729, %v1725
    %v1808 = vpack.c.bf16 %v1731, %v1727
    %v1809 = vpack.c.bf16 %v1789, %v1786
    %v1810 = vpack.c.bf16 %v1739, %v1735
    %v1811 = vpack.c.bf16 %v1741, %v1737
    %v1812 = vpack.c.bf16 %v1797, %v1794
    %v1813 = vpack.c.bf16 %v1745, %v1745
    %v1814 = vpack.c.bf16 %v1747, %v1747
    %v1815 = vpack.c.bf16 %v1802, %v1802
    %v1816 = vld [vmem:[%s5] sm:$0xff]
    %v1817 = vld [vmem:[%s5 + $0x8] sm:$0xff]
    %v1818 = vld [vmem:[%s5 + $0x10] sm:$0xff]
    %v1819 = vld [vmem:[%s5 + $0x18] sm:$0xff]
    %v1820 = vld [vmem:[%s5 + $0x20] sm:$0xff]
    %v1821 = vld [vmem:[%s5 + $0x28] sm:$0xff]
    %v1822 = vld [vmem:[%s5 + $0x30] sm:$0xff]
    %v1823 = vld [vmem:[%s5 + $0x38] sm:$0xff]
    %v1824 = vld [vmem:[%s5 + $0x40] sm:$0xff]
    %v1825 = vld [vmem:[%s5 + $0x48] sm:$0xff]
    %v1826 = vld [vmem:[%s5 + $0x50] sm:$0xff]
    %v1827 = vld [vmem:[%s5 + $0x58] sm:$0xff]
    %v1828 = vld [vmem:[%s5 + $0x60] sm:$0xff]
    %v1829 = vld [vmem:[%s5 + $0x68] sm:$0xff]
    %v1830 = vld [vmem:[%s5 + $0x70] sm:$0xff]
    %v1831 = vld [vmem:[%s5 + $0x78] sm:$0xff]
    %v1832 = vld [vmem:[%s5 + $0x80] sm:$0xff]
    %v1833 = vld [vmem:[%s5 + $0x88] sm:$0xff]
    %v1834 = vld [vmem:[%s5 + $0x90] sm:$0xff]
    %v1835 = vld [vmem:[%s5 + $0x98] sm:$0xff]
    %v1836 = vld [vmem:[%s5 + $0xa0] sm:$0xff]
    %v1837 = vld [vmem:[%s5 + $0xa8] sm:$0xff]
    %v1838 = vld [vmem:[%s5 + $0xb0] sm:$0xff]
    %v1839 = vld [vmem:[%s5 + $0xb8] sm:$0xff]
    %v1840 = vld [vmem:[%s5 + $0xc0] sm:$0xff]
    %v1841 = vld [vmem:[%s5 + $0xc8] sm:$0xff]
    %v1842 = vld [vmem:[%s5 + $0xd0] sm:$0xff]
    %v1843 = vld [vmem:[%s5 + $0xd8] sm:$0xff]
    %v1844 = vld [vmem:[%s5 + $0xe0] sm:$0xff]
    %v1845 = vld [vmem:[%s5 + $0xe8] sm:$0xff]
    %v1846 = vld [vmem:[%s5 + $0xf0] sm:$0xff]
    %v1847 = vld [vmem:[%s5 + $0xf8] sm:$0xff]
    %v1848 = vld [vmem:[%s5 + $0x100] sm:$0xff]
    %v1849 = vld [vmem:[%s5 + $0x108] sm:$0xff]
    %v1850 = vld [vmem:[%s5 + $0x110] sm:$0xff]
    %v1851 = vld [vmem:[%s5 + $0x118] sm:$0xff]
    %s1852 = scalar_lea.vmem %s5, 288
    %v1853 = vld [vmem:[%s1852] sm:$0xff]
    %v1854 = vld [vmem:[%s1852 + $0x8] sm:$0xff]
    %v1855 = vld [vmem:[%s1852 + $0x10] sm:$0xff]
    %v1856 = vld [vmem:[%s1852 + $0x18] sm:$0xff]
    %v1857 = vld [vmem:[%s1852 + $0x20] sm:$0xff]
    %v1858 = vld [vmem:[%s1852 + $0x28] sm:$0xff]
    %v1859 = vld [vmem:[%s1852 + $0x30] sm:$0xff]
    %v1860 = vld [vmem:[%s1852 + $0x38] sm:$0xff]
    %v1861 = vld [vmem:[%s1852 + $0x40] sm:$0xff]
    %v1862 = vld [vmem:[%s1852 + $0x48] sm:$0xff]
    %v1863 = vld [vmem:[%s1852 + $0x50] sm:$0xff]
    %v1864 = vld [vmem:[%s1852 + $0x58] sm:$0xff]
    %v1865 = vld [vmem:[%s1852 + $0x60] sm:$0xff]
    %v1866 = vld [vmem:[%s1852 + $0x68] sm:$0xff]
    %v1867 = vld [vmem:[%s1852 + $0x70] sm:$0xff]
    %v1868 = vld [vmem:[%s1852 + $0x78] sm:$0xff]
    %v1869 = vld [vmem:[%s1852 + $0x80] sm:$0xff]
    %v1870 = vld [vmem:[%s1852 + $0x88] sm:$0xff]
    %v1871 = vld [vmem:[%s1852 + $0x90] sm:$0xff]
    %v1872 = vld [vmem:[%s1852 + $0x98] sm:$0xff]
    %v1873 = vld [vmem:[%s1852 + $0xa0] sm:$0xff]
    %v1874 = vld [vmem:[%s1852 + $0xa8] sm:$0xff]
    %v1875 = vld [vmem:[%s1852 + $0xb0] sm:$0xff]
    %v1876 = vld [vmem:[%s1852 + $0xb8] sm:$0xff]
    %v1877 = vld [vmem:[%s1852 + $0xc0] sm:$0xff]
    %v1878 = vld [vmem:[%s1852 + $0xc8] sm:$0xff]
    %v1879 = vld [vmem:[%s1852 + $0xd0] sm:$0xff]
    %v1880 = vld [vmem:[%s1852 + $0xd8] sm:$0xff]
    %v1881 = vld [vmem:[%s1852 + $0xe0] sm:$0xff]
    %v1882 = vld [vmem:[%s1852 + $0xe8] sm:$0xff]
    %v1883 = vld [vmem:[%s1852 + $0xf0] sm:$0xff]
    %v1884 = vld [vmem:[%s1852 + $0xf8] sm:$0xff]
    %v1885 = vld [vmem:[%s1852 + $0x100] sm:$0xff]
    %v1886 = vld [vmem:[%s1852 + $0x108] sm:$0xff]
    %v1887 = vld [vmem:[%s1852 + $0x110] sm:$0xff]
    %v1888 = vld [vmem:[%s1852 + $0x118] sm:$0xff]
    %v1892 = vrot.slane %v1807, 4
    %v1893 = vrot.slane %v1808, 4
    %v1894 = vrot.slane %v1809, 4
    %v1933 = vunpack.c.l.b16 %v1853
    %v1934 = vunpack.c.h.b16 %v1853
    %v1935 = vunpack.c.l.b16 %v1854
    %v1936 = vunpack.c.h.b16 %v1854
    %v1937 = vunpack.c.l.b16 %v1855
    %v1938 = vunpack.c.h.b16 %v1855
    %v1939 = vunpack.c.l.b16 %v1856
    %v1940 = vunpack.c.h.b16 %v1856
    %v1941 = vunpack.c.l.b16 %v1857
    %v1942 = vunpack.c.h.b16 %v1857
    %v1943 = vunpack.c.l.b16 %v1858
    %v1944 = vunpack.c.h.b16 %v1858
    %v1945 = vunpack.c.l.b16 %v1859
    %v1946 = vunpack.c.h.b16 %v1859
    %v1947 = vunpack.c.l.b16 %v1860
    %v1948 = vunpack.c.h.b16 %v1860
    %v1949 = vunpack.c.l.b16 %v1861
    %v1950 = vunpack.c.h.b16 %v1861
    %v1951 = vunpack.c.l.b16 %v1862
    %v1952 = vunpack.c.h.b16 %v1862
    %v1953 = vunpack.c.l.b16 %v1863
    %v1954 = vunpack.c.h.b16 %v1863
    %v1955 = vunpack.c.l.b16 %v1864
    %v1956 = vunpack.c.h.b16 %v1864
    %v1957 = vunpack.c.l.b16 %v1865
    %v1958 = vunpack.c.h.b16 %v1865
    %v1959 = vunpack.c.l.b16 %v1866
    %v1960 = vunpack.c.h.b16 %v1866
    %v1961 = vunpack.c.l.b16 %v1867
    %v1962 = vunpack.c.h.b16 %v1867
    %v1963 = vunpack.c.l.b16 %v1868
    %v1964 = vunpack.c.h.b16 %v1868
    %v1965 = vunpack.c.l.b16 %v1869
    %v1966 = vunpack.c.h.b16 %v1869
    %v1967 = vunpack.c.l.b16 %v1870
    %v1968 = vunpack.c.h.b16 %v1870
    %v1969 = vunpack.c.l.b16 %v1871
    %v1970 = vunpack.c.h.b16 %v1871
    %v1971 = vunpack.c.l.b16 %v1872
    %v1972 = vunpack.c.h.b16 %v1872
    %v1973 = vunpack.c.l.b16 %v1873
    %v1974 = vunpack.c.h.b16 %v1873
    %v1975 = vunpack.c.l.b16 %v1874
    %v1976 = vunpack.c.h.b16 %v1874
    %v1977 = vunpack.c.l.b16 %v1875
    %v1978 = vunpack.c.h.b16 %v1875
    %v1979 = vunpack.c.l.b16 %v1876
    %v1980 = vunpack.c.h.b16 %v1876
    %v1981 = vunpack.c.l.b16 %v1877
    %v1982 = vunpack.c.h.b16 %v1877
    %v1983 = vunpack.c.l.b16 %v1878
    %v1984 = vunpack.c.h.b16 %v1878
    %v1985 = vunpack.c.l.b16 %v1879
    %v1986 = vunpack.c.h.b16 %v1879
    %v1987 = vunpack.c.l.b16 %v1880
    %v1988 = vunpack.c.h.b16 %v1880
    %v1989 = vunpack.c.l.b16 %v1881
    %v1990 = vunpack.c.h.b16 %v1881
    %v1991 = vunpack.c.l.b16 %v1882
    %v1992 = vunpack.c.h.b16 %v1882
    %v1993 = vunpack.c.l.b16 %v1883
    %v1994 = vunpack.c.h.b16 %v1883
    %v1995 = vunpack.c.l.b16 %v1884
    %v1996 = vunpack.c.h.b16 %v1884
    %v1997 = vunpack.c.l.b16 %v1885
    %v1998 = vunpack.c.h.b16 %v1885
    %v1999 = vunpack.c.l.b16 %v1886
    %v2000 = vunpack.c.h.b16 %v1886
    %v2001 = vunpack.c.l.b16 %v1887
    %v2002 = vunpack.c.h.b16 %v1887
    %v2003 = vunpack.c.l.b16 %v1888
    %v2004 = vunpack.c.h.b16 %v1888
    %v2005 = vpack.c.b16 %v1935, %v1933
    %v2006 = vpack.c.b16 %v1936, %v1934
    %v2007 = vpack.c.b16 %v1939, %v1937
    %v2008 = vpack.c.b16 %v1940, %v1938
    %v2009 = vpack.c.b16 %v1943, %v1941
    %v2010 = vpack.c.b16 %v1944, %v1942
    %v2011 = vpack.c.b16 %v1947, %v1945
    %v2012 = vpack.c.b16 %v1948, %v1946
    %v2013 = vpack.c.b16 %v1951, %v1949
    %v2014 = vpack.c.b16 %v1952, %v1950
    %v2015 = vpack.c.b16 %v1955, %v1953
    %v2016 = vpack.c.b16 %v1956, %v1954
    %v2017 = vpack.c.b16 %v1959, %v1957
    %v2018 = vpack.c.b16 %v1960, %v1958
    %v2019 = vpack.c.b16 %v1963, %v1961
    %v2020 = vpack.c.b16 %v1964, %v1962
    %v2021 = vpack.c.b16 %v1967, %v1965
    %v2022 = vpack.c.b16 %v1968, %v1966
    %v2023 = vpack.c.b16 %v1971, %v1969
    %v2024 = vpack.c.b16 %v1972, %v1970
    %v2025 = vpack.c.b16 %v1975, %v1973
    %v2026 = vpack.c.b16 %v1976, %v1974
    %v2027 = vpack.c.b16 %v1979, %v1977
    %v2028 = vpack.c.b16 %v1980, %v1978
    %v2029 = vpack.c.b16 %v1983, %v1981
    %v2030 = vpack.c.b16 %v1984, %v1982
    %v2031 = vpack.c.b16 %v1987, %v1985
    %v2032 = vpack.c.b16 %v1988, %v1986
    %v2033 = vpack.c.b16 %v1991, %v1989
    %v2034 = vpack.c.b16 %v1992, %v1990
    %v2035 = vpack.c.b16 %v1995, %v1993
    %v2036 = vpack.c.b16 %v1996, %v1994
    %v2037 = vpack.c.b16 %v1999, %v1997
    %v2038 = vpack.c.b16 %v2000, %v1998
    %v2039 = vpack.c.b16 %v2003, %v2001
    %v2040 = vpack.c.b16 %v2004, %v2002
    %vm2077 = vcmask 261120
    %v2079 = vsel %vm2077, %v1894, 0
    %2081 = vmatprep.subr.bf16.mxu0 %v2006
    %2082 = vmatpush1.bf16.msra.mxu0 %v2005
    %2083 = vmatprep.subr.bf16.mxu0 %v2008
    %2084 = vmatpush1.bf16.msra.mxu0 %v2007
    %2085 = vmatprep.subr.bf16.mxu0 %v2010
    %2086 = vmatpush1.bf16.msra.mxu0 %v2009
    %2087 = vmatprep.subr.bf16.mxu0 %v2012
    %2088 = vmatpush1.bf16.msra.mxu0 %v2011
    %2089 = vmatprep.subr.bf16.mxu0 %v2014
    %2090 = vmatpush1.bf16.msra.mxu0 %v2013
    %2091 = vmatprep.subr.bf16.mxu0 %v2016
    %2092 = vmatpush1.bf16.msra.mxu0 %v2015
    %2093 = vmatprep.subr.bf16.mxu0 %v2018
    %2094 = vmatpush1.bf16.msra.mxu0 %v2017
    %2095 = vmatprep.subr.bf16.mxu0 %v2020
    %2096 = vmatpush1.bf16.msra.mxu0 %v2019
    %2097 = vmatprep.subr.bf16.mxu0 %v2022
    %2098 = vmatpush1.bf16.msra.mxu0 %v2021
    %2099 = vmatprep.subr.bf16.mxu0 %v2024
    %2100 = vmatpush1.bf16.msra.mxu0 %v2023
    %2101 = vmatprep.subr.bf16.mxu0 %v2026
    %2102 = vmatpush1.bf16.msra.mxu0 %v2025
    %2103 = vmatprep.subr.bf16.mxu0 %v2028
    %2104 = vmatpush1.bf16.msra.mxu0 %v2027
    %2105 = vmatprep.subr.bf16.mxu0 %v2030
    %2106 = vmatpush1.bf16.msra.mxu0 %v2029
    %2107 = vmatprep.subr.bf16.mxu0 %v2032
    %2108 = vmatpush1.bf16.msra.mxu0 %v2031
    %2109 = vmatprep.subr.bf16.mxu0 %v2034
    %2110 = vmatpush1.bf16.msra.mxu0 %v2033
    %2111 = vmatprep.subr.bf16.mxu0 %v2036
    %2112 = vmatpush1.bf16.msra.mxu0 %v2035
    %2113 = vmatprep.mubr.bf16.mxu0 %v1893
    %2114 = vmatmul.mubr.bf16.gmra.mrb[0].mxu0 %v1892
    %v2115 = vpop.f32.mrb[0].mxu0
    %v2116 = vadd.f32 0.0, %v2115
    %v2117 = vpop.f32.mrb[0].mxu0
    %v2118 = vadd.f32 0.0, %v2117
    %v2119 = vpop.f32.mrb[0].mxu0
    %v2120 = vpop.f32.mrb[0].mxu0
    %2121 = vdwg.mxu0
    %2122 = vmatprep.subr.bf16.mxu0 %v2038
    %2123 = vmatpush1.bf16.msra.mxu0 %v2037
    %2124 = vmatprep.subr.bf16.mxu0 %v2040
    %2125 = vmatpush1.bf16.msra.mxu0 %v2039
    %2126 = vmatprep.subr.bf16.mxu0 0
    %2127 = vmatpush1.bf16.msra.mxu0 0
    %2128 = vmatprep.subr.bf16.mxu0 0
    %2129 = vmatpush1.bf16.msra.mxu0 0
    %2130 = vmatprep.subr.bf16.mxu0 0
    %2131 = vmatpush1.bf16.msra.mxu0 0
    %2132 = vmatprep.subr.bf16.mxu0 0
    %2133 = vmatpush1.bf16.msra.mxu0 0
    %2134 = vmatprep.subr.bf16.mxu0 0
    %2135 = vmatpush1.bf16.msra.mxu0 0
    %2136 = vmatprep.subr.bf16.mxu0 0
    %2137 = vmatpush1.bf16.msra.mxu0 0
    %2138 = vmatprep.subr.bf16.mxu0 0
    %2139 = vmatpush1.bf16.msra.mxu0 0
    %2140 = vmatprep.subr.bf16.mxu0 0
    %2141 = vmatpush1.bf16.msra.mxu0 0
    %2142 = vmatprep.subr.bf16.mxu0 0
    %2143 = vmatpush1.bf16.msra.mxu0 0
    %2144 = vmatprep.subr.bf16.mxu0 0
    %2145 = vmatpush1.bf16.msra.mxu0 0
    %2146 = vmatprep.subr.bf16.mxu0 0
    %2147 = vmatpush1.bf16.msra.mxu0 0
    %2148 = vmatprep.subr.bf16.mxu0 0
    %2149 = vmatpush1.bf16.msra.mxu0 0
    %2150 = vmatprep.subr.bf16.mxu0 0
    %2151 = vmatpush1.bf16.msra.mxu0 0
    %2152 = vmatprep.subr.bf16.mxu0 0
    %2153 = vmatpush1.bf16.msra.mxu0 0
    %2154 = vmatprep.mubr.bf16.mxu0 0
    %2155 = vmatmul.mubr.bf16.gmra.mrb[0].mxu0 %v2079
    %v2156 = vpop.f32.mrb[0].mxu0
    %v2157 = vadd.f32 %v2116, %v2156
    %v2158 = vpop.f32.mrb[0].mxu0
    %v2159 = vadd.f32 %v2118, %v2158
    %v2160 = vpop.f32.mrb[0].mxu0
    %v2161 = vpop.f32.mrb[0].mxu0
    %2162 = vdwg.mxu0
    %v2199 = vunpack.c.l.b16 %v1816
    %v2200 = vunpack.c.h.b16 %v1816
    %v2201 = vunpack.c.l.b16 %v1817
    %v2202 = vunpack.c.h.b16 %v1817
    %v2203 = vunpack.c.l.b16 %v1818
    %v2204 = vunpack.c.h.b16 %v1818
    %v2205 = vunpack.c.l.b16 %v1819
    %v2206 = vunpack.c.h.b16 %v1819
    %v2207 = vunpack.c.l.b16 %v1820
    %v2208 = vunpack.c.h.b16 %v1820
    %v2209 = vunpack.c.l.b16 %v1821
    %v2210 = vunpack.c.h.b16 %v1821
    %v2211 = vunpack.c.l.b16 %v1822
    %v2212 = vunpack.c.h.b16 %v1822
    %v2213 = vunpack.c.l.b16 %v1823
    %v2214 = vunpack.c.h.b16 %v1823
    %v2215 = vunpack.c.l.b16 %v1824
    %v2216 = vunpack.c.h.b16 %v1824
    %v2217 = vunpack.c.l.b16 %v1825
    %v2218 = vunpack.c.h.b16 %v1825
    %v2219 = vunpack.c.l.b16 %v1826
    %v2220 = vunpack.c.h.b16 %v1826
    %v2221 = vunpack.c.l.b16 %v1827
    %v2222 = vunpack.c.h.b16 %v1827
    %v2223 = vunpack.c.l.b16 %v1828
    %v2224 = vunpack.c.h.b16 %v1828
    %v2225 = vunpack.c.l.b16 %v1829
    %v2226 = vunpack.c.h.b16 %v1829
    %v2227 = vunpack.c.l.b16 %v1830
    %v2228 = vunpack.c.h.b16 %v1830
    %v2229 = vunpack.c.l.b16 %v1831
    %v2230 = vunpack.c.h.b16 %v1831
    %v2231 = vunpack.c.l.b16 %v1832
    %v2232 = vunpack.c.h.b16 %v1832
    %v2233 = vunpack.c.l.b16 %v1833
    %v2234 = vunpack.c.h.b16 %v1833
    %v2235 = vunpack.c.l.b16 %v1834
    %v2236 = vunpack.c.h.b16 %v1834
    %v2237 = vunpack.c.l.b16 %v1835
    %v2238 = vunpack.c.h.b16 %v1835
    %v2239 = vunpack.c.l.b16 %v1836
    %v2240 = vunpack.c.h.b16 %v1836
    %v2241 = vunpack.c.l.b16 %v1837
    %v2242 = vunpack.c.h.b16 %v1837
    %v2243 = vunpack.c.l.b16 %v1838
    %v2244 = vunpack.c.h.b16 %v1838
    %v2245 = vunpack.c.l.b16 %v1839
    %v2246 = vunpack.c.h.b16 %v1839
    %v2247 = vunpack.c.l.b16 %v1840
    %v2248 = vunpack.c.h.b16 %v1840
    %v2249 = vunpack.c.l.b16 %v1841
    %v2250 = vunpack.c.h.b16 %v1841
    %v2251 = vunpack.c.l.b16 %v1842
    %v2252 = vunpack.c.h.b16 %v1842
    %v2253 = vunpack.c.l.b16 %v1843
    %v2254 = vunpack.c.h.b16 %v1843
    %v2255 = vunpack.c.l.b16 %v1844
    %v2256 = vunpack.c.h.b16 %v1844
    %v2257 = vunpack.c.l.b16 %v1845
    %v2258 = vunpack.c.h.b16 %v1845
    %v2259 = vunpack.c.l.b16 %v1846
    %v2260 = vunpack.c.h.b16 %v1846
    %v2261 = vunpack.c.l.b16 %v1847
    %v2262 = vunpack.c.h.b16 %v1847
    %v2263 = vunpack.c.l.b16 %v1848
    %v2264 = vunpack.c.h.b16 %v1848
    %v2265 = vunpack.c.l.b16 %v1849
    %v2266 = vunpack.c.h.b16 %v1849
    %v2267 = vunpack.c.l.b16 %v1850
    %v2268 = vunpack.c.h.b16 %v1850
    %v2269 = vunpack.c.l.b16 %v1851
    %v2270 = vunpack.c.h.b16 %v1851
    %v2271 = vpack.c.b16 %v2201, %v2199
    %v2272 = vpack.c.b16 %v2202, %v2200
    %v2273 = vpack.c.b16 %v2205, %v2203
    %v2274 = vpack.c.b16 %v2206, %v2204
    %v2275 = vpack.c.b16 %v2209, %v2207
    %v2276 = vpack.c.b16 %v2210, %v2208
    %v2277 = vpack.c.b16 %v2213, %v2211
    %v2278 = vpack.c.b16 %v2214, %v2212
    %v2279 = vpack.c.b16 %v2217, %v2215
    %v2280 = vpack.c.b16 %v2218, %v2216
    %v2281 = vpack.c.b16 %v2221, %v2219
    %v2282 = vpack.c.b16 %v2222, %v2220
    %v2283 = vpack.c.b16 %v2225, %v2223
    %v2284 = vpack.c.b16 %v2226, %v2224
    %v2285 = vpack.c.b16 %v2229, %v2227
    %v2286 = vpack.c.b16 %v2230, %v2228
    %v2287 = vpack.c.b16 %v2233, %v2231
    %v2288 = vpack.c.b16 %v2234, %v2232
    %v2289 = vpack.c.b16 %v2237, %v2235
    %v2290 = vpack.c.b16 %v2238, %v2236
    %v2291 = vpack.c.b16 %v2241, %v2239
    %v2292 = vpack.c.b16 %v2242, %v2240
    %v2293 = vpack.c.b16 %v2245, %v2243
    %v2294 = vpack.c.b16 %v2246, %v2244
    %v2295 = vpack.c.b16 %v2249, %v2247
    %v2296 = vpack.c.b16 %v2250, %v2248
    %v2297 = vpack.c.b16 %v2253, %v2251
    %v2298 = vpack.c.b16 %v2254, %v2252
    %v2299 = vpack.c.b16 %v2257, %v2255
    %v2300 = vpack.c.b16 %v2258, %v2256
    %v2301 = vpack.c.b16 %v2261, %v2259
    %v2302 = vpack.c.b16 %v2262, %v2260
    %v2303 = vpack.c.b16 %v2265, %v2263
    %v2304 = vpack.c.b16 %v2266, %v2264
    %v2305 = vpack.c.b16 %v2269, %v2267
    %v2306 = vpack.c.b16 %v2270, %v2268
    %v2344 = vsel %vm2077, %v1809, 0
    %2346 = vmatprep.subr.bf16.mxu0 %v2272
    %2347 = vmatpush1.bf16.msra.mxu0 %v2271
    %2348 = vmatprep.subr.bf16.mxu0 %v2274
    %2349 = vmatpush1.bf16.msra.mxu0 %v2273
    %2350 = vmatprep.subr.bf16.mxu0 %v2276
    %2351 = vmatpush1.bf16.msra.mxu0 %v2275
    %2352 = vmatprep.subr.bf16.mxu0 %v2278
    %2353 = vmatpush1.bf16.msra.mxu0 %v2277
    %2354 = vmatprep.subr.bf16.mxu0 %v2280
    %2355 = vmatpush1.bf16.msra.mxu0 %v2279
    %2356 = vmatprep.subr.bf16.mxu0 %v2282
    %2357 = vmatpush1.bf16.msra.mxu0 %v2281
    %2358 = vmatprep.subr.bf16.mxu0 %v2284
    %2359 = vmatpush1.bf16.msra.mxu0 %v2283
    %2360 = vmatprep.subr.bf16.mxu0 %v2286
    %2361 = vmatpush1.bf16.msra.mxu0 %v2285
    %2362 = vmatprep.subr.bf16.mxu0 %v2288
    %2363 = vmatpush1.bf16.msra.mxu0 %v2287
    %2364 = vmatprep.subr.bf16.mxu0 %v2290
    %2365 = vmatpush1.bf16.msra.mxu0 %v2289
    %2366 = vmatprep.subr.bf16.mxu0 %v2292
    %2367 = vmatpush1.bf16.msra.mxu0 %v2291
    %2368 = vmatprep.subr.bf16.mxu0 %v2294
    %2369 = vmatpush1.bf16.msra.mxu0 %v2293
    %2370 = vmatprep.subr.bf16.mxu0 %v2296
    %2371 = vmatpush1.bf16.msra.mxu0 %v2295
    %2372 = vmatprep.subr.bf16.mxu0 %v2298
    %2373 = vmatpush1.bf16.msra.mxu0 %v2297
    %2374 = vmatprep.subr.bf16.mxu0 %v2300
    %2375 = vmatpush1.bf16.msra.mxu0 %v2299
    %2376 = vmatprep.subr.bf16.mxu0 %v2302
    %2377 = vmatpush1.bf16.msra.mxu0 %v2301
    %2378 = vmatprep.mubr.bf16.mxu0 %v1808
    %2379 = vmatmul.mubr.bf16.gmra.mrb[0].mxu0 %v1807
    %v2380 = vpop.f32.mrb[0].mxu0
    %v2381 = vadd.f32 %v2157, %v2380
    %v2382 = vpop.f32.mrb[0].mxu0
    %v2383 = vadd.f32 %v2159, %v2382
    %v2384 = vpop.f32.mrb[0].mxu0
    %v2385 = vpop.f32.mrb[0].mxu0
    %2386 = vdwg.mxu0
    %2387 = vmatprep.subr.bf16.mxu0 %v2304
    %2388 = vmatpush1.bf16.msra.mxu0 %v2303
    %2389 = vmatprep.subr.bf16.mxu0 %v2306
    %2390 = vmatpush1.bf16.msra.mxu0 %v2305
    %2391 = vmatprep.subr.bf16.mxu0 0
    %2392 = vmatpush1.bf16.msra.mxu0 0
    %2393 = vmatprep.subr.bf16.mxu0 0
    %2394 = vmatpush1.bf16.msra.mxu0 0
    %2395 = vmatprep.subr.bf16.mxu0 0
    %2396 = vmatpush1.bf16.msra.mxu0 0
    %2397 = vmatprep.subr.bf16.mxu0 0
    %2398 = vmatpush1.bf16.msra.mxu0 0
    %2399 = vmatprep.subr.bf16.mxu0 0
    %2400 = vmatpush1.bf16.msra.mxu0 0
    %2401 = vmatprep.subr.bf16.mxu0 0
    %2402 = vmatpush1.bf16.msra.mxu0 0
    %2403 = vmatprep.subr.bf16.mxu0 0
    %2404 = vmatpush1.bf16.msra.mxu0 0
    %2405 = vmatprep.subr.bf16.mxu0 0
    %2406 = vmatpush1.bf16.msra.mxu0 0
    %2407 = vmatprep.subr.bf16.mxu0 0
    %2408 = vmatpush1.bf16.msra.mxu0 0
    %2409 = vmatprep.subr.bf16.mxu0 0
    %2410 = vmatpush1.bf16.msra.mxu0 0
    %2411 = vmatprep.subr.bf16.mxu0 0
    %2412 = vmatpush1.bf16.msra.mxu0 0
    %2413 = vmatprep.subr.bf16.mxu0 0
    %2414 = vmatpush1.bf16.msra.mxu0 0
    %2415 = vmatprep.subr.bf16.mxu0 0
    %2416 = vmatpush1.bf16.msra.mxu0 0
    %2417 = vmatprep.subr.bf16.mxu0 0
    %2418 = vmatpush1.bf16.msra.mxu0 0
    %2419 = vmatprep.mubr.bf16.mxu0 0
    %2420 = vmatmul.mubr.bf16.gmra.mrb[0].mxu0 %v2344
    %v2421 = vpop.f32.mrb[0].mxu0
    %v2422 = vadd.f32 %v2381, %v2421
    %v2423 = vpop.f32.mrb[0].mxu0
    %v2424 = vadd.f32 %v2383, %v2423
    %v2425 = vpop.f32.mrb[0].mxu0
    %v2426 = vpop.f32.mrb[0].mxu0
    %2427 = vdwg.mxu0
    %s2428 = scalar_lea.vmem %s5, 576
    %v2429 = vld [vmem:[%s2428] sm:$0xff]
    %v2430 = vld [vmem:[%s2428 + $0x8] sm:$0xff]
    %v2431 = vld [vmem:[%s2428 + $0x10] sm:$0xff]
    %v2432 = vld [vmem:[%s2428 + $0x18] sm:$0xff]
    %v2433 = vld [vmem:[%s2428 + $0x20] sm:$0xff]
    %v2434 = vld [vmem:[%s2428 + $0x28] sm:$0xff]
    %v2435 = vld [vmem:[%s2428 + $0x30] sm:$0xff]
    %v2436 = vld [vmem:[%s2428 + $0x38] sm:$0xff]
    %v2437 = vld [vmem:[%s2428 + $0x40] sm:$0xff]
    %v2438 = vld [vmem:[%s2428 + $0x48] sm:$0xff]
    %v2439 = vld [vmem:[%s2428 + $0x50] sm:$0xff]
    %v2440 = vld [vmem:[%s2428 + $0x58] sm:$0xff]
    %v2441 = vld [vmem:[%s2428 + $0x60] sm:$0xff]
    %v2442 = vld [vmem:[%s2428 + $0x68] sm:$0xff]
    %v2443 = vld [vmem:[%s2428 + $0x70] sm:$0xff]
    %v2444 = vld [vmem:[%s2428 + $0x78] sm:$0xff]
    %v2445 = vld [vmem:[%s2428 + $0x80] sm:$0xff]
    %v2446 = vld [vmem:[%s2428 + $0x88] sm:$0xff]
    %v2447 = vld [vmem:[%s2428 + $0x90] sm:$0xff]
    %v2448 = vld [vmem:[%s2428 + $0x98] sm:$0xff]
    %v2449 = vld [vmem:[%s2428 + $0xa0] sm:$0xff]
    %v2450 = vld [vmem:[%s2428 + $0xa8] sm:$0xff]
    %v2451 = vld [vmem:[%s2428 + $0xb0] sm:$0xff]
    %v2452 = vld [vmem:[%s2428 + $0xb8] sm:$0xff]
    %v2453 = vld [vmem:[%s2428 + $0xc0] sm:$0xff]
    %v2454 = vld [vmem:[%s2428 + $0xc8] sm:$0xff]
    %v2455 = vld [vmem:[%s2428 + $0xd0] sm:$0xff]
    %v2456 = vld [vmem:[%s2428 + $0xd8] sm:$0xff]
    %v2457 = vld [vmem:[%s2428 + $0xe0] sm:$0xff]
    %v2458 = vld [vmem:[%s2428 + $0xe8] sm:$0xff]
    %v2459 = vld [vmem:[%s2428 + $0xf0] sm:$0xff]
    %v2460 = vld [vmem:[%s2428 + $0xf8] sm:$0xff]
    %v2461 = vld [vmem:[%s2428 + $0x100] sm:$0xff]
    %v2462 = vld [vmem:[%s2428 + $0x108] sm:$0xff]
    %v2463 = vld [vmem:[%s2428 + $0x110] sm:$0xff]
    %v2464 = vld [vmem:[%s2428 + $0x118] sm:$0xff]
    %v2501 = vunpack.c.l.b16 %v2429
    %v2502 = vunpack.c.h.b16 %v2429
    %v2503 = vunpack.c.l.b16 %v2430
    %v2504 = vunpack.c.h.b16 %v2430
    %v2505 = vunpack.c.l.b16 %v2431
    %v2506 = vunpack.c.h.b16 %v2431
    %v2507 = vunpack.c.l.b16 %v2432
    %v2508 = vunpack.c.h.b16 %v2432
    %v2509 = vunpack.c.l.b16 %v2433
    %v2510 = vunpack.c.h.b16 %v2433
    %v2511 = vunpack.c.l.b16 %v2434
    %v2512 = vunpack.c.h.b16 %v2434
    %v2513 = vunpack.c.l.b16 %v2435
    %v2514 = vunpack.c.h.b16 %v2435
    %v2515 = vunpack.c.l.b16 %v2436
    %v2516 = vunpack.c.h.b16 %v2436
    %v2517 = vunpack.c.l.b16 %v2437
    %v2518 = vunpack.c.h.b16 %v2437
    %v2519 = vunpack.c.l.b16 %v2438
    %v2520 = vunpack.c.h.b16 %v2438
    %v2521 = vunpack.c.l.b16 %v2439
    %v2522 = vunpack.c.h.b16 %v2439
    %v2523 = vunpack.c.l.b16 %v2440
    %v2524 = vunpack.c.h.b16 %v2440
    %v2525 = vunpack.c.l.b16 %v2441
    %v2526 = vunpack.c.h.b16 %v2441
    %v2527 = vunpack.c.l.b16 %v2442
    %v2528 = vunpack.c.h.b16 %v2442
    %v2529 = vunpack.c.l.b16 %v2443
    %v2530 = vunpack.c.h.b16 %v2443
    %v2531 = vunpack.c.l.b16 %v2444
    %v2532 = vunpack.c.h.b16 %v2444
    %v2533 = vunpack.c.l.b16 %v2445
    %v2534 = vunpack.c.h.b16 %v2445
    %v2535 = vunpack.c.l.b16 %v2446
    %v2536 = vunpack.c.h.b16 %v2446
    %v2537 = vunpack.c.l.b16 %v2447
    %v2538 = vunpack.c.h.b16 %v2447
    %v2539 = vunpack.c.l.b16 %v2448
    %v2540 = vunpack.c.h.b16 %v2448
    %v2541 = vunpack.c.l.b16 %v2449
    %v2542 = vunpack.c.h.b16 %v2449
    %v2543 = vunpack.c.l.b16 %v2450
    %v2544 = vunpack.c.h.b16 %v2450
    %v2545 = vunpack.c.l.b16 %v2451
    %v2546 = vunpack.c.h.b16 %v2451
    %v2547 = vunpack.c.l.b16 %v2452
    %v2548 = vunpack.c.h.b16 %v2452
    %v2549 = vunpack.c.l.b16 %v2453
    %v2550 = vunpack.c.h.b16 %v2453
    %v2551 = vunpack.c.l.b16 %v2454
    %v2552 = vunpack.c.h.b16 %v2454
    %v2553 = vunpack.c.l.b16 %v2455
    %v2554 = vunpack.c.h.b16 %v2455
    %v2555 = vunpack.c.l.b16 %v2456
    %v2556 = vunpack.c.h.b16 %v2456
    %v2557 = vunpack.c.l.b16 %v2457
    %v2558 = vunpack.c.h.b16 %v2457
    %v2559 = vunpack.c.l.b16 %v2458
    %v2560 = vunpack.c.h.b16 %v2458
    %v2561 = vunpack.c.l.b16 %v2459
    %v2562 = vunpack.c.h.b16 %v2459
    %v2563 = vunpack.c.l.b16 %v2460
    %v2564 = vunpack.c.h.b16 %v2460
    %v2565 = vunpack.c.l.b16 %v2461
    %v2566 = vunpack.c.h.b16 %v2461
    %v2567 = vunpack.c.l.b16 %v2462
    %v2568 = vunpack.c.h.b16 %v2462
    %v2569 = vunpack.c.l.b16 %v2463
    %v2570 = vunpack.c.h.b16 %v2463
    %v2571 = vunpack.c.l.b16 %v2464
    %v2572 = vunpack.c.h.b16 %v2464
    %v2573 = vpack.c.b16 %v2503, %v2501
    %v2574 = vpack.c.b16 %v2504, %v2502
    %v2575 = vpack.c.b16 %v2507, %v2505
    %v2576 = vpack.c.b16 %v2508, %v2506
    %v2577 = vpack.c.b16 %v2511, %v2509
    %v2578 = vpack.c.b16 %v2512, %v2510
    %v2579 = vpack.c.b16 %v2515, %v2513
    %v2580 = vpack.c.b16 %v2516, %v2514
    %v2581 = vpack.c.b16 %v2519, %v2517
    %v2582 = vpack.c.b16 %v2520, %v2518
    %v2583 = vpack.c.b16 %v2523, %v2521
    %v2584 = vpack.c.b16 %v2524, %v2522
    %v2585 = vpack.c.b16 %v2527, %v2525
    %v2586 = vpack.c.b16 %v2528, %v2526
    %v2587 = vpack.c.b16 %v2531, %v2529
    %v2588 = vpack.c.b16 %v2532, %v2530
    %v2589 = vpack.c.b16 %v2535, %v2533
    %v2590 = vpack.c.b16 %v2536, %v2534
    %v2591 = vpack.c.b16 %v2539, %v2537
    %v2592 = vpack.c.b16 %v2540, %v2538
    %v2593 = vpack.c.b16 %v2543, %v2541
    %v2594 = vpack.c.b16 %v2544, %v2542
    %v2595 = vpack.c.b16 %v2547, %v2545
    %v2596 = vpack.c.b16 %v2548, %v2546
    %v2597 = vpack.c.b16 %v2551, %v2549
    %v2598 = vpack.c.b16 %v2552, %v2550
    %v2599 = vpack.c.b16 %v2555, %v2553
    %v2600 = vpack.c.b16 %v2556, %v2554
    %v2601 = vpack.c.b16 %v2559, %v2557
    %v2602 = vpack.c.b16 %v2560, %v2558
    %v2603 = vpack.c.b16 %v2563, %v2561
    %v2604 = vpack.c.b16 %v2564, %v2562
    %v2605 = vpack.c.b16 %v2567, %v2565
    %v2606 = vpack.c.b16 %v2568, %v2566
    %v2607 = vpack.c.b16 %v2571, %v2569
    %v2608 = vpack.c.b16 %v2572, %v2570
    %v2646 = vsel %vm2077, %v1812, 0
    %2648 = vmatprep.subr.bf16.mxu0 %v2574
    %2649 = vmatpush1.bf16.msra.mxu0 %v2573
    %2650 = vmatprep.subr.bf16.mxu0 %v2576
    %2651 = vmatpush1.bf16.msra.mxu0 %v2575
    %2652 = vmatprep.subr.bf16.mxu0 %v2578
    %2653 = vmatpush1.bf16.msra.mxu0 %v2577
    %2654 = vmatprep.subr.bf16.mxu0 %v2580
    %2655 = vmatpush1.bf16.msra.mxu0 %v2579
    %2656 = vmatprep.subr.bf16.mxu0 %v2582
    %2657 = vmatpush1.bf16.msra.mxu0 %v2581
    %2658 = vmatprep.subr.bf16.mxu0 %v2584
    %2659 = vmatpush1.bf16.msra.mxu0 %v2583
    %2660 = vmatprep.subr.bf16.mxu0 %v2586
    %2661 = vmatpush1.bf16.msra.mxu0 %v2585
    %2662 = vmatprep.subr.bf16.mxu0 %v2588
    %2663 = vmatpush1.bf16.msra.mxu0 %v2587
    %2664 = vmatprep.subr.bf16.mxu0 %v2590
    %2665 = vmatpush1.bf16.msra.mxu0 %v2589
    %2666 = vmatprep.subr.bf16.mxu0 %v2592
    %2667 = vmatpush1.bf16.msra.mxu0 %v2591
    %2668 = vmatprep.subr.bf16.mxu0 %v2594
    %2669 = vmatpush1.bf16.msra.mxu0 %v2593
    %2670 = vmatprep.subr.bf16.mxu0 %v2596
    %2671 = vmatpush1.bf16.msra.mxu0 %v2595
    %2672 = vmatprep.subr.bf16.mxu0 %v2598
    %2673 = vmatpush1.bf16.msra.mxu0 %v2597
    %2674 = vmatprep.subr.bf16.mxu0 %v2600
    %2675 = vmatpush1.bf16.msra.mxu0 %v2599
    %2676 = vmatprep.subr.bf16.mxu0 %v2602
    %2677 = vmatpush1.bf16.msra.mxu0 %v2601
    %2678 = vmatprep.subr.bf16.mxu0 %v2604
    %2679 = vmatpush1.bf16.msra.mxu0 %v2603
    %2680 = vmatprep.mubr.bf16.mxu0 %v1811
    %2681 = vmatmul.mubr.bf16.gmra.mrb[0].mxu0 %v1810
    %v2682 = vpop.f32.mrb[0].mxu0
    %v2683 = vadd.f32 0.0, %v2682
    %v2684 = vpop.f32.mrb[0].mxu0
    %v2685 = vadd.f32 0.0, %v2684
    %v2686 = vpop.f32.mrb[0].mxu0
    %v2687 = vpop.f32.mrb[0].mxu0
    %2688 = vdwg.mxu0
    %2689 = vmatprep.subr.bf16.mxu0 %v2606
    %2690 = vmatpush1.bf16.msra.mxu0 %v2605
    %2691 = vmatprep.subr.bf16.mxu0 %v2608
    %2692 = vmatpush1.bf16.msra.mxu0 %v2607
    %2693 = vmatprep.subr.bf16.mxu0 0
    %2694 = vmatpush1.bf16.msra.mxu0 0
    %2695 = vmatprep.subr.bf16.mxu0 0
    %2696 = vmatpush1.bf16.msra.mxu0 0
    %2697 = vmatprep.subr.bf16.mxu0 0
    %2698 = vmatpush1.bf16.msra.mxu0 0
    %2699 = vmatprep.subr.bf16.mxu0 0
    %2700 = vmatpush1.bf16.msra.mxu0 0
    %2701 = vmatprep.subr.bf16.mxu0 0
    %2702 = vmatpush1.bf16.msra.mxu0 0
    %2703 = vmatprep.subr.bf16.mxu0 0
    %2704 = vmatpush1.bf16.msra.mxu0 0
    %2705 = vmatprep.subr.bf16.mxu0 0
    %2706 = vmatpush1.bf16.msra.mxu0 0
    %2707 = vmatprep.subr.bf16.mxu0 0
    %2708 = vmatpush1.bf16.msra.mxu0 0
    %2709 = vmatprep.subr.bf16.mxu0 0
    %2710 = vmatpush1.bf16.msra.mxu0 0
    %2711 = vmatprep.subr.bf16.mxu0 0
    %2712 = vmatpush1.bf16.msra.mxu0 0
    %2713 = vmatprep.subr.bf16.mxu0 0
    %2714 = vmatpush1.bf16.msra.mxu0 0
    %2715 = vmatprep.subr.bf16.mxu0 0
    %2716 = vmatpush1.bf16.msra.mxu0 0
    %2717 = vmatprep.subr.bf16.mxu0 0
    %2718 = vmatpush1.bf16.msra.mxu0 0
    %2719 = vmatprep.subr.bf16.mxu0 0
    %2720 = vmatpush1.bf16.msra.mxu0 0
    %2721 = vmatprep.mubr.bf16.mxu0 0
    %2722 = vmatmul.mubr.bf16.gmra.mrb[0].mxu0 %v2646
    %v2723 = vpop.f32.mrb[0].mxu0
    %v2724 = vadd.f32 %v2683, %v2723
    %v2725 = vpop.f32.mrb[0].mxu0
    %v2726 = vadd.f32 %v2685, %v2725
    %v2727 = vpop.f32.mrb[0].mxu0
    %v2728 = vpop.f32.mrb[0].mxu0
    %2729 = vdwg.mxu0
    %v2730 = vadd.f32 %v2422, %v2724
    %v2731 = vadd.f32 %v2424, %v2726
    %s2732 = scalar_lea.vmem %s5, 864
    %v2733 = vld [vmem:[%s2732] sm:$0xff]
    %v2734 = vld [vmem:[%s2732 + $0x8] sm:$0xff]
    %v2735 = vld [vmem:[%s2732 + $0x10] sm:$0xff]
    %v2736 = vld [vmem:[%s2732 + $0x18] sm:$0xff]
    %v2737 = vld [vmem:[%s2732 + $0x20] sm:$0xff]
    %v2738 = vld [vmem:[%s2732 + $0x28] sm:$0xff]
    %v2739 = vld [vmem:[%s2732 + $0x30] sm:$0xff]
    %v2740 = vld [vmem:[%s2732 + $0x38] sm:$0xff]
    %v2741 = vld [vmem:[%s2732 + $0x40] sm:$0xff]
    %v2742 = vld [vmem:[%s2732 + $0x48] sm:$0xff]
    %v2743 = vld [vmem:[%s2732 + $0x50] sm:$0xff]
    %v2744 = vld [vmem:[%s2732 + $0x58] sm:$0xff]
    %v2745 = vld [vmem:[%s2732 + $0x60] sm:$0xff]
    %v2746 = vld [vmem:[%s2732 + $0x68] sm:$0xff]
    %v2747 = vld [vmem:[%s2732 + $0x70] sm:$0xff]
    %v2748 = vld [vmem:[%s2732 + $0x78] sm:$0xff]
    %v2749 = vld [vmem:[%s2732 + $0x80] sm:$0xff]
    %v2750 = vld [vmem:[%s2732 + $0x88] sm:$0xff]
    %v2751 = vld [vmem:[%s2732 + $0x90] sm:$0xff]
    %v2752 = vld [vmem:[%s2732 + $0x98] sm:$0xff]
    %v2753 = vld [vmem:[%s2732 + $0xa0] sm:$0xff]
    %v2754 = vld [vmem:[%s2732 + $0xa8] sm:$0xff]
    %v2755 = vld [vmem:[%s2732 + $0xb0] sm:$0xff]
    %v2756 = vld [vmem:[%s2732 + $0xb8] sm:$0xff]
    %v2757 = vld [vmem:[%s2732 + $0xc0] sm:$0xff]
    %v2758 = vld [vmem:[%s2732 + $0xc8] sm:$0xff]
    %v2759 = vld [vmem:[%s2732 + $0xd0] sm:$0xff]
    %v2760 = vld [vmem:[%s2732 + $0xd8] sm:$0xff]
    %v2761 = vld [vmem:[%s2732 + $0xe0] sm:$0xff]
    %v2762 = vld [vmem:[%s2732 + $0xe8] sm:$0xff]
    %v2763 = vld [vmem:[%s2732 + $0xf0] sm:$0xff]
    %v2764 = vld [vmem:[%s2732 + $0xf8] sm:$0xff]
    %v2765 = vld [vmem:[%s2732 + $0x100] sm:$0xff]
    %v2766 = vld [vmem:[%s2732 + $0x108] sm:$0xff]
    %v2767 = vld [vmem:[%s2732 + $0x110] sm:$0xff]
    %v2768 = vld [vmem:[%s2732 + $0x118] sm:$0xff]
    %v2772 = vrot.slane %v1810, 4
    %v2773 = vrot.slane %v1811, 4
    %v2774 = vrot.slane %v1812, 4
    %v2813 = vunpack.c.l.b16 %v2733
    %v2814 = vunpack.c.h.b16 %v2733
    %v2815 = vunpack.c.l.b16 %v2734
    %v2816 = vunpack.c.h.b16 %v2734
    %v2817 = vunpack.c.l.b16 %v2735
    %v2818 = vunpack.c.h.b16 %v2735
    %v2819 = vunpack.c.l.b16 %v2736
    %v2820 = vunpack.c.h.b16 %v2736
    %v2821 = vunpack.c.l.b16 %v2737
    %v2822 = vunpack.c.h.b16 %v2737
    %v2823 = vunpack.c.l.b16 %v2738
    %v2824 = vunpack.c.h.b16 %v2738
    %v2825 = vunpack.c.l.b16 %v2739
    %v2826 = vunpack.c.h.b16 %v2739
    %v2827 = vunpack.c.l.b16 %v2740
    %v2828 = vunpack.c.h.b16 %v2740
    %v2829 = vunpack.c.l.b16 %v2741
    %v2830 = vunpack.c.h.b16 %v2741
    %v2831 = vunpack.c.l.b16 %v2742
    %v2832 = vunpack.c.h.b16 %v2742
    %v2833 = vunpack.c.l.b16 %v2743
    %v2834 = vunpack.c.h.b16 %v2743
    %v2835 = vunpack.c.l.b16 %v2744
    %v2836 = vunpack.c.h.b16 %v2744
    %v2837 = vunpack.c.l.b16 %v2745
    %v2838 = vunpack.c.h.b16 %v2745
    %v2839 = vunpack.c.l.b16 %v2746
    %v2840 = vunpack.c.h.b16 %v2746
    %v2841 = vunpack.c.l.b16 %v2747
    %v2842 = vunpack.c.h.b16 %v2747
    %v2843 = vunpack.c.l.b16 %v2748
    %v2844 = vunpack.c.h.b16 %v2748
    %v2845 = vunpack.c.l.b16 %v2749
    %v2846 = vunpack.c.h.b16 %v2749
    %v2847 = vunpack.c.l.b16 %v2750
    %v2848 = vunpack.c.h.b16 %v2750
    %v2849 = vunpack.c.l.b16 %v2751
    %v2850 = vunpack.c.h.b16 %v2751
    %v2851 = vunpack.c.l.b16 %v2752
    %v2852 = vunpack.c.h.b16 %v2752
    %v2853 = vunpack.c.l.b16 %v2753
    %v2854 = vunpack.c.h.b16 %v2753
    %v2855 = vunpack.c.l.b16 %v2754
    %v2856 = vunpack.c.h.b16 %v2754
    %v2857 = vunpack.c.l.b16 %v2755
    %v2858 = vunpack.c.h.b16 %v2755
    %v2859 = vunpack.c.l.b16 %v2756
    %v2860 = vunpack.c.h.b16 %v2756
    %v2861 = vunpack.c.l.b16 %v2757
    %v2862 = vunpack.c.h.b16 %v2757
    %v2863 = vunpack.c.l.b16 %v2758
    %v2864 = vunpack.c.h.b16 %v2758
    %v2865 = vunpack.c.l.b16 %v2759
    %v2866 = vunpack.c.h.b16 %v2759
    %v2867 = vunpack.c.l.b16 %v2760
    %v2868 = vunpack.c.h.b16 %v2760
    %v2869 = vunpack.c.l.b16 %v2761
    %v2870 = vunpack.c.h.b16 %v2761
    %v2871 = vunpack.c.l.b16 %v2762
    %v2872 = vunpack.c.h.b16 %v2762
    %v2873 = vunpack.c.l.b16 %v2763
    %v2874 = vunpack.c.h.b16 %v2763
    %v2875 = vunpack.c.l.b16 %v2764
    %v2876 = vunpack.c.h.b16 %v2764
    %v2877 = vunpack.c.l.b16 %v2765
    %v2878 = vunpack.c.h.b16 %v2765
    %v2879 = vunpack.c.l.b16 %v2766
    %v2880 = vunpack.c.h.b16 %v2766
    %v2881 = vunpack.c.l.b16 %v2767
    %v2882 = vunpack.c.h.b16 %v2767
    %v2883 = vunpack.c.l.b16 %v2768
    %v2884 = vunpack.c.h.b16 %v2768
    %v2885 = vpack.c.b16 %v2815, %v2813
    %v2886 = vpack.c.b16 %v2816, %v2814
    %v2887 = vpack.c.b16 %v2819, %v2817
    %v2888 = vpack.c.b16 %v2820, %v2818
    %v2889 = vpack.c.b16 %v2823, %v2821
    %v2890 = vpack.c.b16 %v2824, %v2822
    %v2891 = vpack.c.b16 %v2827, %v2825
    %v2892 = vpack.c.b16 %v2828, %v2826
    %v2893 = vpack.c.b16 %v2831, %v2829
    %v2894 = vpack.c.b16 %v2832, %v2830
    %v2895 = vpack.c.b16 %v2835, %v2833
    %v2896 = vpack.c.b16 %v2836, %v2834
    %v2897 = vpack.c.b16 %v2839, %v2837
    %v2898 = vpack.c.b16 %v2840, %v2838
    %v2899 = vpack.c.b16 %v2843, %v2841
    %v2900 = vpack.c.b16 %v2844, %v2842
    %v2901 = vpack.c.b16 %v2847, %v2845
    %v2902 = vpack.c.b16 %v2848, %v2846
    %v2903 = vpack.c.b16 %v2851, %v2849
    %v2904 = vpack.c.b16 %v2852, %v2850
    %v2905 = vpack.c.b16 %v2855, %v2853
    %v2906 = vpack.c.b16 %v2856, %v2854
    %v2907 = vpack.c.b16 %v2859, %v2857
    %v2908 = vpack.c.b16 %v2860, %v2858
    %v2909 = vpack.c.b16 %v2863, %v2861
    %v2910 = vpack.c.b16 %v2864, %v2862
    %v2911 = vpack.c.b16 %v2867, %v2865
    %v2912 = vpack.c.b16 %v2868, %v2866
    %v2913 = vpack.c.b16 %v2871, %v2869
    %v2914 = vpack.c.b16 %v2872, %v2870
    %v2915 = vpack.c.b16 %v2875, %v2873
    %v2916 = vpack.c.b16 %v2876, %v2874
    %v2917 = vpack.c.b16 %v2879, %v2877
    %v2918 = vpack.c.b16 %v2880, %v2878
    %v2919 = vpack.c.b16 %v2883, %v2881
    %v2920 = vpack.c.b16 %v2884, %v2882
    %v2958 = vsel %vm2077, %v2774, 0
    %2960 = vmatprep.subr.bf16.mxu0 %v2886
    %2961 = vmatpush1.bf16.msra.mxu0 %v2885
    %2962 = vmatprep.subr.bf16.mxu0 %v2888
    %2963 = vmatpush1.bf16.msra.mxu0 %v2887
    %2964 = vmatprep.subr.bf16.mxu0 %v2890
    %2965 = vmatpush1.bf16.msra.mxu0 %v2889
    %2966 = vmatprep.subr.bf16.mxu0 %v2892
    %2967 = vmatpush1.bf16.msra.mxu0 %v2891
    %2968 = vmatprep.subr.bf16.mxu0 %v2894
    %2969 = vmatpush1.bf16.msra.mxu0 %v2893
    %2970 = vmatprep.subr.bf16.mxu0 %v2896
    %2971 = vmatpush1.bf16.msra.mxu0 %v2895
    %2972 = vmatprep.subr.bf16.mxu0 %v2898
    %2973 = vmatpush1.bf16.msra.mxu0 %v2897
    %2974 = vmatprep.subr.bf16.mxu0 %v2900
    %2975 = vmatpush1.bf16.msra.mxu0 %v2899
    %2976 = vmatprep.subr.bf16.mxu0 %v2902
    %2977 = vmatpush1.bf16.msra.mxu0 %v2901
    %2978 = vmatprep.subr.bf16.mxu0 %v2904
    %2979 = vmatpush1.bf16.msra.mxu0 %v2903
    %2980 = vmatprep.subr.bf16.mxu0 %v2906
    %2981 = vmatpush1.bf16.msra.mxu0 %v2905
    %2982 = vmatprep.subr.bf16.mxu0 %v2908
    %2983 = vmatpush1.bf16.msra.mxu0 %v2907
    %2984 = vmatprep.subr.bf16.mxu0 %v2910
    %2985 = vmatpush1.bf16.msra.mxu0 %v2909
    %2986 = vmatprep.subr.bf16.mxu0 %v2912
    %2987 = vmatpush1.bf16.msra.mxu0 %v2911
    %2988 = vmatprep.subr.bf16.mxu0 %v2914
    %2989 = vmatpush1.bf16.msra.mxu0 %v2913
    %2990 = vmatprep.subr.bf16.mxu0 %v2916
    %2991 = vmatpush1.bf16.msra.mxu0 %v2915
    %2992 = vmatprep.mubr.bf16.mxu0 %v2773
    %2993 = vmatmul.mubr.bf16.gmra.mrb[0].mxu0 %v2772
    %v2994 = vpop.f32.mrb[0].mxu0
    %v2995 = vadd.f32 0.0, %v2994
    %v2996 = vpop.f32.mrb[0].mxu0
    %v2997 = vadd.f32 0.0, %v2996
    %v2998 = vpop.f32.mrb[0].mxu0
    %v2999 = vpop.f32.mrb[0].mxu0
    %3000 = vdwg.mxu0
    %3001 = vmatprep.subr.bf16.mxu0 %v2918
    %3002 = vmatpush1.bf16.msra.mxu0 %v2917
    %3003 = vmatprep.subr.bf16.mxu0 %v2920
    %3004 = vmatpush1.bf16.msra.mxu0 %v2919
    %3005 = vmatprep.subr.bf16.mxu0 0
    %3006 = vmatpush1.bf16.msra.mxu0 0
    %3007 = vmatprep.subr.bf16.mxu0 0
    %3008 = vmatpush1.bf16.msra.mxu0 0
    %3009 = vmatprep.subr.bf16.mxu0 0
    %3010 = vmatpush1.bf16.msra.mxu0 0
    %3011 = vmatprep.subr.bf16.mxu0 0
    %3012 = vmatpush1.bf16.msra.mxu0 0
    %3013 = vmatprep.subr.bf16.mxu0 0
    %3014 = vmatpush1.bf16.msra.mxu0 0
    %3015 = vmatprep.subr.bf16.mxu0 0
    %3016 = vmatpush1.bf16.msra.mxu0 0
    %3017 = vmatprep.subr.bf16.mxu0 0
    %3018 = vmatpush1.bf16.msra.mxu0 0
    %3019 = vmatprep.subr.bf16.mxu0 0
    %3020 = vmatpush1.bf16.msra.mxu0 0
    %3021 = vmatprep.subr.bf16.mxu0 0
    %3022 = vmatpush1.bf16.msra.mxu0 0
    %3023 = vmatprep.subr.bf16.mxu0 0
    %3024 = vmatpush1.bf16.msra.mxu0 0
    %3025 = vmatprep.subr.bf16.mxu0 0
    %3026 = vmatpush1.bf16.msra.mxu0 0
    %3027 = vmatprep.subr.bf16.mxu0 0
    %3028 = vmatpush1.bf16.msra.mxu0 0
    %3029 = vmatprep.subr.bf16.mxu0 0
    %3030 = vmatpush1.bf16.msra.mxu0 0
    %3031 = vmatprep.subr.bf16.mxu0 0
    %3032 = vmatpush1.bf16.msra.mxu0 0
    %3033 = vmatprep.mubr.bf16.mxu0 0
    %3034 = vmatmul.mubr.bf16.gmra.mrb[0].mxu0 %v2958
    %v3035 = vpop.f32.mrb[0].mxu0
    %v3036 = vadd.f32 %v2995, %v3035
    %v3037 = vpop.f32.mrb[0].mxu0
    %v3038 = vadd.f32 %v2997, %v3037
    %v3039 = vpop.f32.mrb[0].mxu0
    %v3040 = vpop.f32.mrb[0].mxu0
    %3041 = vdwg.mxu0
    %v3042 = vadd.f32 %v2730, %v3036
    %v3043 = vadd.f32 %v2731, %v3038
    %s3044 = scalar_lea.vmem %s5, 1152
    %v3045 = vld [vmem:[%s3044] sm:$0xff]
    %v3046 = vld [vmem:[%s3044 + $0x8] sm:$0xff]
    %v3047 = vld [vmem:[%s3044 + $0x10] sm:$0xff]
    %v3048 = vld [vmem:[%s3044 + $0x18] sm:$0xff]
    %v3049 = vld [vmem:[%s3044 + $0x20] sm:$0xff]
    %v3050 = vld [vmem:[%s3044 + $0x28] sm:$0xff]
    %v3051 = vld [vmem:[%s3044 + $0x30] sm:$0xff]
    %v3052 = vld [vmem:[%s3044 + $0x38] sm:$0xff]
    %v3053 = vld [vmem:[%s3044 + $0x40] sm:$0xff]
    %v3054 = vld [vmem:[%s3044 + $0x48] sm:$0xff]
    %v3055 = vld [vmem:[%s3044 + $0x50] sm:$0xff]
    %v3056 = vld [vmem:[%s3044 + $0x58] sm:$0xff]
    %v3057 = vld [vmem:[%s3044 + $0x60] sm:$0xff]
    %v3058 = vld [vmem:[%s3044 + $0x68] sm:$0xff]
    %v3059 = vld [vmem:[%s3044 + $0x70] sm:$0xff]
    %v3060 = vld [vmem:[%s3044 + $0x78] sm:$0xff]
    %v3061 = vld [vmem:[%s3044 + $0x80] sm:$0xff]
    %v3062 = vld [vmem:[%s3044 + $0x88] sm:$0xff]
    %v3063 = vld [vmem:[%s3044 + $0x90] sm:$0xff]
    %v3064 = vld [vmem:[%s3044 + $0x98] sm:$0xff]
    %v3065 = vld [vmem:[%s3044 + $0xa0] sm:$0xff]
    %v3066 = vld [vmem:[%s3044 + $0xa8] sm:$0xff]
    %v3067 = vld [vmem:[%s3044 + $0xb0] sm:$0xff]
    %v3068 = vld [vmem:[%s3044 + $0xb8] sm:$0xff]
    %v3069 = vld [vmem:[%s3044 + $0xc0] sm:$0xff]
    %v3070 = vld [vmem:[%s3044 + $0xc8] sm:$0xff]
    %v3071 = vld [vmem:[%s3044 + $0xd0] sm:$0xff]
    %v3072 = vld [vmem:[%s3044 + $0xd8] sm:$0xff]
    %v3073 = vld [vmem:[%s3044 + $0xe0] sm:$0xff]
    %v3074 = vld [vmem:[%s3044 + $0xe8] sm:$0xff]
    %v3075 = vld [vmem:[%s3044 + $0xf0] sm:$0xff]
    %v3076 = vld [vmem:[%s3044 + $0xf8] sm:$0xff]
    %v3077 = vld [vmem:[%s3044 + $0x100] sm:$0xff]
    %v3078 = vld [vmem:[%s3044 + $0x108] sm:$0xff]
    %v3079 = vld [vmem:[%s3044 + $0x110] sm:$0xff]
    %v3080 = vld [vmem:[%s3044 + $0x118] sm:$0xff]
    %v3117 = vunpack.c.l.b16 %v3045
    %v3118 = vunpack.c.h.b16 %v3045
    %v3119 = vunpack.c.l.b16 %v3046
    %v3120 = vunpack.c.h.b16 %v3046
    %v3121 = vunpack.c.l.b16 %v3047
    %v3122 = vunpack.c.h.b16 %v3047
    %v3123 = vunpack.c.l.b16 %v3048
    %v3124 = vunpack.c.h.b16 %v3048
    %v3125 = vunpack.c.l.b16 %v3049
    %v3126 = vunpack.c.h.b16 %v3049
    %v3127 = vunpack.c.l.b16 %v3050
    %v3128 = vunpack.c.h.b16 %v3050
    %v3129 = vunpack.c.l.b16 %v3051
    %v3130 = vunpack.c.h.b16 %v3051
    %v3131 = vunpack.c.l.b16 %v3052
    %v3132 = vunpack.c.h.b16 %v3052
    %v3133 = vunpack.c.l.b16 %v3053
    %v3134 = vunpack.c.h.b16 %v3053
    %v3135 = vunpack.c.l.b16 %v3054
    %v3136 = vunpack.c.h.b16 %v3054
    %v3137 = vunpack.c.l.b16 %v3055
    %v3138 = vunpack.c.h.b16 %v3055
    %v3139 = vunpack.c.l.b16 %v3056
    %v3140 = vunpack.c.h.b16 %v3056
    %v3141 = vunpack.c.l.b16 %v3057
    %v3142 = vunpack.c.h.b16 %v3057
    %v3143 = vunpack.c.l.b16 %v3058
    %v3144 = vunpack.c.h.b16 %v3058
    %v3145 = vunpack.c.l.b16 %v3059
    %v3146 = vunpack.c.h.b16 %v3059
    %v3147 = vunpack.c.l.b16 %v3060
    %v3148 = vunpack.c.h.b16 %v3060
    %v3149 = vunpack.c.l.b16 %v3061
    %v3150 = vunpack.c.h.b16 %v3061
    %v3151 = vunpack.c.l.b16 %v3062
    %v3152 = vunpack.c.h.b16 %v3062
    %v3153 = vunpack.c.l.b16 %v3063
    %v3154 = vunpack.c.h.b16 %v3063
    %v3155 = vunpack.c.l.b16 %v3064
    %v3156 = vunpack.c.h.b16 %v3064
    %v3157 = vunpack.c.l.b16 %v3065
    %v3158 = vunpack.c.h.b16 %v3065
    %v3159 = vunpack.c.l.b16 %v3066
    %v3160 = vunpack.c.h.b16 %v3066
    %v3161 = vunpack.c.l.b16 %v3067
    %v3162 = vunpack.c.h.b16 %v3067
    %v3163 = vunpack.c.l.b16 %v3068
    %v3164 = vunpack.c.h.b16 %v3068
    %v3165 = vunpack.c.l.b16 %v3069
    %v3166 = vunpack.c.h.b16 %v3069
    %v3167 = vunpack.c.l.b16 %v3070
    %v3168 = vunpack.c.h.b16 %v3070
    %v3169 = vunpack.c.l.b16 %v3071
    %v3170 = vunpack.c.h.b16 %v3071
    %v3171 = vunpack.c.l.b16 %v3072
    %v3172 = vunpack.c.h.b16 %v3072
    %v3173 = vunpack.c.l.b16 %v3073
    %v3174 = vunpack.c.h.b16 %v3073
    %v3175 = vunpack.c.l.b16 %v3074
    %v3176 = vunpack.c.h.b16 %v3074
    %v3177 = vunpack.c.l.b16 %v3075
    %v3178 = vunpack.c.h.b16 %v3075
    %v3179 = vunpack.c.l.b16 %v3076
    %v3180 = vunpack.c.h.b16 %v3076
    %v3181 = vunpack.c.l.b16 %v3077
    %v3182 = vunpack.c.h.b16 %v3077
    %v3183 = vunpack.c.l.b16 %v3078
    %v3184 = vunpack.c.h.b16 %v3078
    %v3185 = vunpack.c.l.b16 %v3079
    %v3186 = vunpack.c.h.b16 %v3079
    %v3187 = vunpack.c.l.b16 %v3080
    %v3188 = vunpack.c.h.b16 %v3080
    %v3189 = vpack.c.b16 %v3119, %v3117
    %v3190 = vpack.c.b16 %v3120, %v3118
    %v3191 = vpack.c.b16 %v3123, %v3121
    %v3192 = vpack.c.b16 %v3124, %v3122
    %v3193 = vpack.c.b16 %v3127, %v3125
    %v3194 = vpack.c.b16 %v3128, %v3126
    %v3195 = vpack.c.b16 %v3131, %v3129
    %v3196 = vpack.c.b16 %v3132, %v3130
    %v3197 = vpack.c.b16 %v3135, %v3133
    %v3198 = vpack.c.b16 %v3136, %v3134
    %v3199 = vpack.c.b16 %v3139, %v3137
    %v3200 = vpack.c.b16 %v3140, %v3138
    %v3201 = vpack.c.b16 %v3143, %v3141
    %v3202 = vpack.c.b16 %v3144, %v3142
    %v3203 = vpack.c.b16 %v3147, %v3145
    %v3204 = vpack.c.b16 %v3148, %v3146
    %v3205 = vpack.c.b16 %v3151, %v3149
    %v3206 = vpack.c.b16 %v3152, %v3150
    %v3207 = vpack.c.b16 %v3155, %v3153
    %v3208 = vpack.c.b16 %v3156, %v3154
    %v3209 = vpack.c.b16 %v3159, %v3157
    %v3210 = vpack.c.b16 %v3160, %v3158
    %v3211 = vpack.c.b16 %v3163, %v3161
    %v3212 = vpack.c.b16 %v3164, %v3162
    %v3213 = vpack.c.b16 %v3167, %v3165
    %v3214 = vpack.c.b16 %v3168, %v3166
    %v3215 = vpack.c.b16 %v3171, %v3169
    %v3216 = vpack.c.b16 %v3172, %v3170
    %v3217 = vpack.c.b16 %v3175, %v3173
    %v3218 = vpack.c.b16 %v3176, %v3174
    %v3219 = vpack.c.b16 %v3179, %v3177
    %v3220 = vpack.c.b16 %v3180, %v3178
    %v3221 = vpack.c.b16 %v3183, %v3181
    %v3222 = vpack.c.b16 %v3184, %v3182
    %v3223 = vpack.c.b16 %v3187, %v3185
    %v3224 = vpack.c.b16 %v3188, %v3186
    %v3262 = vsel %vm2077, %v1815, 0
    %3264 = vmatprep.subr.bf16.mxu0 %v3190
    %3265 = vmatpush1.bf16.msra.mxu0 %v3189
    %3266 = vmatprep.subr.bf16.mxu0 %v3192
    %3267 = vmatpush1.bf16.msra.mxu0 %v3191
    %3268 = vmatprep.subr.bf16.mxu0 %v3194
    %3269 = vmatpush1.bf16.msra.mxu0 %v3193
    %3270 = vmatprep.subr.bf16.mxu0 %v3196
    %3271 = vmatpush1.bf16.msra.mxu0 %v3195
    %3272 = vmatprep.subr.bf16.mxu0 %v3198
    %3273 = vmatpush1.bf16.msra.mxu0 %v3197
    %3274 = vmatprep.subr.bf16.mxu0 %v3200
    %3275 = vmatpush1.bf16.msra.mxu0 %v3199
    %3276 = vmatprep.subr.bf16.mxu0 %v3202
    %3277 = vmatpush1.bf16.msra.mxu0 %v3201
    %3278 = vmatprep.subr.bf16.mxu0 %v3204
    %3279 = vmatpush1.bf16.msra.mxu0 %v3203
    %3280 = vmatprep.subr.bf16.mxu0 %v3206
    %3281 = vmatpush1.bf16.msra.mxu0 %v3205
    %3282 = vmatprep.subr.bf16.mxu0 %v3208
    %3283 = vmatpush1.bf16.msra.mxu0 %v3207
    %3284 = vmatprep.subr.bf16.mxu0 %v3210
    %3285 = vmatpush1.bf16.msra.mxu0 %v3209
    %3286 = vmatprep.subr.bf16.mxu0 %v3212
    %3287 = vmatpush1.bf16.msra.mxu0 %v3211
    %3288 = vmatprep.subr.bf16.mxu0 %v3214
    %3289 = vmatpush1.bf16.msra.mxu0 %v3213
    %3290 = vmatprep.subr.bf16.mxu0 %v3216
    %3291 = vmatpush1.bf16.msra.mxu0 %v3215
    %3292 = vmatprep.subr.bf16.mxu0 %v3218
    %3293 = vmatpush1.bf16.msra.mxu0 %v3217
    %3294 = vmatprep.subr.bf16.mxu0 %v3220
    %3295 = vmatpush1.bf16.msra.mxu0 %v3219
    %3296 = vmatprep.mubr.bf16.mxu0 %v1814
    %3297 = vmatmul.mubr.bf16.gmra.mrb[0].mxu0 %v1813
    %v3298 = vpop.f32.mrb[0].mxu0
    %v3299 = vadd.f32 0.0, %v3298
    %v3300 = vpop.f32.mrb[0].mxu0
    %v3301 = vadd.f32 0.0, %v3300
    %v3302 = vpop.f32.mrb[0].mxu0
    %v3303 = vpop.f32.mrb[0].mxu0
    %3304 = vdwg.mxu0
    %3305 = vmatprep.subr.bf16.mxu0 %v3222
    %3306 = vmatpush1.bf16.msra.mxu0 %v3221
    %3307 = vmatprep.subr.bf16.mxu0 %v3224
    %3308 = vmatpush1.bf16.msra.mxu0 %v3223
    %3309 = vmatprep.subr.bf16.mxu0 0
    %3310 = vmatpush1.bf16.msra.mxu0 0
    %3311 = vmatprep.subr.bf16.mxu0 0
    %3312 = vmatpush1.bf16.msra.mxu0 0
    %3313 = vmatprep.subr.bf16.mxu0 0
    %3314 = vmatpush1.bf16.msra.mxu0 0
    %3315 = vmatprep.subr.bf16.mxu0 0
    %3316 = vmatpush1.bf16.msra.mxu0 0
    %3317 = vmatprep.subr.bf16.mxu0 0
    %3318 = vmatpush1.bf16.msra.mxu0 0
    %3319 = vmatprep.subr.bf16.mxu0 0
    %3320 = vmatpush1.bf16.msra.mxu0 0
    %3321 = vmatprep.subr.bf16.mxu0 0
    %3322 = vmatpush1.bf16.msra.mxu0 0
    %3323 = vmatprep.subr.bf16.mxu0 0
    %3324 = vmatpush1.bf16.msra.mxu0 0
    %3325 = vmatprep.subr.bf16.mxu0 0
    %3326 = vmatpush1.bf16.msra.mxu0 0
    %3327 = vmatprep.subr.bf16.mxu0 0
    %3328 = vmatpush1.bf16.msra.mxu0 0
    %3329 = vmatprep.subr.bf16.mxu0 0
    %3330 = vmatpush1.bf16.msra.mxu0 0
    %3331 = vmatprep.subr.bf16.mxu0 0
    %3332 = vmatpush1.bf16.msra.mxu0 0
    %3333 = vmatprep.subr.bf16.mxu0 0
    %3334 = vmatpush1.bf16.msra.mxu0 0
    %3335 = vmatprep.subr.bf16.mxu0 0
    %3336 = vmatpush1.bf16.msra.mxu0 0
    %3337 = vmatprep.mubr.bf16.mxu0 0
    %3338 = vmatmul.mubr.bf16.gmra.mrb[0].mxu0 %v3262
    %v3339 = vpop.f32.mrb[0].mxu0
    %v3340 = vadd.f32 %v3299, %v3339
    %v3341 = vpop.f32.mrb[0].mxu0
    %v3342 = vadd.f32 %v3301, %v3341
    %v3343 = vpop.f32.mrb[0].mxu0
    %v3344 = vpop.f32.mrb[0].mxu0
    %3345 = vdwg.mxu0
    %v3346 = vadd.f32 %v3042, %v3340
    %v3347 = vadd.f32 %v3043, %v3342
    %v3348 = vld [vmem:[%s6] sm:$0x3]
    %v3350 = vlaneseq
    %v3351 = vshrl.u32 %v3350, 7
    %v3352 = vsub.s32 0, %v3351
    %v3353 = vrot.slane %v3348, %v3352
    %v3354 = vlaneseq
    %v3355 = vshrl.u32 %v3354, 7
    %v3356 = vsub.s32 1, %v3355
    %v3357 = vrot.slane %v3348, %v3356
    %v3360 = vadd.f32 %v3346, %v3353
    %v3361 = vadd.f32 %v3347, %v3357
    %v3362 = vmax.f32 %v3360, 0.0
    %v3363 = vmax.f32 %v3361, 0.0
    %v3364 = vpack.c.bf16 %v3362, %v3362
    %v3365 = vpack.c.bf16 %v3363, %v3363
    %v3366 = vld [vmem:[%s7] sm:$0xf]
    %v3367 = vld [vmem:[%s7 + $0x4] sm:$0xf]
    %v3368 = vld [vmem:[%s7 + $0x8] sm:$0xf]
    %v3369 = vld [vmem:[%s7 + $0xc] sm:$0xf]
    %v3370 = vld [vmem:[%s7 + $0x10] sm:$0xf]
    %v3376 = vunpack.c.l.b16 %v3366
    %v3377 = vunpack.c.l.b16 %v3367
    %v3378 = vunpack.c.l.b16 %v3368
    %v3379 = vunpack.c.l.b16 %v3369
    %v3380 = vunpack.c.l.b16 %v3370
    %v3381 = vpack.c.b16 %v3377, %v3376
    %v3382 = vpack.c.b16 %v3379, %v3378
    %v3383 = vpack.c.b16 %v3380, %v3380
    %vm3384 = vcmask 64512
    %v3386 = vsel %vm3384, %v3381, 0
    %v3389 = vsel %vm3384, %v3382, 0
    %v3392 = vsel %vm3384, %v3383, 0
    %v3395 = vsel %vm141, %v3364, 0
    %v3398 = vsel %vm141, %v3365, 0
    %3400 = vmatprep.subr.bf16.mxu0 %v3398
    %3401 = vmatpush1.bf16.msra.mxu0 %v3395
    %3402 = vmatprep.subr.bf16.mxu0 0
    %3403 = vmatpush1.bf16.msra.mxu0 0
    %3404 = vmatprep.subr.bf16.mxu0 0
    %3405 = vmatpush1.bf16.msra.mxu0 0
    %3406 = vmatprep.subr.bf16.mxu0 0
    %3407 = vmatpush1.bf16.msra.mxu0 0
    %3408 = vmatprep.subr.bf16.mxu0 0
    %3409 = vmatpush1.bf16.msra.mxu0 0
    %3410 = vmatprep.subr.bf16.mxu0 0
    %3411 = vmatpush1.bf16.msra.mxu0 0
    %3412 = vmatprep.subr.bf16.mxu0 0
    %3413 = vmatpush1.bf16.msra.mxu0 0
    %3414 = vmatprep.subr.bf16.mxu0 0
    %3415 = vmatpush1.bf16.msra.mxu0 0
    %3416 = vmatprep.subr.bf16.mxu0 0
    %3417 = vmatpush1.bf16.msra.mxu0 0
    %3418 = vmatprep.subr.bf16.mxu0 0
    %3419 = vmatpush1.bf16.msra.mxu0 0
    %3420 = vmatprep.subr.bf16.mxu0 0
    %3421 = vmatpush1.bf16.msra.mxu0 0
    %3422 = vmatprep.subr.bf16.mxu0 0
    %3423 = vmatpush1.bf16.msra.mxu0 0
    %3424 = vmatprep.subr.bf16.mxu0 0
    %3425 = vmatpush1.bf16.msra.mxu0 0
    %3426 = vmatprep.subr.bf16.mxu0 0
    %3427 = vmatpush1.bf16.msra.mxu0 0
    %3428 = vmatprep.subr.bf16.mxu0 0
    %3429 = vmatpush1.bf16.msra.mxu0 0
    %3430 = vmatprep.subr.bf16.mxu0 0
    %3431 = vmatpush1.bf16.msra.mxu0 0
    %3432 = vmatprep.mubr.bf16.mxu0 0
    %3433 = vmatmul.mubr.bf16.gmra.mrb[0].mxu0 %v3386
    %v3434 = vpop.f32.mrb[0].mxu0
    %v3435 = vadd.f32 0.0, %v3434
    %v3436 = vpop.f32.mrb[0].mxu0
    %v3437 = vadd.f32 0.0, %v3436
    %v3438 = vpop.f32.mrb[0].mxu0
    %v3439 = vadd.f32 0.0, %v3438
    %v3440 = vpop.f32.mrb[0].mxu0
    %v3441 = vadd.f32 0.0, %v3440
    %3442 = vmatprep.mubr.bf16.mxu0 0
    %3443 = vmatmul.mubr.bf16.gmra.mrb[0].mxu0 %v3389
    %v3444 = vpop.f32.mrb[0].mxu0
    %v3445 = vadd.f32 0.0, %v3444
    %v3446 = vpop.f32.mrb[0].mxu0
    %v3447 = vadd.f32 0.0, %v3446
    %v3448 = vpop.f32.mrb[0].mxu0
    %v3449 = vadd.f32 0.0, %v3448
    %v3450 = vpop.f32.mrb[0].mxu0
    %v3451 = vadd.f32 0.0, %v3450
    %3452 = vmatprep.mubr.bf16.mxu0 0
    %3453 = vmatmul.mubr.bf16.gmra.mrb[0].mxu0 %v3392
    %v3454 = vpop.f32.mrb[0].mxu0
    %v3455 = vadd.f32 0.0, %v3454
    %v3456 = vpop.f32.mrb[0].mxu0
    %v3457 = vadd.f32 0.0, %v3456
    %v3458 = vpop.f32.mrb[0].mxu0
    %v3459 = vpop.f32.mrb[0].mxu0
    %3460 = vdwg.mxu0
    %v3461 = vpack.c.bf16 %v3439, %v3435
    %v3462 = vpack.c.bf16 %v3441, %v3437
    %v3463 = vpack.c.bf16 %v3449, %v3445
    %v3464 = vpack.c.bf16 %v3451, %v3447
    %v3465 = vpack.c.bf16 %v3455, %v3455
    %v3466 = vpack.c.bf16 %v3457, %v3457
    %v3467 = vld [vmem:[%s8] sm:$0xf]
    %v3468 = vld [vmem:[%s8 + $0x4] sm:$0xf]
    %v3469 = vld [vmem:[%s8 + $0x8] sm:$0xf]
    %v3470 = vld [vmem:[%s8 + $0xc] sm:$0xf]
    %v3471 = vld [vmem:[%s8 + $0x10] sm:$0xf]
    %v3472 = vld [vmem:[%s8 + $0x14] sm:$0xf]
    %v3473 = vld [vmem:[%s8 + $0x18] sm:$0xf]
    %v3474 = vld [vmem:[%s8 + $0x1c] sm:$0xf]
    %v3475 = vld [vmem:[%s8 + $0x20] sm:$0xf]
    %v3476 = vld [vmem:[%s8 + $0x24] sm:$0xf]
    %v3477 = vld [vmem:[%s8 + $0x28] sm:$0xf]
    %v3478 = vld [vmem:[%s8 + $0x2c] sm:$0xf]
    %v3479 = vld [vmem:[%s8 + $0x30] sm:$0xf]
    %v3480 = vld [vmem:[%s8 + $0x34] sm:$0xf]
    %v3481 = vld [vmem:[%s8 + $0x38] sm:$0xf]
    %v3482 = vld [vmem:[%s8 + $0x3c] sm:$0xf]
    %v3483 = vld [vmem:[%s8 + $0x40] sm:$0xf]
    %v3484 = vld [vmem:[%s8 + $0x44] sm:$0xf]
    %v3485 = vld [vmem:[%s8 + $0x48] sm:$0xf]
    %v3486 = vld [vmem:[%s8 + $0x4c] sm:$0xf]
    %v3487 = vld [vmem:[%s8 + $0x50] sm:$0xf]
    %v3488 = vld [vmem:[%s8 + $0x54] sm:$0xf]
    %v3489 = vld [vmem:[%s8 + $0x58] sm:$0xf]
    %v3490 = vld [vmem:[%s8 + $0x5c] sm:$0xf]
    %v3491 = vld [vmem:[%s8 + $0x60] sm:$0xf]
    %v3492 = vld [vmem:[%s8 + $0x64] sm:$0xf]
    %v3493 = vld [vmem:[%s8 + $0x68] sm:$0xf]
    %v3494 = vld [vmem:[%s8 + $0x6c] sm:$0xf]
    %s3495 = scalar_lea.vmem %s8, 112
    %v3496 = vld [vmem:[%s3495] sm:$0xf]
    %v3497 = vld [vmem:[%s3495 + $0x4] sm:$0xf]
    %v3498 = vld [vmem:[%s3495 + $0x8] sm:$0xf]
    %v3499 = vld [vmem:[%s3495 + $0xc] sm:$0xf]
    %v3500 = vld [vmem:[%s3495 + $0x10] sm:$0xf]
    %v3501 = vld [vmem:[%s3495 + $0x14] sm:$0xf]
    %v3502 = vld [vmem:[%s3495 + $0x18] sm:$0xf]
    %v3503 = vld [vmem:[%s3495 + $0x1c] sm:$0xf]
    %v3504 = vld [vmem:[%s3495 + $0x20] sm:$0xf]
    %v3505 = vld [vmem:[%s3495 + $0x24] sm:$0xf]
    %v3506 = vld [vmem:[%s3495 + $0x28] sm:$0xf]
    %v3507 = vld [vmem:[%s3495 + $0x2c] sm:$0xf]
    %v3508 = vld [vmem:[%s3495 + $0x30] sm:$0xf]
    %v3509 = vld [vmem:[%s3495 + $0x34] sm:$0xf]
    %v3510 = vld [vmem:[%s3495 + $0x38] sm:$0xf]
    %v3511 = vld [vmem:[%s3495 + $0x3c] sm:$0xf]
    %v3512 = vld [vmem:[%s3495 + $0x40] sm:$0xf]
    %v3513 = vld [vmem:[%s3495 + $0x44] sm:$0xf]
    %v3514 = vld [vmem:[%s3495 + $0x48] sm:$0xf]
    %v3515 = vld [vmem:[%s3495 + $0x4c] sm:$0xf]
    %v3516 = vld [vmem:[%s3495 + $0x50] sm:$0xf]
    %v3517 = vld [vmem:[%s3495 + $0x54] sm:$0xf]
    %v3518 = vld [vmem:[%s3495 + $0x58] sm:$0xf]
    %v3519 = vld [vmem:[%s3495 + $0x5c] sm:$0xf]
    %v3520 = vld [vmem:[%s3495 + $0x60] sm:$0xf]
    %v3521 = vld [vmem:[%s3495 + $0x64] sm:$0xf]
    %v3522 = vld [vmem:[%s3495 + $0x68] sm:$0xf]
    %v3523 = vld [vmem:[%s3495 + $0x6c] sm:$0xf]
    %v3526 = vrot.slane %v3461, 4
    %v3527 = vrot.slane %v3462, 4
    %v3557 = vunpack.c.l.b16 %v3496
    %v3558 = vunpack.c.l.b16 %v3497
    %v3559 = vunpack.c.l.b16 %v3498
    %v3560 = vunpack.c.l.b16 %v3499
    %v3561 = vunpack.c.l.b16 %v3500
    %v3562 = vunpack.c.l.b16 %v3501
    %v3563 = vunpack.c.l.b16 %v3502
    %v3564 = vunpack.c.l.b16 %v3503
    %v3565 = vunpack.c.l.b16 %v3504
    %v3566 = vunpack.c.l.b16 %v3505
    %v3567 = vunpack.c.l.b16 %v3506
    %v3568 = vunpack.c.l.b16 %v3507
    %v3569 = vunpack.c.l.b16 %v3508
    %v3570 = vunpack.c.l.b16 %v3509
    %v3571 = vunpack.c.l.b16 %v3510
    %v3572 = vunpack.c.l.b16 %v3511
    %v3573 = vunpack.c.l.b16 %v3512
    %v3574 = vunpack.c.l.b16 %v3513
    %v3575 = vunpack.c.l.b16 %v3514
    %v3576 = vunpack.c.l.b16 %v3515
    %v3577 = vunpack.c.l.b16 %v3516
    %v3578 = vunpack.c.l.b16 %v3517
    %v3579 = vunpack.c.l.b16 %v3518
    %v3580 = vunpack.c.l.b16 %v3519
    %v3581 = vunpack.c.l.b16 %v3520
    %v3582 = vunpack.c.l.b16 %v3521
    %v3583 = vunpack.c.l.b16 %v3522
    %v3584 = vunpack.c.l.b16 %v3523
    %v3585 = vpack.c.b16 %v3558, %v3557
    %v3586 = vpack.c.b16 %v3560, %v3559
    %v3587 = vpack.c.b16 %v3562, %v3561
    %v3588 = vpack.c.b16 %v3564, %v3563
    %v3589 = vpack.c.b16 %v3566, %v3565
    %v3590 = vpack.c.b16 %v3568, %v3567
    %v3591 = vpack.c.b16 %v3570, %v3569
    %v3592 = vpack.c.b16 %v3572, %v3571
    %v3593 = vpack.c.b16 %v3574, %v3573
    %v3594 = vpack.c.b16 %v3576, %v3575
    %v3595 = vpack.c.b16 %v3578, %v3577
    %v3596 = vpack.c.b16 %v3580, %v3579
    %v3597 = vpack.c.b16 %v3582, %v3581
    %v3598 = vpack.c.b16 %v3584, %v3583
    %vm3613 = vcmask 785408
    %v3615 = vsel %vm3613, %v3527, 0
    %3617 = vmatprep.subr.bf16.mxu0 0
    %3618 = vmatpush1.bf16.msra.mxu0 %v3585
    %3619 = vmatprep.subr.bf16.mxu0 0
    %3620 = vmatpush1.bf16.msra.mxu0 %v3586
    %3621 = vmatprep.subr.bf16.mxu0 0
    %3622 = vmatpush1.bf16.msra.mxu0 %v3587
    %3623 = vmatprep.subr.bf16.mxu0 0
    %3624 = vmatpush1.bf16.msra.mxu0 %v3588
    %3625 = vmatprep.subr.bf16.mxu0 0
    %3626 = vmatpush1.bf16.msra.mxu0 %v3589
    %3627 = vmatprep.subr.bf16.mxu0 0
    %3628 = vmatpush1.bf16.msra.mxu0 %v3590
    %3629 = vmatprep.subr.bf16.mxu0 0
    %3630 = vmatpush1.bf16.msra.mxu0 %v3591
    %3631 = vmatprep.subr.bf16.mxu0 0
    %3632 = vmatpush1.bf16.msra.mxu0 %v3592
    %3633 = vmatprep.subr.bf16.mxu0 0
    %3634 = vmatpush1.bf16.msra.mxu0 %v3593
    %3635 = vmatprep.subr.bf16.mxu0 0
    %3636 = vmatpush1.bf16.msra.mxu0 %v3594
    %3637 = vmatprep.subr.bf16.mxu0 0
    %3638 = vmatpush1.bf16.msra.mxu0 %v3595
    %3639 = vmatprep.subr.bf16.mxu0 0
    %3640 = vmatpush1.bf16.msra.mxu0 %v3596
    %3641 = vmatprep.subr.bf16.mxu0 0
    %3642 = vmatpush1.bf16.msra.mxu0 %v3597
    %3643 = vmatprep.subr.bf16.mxu0 0
    %3644 = vmatpush1.bf16.msra.mxu0 %v3598
    %3645 = vmatprep.subr.bf16.mxu0 0
    %3646 = vmatpush1.bf16.msra.mxu0 0
    %3647 = vmatprep.subr.bf16.mxu0 0
    %3648 = vmatpush1.bf16.msra.mxu0 0
    %3649 = vmatprep.mubr.bf16.mxu0 %v3615
    %3650 = vmatmul.mubr.bf16.gmra.mrb[0].mxu0 %v3526
    %v3651 = vpop.f32.mrb[0].mxu0
    %v3652 = vadd.f32 0.0, %v3651
    %v3653 = vpop.f32.mrb[0].mxu0
    %v3654 = vpop.f32.mrb[0].mxu0
    %v3655 = vpop.f32.mrb[0].mxu0
    %3656 = vdwg.mxu0
    %v3685 = vunpack.c.l.b16 %v3467
    %v3686 = vunpack.c.l.b16 %v3468
    %v3687 = vunpack.c.l.b16 %v3469
    %v3688 = vunpack.c.l.b16 %v3470
    %v3689 = vunpack.c.l.b16 %v3471
    %v3690 = vunpack.c.l.b16 %v3472
    %v3691 = vunpack.c.l.b16 %v3473
    %v3692 = vunpack.c.l.b16 %v3474
    %v3693 = vunpack.c.l.b16 %v3475
    %v3694 = vunpack.c.l.b16 %v3476
    %v3695 = vunpack.c.l.b16 %v3477
    %v3696 = vunpack.c.l.b16 %v3478
    %v3697 = vunpack.c.l.b16 %v3479
    %v3698 = vunpack.c.l.b16 %v3480
    %v3699 = vunpack.c.l.b16 %v3481
    %v3700 = vunpack.c.l.b16 %v3482
    %v3701 = vunpack.c.l.b16 %v3483
    %v3702 = vunpack.c.l.b16 %v3484
    %v3703 = vunpack.c.l.b16 %v3485
    %v3704 = vunpack.c.l.b16 %v3486
    %v3705 = vunpack.c.l.b16 %v3487
    %v3706 = vunpack.c.l.b16 %v3488
    %v3707 = vunpack.c.l.b16 %v3489
    %v3708 = vunpack.c.l.b16 %v3490
    %v3709 = vunpack.c.l.b16 %v3491
    %v3710 = vunpack.c.l.b16 %v3492
    %v3711 = vunpack.c.l.b16 %v3493
    %v3712 = vunpack.c.l.b16 %v3494
    %v3713 = vpack.c.b16 %v3686, %v3685
    %v3714 = vpack.c.b16 %v3688, %v3687
    %v3715 = vpack.c.b16 %v3690, %v3689
    %v3716 = vpack.c.b16 %v3692, %v3691
    %v3717 = vpack.c.b16 %v3694, %v3693
    %v3718 = vpack.c.b16 %v3696, %v3695
    %v3719 = vpack.c.b16 %v3698, %v3697
    %v3720 = vpack.c.b16 %v3700, %v3699
    %v3721 = vpack.c.b16 %v3702, %v3701
    %v3722 = vpack.c.b16 %v3704, %v3703
    %v3723 = vpack.c.b16 %v3706, %v3705
    %v3724 = vpack.c.b16 %v3708, %v3707
    %v3725 = vpack.c.b16 %v3710, %v3709
    %v3726 = vpack.c.b16 %v3712, %v3711
    %v3742 = vsel %vm3613, %v3462, 0
    %3744 = vmatprep.subr.bf16.mxu0 0
    %3745 = vmatpush1.bf16.msra.mxu0 %v3713
    %3746 = vmatprep.subr.bf16.mxu0 0
    %3747 = vmatpush1.bf16.msra.mxu0 %v3714
    %3748 = vmatprep.subr.bf16.mxu0 0
    %3749 = vmatpush1.bf16.msra.mxu0 %v3715
    %3750 = vmatprep.subr.bf16.mxu0 0
    %3751 = vmatpush1.bf16.msra.mxu0 %v3716
    %3752 = vmatprep.subr.bf16.mxu0 0
    %3753 = vmatpush1.bf16.msra.mxu0 %v3717
    %3754 = vmatprep.subr.bf16.mxu0 0
    %3755 = vmatpush1.bf16.msra.mxu0 %v3718
    %3756 = vmatprep.subr.bf16.mxu0 0
    %3757 = vmatpush1.bf16.msra.mxu0 %v3719
    %3758 = vmatprep.subr.bf16.mxu0 0
    %3759 = vmatpush1.bf16.msra.mxu0 %v3720
    %3760 = vmatprep.subr.bf16.mxu0 0
    %3761 = vmatpush1.bf16.msra.mxu0 %v3721
    %3762 = vmatprep.subr.bf16.mxu0 0
    %3763 = vmatpush1.bf16.msra.mxu0 %v3722
    %3764 = vmatprep.subr.bf16.mxu0 0
    %3765 = vmatpush1.bf16.msra.mxu0 %v3723
    %3766 = vmatprep.subr.bf16.mxu0 0
    %3767 = vmatpush1.bf16.msra.mxu0 %v3724
    %3768 = vmatprep.subr.bf16.mxu0 0
    %3769 = vmatpush1.bf16.msra.mxu0 %v3725
    %3770 = vmatprep.subr.bf16.mxu0 0
    %3771 = vmatpush1.bf16.msra.mxu0 %v3726
    %3772 = vmatprep.subr.bf16.mxu0 0
    %3773 = vmatpush1.bf16.msra.mxu0 0
    %3774 = vmatprep.subr.bf16.mxu0 0
    %3775 = vmatpush1.bf16.msra.mxu0 0
    %3776 = vmatprep.mubr.bf16.mxu0 %v3742
    %3777 = vmatmul.mubr.bf16.gmra.mrb[0].mxu0 %v3461
    %v3778 = vpop.f32.mrb[0].mxu0
    %v3779 = vadd.f32 %v3652, %v3778
    %v3780 = vpop.f32.mrb[0].mxu0
    %v3781 = vpop.f32.mrb[0].mxu0
    %v3782 = vpop.f32.mrb[0].mxu0
    %3783 = vdwg.mxu0
    %s3784 = scalar_lea.vmem %s8, 224
    %v3785 = vld [vmem:[%s3784] sm:$0xf]
    %v3786 = vld [vmem:[%s3784 + $0x4] sm:$0xf]
    %v3787 = vld [vmem:[%s3784 + $0x8] sm:$0xf]
    %v3788 = vld [vmem:[%s3784 + $0xc] sm:$0xf]
    %v3789 = vld [vmem:[%s3784 + $0x10] sm:$0xf]
    %v3790 = vld [vmem:[%s3784 + $0x14] sm:$0xf]
    %v3791 = vld [vmem:[%s3784 + $0x18] sm:$0xf]
    %v3792 = vld [vmem:[%s3784 + $0x1c] sm:$0xf]
    %v3793 = vld [vmem:[%s3784 + $0x20] sm:$0xf]
    %v3794 = vld [vmem:[%s3784 + $0x24] sm:$0xf]
    %v3795 = vld [vmem:[%s3784 + $0x28] sm:$0xf]
    %v3796 = vld [vmem:[%s3784 + $0x2c] sm:$0xf]
    %v3797 = vld [vmem:[%s3784 + $0x30] sm:$0xf]
    %v3798 = vld [vmem:[%s3784 + $0x34] sm:$0xf]
    %v3799 = vld [vmem:[%s3784 + $0x38] sm:$0xf]
    %v3800 = vld [vmem:[%s3784 + $0x3c] sm:$0xf]
    %v3801 = vld [vmem:[%s3784 + $0x40] sm:$0xf]
    %v3802 = vld [vmem:[%s3784 + $0x44] sm:$0xf]
    %v3803 = vld [vmem:[%s3784 + $0x48] sm:$0xf]
    %v3804 = vld [vmem:[%s3784 + $0x4c] sm:$0xf]
    %v3805 = vld [vmem:[%s3784 + $0x50] sm:$0xf]
    %v3806 = vld [vmem:[%s3784 + $0x54] sm:$0xf]
    %v3807 = vld [vmem:[%s3784 + $0x58] sm:$0xf]
    %v3808 = vld [vmem:[%s3784 + $0x5c] sm:$0xf]
    %v3809 = vld [vmem:[%s3784 + $0x60] sm:$0xf]
    %v3810 = vld [vmem:[%s3784 + $0x64] sm:$0xf]
    %v3811 = vld [vmem:[%s3784 + $0x68] sm:$0xf]
    %v3812 = vld [vmem:[%s3784 + $0x6c] sm:$0xf]
    %v3841 = vunpack.c.l.b16 %v3785
    %v3842 = vunpack.c.l.b16 %v3786
    %v3843 = vunpack.c.l.b16 %v3787
    %v3844 = vunpack.c.l.b16 %v3788
    %v3845 = vunpack.c.l.b16 %v3789
    %v3846 = vunpack.c.l.b16 %v3790
    %v3847 = vunpack.c.l.b16 %v3791
    %v3848 = vunpack.c.l.b16 %v3792
    %v3849 = vunpack.c.l.b16 %v3793
    %v3850 = vunpack.c.l.b16 %v3794
    %v3851 = vunpack.c.l.b16 %v3795
    %v3852 = vunpack.c.l.b16 %v3796
    %v3853 = vunpack.c.l.b16 %v3797
    %v3854 = vunpack.c.l.b16 %v3798
    %v3855 = vunpack.c.l.b16 %v3799
    %v3856 = vunpack.c.l.b16 %v3800
    %v3857 = vunpack.c.l.b16 %v3801
    %v3858 = vunpack.c.l.b16 %v3802
    %v3859 = vunpack.c.l.b16 %v3803
    %v3860 = vunpack.c.l.b16 %v3804
    %v3861 = vunpack.c.l.b16 %v3805
    %v3862 = vunpack.c.l.b16 %v3806
    %v3863 = vunpack.c.l.b16 %v3807
    %v3864 = vunpack.c.l.b16 %v3808
    %v3865 = vunpack.c.l.b16 %v3809
    %v3866 = vunpack.c.l.b16 %v3810
    %v3867 = vunpack.c.l.b16 %v3811
    %v3868 = vunpack.c.l.b16 %v3812
    %v3869 = vpack.c.b16 %v3842, %v3841
    %v3870 = vpack.c.b16 %v3844, %v3843
    %v3871 = vpack.c.b16 %v3846, %v3845
    %v3872 = vpack.c.b16 %v3848, %v3847
    %v3873 = vpack.c.b16 %v3850, %v3849
    %v3874 = vpack.c.b16 %v3852, %v3851
    %v3875 = vpack.c.b16 %v3854, %v3853
    %v3876 = vpack.c.b16 %v3856, %v3855
    %v3877 = vpack.c.b16 %v3858, %v3857
    %v3878 = vpack.c.b16 %v3860, %v3859
    %v3879 = vpack.c.b16 %v3862, %v3861
    %v3880 = vpack.c.b16 %v3864, %v3863
    %v3881 = vpack.c.b16 %v3866, %v3865
    %v3882 = vpack.c.b16 %v3868, %v3867
    %v3898 = vsel %vm3613, %v3464, 0
    %3900 = vmatprep.subr.bf16.mxu0 0
    %3901 = vmatpush1.bf16.msra.mxu0 %v3869
    %3902 = vmatprep.subr.bf16.mxu0 0
    %3903 = vmatpush1.bf16.msra.mxu0 %v3870
    %3904 = vmatprep.subr.bf16.mxu0 0
    %3905 = vmatpush1.bf16.msra.mxu0 %v3871
    %3906 = vmatprep.subr.bf16.mxu0 0
    %3907 = vmatpush1.bf16.msra.mxu0 %v3872
    %3908 = vmatprep.subr.bf16.mxu0 0
    %3909 = vmatpush1.bf16.msra.mxu0 %v3873
    %3910 = vmatprep.subr.bf16.mxu0 0
    %3911 = vmatpush1.bf16.msra.mxu0 %v3874
    %3912 = vmatprep.subr.bf16.mxu0 0
    %3913 = vmatpush1.bf16.msra.mxu0 %v3875
    %3914 = vmatprep.subr.bf16.mxu0 0
    %3915 = vmatpush1.bf16.msra.mxu0 %v3876
    %3916 = vmatprep.subr.bf16.mxu0 0
    %3917 = vmatpush1.bf16.msra.mxu0 %v3877
    %3918 = vmatprep.subr.bf16.mxu0 0
    %3919 = vmatpush1.bf16.msra.mxu0 %v3878
    %3920 = vmatprep.subr.bf16.mxu0 0
    %3921 = vmatpush1.bf16.msra.mxu0 %v3879
    %3922 = vmatprep.subr.bf16.mxu0 0
    %3923 = vmatpush1.bf16.msra.mxu0 %v3880
    %3924 = vmatprep.subr.bf16.mxu0 0
    %3925 = vmatpush1.bf16.msra.mxu0 %v3881
    %3926 = vmatprep.subr.bf16.mxu0 0
    %3927 = vmatpush1.bf16.msra.mxu0 %v3882
    %3928 = vmatprep.subr.bf16.mxu0 0
    %3929 = vmatpush1.bf16.msra.mxu0 0
    %3930 = vmatprep.subr.bf16.mxu0 0
    %3931 = vmatpush1.bf16.msra.mxu0 0
    %3932 = vmatprep.mubr.bf16.mxu0 %v3898
    %3933 = vmatmul.mubr.bf16.gmra.mrb[0].mxu0 %v3463
    %v3934 = vpop.f32.mrb[0].mxu0
    %v3935 = vadd.f32 0.0, %v3934
    %v3936 = vpop.f32.mrb[0].mxu0
    %v3937 = vpop.f32.mrb[0].mxu0
    %v3938 = vpop.f32.mrb[0].mxu0
    %3939 = vdwg.mxu0
    %v3940 = vadd.f32 %v3779, %v3935
    %s3941 = scalar_lea.vmem %s8, 336
    %v3942 = vld [vmem:[%s3941] sm:$0xf]
    %v3943 = vld [vmem:[%s3941 + $0x4] sm:$0xf]
    %v3944 = vld [vmem:[%s3941 + $0x8] sm:$0xf]
    %v3945 = vld [vmem:[%s3941 + $0xc] sm:$0xf]
    %v3946 = vld [vmem:[%s3941 + $0x10] sm:$0xf]
    %v3947 = vld [vmem:[%s3941 + $0x14] sm:$0xf]
    %v3948 = vld [vmem:[%s3941 + $0x18] sm:$0xf]
    %v3949 = vld [vmem:[%s3941 + $0x1c] sm:$0xf]
    %v3950 = vld [vmem:[%s3941 + $0x20] sm:$0xf]
    %v3951 = vld [vmem:[%s3941 + $0x24] sm:$0xf]
    %v3952 = vld [vmem:[%s3941 + $0x28] sm:$0xf]
    %v3953 = vld [vmem:[%s3941 + $0x2c] sm:$0xf]
    %v3954 = vld [vmem:[%s3941 + $0x30] sm:$0xf]
    %v3955 = vld [vmem:[%s3941 + $0x34] sm:$0xf]
    %v3956 = vld [vmem:[%s3941 + $0x38] sm:$0xf]
    %v3957 = vld [vmem:[%s3941 + $0x3c] sm:$0xf]
    %v3958 = vld [vmem:[%s3941 + $0x40] sm:$0xf]
    %v3959 = vld [vmem:[%s3941 + $0x44] sm:$0xf]
    %v3960 = vld [vmem:[%s3941 + $0x48] sm:$0xf]
    %v3961 = vld [vmem:[%s3941 + $0x4c] sm:$0xf]
    %v3962 = vld [vmem:[%s3941 + $0x50] sm:$0xf]
    %v3963 = vld [vmem:[%s3941 + $0x54] sm:$0xf]
    %v3964 = vld [vmem:[%s3941 + $0x58] sm:$0xf]
    %v3965 = vld [vmem:[%s3941 + $0x5c] sm:$0xf]
    %v3966 = vld [vmem:[%s3941 + $0x60] sm:$0xf]
    %v3967 = vld [vmem:[%s3941 + $0x64] sm:$0xf]
    %v3968 = vld [vmem:[%s3941 + $0x68] sm:$0xf]
    %v3969 = vld [vmem:[%s3941 + $0x6c] sm:$0xf]
    %v3972 = vrot.slane %v3463, 4
    %v3973 = vrot.slane %v3464, 4
    %v4003 = vunpack.c.l.b16 %v3942
    %v4004 = vunpack.c.l.b16 %v3943
    %v4005 = vunpack.c.l.b16 %v3944
    %v4006 = vunpack.c.l.b16 %v3945
    %v4007 = vunpack.c.l.b16 %v3946
    %v4008 = vunpack.c.l.b16 %v3947
    %v4009 = vunpack.c.l.b16 %v3948
    %v4010 = vunpack.c.l.b16 %v3949
    %v4011 = vunpack.c.l.b16 %v3950
    %v4012 = vunpack.c.l.b16 %v3951
    %v4013 = vunpack.c.l.b16 %v3952
    %v4014 = vunpack.c.l.b16 %v3953
    %v4015 = vunpack.c.l.b16 %v3954
    %v4016 = vunpack.c.l.b16 %v3955
    %v4017 = vunpack.c.l.b16 %v3956
    %v4018 = vunpack.c.l.b16 %v3957
    %v4019 = vunpack.c.l.b16 %v3958
    %v4020 = vunpack.c.l.b16 %v3959
    %v4021 = vunpack.c.l.b16 %v3960
    %v4022 = vunpack.c.l.b16 %v3961
    %v4023 = vunpack.c.l.b16 %v3962
    %v4024 = vunpack.c.l.b16 %v3963
    %v4025 = vunpack.c.l.b16 %v3964
    %v4026 = vunpack.c.l.b16 %v3965
    %v4027 = vunpack.c.l.b16 %v3966
    %v4028 = vunpack.c.l.b16 %v3967
    %v4029 = vunpack.c.l.b16 %v3968
    %v4030 = vunpack.c.l.b16 %v3969
    %v4031 = vpack.c.b16 %v4004, %v4003
    %v4032 = vpack.c.b16 %v4006, %v4005
    %v4033 = vpack.c.b16 %v4008, %v4007
    %v4034 = vpack.c.b16 %v4010, %v4009
    %v4035 = vpack.c.b16 %v4012, %v4011
    %v4036 = vpack.c.b16 %v4014, %v4013
    %v4037 = vpack.c.b16 %v4016, %v4015
    %v4038 = vpack.c.b16 %v4018, %v4017
    %v4039 = vpack.c.b16 %v4020, %v4019
    %v4040 = vpack.c.b16 %v4022, %v4021
    %v4041 = vpack.c.b16 %v4024, %v4023
    %v4042 = vpack.c.b16 %v4026, %v4025
    %v4043 = vpack.c.b16 %v4028, %v4027
    %v4044 = vpack.c.b16 %v4030, %v4029
    %v4060 = vsel %vm3613, %v3973, 0
    %4062 = vmatprep.subr.bf16.mxu0 0
    %4063 = vmatpush1.bf16.msra.mxu0 %v4031
    %4064 = vmatprep.subr.bf16.mxu0 0
    %4065 = vmatpush1.bf16.msra.mxu0 %v4032
    %4066 = vmatprep.subr.bf16.mxu0 0
    %4067 = vmatpush1.bf16.msra.mxu0 %v4033
    %4068 = vmatprep.subr.bf16.mxu0 0
    %4069 = vmatpush1.bf16.msra.mxu0 %v4034
    %4070 = vmatprep.subr.bf16.mxu0 0
    %4071 = vmatpush1.bf16.msra.mxu0 %v4035
    %4072 = vmatprep.subr.bf16.mxu0 0
    %4073 = vmatpush1.bf16.msra.mxu0 %v4036
    %4074 = vmatprep.subr.bf16.mxu0 0
    %4075 = vmatpush1.bf16.msra.mxu0 %v4037
    %4076 = vmatprep.subr.bf16.mxu0 0
    %4077 = vmatpush1.bf16.msra.mxu0 %v4038
    %4078 = vmatprep.subr.bf16.mxu0 0
    %4079 = vmatpush1.bf16.msra.mxu0 %v4039
    %4080 = vmatprep.subr.bf16.mxu0 0
    %4081 = vmatpush1.bf16.msra.mxu0 %v4040
    %4082 = vmatprep.subr.bf16.mxu0 0
    %4083 = vmatpush1.bf16.msra.mxu0 %v4041
    %4084 = vmatprep.subr.bf16.mxu0 0
    %4085 = vmatpush1.bf16.msra.mxu0 %v4042
    %4086 = vmatprep.subr.bf16.mxu0 0
    %4087 = vmatpush1.bf16.msra.mxu0 %v4043
    %4088 = vmatprep.subr.bf16.mxu0 0
    %4089 = vmatpush1.bf16.msra.mxu0 %v4044
    %4090 = vmatprep.subr.bf16.mxu0 0
    %4091 = vmatpush1.bf16.msra.mxu0 0
    %4092 = vmatprep.subr.bf16.mxu0 0
    %4093 = vmatpush1.bf16.msra.mxu0 0
    %4094 = vmatprep.mubr.bf16.mxu0 %v4060
    %4095 = vmatmul.mubr.bf16.gmra.mrb[0].mxu0 %v3972
    %v4096 = vpop.f32.mrb[0].mxu0
    %v4097 = vadd.f32 0.0, %v4096
    %v4098 = vpop.f32.mrb[0].mxu0
    %v4099 = vpop.f32.mrb[0].mxu0
    %v4100 = vpop.f32.mrb[0].mxu0
    %4101 = vdwg.mxu0
    %v4102 = vadd.f32 %v3940, %v4097
    %s4103 = scalar_lea.vmem %s8, 448
    %v4104 = vld [vmem:[%s4103] sm:$0xf]
    %v4105 = vld [vmem:[%s4103 + $0x4] sm:$0xf]
    %v4106 = vld [vmem:[%s4103 + $0x8] sm:$0xf]
    %v4107 = vld [vmem:[%s4103 + $0xc] sm:$0xf]
    %v4108 = vld [vmem:[%s4103 + $0x10] sm:$0xf]
    %v4109 = vld [vmem:[%s4103 + $0x14] sm:$0xf]
    %v4110 = vld [vmem:[%s4103 + $0x18] sm:$0xf]
    %v4111 = vld [vmem:[%s4103 + $0x1c] sm:$0xf]
    %v4112 = vld [vmem:[%s4103 + $0x20] sm:$0xf]
    %v4113 = vld [vmem:[%s4103 + $0x24] sm:$0xf]
    %v4114 = vld [vmem:[%s4103 + $0x28] sm:$0xf]
    %v4115 = vld [vmem:[%s4103 + $0x2c] sm:$0xf]
    %v4116 = vld [vmem:[%s4103 + $0x30] sm:$0xf]
    %v4117 = vld [vmem:[%s4103 + $0x34] sm:$0xf]
    %v4118 = vld [vmem:[%s4103 + $0x38] sm:$0xf]
    %v4119 = vld [vmem:[%s4103 + $0x3c] sm:$0xf]
    %v4120 = vld [vmem:[%s4103 + $0x40] sm:$0xf]
    %v4121 = vld [vmem:[%s4103 + $0x44] sm:$0xf]
    %v4122 = vld [vmem:[%s4103 + $0x48] sm:$0xf]
    %v4123 = vld [vmem:[%s4103 + $0x4c] sm:$0xf]
    %v4124 = vld [vmem:[%s4103 + $0x50] sm:$0xf]
    %v4125 = vld [vmem:[%s4103 + $0x54] sm:$0xf]
    %v4126 = vld [vmem:[%s4103 + $0x58] sm:$0xf]
    %v4127 = vld [vmem:[%s4103 + $0x5c] sm:$0xf]
    %v4128 = vld [vmem:[%s4103 + $0x60] sm:$0xf]
    %v4129 = vld [vmem:[%s4103 + $0x64] sm:$0xf]
    %v4130 = vld [vmem:[%s4103 + $0x68] sm:$0xf]
    %v4131 = vld [vmem:[%s4103 + $0x6c] sm:$0xf]
    %v4160 = vunpack.c.l.b16 %v4104
    %v4161 = vunpack.c.l.b16 %v4105
    %v4162 = vunpack.c.l.b16 %v4106
    %v4163 = vunpack.c.l.b16 %v4107
    %v4164 = vunpack.c.l.b16 %v4108
    %v4165 = vunpack.c.l.b16 %v4109
    %v4166 = vunpack.c.l.b16 %v4110
    %v4167 = vunpack.c.l.b16 %v4111
    %v4168 = vunpack.c.l.b16 %v4112
    %v4169 = vunpack.c.l.b16 %v4113
    %v4170 = vunpack.c.l.b16 %v4114
    %v4171 = vunpack.c.l.b16 %v4115
    %v4172 = vunpack.c.l.b16 %v4116
    %v4173 = vunpack.c.l.b16 %v4117
    %v4174 = vunpack.c.l.b16 %v4118
    %v4175 = vunpack.c.l.b16 %v4119
    %v4176 = vunpack.c.l.b16 %v4120
    %v4177 = vunpack.c.l.b16 %v4121
    %v4178 = vunpack.c.l.b16 %v4122
    %v4179 = vunpack.c.l.b16 %v4123
    %v4180 = vunpack.c.l.b16 %v4124
    %v4181 = vunpack.c.l.b16 %v4125
    %v4182 = vunpack.c.l.b16 %v4126
    %v4183 = vunpack.c.l.b16 %v4127
    %v4184 = vunpack.c.l.b16 %v4128
    %v4185 = vunpack.c.l.b16 %v4129
    %v4186 = vunpack.c.l.b16 %v4130
    %v4187 = vunpack.c.l.b16 %v4131
    %v4188 = vpack.c.b16 %v4161, %v4160
    %v4189 = vpack.c.b16 %v4163, %v4162
    %v4190 = vpack.c.b16 %v4165, %v4164
    %v4191 = vpack.c.b16 %v4167, %v4166
    %v4192 = vpack.c.b16 %v4169, %v4168
    %v4193 = vpack.c.b16 %v4171, %v4170
    %v4194 = vpack.c.b16 %v4173, %v4172
    %v4195 = vpack.c.b16 %v4175, %v4174
    %v4196 = vpack.c.b16 %v4177, %v4176
    %v4197 = vpack.c.b16 %v4179, %v4178
    %v4198 = vpack.c.b16 %v4181, %v4180
    %v4199 = vpack.c.b16 %v4183, %v4182
    %v4200 = vpack.c.b16 %v4185, %v4184
    %v4201 = vpack.c.b16 %v4187, %v4186
    %v4217 = vsel %vm3613, %v3466, 0
    %4219 = vmatprep.subr.bf16.mxu0 0
    %4220 = vmatpush1.bf16.msra.mxu0 %v4188
    %4221 = vmatprep.subr.bf16.mxu0 0
    %4222 = vmatpush1.bf16.msra.mxu0 %v4189
    %4223 = vmatprep.subr.bf16.mxu0 0
    %4224 = vmatpush1.bf16.msra.mxu0 %v4190
    %4225 = vmatprep.subr.bf16.mxu0 0
    %4226 = vmatpush1.bf16.msra.mxu0 %v4191
    %4227 = vmatprep.subr.bf16.mxu0 0
    %4228 = vmatpush1.bf16.msra.mxu0 %v4192
    %4229 = vmatprep.subr.bf16.mxu0 0
    %4230 = vmatpush1.bf16.msra.mxu0 %v4193
    %4231 = vmatprep.subr.bf16.mxu0 0
    %4232 = vmatpush1.bf16.msra.mxu0 %v4194
    %4233 = vmatprep.subr.bf16.mxu0 0
    %4234 = vmatpush1.bf16.msra.mxu0 %v4195
    %4235 = vmatprep.subr.bf16.mxu0 0
    %4236 = vmatpush1.bf16.msra.mxu0 %v4196
    %4237 = vmatprep.subr.bf16.mxu0 0
    %4238 = vmatpush1.bf16.msra.mxu0 %v4197
    %4239 = vmatprep.subr.bf16.mxu0 0
    %4240 = vmatpush1.bf16.msra.mxu0 %v4198
    %4241 = vmatprep.subr.bf16.mxu0 0
    %4242 = vmatpush1.bf16.msra.mxu0 %v4199
    %4243 = vmatprep.subr.bf16.mxu0 0
    %4244 = vmatpush1.bf16.msra.mxu0 %v4200
    %4245 = vmatprep.subr.bf16.mxu0 0
    %4246 = vmatpush1.bf16.msra.mxu0 %v4201
    %4247 = vmatprep.subr.bf16.mxu0 0
    %4248 = vmatpush1.bf16.msra.mxu0 0
    %4249 = vmatprep.subr.bf16.mxu0 0
    %4250 = vmatpush1.bf16.msra.mxu0 0
    %4251 = vmatprep.mubr.bf16.mxu0 %v4217
    %4252 = vmatmul.mubr.bf16.gmra.mrb[0].mxu0 %v3465
    %v4253 = vpop.f32.mrb[0].mxu0
    %v4254 = vadd.f32 0.0, %v4253
    %v4255 = vpop.f32.mrb[0].mxu0
    %v4256 = vpop.f32.mrb[0].mxu0
    %v4257 = vpop.f32.mrb[0].mxu0
    %4258 = vdwg.mxu0
    %v4259 = vadd.f32 %v4102, %v4254
    %v4260 = vld [vmem:[%s9] sm:$0x1]
    %v4262 = vlaneseq
    %v4263 = vshrl.u32 %v4262, 7
    %v4264 = vsub.s32 0, %v4263
    %v4265 = vrot.slane %v4260, %v4264
    %v4267 = vadd.f32 %v4259, %v4265
    %v4268 = vmax.f32 %v4267, 0.0
    %v4269 = vpack.c.bf16 %v4268, %v4268
    %v4270 = vld [vmem:[%s11] sm:$0x1]
    %v4271 = vld [vmem:[%s10] sm:$0xf]
    %v4272 = vld [vmem:[%s10 + $0x4] sm:$0xf]
    %v4273 = vld [vmem:[%s10 + $0x8] sm:$0xf]
    %v4274 = vld [vmem:[%s10 + $0xc] sm:$0xf]
    %v4275 = vld [vmem:[%s10 + $0x10] sm:$0xf]
    %v4276 = vld [vmem:[%s10 + $0x14] sm:$0xf]
    %v4277 = vld [vmem:[%s10 + $0x18] sm:$0xf]
    %v4278 = vld [vmem:[%s10 + $0x1c] sm:$0xf]
    %v4287 = vunpack.c.l.b16 %v4271
    %v4288 = vunpack.c.l.b16 %v4272
    %v4289 = vunpack.c.l.b16 %v4273
    %v4290 = vunpack.c.l.b16 %v4274
    %v4291 = vunpack.c.l.b16 %v4275
    %v4292 = vunpack.c.l.b16 %v4276
    %v4293 = vunpack.c.l.b16 %v4277
    %v4294 = vunpack.c.l.b16 %v4278
    %v4295 = vpack.c.b16 %v4288, %v4287
    %v4296 = vpack.c.b16 %v4290, %v4289
    %v4297 = vpack.c.b16 %v4292, %v4291
    %v4298 = vpack.c.b16 %v4294, %v4293
    %vm4303 = vcmask 523264
    %v4305 = vsel %vm4303, %v4269, 0
    %4307 = vmatprep.subr.bf16.mxu0 0
    %4308 = vmatpush1.bf16.msra.mxu0 %v4295
    %4309 = vmatprep.subr.bf16.mxu0 0
    %4310 = vmatpush1.bf16.msra.mxu0 %v4296
    %4311 = vmatprep.subr.bf16.mxu0 0
    %4312 = vmatpush1.bf16.msra.mxu0 %v4297
    %4313 = vmatprep.subr.bf16.mxu0 0
    %4314 = vmatpush1.bf16.msra.mxu0 %v4298
    %4315 = vmatprep.subr.bf16.mxu0 0
    %4316 = vmatpush1.bf16.msra.mxu0 0
    %4317 = vmatprep.subr.bf16.mxu0 0
    %4318 = vmatpush1.bf16.msra.mxu0 0
    %4319 = vmatprep.subr.bf16.mxu0 0
    %4320 = vmatpush1.bf16.msra.mxu0 0
    %4321 = vmatprep.subr.bf16.mxu0 0
    %4322 = vmatpush1.bf16.msra.mxu0 0
    %4323 = vmatprep.subr.bf16.mxu0 0
    %4324 = vmatpush1.bf16.msra.mxu0 0
    %4325 = vmatprep.subr.bf16.mxu0 0
    %4326 = vmatpush1.bf16.msra.mxu0 0
    %4327 = vmatprep.subr.bf16.mxu0 0
    %4328 = vmatpush1.bf16.msra.mxu0 0
    %4329 = vmatprep.subr.bf16.mxu0 0
    %4330 = vmatpush1.bf16.msra.mxu0 0
    %4331 = vmatprep.subr.bf16.mxu0 0
    %4332 = vmatpush1.bf16.msra.mxu0 0
    %4333 = vmatprep.subr.bf16.mxu0 0
    %4334 = vmatpush1.bf16.msra.mxu0 0
    %4335 = vmatprep.subr.bf16.mxu0 0
    %4336 = vmatpush1.bf16.msra.mxu0 0
    %4337 = vmatprep.subr.bf16.mxu0 0
    %4338 = vmatpush1.bf16.msra.mxu0 0
    %4339 = vmatprep.mubr.bf16.mxu0 0
    %4340 = vmatmul.mubr.bf16.gmra.mrb[0].mxu0 %v4305
    %v4341 = vpop.f32.mrb[0].mxu0
    %v4342 = vadd.f32 0.0, %v4341
    %v4343 = vpop.f32.mrb[0].mxu0
    %v4344 = vpop.f32.mrb[0].mxu0
    %v4345 = vpop.f32.mrb[0].mxu0
    %4346 = vdwg.mxu0
    %v4347 = vadd.f32 %v4270, %v4342
    %s4348 = scalar_lea.vmem %s10, 32
    %v4349 = vld [vmem:[%s4348] sm:$0xf]
    %v4350 = vld [vmem:[%s4348 + $0x4] sm:$0xf]
    %v4351 = vld [vmem:[%s4348 + $0x8] sm:$0xf]
    %v4352 = vld [vmem:[%s4348 + $0xc] sm:$0xf]
    %v4353 = vld [vmem:[%s4348 + $0x10] sm:$0xf]
    %v4354 = vld [vmem:[%s4348 + $0x14] sm:$0xf]
    %v4355 = vld [vmem:[%s4348 + $0x18] sm:$0xf]
    %v4356 = vld [vmem:[%s4348 + $0x1c] sm:$0xf]
    %v4357 = vshrl.u32 %v4269, 16
    %v4367 = vunpack.c.l.b16 %v4349
    %v4368 = vunpack.c.l.b16 %v4350
    %v4369 = vunpack.c.l.b16 %v4351
    %v4370 = vunpack.c.l.b16 %v4352
    %v4371 = vunpack.c.l.b16 %v4353
    %v4372 = vunpack.c.l.b16 %v4354
    %v4373 = vunpack.c.l.b16 %v4355
    %v4374 = vunpack.c.l.b16 %v4356
    %v4375 = vpack.c.b16 %v4368, %v4367
    %v4376 = vpack.c.b16 %v4370, %v4369
    %v4377 = vpack.c.b16 %v4372, %v4371
    %v4378 = vpack.c.b16 %v4374, %v4373
    %v4384 = vsel %vm4303, %v4357, 0
    %4386 = vmatprep.subr.bf16.mxu0 0
    %4387 = vmatpush1.bf16.msra.mxu0 %v4375
    %4388 = vmatprep.subr.bf16.mxu0 0
    %4389 = vmatpush1.bf16.msra.mxu0 %v4376
    %4390 = vmatprep.subr.bf16.mxu0 0
    %4391 = vmatpush1.bf16.msra.mxu0 %v4377
    %4392 = vmatprep.subr.bf16.mxu0 0
    %4393 = vmatpush1.bf16.msra.mxu0 %v4378
    %4394 = vmatprep.subr.bf16.mxu0 0
    %4395 = vmatpush1.bf16.msra.mxu0 0
    %4396 = vmatprep.subr.bf16.mxu0 0
    %4397 = vmatpush1.bf16.msra.mxu0 0
    %4398 = vmatprep.subr.bf16.mxu0 0
    %4399 = vmatpush1.bf16.msra.mxu0 0
    %4400 = vmatprep.subr.bf16.mxu0 0
    %4401 = vmatpush1.bf16.msra.mxu0 0
    %4402 = vmatprep.subr.bf16.mxu0 0
    %4403 = vmatpush1.bf16.msra.mxu0 0
    %4404 = vmatprep.subr.bf16.mxu0 0
    %4405 = vmatpush1.bf16.msra.mxu0 0
    %4406 = vmatprep.subr.bf16.mxu0 0
    %4407 = vmatpush1.bf16.msra.mxu0 0
    %4408 = vmatprep.subr.bf16.mxu0 0
    %4409 = vmatpush1.bf16.msra.mxu0 0
    %4410 = vmatprep.subr.bf16.mxu0 0
    %4411 = vmatpush1.bf16.msra.mxu0 0
    %4412 = vmatprep.subr.bf16.mxu0 0
    %4413 = vmatpush1.bf16.msra.mxu0 0
    %4414 = vmatprep.subr.bf16.mxu0 0
    %4415 = vmatpush1.bf16.msra.mxu0 0
    %4416 = vmatprep.subr.bf16.mxu0 0
    %4417 = vmatpush1.bf16.msra.mxu0 0
    %4418 = vmatprep.mubr.bf16.mxu0 0
    %4419 = vmatmul.mubr.bf16.gmra.mrb[0].mxu0 %v4384
    %v4420 = vpop.f32.mrb[0].mxu0
    %v4421 = vadd.f32 0.0, %v4420
    %v4422 = vpop.f32.mrb[0].mxu0
    %v4423 = vpop.f32.mrb[0].mxu0
    %v4424 = vpop.f32.mrb[0].mxu0
    %4425 = vdwg.mxu0
    %v4426 = vadd.f32 %v4347, %v4421
    %vm4427 = vcmask 139264
    %4428 = vst.msk [vmem:[#allocation2] sm:$0x1] %vm4427, %v4426
    %s4429 = scalar_lea.vmem %s0, 20
    %v4430 = vld [vmem:[%s4429] sm:$0xf]
    %v4431 = vld [vmem:[%s4429 + $0x4] sm:$0xf]
    %v4432 = vld [vmem:[%s4429 + $0x8] sm:$0xf]
    %v4433 = vld [vmem:[%s4429 + $0xc] sm:$0xf]
    %v4434 = vld [vmem:[%s4429 + $0x10] sm:$0xf]
    %v4435 = vld [vmem:[%s1] sm:$0xf]
    %v4436 = vld [vmem:[%s1 + $0x4] sm:$0xf]
    %v4437 = vld [vmem:[%s1 + $0x8] sm:$0xf]
    %v4438 = vld [vmem:[%s1 + $0xc] sm:$0xf]
    %v4439 = vld [vmem:[%s1 + $0x10] sm:$0xf]
    %v4440 = vld [vmem:[%s1 + $0x14] sm:$0xf]
    %v4441 = vld [vmem:[%s1 + $0x18] sm:$0xf]
    %v4442 = vld [vmem:[%s1 + $0x1c] sm:$0xf]
    %v4443 = vld [vmem:[%s1 + $0x20] sm:$0xf]
    %v4444 = vld [vmem:[%s1 + $0x24] sm:$0xf]
    %v4445 = vld [vmem:[%s1 + $0x28] sm:$0xf]
    %v4446 = vld [vmem:[%s1 + $0x2c] sm:$0xf]
    %v4447 = vld [vmem:[%s1 + $0x30] sm:$0xf]
    %v4448 = vld [vmem:[%s1 + $0x34] sm:$0xf]
    %v4449 = vld [vmem:[%s1 + $0x38] sm:$0xf]
    %v4465 = vunpack.c.l.b16 %v4435
    %v4466 = vunpack.c.l.b16 %v4436
    %v4467 = vunpack.c.l.b16 %v4437
    %v4468 = vunpack.c.l.b16 %v4438
    %v4469 = vunpack.c.l.b16 %v4439
    %v4470 = vunpack.c.l.b16 %v4440
    %v4471 = vunpack.c.l.b16 %v4441
    %v4472 = vunpack.c.l.b16 %v4442
    %v4473 = vunpack.c.l.b16 %v4443
    %v4474 = vunpack.c.l.b16 %v4444
    %v4475 = vunpack.c.l.b16 %v4445
    %v4476 = vunpack.c.l.b16 %v4446
    %v4477 = vunpack.c.l.b16 %v4447
    %v4478 = vunpack.c.l.b16 %v4448
    %v4479 = vunpack.c.l.b16 %v4449
    %v4480 = vpack.c.b16 %v4466, %v4465
    %v4481 = vpack.c.b16 %v4468, %v4467
    %v4482 = vpack.c.b16 %v4470, %v4469
    %v4483 = vpack.c.b16 %v4472, %v4471
    %v4484 = vpack.c.b16 %v4474, %v4473
    %v4485 = vpack.c.b16 %v4476, %v4475
    %v4486 = vpack.c.b16 %v4478, %v4477
    %v4487 = vpack.c.b16 %v4479, %v4479
    %v4493 = vunpack.c.l.b16 %v4430
    %v4494 = vunpack.c.l.b16 %v4431
    %v4495 = vunpack.c.l.b16 %v4432
    %v4496 = vunpack.c.l.b16 %v4433
    %v4497 = vunpack.c.l.b16 %v4434
    %v4498 = vpack.c.b16 %v4494, %v4493
    %v4499 = vpack.c.b16 %v4496, %v4495
    %v4500 = vpack.c.b16 %v4497, %v4497
    %v4504 = vsel %vm116, %v4480, 0
    %v4507 = vsel %vm116, %v4481, 0
    %v4510 = vsel %vm116, %v4482, 0
    %v4513 = vsel %vm116, %v4483, 0
    %v4516 = vsel %vm116, %v4484, 0
    %v4519 = vsel %vm116, %v4485, 0
    %v4522 = vsel %vm116, %v4486, 0
    %v4525 = vsel %vm116, %v4487, 0
    %v4528 = vsel %vm141, %v4500, 0
    %4530 = vmatprep.subr.bf16.mxu0 0
    %4531 = vmatpush1.bf16.msra.mxu0 %v4498
    %4532 = vmatprep.subr.bf16.mxu0 0
    %4533 = vmatpush1.bf16.msra.mxu0 %v4499
    %4534 = vmatprep.subr.bf16.mxu0 0
    %4535 = vmatpush1.bf16.msra.mxu0 %v4528
    %4536 = vmatprep.subr.bf16.mxu0 0
    %4537 = vmatpush1.bf16.msra.mxu0 0
    %4538 = vmatprep.subr.bf16.mxu0 0
    %4539 = vmatpush1.bf16.msra.mxu0 0
    %4540 = vmatprep.subr.bf16.mxu0 0
    %4541 = vmatpush1.bf16.msra.mxu0 0
    %4542 = vmatprep.subr.bf16.mxu0 0
    %4543 = vmatpush1.bf16.msra.mxu0 0
    %4544 = vmatprep.subr.bf16.mxu0 0
    %4545 = vmatpush1.bf16.msra.mxu0 0
    %4546 = vmatprep.subr.bf16.mxu0 0
    %4547 = vmatpush1.bf16.msra.mxu0 0
    %4548 = vmatprep.subr.bf16.mxu0 0
    %4549 = vmatpush1.bf16.msra.mxu0 0
    %4550 = vmatprep.subr.bf16.mxu0 0
    %4551 = vmatpush1.bf16.msra.mxu0 0
    %4552 = vmatprep.subr.bf16.mxu0 0
    %4553 = vmatpush1.bf16.msra.mxu0 0
    %4554 = vmatprep.subr.bf16.mxu0 0
    %4555 = vmatpush1.bf16.msra.mxu0 0
    %4556 = vmatprep.subr.bf16.mxu0 0
    %4557 = vmatpush1.bf16.msra.mxu0 0
    %4558 = vmatprep.subr.bf16.mxu0 0
    %4559 = vmatpush1.bf16.msra.mxu0 0
    %4560 = vmatprep.subr.bf16.mxu0 0
    %4561 = vmatpush1.bf16.msra.mxu0 0
    %4562 = vmatprep.mubr.bf16.mxu0 0
    %4563 = vmatmul.mubr.bf16.gmra.mrb[0].mxu0 %v4504
    %v4564 = vpop.f32.mrb[0].mxu0
    %v4565 = vadd.f32 0.0, %v4564
    %v4566 = vpop.f32.mrb[0].mxu0
    %v4567 = vpop.f32.mrb[0].mxu0
    %v4568 = vadd.f32 0.0, %v4567
    %v4569 = vpop.f32.mrb[0].mxu0
    %4570 = vmatprep.mubr.bf16.mxu0 0
    %4571 = vmatmul.mubr.bf16.gmra.mrb[0].mxu0 %v4507
    %v4572 = vpop.f32.mrb[0].mxu0
    %v4573 = vadd.f32 0.0, %v4572
    %v4574 = vpop.f32.mrb[0].mxu0
    %v4575 = vpop.f32.mrb[0].mxu0
    %v4576 = vadd.f32 0.0, %v4575
    %v4577 = vpop.f32.mrb[0].mxu0
    %4578 = vmatprep.mubr.bf16.mxu0 0
    %4579 = vmatmul.mubr.bf16.gmra.mrb[0].mxu0 %v4510
    %v4580 = vpop.f32.mrb[0].mxu0
    %v4581 = vadd.f32 0.0, %v4580
    %v4582 = vpop.f32.mrb[0].mxu0
    %v4583 = vpop.f32.mrb[0].mxu0
    %v4584 = vadd.f32 0.0, %v4583
    %v4585 = vpop.f32.mrb[0].mxu0
    %4586 = vmatprep.mubr.bf16.mxu0 0
    %4587 = vmatmul.mubr.bf16.gmra.mrb[0].mxu0 %v4513
    %v4588 = vpop.f32.mrb[0].mxu0
    %v4589 = vadd.f32 0.0, %v4588
    %v4590 = vpop.f32.mrb[0].mxu0
    %v4591 = vpop.f32.mrb[0].mxu0
    %v4592 = vadd.f32 0.0, %v4591
    %v4593 = vpop.f32.mrb[0].mxu0
    %4594 = vmatprep.mubr.bf16.mxu0 0
    %4595 = vmatmul.mubr.bf16.gmra.mrb[0].mxu0 %v4516
    %v4596 = vpop.f32.mrb[0].mxu0
    %v4597 = vadd.f32 0.0, %v4596
    %v4598 = vpop.f32.mrb[0].mxu0
    %v4599 = vpop.f32.mrb[0].mxu0
    %v4600 = vadd.f32 0.0, %v4599
    %v4601 = vpop.f32.mrb[0].mxu0
    %4602 = vmatprep.mubr.bf16.mxu0 0
    %4603 = vmatmul.mubr.bf16.gmra.mrb[0].mxu0 %v4519
    %v4604 = vpop.f32.mrb[0].mxu0
    %v4605 = vadd.f32 0.0, %v4604
    %v4606 = vpop.f32.mrb[0].mxu0
    %v4607 = vpop.f32.mrb[0].mxu0
    %v4608 = vadd.f32 0.0, %v4607
    %v4609 = vpop.f32.mrb[0].mxu0
    %4610 = vmatprep.mubr.bf16.mxu0 0
    %4611 = vmatmul.mubr.bf16.gmra.mrb[0].mxu0 %v4522
    %v4612 = vpop.f32.mrb[0].mxu0
    %v4613 = vadd.f32 0.0, %v4612
    %v4614 = vpop.f32.mrb[0].mxu0
    %v4615 = vpop.f32.mrb[0].mxu0
    %v4616 = vadd.f32 0.0, %v4615
    %v4617 = vpop.f32.mrb[0].mxu0
    %4618 = vmatprep.mubr.bf16.mxu0 0
    %4619 = vmatmul.mubr.bf16.gmra.mrb[0].mxu0 %v4525
    %v4620 = vpop.f32.mrb[0].mxu0
    %v4621 = vadd.f32 0.0, %v4620
    %v4622 = vpop.f32.mrb[0].mxu0
    %v4623 = vpop.f32.mrb[0].mxu0
    %v4624 = vpop.f32.mrb[0].mxu0
    %4625 = vdwg.mxu0
    %v4626 = vpack.c.bf16 %v4568, %v4565
    %v4627 = vpack.c.bf16 %v4576, %v4573
    %v4628 = vpack.c.bf16 %v4584, %v4581
    %v4629 = vpack.c.bf16 %v4592, %v4589
    %v4630 = vpack.c.bf16 %v4600, %v4597
    %v4631 = vpack.c.bf16 %v4608, %v4605
    %v4632 = vpack.c.bf16 %v4616, %v4613
    %v4633 = vpack.c.bf16 %v4621, %v4621
    %v4634 = vld [vmem:[%s2] sm:$0xff]
    %v4635 = vld [vmem:[%s2 + $0x8] sm:$0xf]
    %v4636 = vld [vmem:[%s2 + $0xc] sm:$0xff]
    %v4637 = vld [vmem:[%s2 + $0x14] sm:$0xf]
    %v4638 = vld [vmem:[%s2 + $0x18] sm:$0xff]
    %v4639 = vld [vmem:[%s2 + $0x20] sm:$0xf]
    %v4640 = vld [vmem:[%s2 + $0x24] sm:$0xff]
    %v4641 = vld [vmem:[%s2 + $0x2c] sm:$0xf]
    %v4642 = vld [vmem:[%s2 + $0x30] sm:$0xff]
    %v4643 = vld [vmem:[%s2 + $0x38] sm:$0xf]
    %v4644 = vld [vmem:[%s2 + $0x3c] sm:$0xff]
    %v4645 = vld [vmem:[%s2 + $0x44] sm:$0xf]
    %v4646 = vld [vmem:[%s2 + $0x48] sm:$0xff]
    %v4647 = vld [vmem:[%s2 + $0x50] sm:$0xf]
    %v4648 = vld [vmem:[%s2 + $0x54] sm:$0xff]
    %v4649 = vld [vmem:[%s2 + $0x5c] sm:$0xf]
    %v4650 = vld [vmem:[%s2 + $0x60] sm:$0xff]
    %v4651 = vld [vmem:[%s2 + $0x68] sm:$0xf]
    %v4652 = vld [vmem:[%s2 + $0x6c] sm:$0xff]
    %v4653 = vld [vmem:[%s2 + $0x74] sm:$0xf]
    %v4654 = vld [vmem:[%s2 + $0x78] sm:$0xff]
    %v4655 = vld [vmem:[%s2 + $0x80] sm:$0xf]
    %v4656 = vld [vmem:[%s2 + $0x84] sm:$0xff]
    %v4657 = vld [vmem:[%s2 + $0x8c] sm:$0xf]
    %v4658 = vld [vmem:[%s2 + $0x90] sm:$0xff]
    %v4659 = vld [vmem:[%s2 + $0x98] sm:$0xf]
    %v4660 = vld [vmem:[%s2 + $0x9c] sm:$0xff]
    %v4661 = vld [vmem:[%s2 + $0xa4] sm:$0xf]
    %v4662 = vld [vmem:[%s2 + $0xa8] sm:$0xff]
    %v4663 = vld [vmem:[%s2 + $0xb0] sm:$0xf]
    %v4664 = vld [vmem:[%s279] sm:$0xff]
    %v4665 = vld [vmem:[%s279 + $0x8] sm:$0xf]
    %v4666 = vld [vmem:[%s279 + $0xc] sm:$0xff]
    %v4667 = vld [vmem:[%s279 + $0x14] sm:$0xf]
    %v4668 = vld [vmem:[%s279 + $0x18] sm:$0xff]
    %v4669 = vld [vmem:[%s279 + $0x20] sm:$0xf]
    %v4670 = vld [vmem:[%s279 + $0x24] sm:$0xff]
    %v4671 = vld [vmem:[%s279 + $0x2c] sm:$0xf]
    %v4672 = vld [vmem:[%s279 + $0x30] sm:$0xff]
    %v4673 = vld [vmem:[%s279 + $0x38] sm:$0xf]
    %v4674 = vld [vmem:[%s279 + $0x3c] sm:$0xff]
    %v4675 = vld [vmem:[%s279 + $0x44] sm:$0xf]
    %v4676 = vld [vmem:[%s279 + $0x48] sm:$0xff]
    %v4677 = vld [vmem:[%s279 + $0x50] sm:$0xf]
    %v4678 = vld [vmem:[%s279 + $0x54] sm:$0xff]
    %v4679 = vld [vmem:[%s279 + $0x5c] sm:$0xf]
    %v4680 = vld [vmem:[%s279 + $0x60] sm:$0xff]
    %v4681 = vld [vmem:[%s279 + $0x68] sm:$0xf]
    %v4682 = vld [vmem:[%s279 + $0x6c] sm:$0xff]
    %v4683 = vld [vmem:[%s279 + $0x74] sm:$0xf]
    %v4684 = vld [vmem:[%s279 + $0x78] sm:$0xff]
    %v4685 = vld [vmem:[%s279 + $0x80] sm:$0xf]
    %v4686 = vld [vmem:[%s279 + $0x84] sm:$0xff]
    %v4687 = vld [vmem:[%s279 + $0x8c] sm:$0xf]
    %v4688 = vld [vmem:[%s279 + $0x90] sm:$0xff]
    %v4689 = vld [vmem:[%s279 + $0x98] sm:$0xf]
    %v4690 = vld [vmem:[%s279 + $0x9c] sm:$0xff]
    %v4691 = vld [vmem:[%s279 + $0xa4] sm:$0xf]
    %v4692 = vld [vmem:[%s279 + $0xa8] sm:$0xff]
    %v4693 = vld [vmem:[%s279 + $0xb0] sm:$0xf]
    %v4696 = vrot.slane %v4627, 4
    %v4697 = vrot.slane %v4628, 4
    %v4698 = vsel %vm312, %v4696, %v4697
    %v4729 = vunpack.c.l.b16 %v4664
    %v4730 = vunpack.c.h.b16 %v4664
    %v4731 = vunpack.c.l.b16 %v4665
    %v4732 = vunpack.c.l.b16 %v4666
    %v4733 = vunpack.c.h.b16 %v4666
    %v4734 = vunpack.c.l.b16 %v4667
    %v4735 = vunpack.c.l.b16 %v4668
    %v4736 = vunpack.c.h.b16 %v4668
    %v4737 = vunpack.c.l.b16 %v4669
    %v4738 = vunpack.c.l.b16 %v4670
    %v4739 = vunpack.c.h.b16 %v4670
    %v4740 = vunpack.c.l.b16 %v4671
    %v4741 = vunpack.c.l.b16 %v4672
    %v4742 = vunpack.c.h.b16 %v4672
    %v4743 = vunpack.c.l.b16 %v4673
    %v4744 = vunpack.c.l.b16 %v4674
    %v4745 = vunpack.c.h.b16 %v4674
    %v4746 = vunpack.c.l.b16 %v4675
    %v4747 = vunpack.c.l.b16 %v4676
    %v4748 = vunpack.c.h.b16 %v4676
    %v4749 = vunpack.c.l.b16 %v4677
    %v4750 = vunpack.c.l.b16 %v4678
    %v4751 = vunpack.c.h.b16 %v4678
    %v4752 = vunpack.c.l.b16 %v4679
    %v4753 = vunpack.c.l.b16 %v4680
    %v4754 = vunpack.c.h.b16 %v4680
    %v4755 = vunpack.c.l.b16 %v4681
    %v4756 = vunpack.c.l.b16 %v4682
    %v4757 = vunpack.c.h.b16 %v4682
    %v4758 = vunpack.c.l.b16 %v4683
    %v4759 = vunpack.c.l.b16 %v4684
    %v4760 = vunpack.c.h.b16 %v4684
    %v4761 = vunpack.c.l.b16 %v4685
    %v4762 = vunpack.c.l.b16 %v4686
    %v4763 = vunpack.c.h.b16 %v4686
    %v4764 = vunpack.c.l.b16 %v4687
    %v4765 = vunpack.c.l.b16 %v4688
    %v4766 = vunpack.c.h.b16 %v4688
    %v4767 = vunpack.c.l.b16 %v4689
    %v4768 = vunpack.c.l.b16 %v4690
    %v4769 = vunpack.c.h.b16 %v4690
    %v4770 = vunpack.c.l.b16 %v4691
    %v4771 = vunpack.c.l.b16 %v4692
    %v4772 = vunpack.c.h.b16 %v4692
    %v4773 = vunpack.c.l.b16 %v4693
    %v4774 = vpack.c.b16 %v4732, %v4729
    %v4775 = vpack.c.b16 %v4733, %v4730
    %v4776 = vpack.c.b16 %v4734, %v4731
    %v4777 = vpack.c.b16 %v4738, %v4735
    %v4778 = vpack.c.b16 %v4739, %v4736
    %v4779 = vpack.c.b16 %v4740, %v4737
    %v4780 = vpack.c.b16 %v4744, %v4741
    %v4781 = vpack.c.b16 %v4745, %v4742
    %v4782 = vpack.c.b16 %v4746, %v4743
    %v4783 = vpack.c.b16 %v4750, %v4747
    %v4784 = vpack.c.b16 %v4751, %v4748
    %v4785 = vpack.c.b16 %v4752, %v4749
    %v4786 = vpack.c.b16 %v4756, %v4753
    %v4787 = vpack.c.b16 %v4757, %v4754
    %v4788 = vpack.c.b16 %v4758, %v4755
    %v4789 = vpack.c.b16 %v4762, %v4759
    %v4790 = vpack.c.b16 %v4763, %v4760
    %v4791 = vpack.c.b16 %v4764, %v4761
    %v4792 = vpack.c.b16 %v4768, %v4765
    %v4793 = vpack.c.b16 %v4769, %v4766
    %v4794 = vpack.c.b16 %v4770, %v4767
    %v4795 = vpack.c.b16 %v4771, %v4771
    %v4796 = vpack.c.b16 %v4772, %v4772
    %v4797 = vpack.c.b16 %v4773, %v4773
    %v4820 = vsel %vm436, %v4698, 0
    %v4823 = vsel %vm436, %v4697, 0
    %v4826 = vsel %vm141, %v4795, 0
    %v4829 = vsel %vm141, %v4796, 0
    %v4832 = vsel %vm141, %v4797, 0
    %4834 = vmatprep.subr.bf16.mxu0 %v4775
    %4835 = vmatpush1.bf16.msra.mxu0 %v4774
    %4836 = vmatprep.subr.bf16.mxu0 %v4778
    %4837 = vmatpush1.bf16.msra.mxu0 %v4777
    %4838 = vmatprep.subr.bf16.mxu0 %v4781
    %4839 = vmatpush1.bf16.msra.mxu0 %v4780
    %4840 = vmatprep.subr.bf16.mxu0 %v4784
    %4841 = vmatpush1.bf16.msra.mxu0 %v4783
    %4842 = vmatprep.subr.bf16.mxu0 %v4787
    %4843 = vmatpush1.bf16.msra.mxu0 %v4786
    %4844 = vmatprep.subr.bf16.mxu0 %v4790
    %4845 = vmatpush1.bf16.msra.mxu0 %v4789
    %4846 = vmatprep.subr.bf16.mxu0 %v4793
    %4847 = vmatpush1.bf16.msra.mxu0 %v4792
    %4848 = vmatprep.subr.bf16.mxu0 %v4829
    %4849 = vmatpush1.bf16.msra.mxu0 %v4826
    %4850 = vmatprep.subr.bf16.mxu0 0
    %4851 = vmatpush1.bf16.msra.mxu0 0
    %4852 = vmatprep.subr.bf16.mxu0 0
    %4853 = vmatpush1.bf16.msra.mxu0 0
    %4854 = vmatprep.subr.bf16.mxu0 0
    %4855 = vmatpush1.bf16.msra.mxu0 0
    %4856 = vmatprep.subr.bf16.mxu0 0
    %4857 = vmatpush1.bf16.msra.mxu0 0
    %4858 = vmatprep.subr.bf16.mxu0 0
    %4859 = vmatpush1.bf16.msra.mxu0 0
    %4860 = vmatprep.subr.bf16.mxu0 0
    %4861 = vmatpush1.bf16.msra.mxu0 0
    %4862 = vmatprep.subr.bf16.mxu0 0
    %4863 = vmatpush1.bf16.msra.mxu0 0
    %4864 = vmatprep.subr.bf16.mxu0 0
    %4865 = vmatpush1.bf16.msra.mxu0 0
    %4866 = vmatprep.mubr.bf16.mxu0 0
    %4867 = vmatmul.mubr.bf16.gmra.mrb[0].mxu0 %v4820
    %v4868 = vpop.f32.mrb[0].mxu0
    %v4869 = vadd.f32 0.0, %v4868
    %v4870 = vpop.f32.mrb[0].mxu0
    %v4871 = vadd.f32 0.0, %v4870
    %v4872 = vpop.f32.mrb[0].mxu0
    %v4873 = vadd.f32 0.0, %v4872
    %v4874 = vpop.f32.mrb[0].mxu0
    %v4875 = vadd.f32 0.0, %v4874
    %4876 = vmatprep.mubr.bf16.mxu0 0
    %4877 = vmatmul.mubr.bf16.gmra.mrb[0].mxu0 %v4823
    %v4878 = vpop.f32.mrb[0].mxu0
    %v4879 = vadd.f32 0.0, %v4878
    %v4880 = vpop.f32.mrb[0].mxu0
    %v4881 = vadd.f32 0.0, %v4880
    %v4882 = vpop.f32.mrb[0].mxu0
    %v4883 = vpop.f32.mrb[0].mxu0
    %4884 = vdwg.mxu0
    %4885 = vmatprep.subr.bf16.mxu0 0
    %4886 = vmatpush1.bf16.msra.mxu0 %v4776
    %4887 = vmatprep.subr.bf16.mxu0 0
    %4888 = vmatpush1.bf16.msra.mxu0 %v4779
    %4889 = vmatprep.subr.bf16.mxu0 0
    %4890 = vmatpush1.bf16.msra.mxu0 %v4782
    %4891 = vmatprep.subr.bf16.mxu0 0
    %4892 = vmatpush1.bf16.msra.mxu0 %v4785
    %4893 = vmatprep.subr.bf16.mxu0 0
    %4894 = vmatpush1.bf16.msra.mxu0 %v4788
    %4895 = vmatprep.subr.bf16.mxu0 0
    %4896 = vmatpush1.bf16.msra.mxu0 %v4791
    %4897 = vmatprep.subr.bf16.mxu0 0
    %4898 = vmatpush1.bf16.msra.mxu0 %v4794
    %4899 = vmatprep.subr.bf16.mxu0 0
    %4900 = vmatpush1.bf16.msra.mxu0 %v4832
    %4901 = vmatprep.subr.bf16.mxu0 0
    %4902 = vmatpush1.bf16.msra.mxu0 0
    %4903 = vmatprep.subr.bf16.mxu0 0
    %4904 = vmatpush1.bf16.msra.mxu0 0
    %4905 = vmatprep.subr.bf16.mxu0 0
    %4906 = vmatpush1.bf16.msra.mxu0 0
    %4907 = vmatprep.subr.bf16.mxu0 0
    %4908 = vmatpush1.bf16.msra.mxu0 0
    %4909 = vmatprep.subr.bf16.mxu0 0
    %4910 = vmatpush1.bf16.msra.mxu0 0
    %4911 = vmatprep.subr.bf16.mxu0 0
    %4912 = vmatpush1.bf16.msra.mxu0 0
    %4913 = vmatprep.subr.bf16.mxu0 0
    %4914 = vmatpush1.bf16.msra.mxu0 0
    %4915 = vmatprep.subr.bf16.mxu0 0
    %4916 = vmatpush1.bf16.msra.mxu0 0
    %4917 = vmatprep.mubr.bf16.mxu0 0
    %4918 = vmatmul.mubr.bf16.gmra.mrb[0].mxu0 %v4820
    %v4919 = vpop.f32.mrb[0].mxu0
    %v4920 = vadd.f32 0.0, %v4919
    %v4921 = vpop.f32.mrb[0].mxu0
    %v4922 = vpop.f32.mrb[0].mxu0
    %v4923 = vadd.f32 0.0, %v4922
    %v4924 = vpop.f32.mrb[0].mxu0
    %4925 = vmatprep.mubr.bf16.mxu0 0
    %4926 = vmatmul.mubr.bf16.gmra.mrb[0].mxu0 %v4823
    %v4927 = vpop.f32.mrb[0].mxu0
    %v4928 = vadd.f32 0.0, %v4927
    %v4929 = vpop.f32.mrb[0].mxu0
    %v4930 = vpop.f32.mrb[0].mxu0
    %v4931 = vpop.f32.mrb[0].mxu0
    %4932 = vdwg.mxu0
    %v4963 = vunpack.c.l.b16 %v4634
    %v4964 = vunpack.c.h.b16 %v4634
    %v4965 = vunpack.c.l.b16 %v4635
    %v4966 = vunpack.c.l.b16 %v4636
    %v4967 = vunpack.c.h.b16 %v4636
    %v4968 = vunpack.c.l.b16 %v4637
    %v4969 = vunpack.c.l.b16 %v4638
    %v4970 = vunpack.c.h.b16 %v4638
    %v4971 = vunpack.c.l.b16 %v4639
    %v4972 = vunpack.c.l.b16 %v4640
    %v4973 = vunpack.c.h.b16 %v4640
    %v4974 = vunpack.c.l.b16 %v4641
    %v4975 = vunpack.c.l.b16 %v4642
    %v4976 = vunpack.c.h.b16 %v4642
    %v4977 = vunpack.c.l.b16 %v4643
    %v4978 = vunpack.c.l.b16 %v4644
    %v4979 = vunpack.c.h.b16 %v4644
    %v4980 = vunpack.c.l.b16 %v4645
    %v4981 = vunpack.c.l.b16 %v4646
    %v4982 = vunpack.c.h.b16 %v4646
    %v4983 = vunpack.c.l.b16 %v4647
    %v4984 = vunpack.c.l.b16 %v4648
    %v4985 = vunpack.c.h.b16 %v4648
    %v4986 = vunpack.c.l.b16 %v4649
    %v4987 = vunpack.c.l.b16 %v4650
    %v4988 = vunpack.c.h.b16 %v4650
    %v4989 = vunpack.c.l.b16 %v4651
    %v4990 = vunpack.c.l.b16 %v4652
    %v4991 = vunpack.c.h.b16 %v4652
    %v4992 = vunpack.c.l.b16 %v4653
    %v4993 = vunpack.c.l.b16 %v4654
    %v4994 = vunpack.c.h.b16 %v4654
    %v4995 = vunpack.c.l.b16 %v4655
    %v4996 = vunpack.c.l.b16 %v4656
    %v4997 = vunpack.c.h.b16 %v4656
    %v4998 = vunpack.c.l.b16 %v4657
    %v4999 = vunpack.c.l.b16 %v4658
    %v5000 = vunpack.c.h.b16 %v4658
    %v5001 = vunpack.c.l.b16 %v4659
    %v5002 = vunpack.c.l.b16 %v4660
    %v5003 = vunpack.c.h.b16 %v4660
    %v5004 = vunpack.c.l.b16 %v4661
    %v5005 = vunpack.c.l.b16 %v4662
    %v5006 = vunpack.c.h.b16 %v4662
    %v5007 = vunpack.c.l.b16 %v4663
    %v5008 = vpack.c.b16 %v4966, %v4963
    %v5009 = vpack.c.b16 %v4967, %v4964
    %v5010 = vpack.c.b16 %v4968, %v4965
    %v5011 = vpack.c.b16 %v4972, %v4969
    %v5012 = vpack.c.b16 %v4973, %v4970
    %v5013 = vpack.c.b16 %v4974, %v4971
    %v5014 = vpack.c.b16 %v4978, %v4975
    %v5015 = vpack.c.b16 %v4979, %v4976
    %v5016 = vpack.c.b16 %v4980, %v4977
    %v5017 = vpack.c.b16 %v4984, %v4981
    %v5018 = vpack.c.b16 %v4985, %v4982
    %v5019 = vpack.c.b16 %v4986, %v4983
    %v5020 = vpack.c.b16 %v4990, %v4987
    %v5021 = vpack.c.b16 %v4991, %v4988
    %v5022 = vpack.c.b16 %v4992, %v4989
    %v5023 = vpack.c.b16 %v4996, %v4993
    %v5024 = vpack.c.b16 %v4997, %v4994
    %v5025 = vpack.c.b16 %v4998, %v4995
    %v5026 = vpack.c.b16 %v5002, %v4999
    %v5027 = vpack.c.b16 %v5003, %v5000
    %v5028 = vpack.c.b16 %v5004, %v5001
    %v5029 = vpack.c.b16 %v5005, %v5005
    %v5030 = vpack.c.b16 %v5006, %v5006
    %v5031 = vpack.c.b16 %v5007, %v5007
    %v5054 = vsel %vm436, %v4626, 0
    %v5057 = vsel %vm436, %v4627, 0
    %v5060 = vsel %vm141, %v5029, 0
    %v5063 = vsel %vm141, %v5030, 0
    %v5066 = vsel %vm141, %v5031, 0
    %5068 = vmatprep.subr.bf16.mxu0 %v5009
    %5069 = vmatpush1.bf16.msra.mxu0 %v5008
    %5070 = vmatprep.subr.bf16.mxu0 %v5012
    %5071 = vmatpush1.bf16.msra.mxu0 %v5011
    %5072 = vmatprep.subr.bf16.mxu0 %v5015
    %5073 = vmatpush1.bf16.msra.mxu0 %v5014
    %5074 = vmatprep.subr.bf16.mxu0 %v5018
    %5075 = vmatpush1.bf16.msra.mxu0 %v5017
    %5076 = vmatprep.subr.bf16.mxu0 %v5021
    %5077 = vmatpush1.bf16.msra.mxu0 %v5020
    %5078 = vmatprep.subr.bf16.mxu0 %v5024
    %5079 = vmatpush1.bf16.msra.mxu0 %v5023
    %5080 = vmatprep.subr.bf16.mxu0 %v5027
    %5081 = vmatpush1.bf16.msra.mxu0 %v5026
    %5082 = vmatprep.subr.bf16.mxu0 %v5063
    %5083 = vmatpush1.bf16.msra.mxu0 %v5060
    %5084 = vmatprep.subr.bf16.mxu0 0
    %5085 = vmatpush1.bf16.msra.mxu0 0
    %5086 = vmatprep.subr.bf16.mxu0 0
    %5087 = vmatpush1.bf16.msra.mxu0 0
    %5088 = vmatprep.subr.bf16.mxu0 0
    %5089 = vmatpush1.bf16.msra.mxu0 0
    %5090 = vmatprep.subr.bf16.mxu0 0
    %5091 = vmatpush1.bf16.msra.mxu0 0
    %5092 = vmatprep.subr.bf16.mxu0 0
    %5093 = vmatpush1.bf16.msra.mxu0 0
    %5094 = vmatprep.subr.bf16.mxu0 0
    %5095 = vmatpush1.bf16.msra.mxu0 0
    %5096 = vmatprep.subr.bf16.mxu0 0
    %5097 = vmatpush1.bf16.msra.mxu0 0
    %5098 = vmatprep.subr.bf16.mxu0 0
    %5099 = vmatpush1.bf16.msra.mxu0 0
    %5100 = vmatprep.mubr.bf16.mxu0 0
    %5101 = vmatmul.mubr.bf16.gmra.mrb[0].mxu0 %v5054
    %v5102 = vpop.f32.mrb[0].mxu0
    %v5103 = vadd.f32 %v4869, %v5102
    %v5104 = vpop.f32.mrb[0].mxu0
    %v5105 = vadd.f32 %v4871, %v5104
    %v5106 = vpop.f32.mrb[0].mxu0
    %v5107 = vadd.f32 %v4873, %v5106
    %v5108 = vpop.f32.mrb[0].mxu0
    %v5109 = vadd.f32 %v4875, %v5108
    %5110 = vmatprep.mubr.bf16.mxu0 0
    %5111 = vmatmul.mubr.bf16.gmra.mrb[0].mxu0 %v5057
    %v5112 = vpop.f32.mrb[0].mxu0
    %v5113 = vadd.f32 %v4879, %v5112
    %v5114 = vpop.f32.mrb[0].mxu0
    %v5115 = vadd.f32 %v4881, %v5114
    %v5116 = vpop.f32.mrb[0].mxu0
    %v5117 = vpop.f32.mrb[0].mxu0
    %5118 = vdwg.mxu0
    %5119 = vmatprep.subr.bf16.mxu0 0
    %5120 = vmatpush1.bf16.msra.mxu0 %v5010
    %5121 = vmatprep.subr.bf16.mxu0 0
    %5122 = vmatpush1.bf16.msra.mxu0 %v5013
    %5123 = vmatprep.subr.bf16.mxu0 0
    %5124 = vmatpush1.bf16.msra.mxu0 %v5016
    %5125 = vmatprep.subr.bf16.mxu0 0
    %5126 = vmatpush1.bf16.msra.mxu0 %v5019
    %5127 = vmatprep.subr.bf16.mxu0 0
    %5128 = vmatpush1.bf16.msra.mxu0 %v5022
    %5129 = vmatprep.subr.bf16.mxu0 0
    %5130 = vmatpush1.bf16.msra.mxu0 %v5025
    %5131 = vmatprep.subr.bf16.mxu0 0
    %5132 = vmatpush1.bf16.msra.mxu0 %v5028
    %5133 = vmatprep.subr.bf16.mxu0 0
    %5134 = vmatpush1.bf16.msra.mxu0 %v5066
    %5135 = vmatprep.subr.bf16.mxu0 0
    %5136 = vmatpush1.bf16.msra.mxu0 0
    %5137 = vmatprep.subr.bf16.mxu0 0
    %5138 = vmatpush1.bf16.msra.mxu0 0
    %5139 = vmatprep.subr.bf16.mxu0 0
    %5140 = vmatpush1.bf16.msra.mxu0 0
    %5141 = vmatprep.subr.bf16.mxu0 0
    %5142 = vmatpush1.bf16.msra.mxu0 0
    %5143 = vmatprep.subr.bf16.mxu0 0
    %5144 = vmatpush1.bf16.msra.mxu0 0
    %5145 = vmatprep.subr.bf16.mxu0 0
    %5146 = vmatpush1.bf16.msra.mxu0 0
    %5147 = vmatprep.subr.bf16.mxu0 0
    %5148 = vmatpush1.bf16.msra.mxu0 0
    %5149 = vmatprep.subr.bf16.mxu0 0
    %5150 = vmatpush1.bf16.msra.mxu0 0
    %5151 = vmatprep.mubr.bf16.mxu0 0
    %5152 = vmatmul.mubr.bf16.gmra.mrb[0].mxu0 %v5054
    %v5153 = vpop.f32.mrb[0].mxu0
    %v5154 = vadd.f32 %v4920, %v5153
    %v5155 = vpop.f32.mrb[0].mxu0
    %v5156 = vpop.f32.mrb[0].mxu0
    %v5157 = vadd.f32 %v4923, %v5156
    %v5158 = vpop.f32.mrb[0].mxu0
    %5159 = vmatprep.mubr.bf16.mxu0 0
    %5160 = vmatmul.mubr.bf16.gmra.mrb[0].mxu0 %v5057
    %v5161 = vpop.f32.mrb[0].mxu0
    %v5162 = vadd.f32 %v4928, %v5161
    %v5163 = vpop.f32.mrb[0].mxu0
    %v5164 = vpop.f32.mrb[0].mxu0
    %v5165 = vpop.f32.mrb[0].mxu0
    %5166 = vdwg.mxu0
    %v5167 = vld [vmem:[%s785] sm:$0xff]
    %v5168 = vld [vmem:[%s785 + $0x8] sm:$0xf]
    %v5169 = vld [vmem:[%s785 + $0xc] sm:$0xff]
    %v5170 = vld [vmem:[%s785 + $0x14] sm:$0xf]
    %v5171 = vld [vmem:[%s785 + $0x18] sm:$0xff]
    %v5172 = vld [vmem:[%s785 + $0x20] sm:$0xf]
    %v5173 = vld [vmem:[%s785 + $0x24] sm:$0xff]
    %v5174 = vld [vmem:[%s785 + $0x2c] sm:$0xf]
    %v5175 = vld [vmem:[%s785 + $0x30] sm:$0xff]
    %v5176 = vld [vmem:[%s785 + $0x38] sm:$0xf]
    %v5177 = vld [vmem:[%s785 + $0x3c] sm:$0xff]
    %v5178 = vld [vmem:[%s785 + $0x44] sm:$0xf]
    %v5179 = vld [vmem:[%s785 + $0x48] sm:$0xff]
    %v5180 = vld [vmem:[%s785 + $0x50] sm:$0xf]
    %v5181 = vld [vmem:[%s785 + $0x54] sm:$0xff]
    %v5182 = vld [vmem:[%s785 + $0x5c] sm:$0xf]
    %v5183 = vld [vmem:[%s785 + $0x60] sm:$0xff]
    %v5184 = vld [vmem:[%s785 + $0x68] sm:$0xf]
    %v5185 = vld [vmem:[%s785 + $0x6c] sm:$0xff]
    %v5186 = vld [vmem:[%s785 + $0x74] sm:$0xf]
    %v5187 = vld [vmem:[%s785 + $0x78] sm:$0xff]
    %v5188 = vld [vmem:[%s785 + $0x80] sm:$0xf]
    %v5189 = vld [vmem:[%s785 + $0x84] sm:$0xff]
    %v5190 = vld [vmem:[%s785 + $0x8c] sm:$0xf]
    %v5191 = vld [vmem:[%s785 + $0x90] sm:$0xff]
    %v5192 = vld [vmem:[%s785 + $0x98] sm:$0xf]
    %v5193 = vld [vmem:[%s785 + $0x9c] sm:$0xff]
    %v5194 = vld [vmem:[%s785 + $0xa4] sm:$0xf]
    %v5195 = vld [vmem:[%s785 + $0xa8] sm:$0xff]
    %v5196 = vld [vmem:[%s785 + $0xb0] sm:$0xf]
    %v5227 = vunpack.c.l.b16 %v5167
    %v5228 = vunpack.c.h.b16 %v5167
    %v5229 = vunpack.c.l.b16 %v5168
    %v5230 = vunpack.c.l.b16 %v5169
    %v5231 = vunpack.c.h.b16 %v5169
    %v5232 = vunpack.c.l.b16 %v5170
    %v5233 = vunpack.c.l.b16 %v5171
    %v5234 = vunpack.c.h.b16 %v5171
    %v5235 = vunpack.c.l.b16 %v5172
    %v5236 = vunpack.c.l.b16 %v5173
    %v5237 = vunpack.c.h.b16 %v5173
    %v5238 = vunpack.c.l.b16 %v5174
    %v5239 = vunpack.c.l.b16 %v5175
    %v5240 = vunpack.c.h.b16 %v5175
    %v5241 = vunpack.c.l.b16 %v5176
    %v5242 = vunpack.c.l.b16 %v5177
    %v5243 = vunpack.c.h.b16 %v5177
    %v5244 = vunpack.c.l.b16 %v5178
    %v5245 = vunpack.c.l.b16 %v5179
    %v5246 = vunpack.c.h.b16 %v5179
    %v5247 = vunpack.c.l.b16 %v5180
    %v5248 = vunpack.c.l.b16 %v5181
    %v5249 = vunpack.c.h.b16 %v5181
    %v5250 = vunpack.c.l.b16 %v5182
    %v5251 = vunpack.c.l.b16 %v5183
    %v5252 = vunpack.c.h.b16 %v5183
    %v5253 = vunpack.c.l.b16 %v5184
    %v5254 = vunpack.c.l.b16 %v5185
    %v5255 = vunpack.c.h.b16 %v5185
    %v5256 = vunpack.c.l.b16 %v5186
    %v5257 = vunpack.c.l.b16 %v5187
    %v5258 = vunpack.c.h.b16 %v5187
    %v5259 = vunpack.c.l.b16 %v5188
    %v5260 = vunpack.c.l.b16 %v5189
    %v5261 = vunpack.c.h.b16 %v5189
    %v5262 = vunpack.c.l.b16 %v5190
    %v5263 = vunpack.c.l.b16 %v5191
    %v5264 = vunpack.c.h.b16 %v5191
    %v5265 = vunpack.c.l.b16 %v5192
    %v5266 = vunpack.c.l.b16 %v5193
    %v5267 = vunpack.c.h.b16 %v5193
    %v5268 = vunpack.c.l.b16 %v5194
    %v5269 = vunpack.c.l.b16 %v5195
    %v5270 = vunpack.c.h.b16 %v5195
    %v5271 = vunpack.c.l.b16 %v5196
    %v5272 = vpack.c.b16 %v5230, %v5227
    %v5273 = vpack.c.b16 %v5231, %v5228
    %v5274 = vpack.c.b16 %v5232, %v5229
    %v5275 = vpack.c.b16 %v5236, %v5233
    %v5276 = vpack.c.b16 %v5237, %v5234
    %v5277 = vpack.c.b16 %v5238, %v5235
    %v5278 = vpack.c.b16 %v5242, %v5239
    %v5279 = vpack.c.b16 %v5243, %v5240
    %v5280 = vpack.c.b16 %v5244, %v5241
    %v5281 = vpack.c.b16 %v5248, %v5245
    %v5282 = vpack.c.b16 %v5249, %v5246
    %v5283 = vpack.c.b16 %v5250, %v5247
    %v5284 = vpack.c.b16 %v5254, %v5251
    %v5285 = vpack.c.b16 %v5255, %v5252
    %v5286 = vpack.c.b16 %v5256, %v5253
    %v5287 = vpack.c.b16 %v5260, %v5257
    %v5288 = vpack.c.b16 %v5261, %v5258
    %v5289 = vpack.c.b16 %v5262, %v5259
    %v5290 = vpack.c.b16 %v5266, %v5263
    %v5291 = vpack.c.b16 %v5267, %v5264
    %v5292 = vpack.c.b16 %v5268, %v5265
    %v5293 = vpack.c.b16 %v5269, %v5269
    %v5294 = vpack.c.b16 %v5270, %v5270
    %v5295 = vpack.c.b16 %v5271, %v5271
    %v5318 = vsel %vm436, %v4629, 0
    %v5321 = vsel %vm436, %v4630, 0
    %v5324 = vsel %vm141, %v5293, 0
    %v5327 = vsel %vm141, %v5294, 0
    %v5330 = vsel %vm141, %v5295, 0
    %5332 = vmatprep.subr.bf16.mxu0 %v5273
    %5333 = vmatpush1.bf16.msra.mxu0 %v5272
    %5334 = vmatprep.subr.bf16.mxu0 %v5276
    %5335 = vmatpush1.bf16.msra.mxu0 %v5275
    %5336 = vmatprep.subr.bf16.mxu0 %v5279
    %5337 = vmatpush1.bf16.msra.mxu0 %v5278
    %5338 = vmatprep.subr.bf16.mxu0 %v5282
    %5339 = vmatpush1.bf16.msra.mxu0 %v5281
    %5340 = vmatprep.subr.bf16.mxu0 %v5285
    %5341 = vmatpush1.bf16.msra.mxu0 %v5284
    %5342 = vmatprep.subr.bf16.mxu0 %v5288
    %5343 = vmatpush1.bf16.msra.mxu0 %v5287
    %5344 = vmatprep.subr.bf16.mxu0 %v5291
    %5345 = vmatpush1.bf16.msra.mxu0 %v5290
    %5346 = vmatprep.subr.bf16.mxu0 %v5327
    %5347 = vmatpush1.bf16.msra.mxu0 %v5324
    %5348 = vmatprep.subr.bf16.mxu0 0
    %5349 = vmatpush1.bf16.msra.mxu0 0
    %5350 = vmatprep.subr.bf16.mxu0 0
    %5351 = vmatpush1.bf16.msra.mxu0 0
    %5352 = vmatprep.subr.bf16.mxu0 0
    %5353 = vmatpush1.bf16.msra.mxu0 0
    %5354 = vmatprep.subr.bf16.mxu0 0
    %5355 = vmatpush1.bf16.msra.mxu0 0
    %5356 = vmatprep.subr.bf16.mxu0 0
    %5357 = vmatpush1.bf16.msra.mxu0 0
    %5358 = vmatprep.subr.bf16.mxu0 0
    %5359 = vmatpush1.bf16.msra.mxu0 0
    %5360 = vmatprep.subr.bf16.mxu0 0
    %5361 = vmatpush1.bf16.msra.mxu0 0
    %5362 = vmatprep.subr.bf16.mxu0 0
    %5363 = vmatpush1.bf16.msra.mxu0 0
    %5364 = vmatprep.mubr.bf16.mxu0 0
    %5365 = vmatmul.mubr.bf16.gmra.mrb[0].mxu0 %v5318
    %v5366 = vpop.f32.mrb[0].mxu0
    %v5367 = vadd.f32 0.0, %v5366
    %v5368 = vpop.f32.mrb[0].mxu0
    %v5369 = vadd.f32 0.0, %v5368
    %v5370 = vpop.f32.mrb[0].mxu0
    %v5371 = vadd.f32 0.0, %v5370
    %v5372 = vpop.f32.mrb[0].mxu0
    %v5373 = vadd.f32 0.0, %v5372
    %5374 = vmatprep.mubr.bf16.mxu0 0
    %5375 = vmatmul.mubr.bf16.gmra.mrb[0].mxu0 %v5321
    %v5376 = vpop.f32.mrb[0].mxu0
    %v5377 = vadd.f32 0.0, %v5376
    %v5378 = vpop.f32.mrb[0].mxu0
    %v5379 = vadd.f32 0.0, %v5378
    %v5380 = vpop.f32.mrb[0].mxu0
    %v5381 = vpop.f32.mrb[0].mxu0
    %5382 = vdwg.mxu0
    %5383 = vmatprep.subr.bf16.mxu0 0
    %5384 = vmatpush1.bf16.msra.mxu0 %v5274
    %5385 = vmatprep.subr.bf16.mxu0 0
    %5386 = vmatpush1.bf16.msra.mxu0 %v5277
    %5387 = vmatprep.subr.bf16.mxu0 0
    %5388 = vmatpush1.bf16.msra.mxu0 %v5280
    %5389 = vmatprep.subr.bf16.mxu0 0
    %5390 = vmatpush1.bf16.msra.mxu0 %v5283
    %5391 = vmatprep.subr.bf16.mxu0 0
    %5392 = vmatpush1.bf16.msra.mxu0 %v5286
    %5393 = vmatprep.subr.bf16.mxu0 0
    %5394 = vmatpush1.bf16.msra.mxu0 %v5289
    %5395 = vmatprep.subr.bf16.mxu0 0
    %5396 = vmatpush1.bf16.msra.mxu0 %v5292
    %5397 = vmatprep.subr.bf16.mxu0 0
    %5398 = vmatpush1.bf16.msra.mxu0 %v5330
    %5399 = vmatprep.subr.bf16.mxu0 0
    %5400 = vmatpush1.bf16.msra.mxu0 0
    %5401 = vmatprep.subr.bf16.mxu0 0
    %5402 = vmatpush1.bf16.msra.mxu0 0
    %5403 = vmatprep.subr.bf16.mxu0 0
    %5404 = vmatpush1.bf16.msra.mxu0 0
    %5405 = vmatprep.subr.bf16.mxu0 0
    %5406 = vmatpush1.bf16.msra.mxu0 0
    %5407 = vmatprep.subr.bf16.mxu0 0
    %5408 = vmatpush1.bf16.msra.mxu0 0
    %5409 = vmatprep.subr.bf16.mxu0 0
    %5410 = vmatpush1.bf16.msra.mxu0 0
    %5411 = vmatprep.subr.bf16.mxu0 0
    %5412 = vmatpush1.bf16.msra.mxu0 0
    %5413 = vmatprep.subr.bf16.mxu0 0
    %5414 = vmatpush1.bf16.msra.mxu0 0
    %5415 = vmatprep.mubr.bf16.mxu0 0
    %5416 = vmatmul.mubr.bf16.gmra.mrb[0].mxu0 %v5318
    %v5417 = vpop.f32.mrb[0].mxu0
    %v5418 = vadd.f32 0.0, %v5417
    %v5419 = vpop.f32.mrb[0].mxu0
    %v5420 = vpop.f32.mrb[0].mxu0
    %v5421 = vadd.f32 0.0, %v5420
    %v5422 = vpop.f32.mrb[0].mxu0
    %5423 = vmatprep.mubr.bf16.mxu0 0
    %5424 = vmatmul.mubr.bf16.gmra.mrb[0].mxu0 %v5321
    %v5425 = vpop.f32.mrb[0].mxu0
    %v5426 = vadd.f32 0.0, %v5425
    %v5427 = vpop.f32.mrb[0].mxu0
    %v5428 = vpop.f32.mrb[0].mxu0
    %v5429 = vpop.f32.mrb[0].mxu0
    %5430 = vdwg.mxu0
    %v5431 = vadd.f32 %v5103, %v5367
    %v5432 = vadd.f32 %v5105, %v5369
    %v5433 = vadd.f32 %v5154, %v5418
    %v5434 = vadd.f32 %v5107, %v5371
    %v5435 = vadd.f32 %v5109, %v5373
    %v5436 = vadd.f32 %v5157, %v5421
    %v5437 = vadd.f32 %v5113, %v5377
    %v5438 = vadd.f32 %v5115, %v5379
    %v5439 = vadd.f32 %v5162, %v5426
    %v5440 = vld [vmem:[%s1059] sm:$0xff]
    %v5441 = vld [vmem:[%s1059 + $0x8] sm:$0xf]
    %v5442 = vld [vmem:[%s1059 + $0xc] sm:$0xff]
    %v5443 = vld [vmem:[%s1059 + $0x14] sm:$0xf]
    %v5444 = vld [vmem:[%s1059 + $0x18] sm:$0xff]
    %v5445 = vld [vmem:[%s1059 + $0x20] sm:$0xf]
    %v5446 = vld [vmem:[%s1059 + $0x24] sm:$0xff]
    %v5447 = vld [vmem:[%s1059 + $0x2c] sm:$0xf]
    %v5448 = vld [vmem:[%s1059 + $0x30] sm:$0xff]
    %v5449 = vld [vmem:[%s1059 + $0x38] sm:$0xf]
    %v5450 = vld [vmem:[%s1059 + $0x3c] sm:$0xff]
    %v5451 = vld [vmem:[%s1059 + $0x44] sm:$0xf]
    %v5452 = vld [vmem:[%s1059 + $0x48] sm:$0xff]
    %v5453 = vld [vmem:[%s1059 + $0x50] sm:$0xf]
    %v5454 = vld [vmem:[%s1059 + $0x54] sm:$0xff]
    %v5455 = vld [vmem:[%s1059 + $0x5c] sm:$0xf]
    %v5456 = vld [vmem:[%s1059 + $0x60] sm:$0xff]
    %v5457 = vld [vmem:[%s1059 + $0x68] sm:$0xf]
    %v5458 = vld [vmem:[%s1059 + $0x6c] sm:$0xff]
    %v5459 = vld [vmem:[%s1059 + $0x74] sm:$0xf]
    %v5460 = vld [vmem:[%s1059 + $0x78] sm:$0xff]
    %v5461 = vld [vmem:[%s1059 + $0x80] sm:$0xf]
    %v5462 = vld [vmem:[%s1059 + $0x84] sm:$0xff]
    %v5463 = vld [vmem:[%s1059 + $0x8c] sm:$0xf]
    %v5464 = vld [vmem:[%s1059 + $0x90] sm:$0xff]
    %v5465 = vld [vmem:[%s1059 + $0x98] sm:$0xf]
    %v5466 = vld [vmem:[%s1059 + $0x9c] sm:$0xff]
    %v5467 = vld [vmem:[%s1059 + $0xa4] sm:$0xf]
    %v5468 = vld [vmem:[%s1059 + $0xa8] sm:$0xff]
    %v5469 = vld [vmem:[%s1059 + $0xb0] sm:$0xf]
    %v5472 = vrot.slane %v4630, 4
    %v5473 = vrot.slane %v4631, 4
    %v5474 = vsel %vm312, %v5472, %v5473
    %v5505 = vunpack.c.l.b16 %v5440
    %v5506 = vunpack.c.h.b16 %v5440
    %v5507 = vunpack.c.l.b16 %v5441
    %v5508 = vunpack.c.l.b16 %v5442
    %v5509 = vunpack.c.h.b16 %v5442
    %v5510 = vunpack.c.l.b16 %v5443
    %v5511 = vunpack.c.l.b16 %v5444
    %v5512 = vunpack.c.h.b16 %v5444
    %v5513 = vunpack.c.l.b16 %v5445
    %v5514 = vunpack.c.l.b16 %v5446
    %v5515 = vunpack.c.h.b16 %v5446
    %v5516 = vunpack.c.l.b16 %v5447
    %v5517 = vunpack.c.l.b16 %v5448
    %v5518 = vunpack.c.h.b16 %v5448
    %v5519 = vunpack.c.l.b16 %v5449
    %v5520 = vunpack.c.l.b16 %v5450
    %v5521 = vunpack.c.h.b16 %v5450
    %v5522 = vunpack.c.l.b16 %v5451
    %v5523 = vunpack.c.l.b16 %v5452
    %v5524 = vunpack.c.h.b16 %v5452
    %v5525 = vunpack.c.l.b16 %v5453
    %v5526 = vunpack.c.l.b16 %v5454
    %v5527 = vunpack.c.h.b16 %v5454
    %v5528 = vunpack.c.l.b16 %v5455
    %v5529 = vunpack.c.l.b16 %v5456
    %v5530 = vunpack.c.h.b16 %v5456
    %v5531 = vunpack.c.l.b16 %v5457
    %v5532 = vunpack.c.l.b16 %v5458
    %v5533 = vunpack.c.h.b16 %v5458
    %v5534 = vunpack.c.l.b16 %v5459
    %v5535 = vunpack.c.l.b16 %v5460
    %v5536 = vunpack.c.h.b16 %v5460
    %v5537 = vunpack.c.l.b16 %v5461
    %v5538 = vunpack.c.l.b16 %v5462
    %v5539 = vunpack.c.h.b16 %v5462
    %v5540 = vunpack.c.l.b16 %v5463
    %v5541 = vunpack.c.l.b16 %v5464
    %v5542 = vunpack.c.h.b16 %v5464
    %v5543 = vunpack.c.l.b16 %v5465
    %v5544 = vunpack.c.l.b16 %v5466
    %v5545 = vunpack.c.h.b16 %v5466
    %v5546 = vunpack.c.l.b16 %v5467
    %v5547 = vunpack.c.l.b16 %v5468
    %v5548 = vunpack.c.h.b16 %v5468
    %v5549 = vunpack.c.l.b16 %v5469
    %v5550 = vpack.c.b16 %v5508, %v5505
    %v5551 = vpack.c.b16 %v5509, %v5506
    %v5552 = vpack.c.b16 %v5510, %v5507
    %v5553 = vpack.c.b16 %v5514, %v5511
    %v5554 = vpack.c.b16 %v5515, %v5512
    %v5555 = vpack.c.b16 %v5516, %v5513
    %v5556 = vpack.c.b16 %v5520, %v5517
    %v5557 = vpack.c.b16 %v5521, %v5518
    %v5558 = vpack.c.b16 %v5522, %v5519
    %v5559 = vpack.c.b16 %v5526, %v5523
    %v5560 = vpack.c.b16 %v5527, %v5524
    %v5561 = vpack.c.b16 %v5528, %v5525
    %v5562 = vpack.c.b16 %v5532, %v5529
    %v5563 = vpack.c.b16 %v5533, %v5530
    %v5564 = vpack.c.b16 %v5534, %v5531
    %v5565 = vpack.c.b16 %v5538, %v5535
    %v5566 = vpack.c.b16 %v5539, %v5536
    %v5567 = vpack.c.b16 %v5540, %v5537
    %v5568 = vpack.c.b16 %v5544, %v5541
    %v5569 = vpack.c.b16 %v5545, %v5542
    %v5570 = vpack.c.b16 %v5546, %v5543
    %v5571 = vpack.c.b16 %v5547, %v5547
    %v5572 = vpack.c.b16 %v5548, %v5548
    %v5573 = vpack.c.b16 %v5549, %v5549
    %v5596 = vsel %vm436, %v5474, 0
    %v5599 = vsel %vm436, %v5473, 0
    %v5602 = vsel %vm141, %v5571, 0
    %v5605 = vsel %vm141, %v5572, 0
    %v5608 = vsel %vm141, %v5573, 0
    %5610 = vmatprep.subr.bf16.mxu0 %v5551
    %5611 = vmatpush1.bf16.msra.mxu0 %v5550
    %5612 = vmatprep.subr.bf16.mxu0 %v5554
    %5613 = vmatpush1.bf16.msra.mxu0 %v5553
    %5614 = vmatprep.subr.bf16.mxu0 %v5557
    %5615 = vmatpush1.bf16.msra.mxu0 %v5556
    %5616 = vmatprep.subr.bf16.mxu0 %v5560
    %5617 = vmatpush1.bf16.msra.mxu0 %v5559
    %5618 = vmatprep.subr.bf16.mxu0 %v5563
    %5619 = vmatpush1.bf16.msra.mxu0 %v5562
    %5620 = vmatprep.subr.bf16.mxu0 %v5566
    %5621 = vmatpush1.bf16.msra.mxu0 %v5565
    %5622 = vmatprep.subr.bf16.mxu0 %v5569
    %5623 = vmatpush1.bf16.msra.mxu0 %v5568
    %5624 = vmatprep.subr.bf16.mxu0 %v5605
    %5625 = vmatpush1.bf16.msra.mxu0 %v5602
    %5626 = vmatprep.subr.bf16.mxu0 0
    %5627 = vmatpush1.bf16.msra.mxu0 0
    %5628 = vmatprep.subr.bf16.mxu0 0
    %5629 = vmatpush1.bf16.msra.mxu0 0
    %5630 = vmatprep.subr.bf16.mxu0 0
    %5631 = vmatpush1.bf16.msra.mxu0 0
    %5632 = vmatprep.subr.bf16.mxu0 0
    %5633 = vmatpush1.bf16.msra.mxu0 0
    %5634 = vmatprep.subr.bf16.mxu0 0
    %5635 = vmatpush1.bf16.msra.mxu0 0
    %5636 = vmatprep.subr.bf16.mxu0 0
    %5637 = vmatpush1.bf16.msra.mxu0 0
    %5638 = vmatprep.subr.bf16.mxu0 0
    %5639 = vmatpush1.bf16.msra.mxu0 0
    %5640 = vmatprep.subr.bf16.mxu0 0
    %5641 = vmatpush1.bf16.msra.mxu0 0
    %5642 = vmatprep.mubr.bf16.mxu0 0
    %5643 = vmatmul.mubr.bf16.gmra.mrb[0].mxu0 %v5596
    %v5644 = vpop.f32.mrb[0].mxu0
    %v5645 = vadd.f32 0.0, %v5644
    %v5646 = vpop.f32.mrb[0].mxu0
    %v5647 = vadd.f32 0.0, %v5646
    %v5648 = vpop.f32.mrb[0].mxu0
    %v5649 = vadd.f32 0.0, %v5648
    %v5650 = vpop.f32.mrb[0].mxu0
    %v5651 = vadd.f32 0.0, %v5650
    %5652 = vmatprep.mubr.bf16.mxu0 0
    %5653 = vmatmul.mubr.bf16.gmra.mrb[0].mxu0 %v5599
    %v5654 = vpop.f32.mrb[0].mxu0
    %v5655 = vadd.f32 0.0, %v5654
    %v5656 = vpop.f32.mrb[0].mxu0
    %v5657 = vadd.f32 0.0, %v5656
    %v5658 = vpop.f32.mrb[0].mxu0
    %v5659 = vpop.f32.mrb[0].mxu0
    %5660 = vdwg.mxu0
    %5661 = vmatprep.subr.bf16.mxu0 0
    %5662 = vmatpush1.bf16.msra.mxu0 %v5552
    %5663 = vmatprep.subr.bf16.mxu0 0
    %5664 = vmatpush1.bf16.msra.mxu0 %v5555
    %5665 = vmatprep.subr.bf16.mxu0 0
    %5666 = vmatpush1.bf16.msra.mxu0 %v5558
    %5667 = vmatprep.subr.bf16.mxu0 0
    %5668 = vmatpush1.bf16.msra.mxu0 %v5561
    %5669 = vmatprep.subr.bf16.mxu0 0
    %5670 = vmatpush1.bf16.msra.mxu0 %v5564
    %5671 = vmatprep.subr.bf16.mxu0 0
    %5672 = vmatpush1.bf16.msra.mxu0 %v5567
    %5673 = vmatprep.subr.bf16.mxu0 0
    %5674 = vmatpush1.bf16.msra.mxu0 %v5570
    %5675 = vmatprep.subr.bf16.mxu0 0
    %5676 = vmatpush1.bf16.msra.mxu0 %v5608
    %5677 = vmatprep.subr.bf16.mxu0 0
    %5678 = vmatpush1.bf16.msra.mxu0 0
    %5679 = vmatprep.subr.bf16.mxu0 0
    %5680 = vmatpush1.bf16.msra.mxu0 0
    %5681 = vmatprep.subr.bf16.mxu0 0
    %5682 = vmatpush1.bf16.msra.mxu0 0
    %5683 = vmatprep.subr.bf16.mxu0 0
    %5684 = vmatpush1.bf16.msra.mxu0 0
    %5685 = vmatprep.subr.bf16.mxu0 0
    %5686 = vmatpush1.bf16.msra.mxu0 0
    %5687 = vmatprep.subr.bf16.mxu0 0
    %5688 = vmatpush1.bf16.msra.mxu0 0
    %5689 = vmatprep.subr.bf16.mxu0 0
    %5690 = vmatpush1.bf16.msra.mxu0 0
    %5691 = vmatprep.subr.bf16.mxu0 0
    %5692 = vmatpush1.bf16.msra.mxu0 0
    %5693 = vmatprep.mubr.bf16.mxu0 0
    %5694 = vmatmul.mubr.bf16.gmra.mrb[0].mxu0 %v5596
    %v5695 = vpop.f32.mrb[0].mxu0
    %v5696 = vadd.f32 0.0, %v5695
    %v5697 = vpop.f32.mrb[0].mxu0
    %v5698 = vpop.f32.mrb[0].mxu0
    %v5699 = vadd.f32 0.0, %v5698
    %v5700 = vpop.f32.mrb[0].mxu0
    %5701 = vmatprep.mubr.bf16.mxu0 0
    %5702 = vmatmul.mubr.bf16.gmra.mrb[0].mxu0 %v5599
    %v5703 = vpop.f32.mrb[0].mxu0
    %v5704 = vadd.f32 0.0, %v5703
    %v5705 = vpop.f32.mrb[0].mxu0
    %v5706 = vpop.f32.mrb[0].mxu0
    %v5707 = vpop.f32.mrb[0].mxu0
    %5708 = vdwg.mxu0
    %v5709 = vadd.f32 %v5431, %v5645
    %v5710 = vadd.f32 %v5432, %v5647
    %v5711 = vadd.f32 %v5433, %v5696
    %v5712 = vadd.f32 %v5434, %v5649
    %v5713 = vadd.f32 %v5435, %v5651
    %v5714 = vadd.f32 %v5436, %v5699
    %v5715 = vadd.f32 %v5437, %v5655
    %v5716 = vadd.f32 %v5438, %v5657
    %v5717 = vadd.f32 %v5439, %v5704
    %v5718 = vld [vmem:[%s1338] sm:$0xff]
    %v5719 = vld [vmem:[%s1338 + $0x8] sm:$0xf]
    %v5720 = vld [vmem:[%s1338 + $0xc] sm:$0xff]
    %v5721 = vld [vmem:[%s1338 + $0x14] sm:$0xf]
    %v5722 = vld [vmem:[%s1338 + $0x18] sm:$0xff]
    %v5723 = vld [vmem:[%s1338 + $0x20] sm:$0xf]
    %v5724 = vld [vmem:[%s1338 + $0x24] sm:$0xff]
    %v5725 = vld [vmem:[%s1338 + $0x2c] sm:$0xf]
    %v5726 = vld [vmem:[%s1338 + $0x30] sm:$0xff]
    %v5727 = vld [vmem:[%s1338 + $0x38] sm:$0xf]
    %v5728 = vld [vmem:[%s1338 + $0x3c] sm:$0xff]
    %v5729 = vld [vmem:[%s1338 + $0x44] sm:$0xf]
    %v5730 = vld [vmem:[%s1338 + $0x48] sm:$0xff]
    %v5731 = vld [vmem:[%s1338 + $0x50] sm:$0xf]
    %v5732 = vld [vmem:[%s1338 + $0x54] sm:$0xff]
    %v5733 = vld [vmem:[%s1338 + $0x5c] sm:$0xf]
    %v5734 = vld [vmem:[%s1338 + $0x60] sm:$0xff]
    %v5735 = vld [vmem:[%s1338 + $0x68] sm:$0xf]
    %v5736 = vld [vmem:[%s1338 + $0x6c] sm:$0xff]
    %v5737 = vld [vmem:[%s1338 + $0x74] sm:$0xf]
    %v5738 = vld [vmem:[%s1338 + $0x78] sm:$0xff]
    %v5739 = vld [vmem:[%s1338 + $0x80] sm:$0xf]
    %v5740 = vld [vmem:[%s1338 + $0x84] sm:$0xff]
    %v5741 = vld [vmem:[%s1338 + $0x8c] sm:$0xf]
    %v5742 = vld [vmem:[%s1338 + $0x90] sm:$0xff]
    %v5743 = vld [vmem:[%s1338 + $0x98] sm:$0xf]
    %v5744 = vld [vmem:[%s1338 + $0x9c] sm:$0xff]
    %v5745 = vld [vmem:[%s1338 + $0xa4] sm:$0xf]
    %v5746 = vld [vmem:[%s1338 + $0xa8] sm:$0xff]
    %v5747 = vld [vmem:[%s1338 + $0xb0] sm:$0xf]
    %v5778 = vunpack.c.l.b16 %v5718
    %v5779 = vunpack.c.h.b16 %v5718
    %v5780 = vunpack.c.l.b16 %v5719
    %v5781 = vunpack.c.l.b16 %v5720
    %v5782 = vunpack.c.h.b16 %v5720
    %v5783 = vunpack.c.l.b16 %v5721
    %v5784 = vunpack.c.l.b16 %v5722
    %v5785 = vunpack.c.h.b16 %v5722
    %v5786 = vunpack.c.l.b16 %v5723
    %v5787 = vunpack.c.l.b16 %v5724
    %v5788 = vunpack.c.h.b16 %v5724
    %v5789 = vunpack.c.l.b16 %v5725
    %v5790 = vunpack.c.l.b16 %v5726
    %v5791 = vunpack.c.h.b16 %v5726
    %v5792 = vunpack.c.l.b16 %v5727
    %v5793 = vunpack.c.l.b16 %v5728
    %v5794 = vunpack.c.h.b16 %v5728
    %v5795 = vunpack.c.l.b16 %v5729
    %v5796 = vunpack.c.l.b16 %v5730
    %v5797 = vunpack.c.h.b16 %v5730
    %v5798 = vunpack.c.l.b16 %v5731
    %v5799 = vunpack.c.l.b16 %v5732
    %v5800 = vunpack.c.h.b16 %v5732
    %v5801 = vunpack.c.l.b16 %v5733
    %v5802 = vunpack.c.l.b16 %v5734
    %v5803 = vunpack.c.h.b16 %v5734
    %v5804 = vunpack.c.l.b16 %v5735
    %v5805 = vunpack.c.l.b16 %v5736
    %v5806 = vunpack.c.h.b16 %v5736
    %v5807 = vunpack.c.l.b16 %v5737
    %v5808 = vunpack.c.l.b16 %v5738
    %v5809 = vunpack.c.h.b16 %v5738
    %v5810 = vunpack.c.l.b16 %v5739
    %v5811 = vunpack.c.l.b16 %v5740
    %v5812 = vunpack.c.h.b16 %v5740
    %v5813 = vunpack.c.l.b16 %v5741
    %v5814 = vunpack.c.l.b16 %v5742
    %v5815 = vunpack.c.h.b16 %v5742
    %v5816 = vunpack.c.l.b16 %v5743
    %v5817 = vunpack.c.l.b16 %v5744
    %v5818 = vunpack.c.h.b16 %v5744
    %v5819 = vunpack.c.l.b16 %v5745
    %v5820 = vunpack.c.l.b16 %v5746
    %v5821 = vunpack.c.h.b16 %v5746
    %v5822 = vunpack.c.l.b16 %v5747
    %v5823 = vpack.c.b16 %v5781, %v5778
    %v5824 = vpack.c.b16 %v5782, %v5779
    %v5825 = vpack.c.b16 %v5783, %v5780
    %v5826 = vpack.c.b16 %v5787, %v5784
    %v5827 = vpack.c.b16 %v5788, %v5785
    %v5828 = vpack.c.b16 %v5789, %v5786
    %v5829 = vpack.c.b16 %v5793, %v5790
    %v5830 = vpack.c.b16 %v5794, %v5791
    %v5831 = vpack.c.b16 %v5795, %v5792
    %v5832 = vpack.c.b16 %v5799, %v5796
    %v5833 = vpack.c.b16 %v5800, %v5797
    %v5834 = vpack.c.b16 %v5801, %v5798
    %v5835 = vpack.c.b16 %v5805, %v5802
    %v5836 = vpack.c.b16 %v5806, %v5803
    %v5837 = vpack.c.b16 %v5807, %v5804
    %v5838 = vpack.c.b16 %v5811, %v5808
    %v5839 = vpack.c.b16 %v5812, %v5809
    %v5840 = vpack.c.b16 %v5813, %v5810
    %v5841 = vpack.c.b16 %v5817, %v5814
    %v5842 = vpack.c.b16 %v5818, %v5815
    %v5843 = vpack.c.b16 %v5819, %v5816
    %v5844 = vpack.c.b16 %v5820, %v5820
    %v5845 = vpack.c.b16 %v5821, %v5821
    %v5846 = vpack.c.b16 %v5822, %v5822
    %v5869 = vsel %vm436, %v4632, 0
    %v5872 = vsel %vm436, %v4633, 0
    %v5875 = vsel %vm141, %v5844, 0
    %v5878 = vsel %vm141, %v5845, 0
    %v5881 = vsel %vm141, %v5846, 0
    %5883 = vmatprep.subr.bf16.mxu0 %v5824
    %5884 = vmatpush1.bf16.msra.mxu0 %v5823
    %5885 = vmatprep.subr.bf16.mxu0 %v5827
    %5886 = vmatpush1.bf16.msra.mxu0 %v5826
    %5887 = vmatprep.subr.bf16.mxu0 %v5830
    %5888 = vmatpush1.bf16.msra.mxu0 %v5829
    %5889 = vmatprep.subr.bf16.mxu0 %v5833
    %5890 = vmatpush1.bf16.msra.mxu0 %v5832
    %5891 = vmatprep.subr.bf16.mxu0 %v5836
    %5892 = vmatpush1.bf16.msra.mxu0 %v5835
    %5893 = vmatprep.subr.bf16.mxu0 %v5839
    %5894 = vmatpush1.bf16.msra.mxu0 %v5838
    %5895 = vmatprep.subr.bf16.mxu0 %v5842
    %5896 = vmatpush1.bf16.msra.mxu0 %v5841
    %5897 = vmatprep.subr.bf16.mxu0 %v5878
    %5898 = vmatpush1.bf16.msra.mxu0 %v5875
    %5899 = vmatprep.subr.bf16.mxu0 0
    %5900 = vmatpush1.bf16.msra.mxu0 0
    %5901 = vmatprep.subr.bf16.mxu0 0
    %5902 = vmatpush1.bf16.msra.mxu0 0
    %5903 = vmatprep.subr.bf16.mxu0 0
    %5904 = vmatpush1.bf16.msra.mxu0 0
    %5905 = vmatprep.subr.bf16.mxu0 0
    %5906 = vmatpush1.bf16.msra.mxu0 0
    %5907 = vmatprep.subr.bf16.mxu0 0
    %5908 = vmatpush1.bf16.msra.mxu0 0
    %5909 = vmatprep.subr.bf16.mxu0 0
    %5910 = vmatpush1.bf16.msra.mxu0 0
    %5911 = vmatprep.subr.bf16.mxu0 0
    %5912 = vmatpush1.bf16.msra.mxu0 0
    %5913 = vmatprep.subr.bf16.mxu0 0
    %5914 = vmatpush1.bf16.msra.mxu0 0
    %5915 = vmatprep.mubr.bf16.mxu0 0
    %5916 = vmatmul.mubr.bf16.gmra.mrb[0].mxu0 %v5869
    %v5917 = vpop.f32.mrb[0].mxu0
    %v5918 = vadd.f32 0.0, %v5917
    %v5919 = vpop.f32.mrb[0].mxu0
    %v5920 = vadd.f32 0.0, %v5919
    %v5921 = vpop.f32.mrb[0].mxu0
    %v5922 = vadd.f32 0.0, %v5921
    %v5923 = vpop.f32.mrb[0].mxu0
    %v5924 = vadd.f32 0.0, %v5923
    %5925 = vmatprep.mubr.bf16.mxu0 0
    %5926 = vmatmul.mubr.bf16.gmra.mrb[0].mxu0 %v5872
    %v5927 = vpop.f32.mrb[0].mxu0
    %v5928 = vadd.f32 0.0, %v5927
    %v5929 = vpop.f32.mrb[0].mxu0
    %v5930 = vadd.f32 0.0, %v5929
    %v5931 = vpop.f32.mrb[0].mxu0
    %v5932 = vpop.f32.mrb[0].mxu0
    %5933 = vdwg.mxu0
    %5934 = vmatprep.subr.bf16.mxu0 0
    %5935 = vmatpush1.bf16.msra.mxu0 %v5825
    %5936 = vmatprep.subr.bf16.mxu0 0
    %5937 = vmatpush1.bf16.msra.mxu0 %v5828
    %5938 = vmatprep.subr.bf16.mxu0 0
    %5939 = vmatpush1.bf16.msra.mxu0 %v5831
    %5940 = vmatprep.subr.bf16.mxu0 0
    %5941 = vmatpush1.bf16.msra.mxu0 %v5834
    %5942 = vmatprep.subr.bf16.mxu0 0
    %5943 = vmatpush1.bf16.msra.mxu0 %v5837
    %5944 = vmatprep.subr.bf16.mxu0 0
    %5945 = vmatpush1.bf16.msra.mxu0 %v5840
    %5946 = vmatprep.subr.bf16.mxu0 0
    %5947 = vmatpush1.bf16.msra.mxu0 %v5843
    %5948 = vmatprep.subr.bf16.mxu0 0
    %5949 = vmatpush1.bf16.msra.mxu0 %v5881
    %5950 = vmatprep.subr.bf16.mxu0 0
    %5951 = vmatpush1.bf16.msra.mxu0 0
    %5952 = vmatprep.subr.bf16.mxu0 0
    %5953 = vmatpush1.bf16.msra.mxu0 0
    %5954 = vmatprep.subr.bf16.mxu0 0
    %5955 = vmatpush1.bf16.msra.mxu0 0
    %5956 = vmatprep.subr.bf16.mxu0 0
    %5957 = vmatpush1.bf16.msra.mxu0 0
    %5958 = vmatprep.subr.bf16.mxu0 0
    %5959 = vmatpush1.bf16.msra.mxu0 0
    %5960 = vmatprep.subr.bf16.mxu0 0
    %5961 = vmatpush1.bf16.msra.mxu0 0
    %5962 = vmatprep.subr.bf16.mxu0 0
    %5963 = vmatpush1.bf16.msra.mxu0 0
    %5964 = vmatprep.subr.bf16.mxu0 0
    %5965 = vmatpush1.bf16.msra.mxu0 0
    %5966 = vmatprep.mubr.bf16.mxu0 0
    %5967 = vmatmul.mubr.bf16.gmra.mrb[0].mxu0 %v5869
    %v5968 = vpop.f32.mrb[0].mxu0
    %v5969 = vadd.f32 0.0, %v5968
    %v5970 = vpop.f32.mrb[0].mxu0
    %v5971 = vpop.f32.mrb[0].mxu0
    %v5972 = vadd.f32 0.0, %v5971
    %v5973 = vpop.f32.mrb[0].mxu0
    %5974 = vmatprep.mubr.bf16.mxu0 0
    %5975 = vmatmul.mubr.bf16.gmra.mrb[0].mxu0 %v5872
    %v5976 = vpop.f32.mrb[0].mxu0
    %v5977 = vadd.f32 0.0, %v5976
    %v5978 = vpop.f32.mrb[0].mxu0
    %v5979 = vpop.f32.mrb[0].mxu0
    %v5980 = vpop.f32.mrb[0].mxu0
    %5981 = vdwg.mxu0
    %v5982 = vadd.f32 %v5709, %v5918
    %v5983 = vadd.f32 %v5710, %v5920
    %v5984 = vadd.f32 %v5711, %v5969
    %v5985 = vadd.f32 %v5712, %v5922
    %v5986 = vadd.f32 %v5713, %v5924
    %v5987 = vadd.f32 %v5714, %v5972
    %v5988 = vadd.f32 %v5715, %v5928
    %v5989 = vadd.f32 %v5716, %v5930
    %v5990 = vadd.f32 %v5717, %v5977
    %v5991 = vld [vmem:[%s3] sm:$0x7]
    %v5993 = vlaneseq
    %v5994 = vshrl.u32 %v5993, 7
    %v5995 = vsub.s32 0, %v5994
    %v5996 = vrot.slane %v5991, %v5995
    %v5997 = vlaneseq
    %v5998 = vshrl.u32 %v5997, 7
    %v5999 = vsub.s32 1, %v5998
    %v6000 = vrot.slane %v5991, %v5999
    %v6001 = vlaneseq
    %v6002 = vshrl.u32 %v6001, 7
    %v6003 = vsub.s32 2, %v6002
    %v6004 = vrot.slane %v5991, %v6003
    %v6008 = vadd.f32 %v5982, %v5996
    %v6009 = vadd.f32 %v5983, %v6000
    %v6010 = vadd.f32 %v5984, %v6004
    %v6011 = vadd.f32 %v5985, %v5996
    %v6012 = vadd.f32 %v5986, %v6000
    %v6013 = vadd.f32 %v5987, %v6004
    %v6014 = vadd.f32 %v5988, %v5996
    %v6015 = vadd.f32 %v5989, %v6000
    %v6016 = vadd.f32 %v5990, %v6004
    %v6017 = vmax.f32 %v6008, 0.0
    %v6018 = vmax.f32 %v6009, 0.0
    %v6019 = vmax.f32 %v6010, 0.0
    %v6020 = vmax.f32 %v6011, 0.0
    %v6021 = vmax.f32 %v6012, 0.0
    %v6022 = vmax.f32 %v6013, 0.0
    %v6023 = vmax.f32 %v6014, 0.0
    %v6024 = vmax.f32 %v6015, 0.0
    %v6025 = vmax.f32 %v6016, 0.0
    %v6026 = vpack.c.bf16 %v6020, %v6017
    %v6027 = vpack.c.bf16 %v6021, %v6018
    %v6028 = vpack.c.bf16 %v6022, %v6019
    %v6029 = vpack.c.bf16 %v6023, %v6023
    %v6030 = vpack.c.bf16 %v6024, %v6024
    %v6031 = vpack.c.bf16 %v6025, %v6025
    %v6032 = vld [vmem:[%s4] sm:$0xf]
    %v6033 = vld [vmem:[%s4 + $0x4] sm:$0xf]
    %v6034 = vld [vmem:[%s4 + $0x8] sm:$0xf]
    %v6035 = vld [vmem:[%s4 + $0xc] sm:$0xf]
    %v6036 = vld [vmem:[%s4 + $0x10] sm:$0xf]
    %v6042 = vunpack.c.l.b16 %v6032
    %v6043 = vunpack.c.l.b16 %v6033
    %v6044 = vunpack.c.l.b16 %v6034
    %v6045 = vunpack.c.l.b16 %v6035
    %v6046 = vunpack.c.l.b16 %v6036
    %v6047 = vpack.c.b16 %v6043, %v6042
    %v6048 = vpack.c.b16 %v6045, %v6044
    %v6049 = vpack.c.b16 %v6046, %v6046
    %v6051 = vsel %vm1671, %v6047, 0
    %v6054 = vsel %vm1671, %v6048, 0
    %v6057 = vsel %vm1671, %v6049, 0
    %v6060 = vsel %vm141, %v6029, 0
    %v6063 = vsel %vm141, %v6030, 0
    %v6066 = vsel %vm141, %v6031, 0
    %6068 = vmatprep.subr.bf16.mxu0 %v6027
    %6069 = vmatpush1.bf16.msra.mxu0 %v6026
    %6070 = vmatprep.subr.bf16.mxu0 %v6063
    %6071 = vmatpush1.bf16.msra.mxu0 %v6060
    %6072 = vmatprep.subr.bf16.mxu0 0
    %6073 = vmatpush1.bf16.msra.mxu0 0
    %6074 = vmatprep.subr.bf16.mxu0 0
    %6075 = vmatpush1.bf16.msra.mxu0 0
    %6076 = vmatprep.subr.bf16.mxu0 0
    %6077 = vmatpush1.bf16.msra.mxu0 0
    %6078 = vmatprep.subr.bf16.mxu0 0
    %6079 = vmatpush1.bf16.msra.mxu0 0
    %6080 = vmatprep.subr.bf16.mxu0 0
    %6081 = vmatpush1.bf16.msra.mxu0 0
    %6082 = vmatprep.subr.bf16.mxu0 0
    %6083 = vmatpush1.bf16.msra.mxu0 0
    %6084 = vmatprep.subr.bf16.mxu0 0
    %6085 = vmatpush1.bf16.msra.mxu0 0
    %6086 = vmatprep.subr.bf16.mxu0 0
    %6087 = vmatpush1.bf16.msra.mxu0 0
    %6088 = vmatprep.subr.bf16.mxu0 0
    %6089 = vmatpush1.bf16.msra.mxu0 0
    %6090 = vmatprep.subr.bf16.mxu0 0
    %6091 = vmatpush1.bf16.msra.mxu0 0
    %6092 = vmatprep.subr.bf16.mxu0 0
    %6093 = vmatpush1.bf16.msra.mxu0 0
    %6094 = vmatprep.subr.bf16.mxu0 0
    %6095 = vmatpush1.bf16.msra.mxu0 0
    %6096 = vmatprep.subr.bf16.mxu0 0
    %6097 = vmatpush1.bf16.msra.mxu0 0
    %6098 = vmatprep.subr.bf16.mxu0 0
    %6099 = vmatpush1.bf16.msra.mxu0 0
    %6100 = vmatprep.mubr.bf16.mxu0 0
    %6101 = vmatmul.mubr.bf16.gmra.mrb[0].mxu0 %v6051
    %v6102 = vpop.f32.mrb[0].mxu0
    %v6103 = vadd.f32 0.0, %v6102
    %v6104 = vpop.f32.mrb[0].mxu0
    %v6105 = vadd.f32 0.0, %v6104
    %v6106 = vpop.f32.mrb[0].mxu0
    %v6107 = vadd.f32 0.0, %v6106
    %v6108 = vpop.f32.mrb[0].mxu0
    %v6109 = vadd.f32 0.0, %v6108
    %6110 = vmatprep.mubr.bf16.mxu0 0
    %6111 = vmatmul.mubr.bf16.gmra.mrb[0].mxu0 %v6054
    %v6112 = vpop.f32.mrb[0].mxu0
    %v6113 = vadd.f32 0.0, %v6112
    %v6114 = vpop.f32.mrb[0].mxu0
    %v6115 = vadd.f32 0.0, %v6114
    %v6116 = vpop.f32.mrb[0].mxu0
    %v6117 = vadd.f32 0.0, %v6116
    %v6118 = vpop.f32.mrb[0].mxu0
    %v6119 = vadd.f32 0.0, %v6118
    %6120 = vmatprep.mubr.bf16.mxu0 0
    %6121 = vmatmul.mubr.bf16.gmra.mrb[0].mxu0 %v6057
    %v6122 = vpop.f32.mrb[0].mxu0
    %v6123 = vadd.f32 0.0, %v6122
    %v6124 = vpop.f32.mrb[0].mxu0
    %v6125 = vadd.f32 0.0, %v6124
    %v6126 = vpop.f32.mrb[0].mxu0
    %v6127 = vpop.f32.mrb[0].mxu0
    %6128 = vdwg.mxu0
    %6129 = vmatprep.subr.bf16.mxu0 0
    %6130 = vmatpush1.bf16.msra.mxu0 %v6028
    %6131 = vmatprep.subr.bf16.mxu0 0
    %6132 = vmatpush1.bf16.msra.mxu0 %v6066
    %6133 = vmatprep.subr.bf16.mxu0 0
    %6134 = vmatpush1.bf16.msra.mxu0 0
    %6135 = vmatprep.subr.bf16.mxu0 0
    %6136 = vmatpush1.bf16.msra.mxu0 0
    %6137 = vmatprep.subr.bf16.mxu0 0
    %6138 = vmatpush1.bf16.msra.mxu0 0
    %6139 = vmatprep.subr.bf16.mxu0 0
    %6140 = vmatpush1.bf16.msra.mxu0 0
    %6141 = vmatprep.subr.bf16.mxu0 0
    %6142 = vmatpush1.bf16.msra.mxu0 0
    %6143 = vmatprep.subr.bf16.mxu0 0
    %6144 = vmatpush1.bf16.msra.mxu0 0
    %6145 = vmatprep.subr.bf16.mxu0 0
    %6146 = vmatpush1.bf16.msra.mxu0 0
    %6147 = vmatprep.subr.bf16.mxu0 0
    %6148 = vmatpush1.bf16.msra.mxu0 0
    %6149 = vmatprep.subr.bf16.mxu0 0
    %6150 = vmatpush1.bf16.msra.mxu0 0
    %6151 = vmatprep.subr.bf16.mxu0 0
    %6152 = vmatpush1.bf16.msra.mxu0 0
    %6153 = vmatprep.subr.bf16.mxu0 0
    %6154 = vmatpush1.bf16.msra.mxu0 0
    %6155 = vmatprep.subr.bf16.mxu0 0
    %6156 = vmatpush1.bf16.msra.mxu0 0
    %6157 = vmatprep.subr.bf16.mxu0 0
    %6158 = vmatpush1.bf16.msra.mxu0 0
    %6159 = vmatprep.subr.bf16.mxu0 0
    %6160 = vmatpush1.bf16.msra.mxu0 0
    %6161 = vmatprep.mubr.bf16.mxu0 0
    %6162 = vmatmul.mubr.bf16.gmra.mrb[0].mxu0 %v6051
    %v6163 = vpop.f32.mrb[0].mxu0
    %v6164 = vadd.f32 0.0, %v6163
    %v6165 = vpop.f32.mrb[0].mxu0
    %v6166 = vpop.f32.mrb[0].mxu0
    %v6167 = vadd.f32 0.0, %v6166
    %v6168 = vpop.f32.mrb[0].mxu0
    %6169 = vmatprep.mubr.bf16.mxu0 0
    %6170 = vmatmul.mubr.bf16.gmra.mrb[0].mxu0 %v6054
    %v6171 = vpop.f32.mrb[0].mxu0
    %v6172 = vadd.f32 0.0, %v6171
    %v6173 = vpop.f32.mrb[0].mxu0
    %v6174 = vpop.f32.mrb[0].mxu0
    %v6175 = vadd.f32 0.0, %v6174
    %v6176 = vpop.f32.mrb[0].mxu0
    %6177 = vmatprep.mubr.bf16.mxu0 0
    %6178 = vmatmul.mubr.bf16.gmra.mrb[0].mxu0 %v6057
    %v6179 = vpop.f32.mrb[0].mxu0
    %v6180 = vadd.f32 0.0, %v6179
    %v6181 = vpop.f32.mrb[0].mxu0
    %v6182 = vpop.f32.mrb[0].mxu0
    %v6183 = vpop.f32.mrb[0].mxu0
    %6184 = vdwg.mxu0
    %v6185 = vpack.c.bf16 %v6107, %v6103
    %v6186 = vpack.c.bf16 %v6109, %v6105
    %v6187 = vpack.c.bf16 %v6167, %v6164
    %v6188 = vpack.c.bf16 %v6117, %v6113
    %v6189 = vpack.c.bf16 %v6119, %v6115
    %v6190 = vpack.c.bf16 %v6175, %v6172
    %v6191 = vpack.c.bf16 %v6123, %v6123
    %v6192 = vpack.c.bf16 %v6125, %v6125
    %v6193 = vpack.c.bf16 %v6180, %v6180
    %v6194 = vld [vmem:[%s5] sm:$0xff]
    %v6195 = vld [vmem:[%s5 + $0x8] sm:$0xff]
    %v6196 = vld [vmem:[%s5 + $0x10] sm:$0xff]
    %v6197 = vld [vmem:[%s5 + $0x18] sm:$0xff]
    %v6198 = vld [vmem:[%s5 + $0x20] sm:$0xff]
    %v6199 = vld [vmem:[%s5 + $0x28] sm:$0xff]
    %v6200 = vld [vmem:[%s5 + $0x30] sm:$0xff]
    %v6201 = vld [vmem:[%s5 + $0x38] sm:$0xff]
    %v6202 = vld [vmem:[%s5 + $0x40] sm:$0xff]
    %v6203 = vld [vmem:[%s5 + $0x48] sm:$0xff]
    %v6204 = vld [vmem:[%s5 + $0x50] sm:$0xff]
    %v6205 = vld [vmem:[%s5 + $0x58] sm:$0xff]
    %v6206 = vld [vmem:[%s5 + $0x60] sm:$0xff]
    %v6207 = vld [vmem:[%s5 + $0x68] sm:$0xff]
    %v6208 = vld [vmem:[%s5 + $0x70] sm:$0xff]
    %v6209 = vld [vmem:[%s5 + $0x78] sm:$0xff]
    %v6210 = vld [vmem:[%s5 + $0x80] sm:$0xff]
    %v6211 = vld [vmem:[%s5 + $0x88] sm:$0xff]
    %v6212 = vld [vmem:[%s5 + $0x90] sm:$0xff]
    %v6213 = vld [vmem:[%s5 + $0x98] sm:$0xff]
    %v6214 = vld [vmem:[%s5 + $0xa0] sm:$0xff]
    %v6215 = vld [vmem:[%s5 + $0xa8] sm:$0xff]
    %v6216 = vld [vmem:[%s5 + $0xb0] sm:$0xff]
    %v6217 = vld [vmem:[%s5 + $0xb8] sm:$0xff]
    %v6218 = vld [vmem:[%s5 + $0xc0] sm:$0xff]
    %v6219 = vld [vmem:[%s5 + $0xc8] sm:$0xff]
    %v6220 = vld [vmem:[%s5 + $0xd0] sm:$0xff]
    %v6221 = vld [vmem:[%s5 + $0xd8] sm:$0xff]
    %v6222 = vld [vmem:[%s5 + $0xe0] sm:$0xff]
    %v6223 = vld [vmem:[%s5 + $0xe8] sm:$0xff]
    %v6224 = vld [vmem:[%s5 + $0xf0] sm:$0xff]
    %v6225 = vld [vmem:[%s5 + $0xf8] sm:$0xff]
    %v6226 = vld [vmem:[%s5 + $0x100] sm:$0xff]
    %v6227 = vld [vmem:[%s5 + $0x108] sm:$0xff]
    %v6228 = vld [vmem:[%s5 + $0x110] sm:$0xff]
    %v6229 = vld [vmem:[%s5 + $0x118] sm:$0xff]
    %v6230 = vld [vmem:[%s1852] sm:$0xff]
    %v6231 = vld [vmem:[%s1852 + $0x8] sm:$0xff]
    %v6232 = vld [vmem:[%s1852 + $0x10] sm:$0xff]
    %v6233 = vld [vmem:[%s1852 + $0x18] sm:$0xff]
    %v6234 = vld [vmem:[%s1852 + $0x20] sm:$0xff]
    %v6235 = vld [vmem:[%s1852 + $0x28] sm:$0xff]
    %v6236 = vld [vmem:[%s1852 + $0x30] sm:$0xff]
    %v6237 = vld [vmem:[%s1852 + $0x38] sm:$0xff]
    %v6238 = vld [vmem:[%s1852 + $0x40] sm:$0xff]
    %v6239 = vld [vmem:[%s1852 + $0x48] sm:$0xff]
    %v6240 = vld [vmem:[%s1852 + $0x50] sm:$0xff]
    %v6241 = vld [vmem:[%s1852 + $0x58] sm:$0xff]
    %v6242 = vld [vmem:[%s1852 + $0x60] sm:$0xff]
    %v6243 = vld [vmem:[%s1852 + $0x68] sm:$0xff]
    %v6244 = vld [vmem:[%s1852 + $0x70] sm:$0xff]
    %v6245 = vld [vmem:[%s1852 + $0x78] sm:$0xff]
    %v6246 = vld [vmem:[%s1852 + $0x80] sm:$0xff]
    %v6247 = vld [vmem:[%s1852 + $0x88] sm:$0xff]
    %v6248 = vld [vmem:[%s1852 + $0x90] sm:$0xff]
    %v6249 = vld [vmem:[%s1852 + $0x98] sm:$0xff]
    %v6250 = vld [vmem:[%s1852 + $0xa0] sm:$0xff]
    %v6251 = vld [vmem:[%s1852 + $0xa8] sm:$0xff]
    %v6252 = vld [vmem:[%s1852 + $0xb0] sm:$0xff]
    %v6253 = vld [vmem:[%s1852 + $0xb8] sm:$0xff]
    %v6254 = vld [vmem:[%s1852 + $0xc0] sm:$0xff]
    %v6255 = vld [vmem:[%s1852 + $0xc8] sm:$0xff]
    %v6256 = vld [vmem:[%s1852 + $0xd0] sm:$0xff]
    %v6257 = vld [vmem:[%s1852 + $0xd8] sm:$0xff]
    %v6258 = vld [vmem:[%s1852 + $0xe0] sm:$0xff]
    %v6259 = vld [vmem:[%s1852 + $0xe8] sm:$0xff]
    %v6260 = vld [vmem:[%s1852 + $0xf0] sm:$0xff]
    %v6261 = vld [vmem:[%s1852 + $0xf8] sm:$0xff]
    %v6262 = vld [vmem:[%s1852 + $0x100] sm:$0xff]
    %v6263 = vld [vmem:[%s1852 + $0x108] sm:$0xff]
    %v6264 = vld [vmem:[%s1852 + $0x110] sm:$0xff]
    %v6265 = vld [vmem:[%s1852 + $0x118] sm:$0xff]
    %v6269 = vrot.slane %v6185, 4
    %v6270 = vrot.slane %v6186, 4
    %v6271 = vrot.slane %v6187, 4
    %v6310 = vunpack.c.l.b16 %v6230
    %v6311 = vunpack.c.h.b16 %v6230
    %v6312 = vunpack.c.l.b16 %v6231
    %v6313 = vunpack.c.h.b16 %v6231
    %v6314 = vunpack.c.l.b16 %v6232
    %v6315 = vunpack.c.h.b16 %v6232
    %v6316 = vunpack.c.l.b16 %v6233
    %v6317 = vunpack.c.h.b16 %v6233
    %v6318 = vunpack.c.l.b16 %v6234
    %v6319 = vunpack.c.h.b16 %v6234
    %v6320 = vunpack.c.l.b16 %v6235
    %v6321 = vunpack.c.h.b16 %v6235
    %v6322 = vunpack.c.l.b16 %v6236
    %v6323 = vunpack.c.h.b16 %v6236
    %v6324 = vunpack.c.l.b16 %v6237
    %v6325 = vunpack.c.h.b16 %v6237
    %v6326 = vunpack.c.l.b16 %v6238
    %v6327 = vunpack.c.h.b16 %v6238
    %v6328 = vunpack.c.l.b16 %v6239
    %v6329 = vunpack.c.h.b16 %v6239
    %v6330 = vunpack.c.l.b16 %v6240
    %v6331 = vunpack.c.h.b16 %v6240
    %v6332 = vunpack.c.l.b16 %v6241
    %v6333 = vunpack.c.h.b16 %v6241
    %v6334 = vunpack.c.l.b16 %v6242
    %v6335 = vunpack.c.h.b16 %v6242
    %v6336 = vunpack.c.l.b16 %v6243
    %v6337 = vunpack.c.h.b16 %v6243
    %v6338 = vunpack.c.l.b16 %v6244
    %v6339 = vunpack.c.h.b16 %v6244
    %v6340 = vunpack.c.l.b16 %v6245
    %v6341 = vunpack.c.h.b16 %v6245
    %v6342 = vunpack.c.l.b16 %v6246
    %v6343 = vunpack.c.h.b16 %v6246
    %v6344 = vunpack.c.l.b16 %v6247
    %v6345 = vunpack.c.h.b16 %v6247
    %v6346 = vunpack.c.l.b16 %v6248
    %v6347 = vunpack.c.h.b16 %v6248
    %v6348 = vunpack.c.l.b16 %v6249
    %v6349 = vunpack.c.h.b16 %v6249
    %v6350 = vunpack.c.l.b16 %v6250
    %v6351 = vunpack.c.h.b16 %v6250
    %v6352 = vunpack.c.l.b16 %v6251
    %v6353 = vunpack.c.h.b16 %v6251
    %v6354 = vunpack.c.l.b16 %v6252
    %v6355 = vunpack.c.h.b16 %v6252
    %v6356 = vunpack.c.l.b16 %v6253
    %v6357 = vunpack.c.h.b16 %v6253
    %v6358 = vunpack.c.l.b16 %v6254
    %v6359 = vunpack.c.h.b16 %v6254
    %v6360 = vunpack.c.l.b16 %v6255
    %v6361 = vunpack.c.h.b16 %v6255
    %v6362 = vunpack.c.l.b16 %v6256
    %v6363 = vunpack.c.h.b16 %v6256
    %v6364 = vunpack.c.l.b16 %v6257
    %v6365 = vunpack.c.h.b16 %v6257
    %v6366 = vunpack.c.l.b16 %v6258
    %v6367 = vunpack.c.h.b16 %v6258
    %v6368 = vunpack.c.l.b16 %v6259
    %v6369 = vunpack.c.h.b16 %v6259
    %v6370 = vunpack.c.l.b16 %v6260
    %v6371 = vunpack.c.h.b16 %v6260
    %v6372 = vunpack.c.l.b16 %v6261
    %v6373 = vunpack.c.h.b16 %v6261
    %v6374 = vunpack.c.l.b16 %v6262
    %v6375 = vunpack.c.h.b16 %v6262
    %v6376 = vunpack.c.l.b16 %v6263
    %v6377 = vunpack.c.h.b16 %v6263
    %v6378 = vunpack.c.l.b16 %v6264
    %v6379 = vunpack.c.h.b16 %v6264
    %v6380 = vunpack.c.l.b16 %v6265
    %v6381 = vunpack.c.h.b16 %v6265
    %v6382 = vpack.c.b16 %v6312, %v6310
    %v6383 = vpack.c.b16 %v6313, %v6311
    %v6384 = vpack.c.b16 %v6316, %v6314
    %v6385 = vpack.c.b16 %v6317, %v6315
    %v6386 = vpack.c.b16 %v6320, %v6318
    %v6387 = vpack.c.b16 %v6321, %v6319
    %v6388 = vpack.c.b16 %v6324, %v6322
    %v6389 = vpack.c.b16 %v6325, %v6323
    %v6390 = vpack.c.b16 %v6328, %v6326
    %v6391 = vpack.c.b16 %v6329, %v6327
    %v6392 = vpack.c.b16 %v6332, %v6330
    %v6393 = vpack.c.b16 %v6333, %v6331
    %v6394 = vpack.c.b16 %v6336, %v6334
    %v6395 = vpack.c.b16 %v6337, %v6335
    %v6396 = vpack.c.b16 %v6340, %v6338
    %v6397 = vpack.c.b16 %v6341, %v6339
    %v6398 = vpack.c.b16 %v6344, %v6342
    %v6399 = vpack.c.b16 %v6345, %v6343
    %v6400 = vpack.c.b16 %v6348, %v6346
    %v6401 = vpack.c.b16 %v6349, %v6347
    %v6402 = vpack.c.b16 %v6352, %v6350
    %v6403 = vpack.c.b16 %v6353, %v6351
    %v6404 = vpack.c.b16 %v6356, %v6354
    %v6405 = vpack.c.b16 %v6357, %v6355
    %v6406 = vpack.c.b16 %v6360, %v6358
    %v6407 = vpack.c.b16 %v6361, %v6359
    %v6408 = vpack.c.b16 %v6364, %v6362
    %v6409 = vpack.c.b16 %v6365, %v6363
    %v6410 = vpack.c.b16 %v6368, %v6366
    %v6411 = vpack.c.b16 %v6369, %v6367
    %v6412 = vpack.c.b16 %v6372, %v6370
    %v6413 = vpack.c.b16 %v6373, %v6371
    %v6414 = vpack.c.b16 %v6376, %v6374
    %v6415 = vpack.c.b16 %v6377, %v6375
    %v6416 = vpack.c.b16 %v6380, %v6378
    %v6417 = vpack.c.b16 %v6381, %v6379
    %v6455 = vsel %vm2077, %v6271, 0
    %6457 = vmatprep.subr.bf16.mxu0 %v6383
    %6458 = vmatpush1.bf16.msra.mxu0 %v6382
    %6459 = vmatprep.subr.bf16.mxu0 %v6385
    %6460 = vmatpush1.bf16.msra.mxu0 %v6384
    %6461 = vmatprep.subr.bf16.mxu0 %v6387
    %6462 = vmatpush1.bf16.msra.mxu0 %v6386
    %6463 = vmatprep.subr.bf16.mxu0 %v6389
    %6464 = vmatpush1.bf16.msra.mxu0 %v6388
    %6465 = vmatprep.subr.bf16.mxu0 %v6391
    %6466 = vmatpush1.bf16.msra.mxu0 %v6390
    %6467 = vmatprep.subr.bf16.mxu0 %v6393
    %6468 = vmatpush1.bf16.msra.mxu0 %v6392
    %6469 = vmatprep.subr.bf16.mxu0 %v6395
    %6470 = vmatpush1.bf16.msra.mxu0 %v6394
    %6471 = vmatprep.subr.bf16.mxu0 %v6397
    %6472 = vmatpush1.bf16.msra.mxu0 %v6396
    %6473 = vmatprep.subr.bf16.mxu0 %v6399
    %6474 = vmatpush1.bf16.msra.mxu0 %v6398
    %6475 = vmatprep.subr.bf16.mxu0 %v6401
    %6476 = vmatpush1.bf16.msra.mxu0 %v6400
    %6477 = vmatprep.subr.bf16.mxu0 %v6403
    %6478 = vmatpush1.bf16.msra.mxu0 %v6402
    %6479 = vmatprep.subr.bf16.mxu0 %v6405
    %6480 = vmatpush1.bf16.msra.mxu0 %v6404
    %6481 = vmatprep.subr.bf16.mxu0 %v6407
    %6482 = vmatpush1.bf16.msra.mxu0 %v6406
    %6483 = vmatprep.subr.bf16.mxu0 %v6409
    %6484 = vmatpush1.bf16.msra.mxu0 %v6408
    %6485 = vmatprep.subr.bf16.mxu0 %v6411
    %6486 = vmatpush1.bf16.msra.mxu0 %v6410
    %6487 = vmatprep.subr.bf16.mxu0 %v6413
    %6488 = vmatpush1.bf16.msra.mxu0 %v6412
    %6489 = vmatprep.mubr.bf16.mxu0 %v6270
    %6490 = vmatmul.mubr.bf16.gmra.mrb[0].mxu0 %v6269
    %v6491 = vpop.f32.mrb[0].mxu0
    %v6492 = vadd.f32 0.0, %v6491
    %v6493 = vpop.f32.mrb[0].mxu0
    %v6494 = vadd.f32 0.0, %v6493
    %v6495 = vpop.f32.mrb[0].mxu0
    %v6496 = vpop.f32.mrb[0].mxu0
    %6497 = vdwg.mxu0
    %6498 = vmatprep.subr.bf16.mxu0 %v6415
    %6499 = vmatpush1.bf16.msra.mxu0 %v6414
    %6500 = vmatprep.subr.bf16.mxu0 %v6417
    %6501 = vmatpush1.bf16.msra.mxu0 %v6416
    %6502 = vmatprep.subr.bf16.mxu0 0
    %6503 = vmatpush1.bf16.msra.mxu0 0
    %6504 = vmatprep.subr.bf16.mxu0 0
    %6505 = vmatpush1.bf16.msra.mxu0 0
    %6506 = vmatprep.subr.bf16.mxu0 0
    %6507 = vmatpush1.bf16.msra.mxu0 0
    %6508 = vmatprep.subr.bf16.mxu0 0
    %6509 = vmatpush1.bf16.msra.mxu0 0
    %6510 = vmatprep.subr.bf16.mxu0 0
    %6511 = vmatpush1.bf16.msra.mxu0 0
    %6512 = vmatprep.subr.bf16.mxu0 0
    %6513 = vmatpush1.bf16.msra.mxu0 0
    %6514 = vmatprep.subr.bf16.mxu0 0
    %6515 = vmatpush1.bf16.msra.mxu0 0
    %6516 = vmatprep.subr.bf16.mxu0 0
    %6517 = vmatpush1.bf16.msra.mxu0 0
    %6518 = vmatprep.subr.bf16.mxu0 0
    %6519 = vmatpush1.bf16.msra.mxu0 0
    %6520 = vmatprep.subr.bf16.mxu0 0
    %6521 = vmatpush1.bf16.msra.mxu0 0
    %6522 = vmatprep.subr.bf16.mxu0 0
    %6523 = vmatpush1.bf16.msra.mxu0 0
    %6524 = vmatprep.subr.bf16.mxu0 0
    %6525 = vmatpush1.bf16.msra.mxu0 0
    %6526 = vmatprep.subr.bf16.mxu0 0
    %6527 = vmatpush1.bf16.msra.mxu0 0
    %6528 = vmatprep.subr.bf16.mxu0 0
    %6529 = vmatpush1.bf16.msra.mxu0 0
    %6530 = vmatprep.mubr.bf16.mxu0 0
    %6531 = vmatmul.mubr.bf16.gmra.mrb[0].mxu0 %v6455
    %v6532 = vpop.f32.mrb[0].mxu0
    %v6533 = vadd.f32 %v6492, %v6532
    %v6534 = vpop.f32.mrb[0].mxu0
    %v6535 = vadd.f32 %v6494, %v6534
    %v6536 = vpop.f32.mrb[0].mxu0
    %v6537 = vpop.f32.mrb[0].mxu0
    %6538 = vdwg.mxu0
    %v6575 = vunpack.c.l.b16 %v6194
    %v6576 = vunpack.c.h.b16 %v6194
    %v6577 = vunpack.c.l.b16 %v6195
    %v6578 = vunpack.c.h.b16 %v6195
    %v6579 = vunpack.c.l.b16 %v6196
    %v6580 = vunpack.c.h.b16 %v6196
    %v6581 = vunpack.c.l.b16 %v6197
    %v6582 = vunpack.c.h.b16 %v6197
    %v6583 = vunpack.c.l.b16 %v6198
    %v6584 = vunpack.c.h.b16 %v6198
    %v6585 = vunpack.c.l.b16 %v6199
    %v6586 = vunpack.c.h.b16 %v6199
    %v6587 = vunpack.c.l.b16 %v6200
    %v6588 = vunpack.c.h.b16 %v6200
    %v6589 = vunpack.c.l.b16 %v6201
    %v6590 = vunpack.c.h.b16 %v6201
    %v6591 = vunpack.c.l.b16 %v6202
    %v6592 = vunpack.c.h.b16 %v6202
    %v6593 = vunpack.c.l.b16 %v6203
    %v6594 = vunpack.c.h.b16 %v6203
    %v6595 = vunpack.c.l.b16 %v6204
    %v6596 = vunpack.c.h.b16 %v6204
    %v6597 = vunpack.c.l.b16 %v6205
    %v6598 = vunpack.c.h.b16 %v6205
    %v6599 = vunpack.c.l.b16 %v6206
    %v6600 = vunpack.c.h.b16 %v6206
    %v6601 = vunpack.c.l.b16 %v6207
    %v6602 = vunpack.c.h.b16 %v6207
    %v6603 = vunpack.c.l.b16 %v6208
    %v6604 = vunpack.c.h.b16 %v6208
    %v6605 = vunpack.c.l.b16 %v6209
    %v6606 = vunpack.c.h.b16 %v6209
    %v6607 = vunpack.c.l.b16 %v6210
    %v6608 = vunpack.c.h.b16 %v6210
    %v6609 = vunpack.c.l.b16 %v6211
    %v6610 = vunpack.c.h.b16 %v6211
    %v6611 = vunpack.c.l.b16 %v6212
    %v6612 = vunpack.c.h.b16 %v6212
    %v6613 = vunpack.c.l.b16 %v6213
    %v6614 = vunpack.c.h.b16 %v6213
    %v6615 = vunpack.c.l.b16 %v6214
    %v6616 = vunpack.c.h.b16 %v6214
    %v6617 = vunpack.c.l.b16 %v6215
    %v6618 = vunpack.c.h.b16 %v6215
    %v6619 = vunpack.c.l.b16 %v6216
    %v6620 = vunpack.c.h.b16 %v6216
    %v6621 = vunpack.c.l.b16 %v6217
    %v6622 = vunpack.c.h.b16 %v6217
    %v6623 = vunpack.c.l.b16 %v6218
    %v6624 = vunpack.c.h.b16 %v6218
    %v6625 = vunpack.c.l.b16 %v6219
    %v6626 = vunpack.c.h.b16 %v6219
    %v6627 = vunpack.c.l.b16 %v6220
    %v6628 = vunpack.c.h.b16 %v6220
    %v6629 = vunpack.c.l.b16 %v6221
    %v6630 = vunpack.c.h.b16 %v6221
    %v6631 = vunpack.c.l.b16 %v6222
    %v6632 = vunpack.c.h.b16 %v6222
    %v6633 = vunpack.c.l.b16 %v6223
    %v6634 = vunpack.c.h.b16 %v6223
    %v6635 = vunpack.c.l.b16 %v6224
    %v6636 = vunpack.c.h.b16 %v6224
    %v6637 = vunpack.c.l.b16 %v6225
    %v6638 = vunpack.c.h.b16 %v6225
    %v6639 = vunpack.c.l.b16 %v6226
    %v6640 = vunpack.c.h.b16 %v6226
    %v6641 = vunpack.c.l.b16 %v6227
    %v6642 = vunpack.c.h.b16 %v6227
    %v6643 = vunpack.c.l.b16 %v6228
    %v6644 = vunpack.c.h.b16 %v6228
    %v6645 = vunpack.c.l.b16 %v6229
    %v6646 = vunpack.c.h.b16 %v6229
    %v6647 = vpack.c.b16 %v6577, %v6575
    %v6648 = vpack.c.b16 %v6578, %v6576
    %v6649 = vpack.c.b16 %v6581, %v6579
    %v6650 = vpack.c.b16 %v6582, %v6580
    %v6651 = vpack.c.b16 %v6585, %v6583
    %v6652 = vpack.c.b16 %v6586, %v6584
    %v6653 = vpack.c.b16 %v6589, %v6587
    %v6654 = vpack.c.b16 %v6590, %v6588
    %v6655 = vpack.c.b16 %v6593, %v6591
    %v6656 = vpack.c.b16 %v6594, %v6592
    %v6657 = vpack.c.b16 %v6597, %v6595
    %v6658 = vpack.c.b16 %v6598, %v6596
    %v6659 = vpack.c.b16 %v6601, %v6599
    %v6660 = vpack.c.b16 %v6602, %v6600
    %v6661 = vpack.c.b16 %v6605, %v6603
    %v6662 = vpack.c.b16 %v6606, %v6604
    %v6663 = vpack.c.b16 %v6609, %v6607
    %v6664 = vpack.c.b16 %v6610, %v6608
    %v6665 = vpack.c.b16 %v6613, %v6611
    %v6666 = vpack.c.b16 %v6614, %v6612
    %v6667 = vpack.c.b16 %v6617, %v6615
    %v6668 = vpack.c.b16 %v6618, %v6616
    %v6669 = vpack.c.b16 %v6621, %v6619
    %v6670 = vpack.c.b16 %v6622, %v6620
    %v6671 = vpack.c.b16 %v6625, %v6623
    %v6672 = vpack.c.b16 %v6626, %v6624
    %v6673 = vpack.c.b16 %v6629, %v6627
    %v6674 = vpack.c.b16 %v6630, %v6628
    %v6675 = vpack.c.b16 %v6633, %v6631
    %v6676 = vpack.c.b16 %v6634, %v6632
    %v6677 = vpack.c.b16 %v6637, %v6635
    %v6678 = vpack.c.b16 %v6638, %v6636
    %v6679 = vpack.c.b16 %v6641, %v6639
    %v6680 = vpack.c.b16 %v6642, %v6640
    %v6681 = vpack.c.b16 %v6645, %v6643
    %v6682 = vpack.c.b16 %v6646, %v6644
    %v6720 = vsel %vm2077, %v6187, 0
    %6722 = vmatprep.subr.bf16.mxu0 %v6648
    %6723 = vmatpush1.bf16.msra.mxu0 %v6647
    %6724 = vmatprep.subr.bf16.mxu0 %v6650
    %6725 = vmatpush1.bf16.msra.mxu0 %v6649
    %6726 = vmatprep.subr.bf16.mxu0 %v6652
    %6727 = vmatpush1.bf16.msra.mxu0 %v6651
    %6728 = vmatprep.subr.bf16.mxu0 %v6654
    %6729 = vmatpush1.bf16.msra.mxu0 %v6653
    %6730 = vmatprep.subr.bf16.mxu0 %v6656
    %6731 = vmatpush1.bf16.msra.mxu0 %v6655
    %6732 = vmatprep.subr.bf16.mxu0 %v6658
    %6733 = vmatpush1.bf16.msra.mxu0 %v6657
    %6734 = vmatprep.subr.bf16.mxu0 %v6660
    %6735 = vmatpush1.bf16.msra.mxu0 %v6659
    %6736 = vmatprep.subr.bf16.mxu0 %v6662
    %6737 = vmatpush1.bf16.msra.mxu0 %v6661
    %6738 = vmatprep.subr.bf16.mxu0 %v6664
    %6739 = vmatpush1.bf16.msra.mxu0 %v6663
    %6740 = vmatprep.subr.bf16.mxu0 %v6666
    %6741 = vmatpush1.bf16.msra.mxu0 %v6665
    %6742 = vmatprep.subr.bf16.mxu0 %v6668
    %6743 = vmatpush1.bf16.msra.mxu0 %v6667
    %6744 = vmatprep.subr.bf16.mxu0 %v6670
    %6745 = vmatpush1.bf16.msra.mxu0 %v6669
    %6746 = vmatprep.subr.bf16.mxu0 %v6672
    %6747 = vmatpush1.bf16.msra.mxu0 %v6671
    %6748 = vmatprep.subr.bf16.mxu0 %v6674
    %6749 = vmatpush1.bf16.msra.mxu0 %v6673
    %6750 = vmatprep.subr.bf16.mxu0 %v6676
    %6751 = vmatpush1.bf16.msra.mxu0 %v6675
    %6752 = vmatprep.subr.bf16.mxu0 %v6678
    %6753 = vmatpush1.bf16.msra.mxu0 %v6677
    %6754 = vmatprep.mubr.bf16.mxu0 %v6186
    %6755 = vmatmul.mubr.bf16.gmra.mrb[0].mxu0 %v6185
    %v6756 = vpop.f32.mrb[0].mxu0
    %v6757 = vadd.f32 %v6533, %v6756
    %v6758 = vpop.f32.mrb[0].mxu0
    %v6759 = vadd.f32 %v6535, %v6758
    %v6760 = vpop.f32.mrb[0].mxu0
    %v6761 = vpop.f32.mrb[0].mxu0
    %6762 = vdwg.mxu0
    %6763 = vmatprep.subr.bf16.mxu0 %v6680
    %6764 = vmatpush1.bf16.msra.mxu0 %v6679
    %6765 = vmatprep.subr.bf16.mxu0 %v6682
    %6766 = vmatpush1.bf16.msra.mxu0 %v6681
    %6767 = vmatprep.subr.bf16.mxu0 0
    %6768 = vmatpush1.bf16.msra.mxu0 0
    %6769 = vmatprep.subr.bf16.mxu0 0
    %6770 = vmatpush1.bf16.msra.mxu0 0
    %6771 = vmatprep.subr.bf16.mxu0 0
    %6772 = vmatpush1.bf16.msra.mxu0 0
    %6773 = vmatprep.subr.bf16.mxu0 0
    %6774 = vmatpush1.bf16.msra.mxu0 0
    %6775 = vmatprep.subr.bf16.mxu0 0
    %6776 = vmatpush1.bf16.msra.mxu0 0
    %6777 = vmatprep.subr.bf16.mxu0 0
    %6778 = vmatpush1.bf16.msra.mxu0 0
    %6779 = vmatprep.subr.bf16.mxu0 0
    %6780 = vmatpush1.bf16.msra.mxu0 0
    %6781 = vmatprep.subr.bf16.mxu0 0
    %6782 = vmatpush1.bf16.msra.mxu0 0
    %6783 = vmatprep.subr.bf16.mxu0 0
    %6784 = vmatpush1.bf16.msra.mxu0 0
    %6785 = vmatprep.subr.bf16.mxu0 0
    %6786 = vmatpush1.bf16.msra.mxu0 0
    %6787 = vmatprep.subr.bf16.mxu0 0
    %6788 = vmatpush1.bf16.msra.mxu0 0
    %6789 = vmatprep.subr.bf16.mxu0 0
    %6790 = vmatpush1.bf16.msra.mxu0 0
    %6791 = vmatprep.subr.bf16.mxu0 0
    %6792 = vmatpush1.bf16.msra.mxu0 0
    %6793 = vmatprep.subr.bf16.mxu0 0
    %6794 = vmatpush1.bf16.msra.mxu0 0
    %6795 = vmatprep.mubr.bf16.mxu0 0
    %6796 = vmatmul.mubr.bf16.gmra.mrb[0].mxu0 %v6720
    %v6797 = vpop.f32.mrb[0].mxu0
    %v6798 = vadd.f32 %v6757, %v6797
    %v6799 = vpop.f32.mrb[0].mxu0
    %v6800 = vadd.f32 %v6759, %v6799
    %v6801 = vpop.f32.mrb[0].mxu0
    %v6802 = vpop.f32.mrb[0].mxu0
    %6803 = vdwg.mxu0
    %v6804 = vld [vmem:[%s2428] sm:$0xff]
    %v6805 = vld [vmem:[%s2428 + $0x8] sm:$0xff]
    %v6806 = vld [vmem:[%s2428 + $0x10] sm:$0xff]
    %v6807 = vld [vmem:[%s2428 + $0x18] sm:$0xff]
    %v6808 = vld [vmem:[%s2428 + $0x20] sm:$0xff]
    %v6809 = vld [vmem:[%s2428 + $0x28] sm:$0xff]
    %v6810 = vld [vmem:[%s2428 + $0x30] sm:$0xff]
    %v6811 = vld [vmem:[%s2428 + $0x38] sm:$0xff]
    %v6812 = vld [vmem:[%s2428 + $0x40] sm:$0xff]
    %v6813 = vld [vmem:[%s2428 + $0x48] sm:$0xff]
    %v6814 = vld [vmem:[%s2428 + $0x50] sm:$0xff]
    %v6815 = vld [vmem:[%s2428 + $0x58] sm:$0xff]
    %v6816 = vld [vmem:[%s2428 + $0x60] sm:$0xff]
    %v6817 = vld [vmem:[%s2428 + $0x68] sm:$0xff]
    %v6818 = vld [vmem:[%s2428 + $0x70] sm:$0xff]
    %v6819 = vld [vmem:[%s2428 + $0x78] sm:$0xff]
    %v6820 = vld [vmem:[%s2428 + $0x80] sm:$0xff]
    %v6821 = vld [vmem:[%s2428 + $0x88] sm:$0xff]
    %v6822 = vld [vmem:[%s2428 + $0x90] sm:$0xff]
    %v6823 = vld [vmem:[%s2428 + $0x98] sm:$0xff]
    %v6824 = vld [vmem:[%s2428 + $0xa0] sm:$0xff]
    %v6825 = vld [vmem:[%s2428 + $0xa8] sm:$0xff]
    %v6826 = vld [vmem:[%s2428 + $0xb0] sm:$0xff]
    %v6827 = vld [vmem:[%s2428 + $0xb8] sm:$0xff]
    %v6828 = vld [vmem:[%s2428 + $0xc0] sm:$0xff]
    %v6829 = vld [vmem:[%s2428 + $0xc8] sm:$0xff]
    %v6830 = vld [vmem:[%s2428 + $0xd0] sm:$0xff]
    %v6831 = vld [vmem:[%s2428 + $0xd8] sm:$0xff]
    %v6832 = vld [vmem:[%s2428 + $0xe0] sm:$0xff]
    %v6833 = vld [vmem:[%s2428 + $0xe8] sm:$0xff]
    %v6834 = vld [vmem:[%s2428 + $0xf0] sm:$0xff]
    %v6835 = vld [vmem:[%s2428 + $0xf8] sm:$0xff]
    %v6836 = vld [vmem:[%s2428 + $0x100] sm:$0xff]
    %v6837 = vld [vmem:[%s2428 + $0x108] sm:$0xff]
    %v6838 = vld [vmem:[%s2428 + $0x110] sm:$0xff]
    %v6839 = vld [vmem:[%s2428 + $0x118] sm:$0xff]
    %v6876 = vunpack.c.l.b16 %v6804
    %v6877 = vunpack.c.h.b16 %v6804
    %v6878 = vunpack.c.l.b16 %v6805
    %v6879 = vunpack.c.h.b16 %v6805
    %v6880 = vunpack.c.l.b16 %v6806
    %v6881 = vunpack.c.h.b16 %v6806
    %v6882 = vunpack.c.l.b16 %v6807
    %v6883 = vunpack.c.h.b16 %v6807
    %v6884 = vunpack.c.l.b16 %v6808
    %v6885 = vunpack.c.h.b16 %v6808
    %v6886 = vunpack.c.l.b16 %v6809
    %v6887 = vunpack.c.h.b16 %v6809
    %v6888 = vunpack.c.l.b16 %v6810
    %v6889 = vunpack.c.h.b16 %v6810
    %v6890 = vunpack.c.l.b16 %v6811
    %v6891 = vunpack.c.h.b16 %v6811
    %v6892 = vunpack.c.l.b16 %v6812
    %v6893 = vunpack.c.h.b16 %v6812
    %v6894 = vunpack.c.l.b16 %v6813
    %v6895 = vunpack.c.h.b16 %v6813
    %v6896 = vunpack.c.l.b16 %v6814
    %v6897 = vunpack.c.h.b16 %v6814
    %v6898 = vunpack.c.l.b16 %v6815
    %v6899 = vunpack.c.h.b16 %v6815
    %v6900 = vunpack.c.l.b16 %v6816
    %v6901 = vunpack.c.h.b16 %v6816
    %v6902 = vunpack.c.l.b16 %v6817
    %v6903 = vunpack.c.h.b16 %v6817
    %v6904 = vunpack.c.l.b16 %v6818
    %v6905 = vunpack.c.h.b16 %v6818
    %v6906 = vunpack.c.l.b16 %v6819
    %v6907 = vunpack.c.h.b16 %v6819
    %v6908 = vunpack.c.l.b16 %v6820
    %v6909 = vunpack.c.h.b16 %v6820
    %v6910 = vunpack.c.l.b16 %v6821
    %v6911 = vunpack.c.h.b16 %v6821
    %v6912 = vunpack.c.l.b16 %v6822
    %v6913 = vunpack.c.h.b16 %v6822
    %v6914 = vunpack.c.l.b16 %v6823
    %v6915 = vunpack.c.h.b16 %v6823
    %v6916 = vunpack.c.l.b16 %v6824
    %v6917 = vunpack.c.h.b16 %v6824
    %v6918 = vunpack.c.l.b16 %v6825
    %v6919 = vunpack.c.h.b16 %v6825
    %v6920 = vunpack.c.l.b16 %v6826
    %v6921 = vunpack.c.h.b16 %v6826
    %v6922 = vunpack.c.l.b16 %v6827
    %v6923 = vunpack.c.h.b16 %v6827
    %v6924 = vunpack.c.l.b16 %v6828
    %v6925 = vunpack.c.h.b16 %v6828
    %v6926 = vunpack.c.l.b16 %v6829
    %v6927 = vunpack.c.h.b16 %v6829
    %v6928 = vunpack.c.l.b16 %v6830
    %v6929 = vunpack.c.h.b16 %v6830
    %v6930 = vunpack.c.l.b16 %v6831
    %v6931 = vunpack.c.h.b16 %v6831
    %v6932 = vunpack.c.l.b16 %v6832
    %v6933 = vunpack.c.h.b16 %v6832
    %v6934 = vunpack.c.l.b16 %v6833
    %v6935 = vunpack.c.h.b16 %v6833
    %v6936 = vunpack.c.l.b16 %v6834
    %v6937 = vunpack.c.h.b16 %v6834
    %v6938 = vunpack.c.l.b16 %v6835
    %v6939 = vunpack.c.h.b16 %v6835
    %v6940 = vunpack.c.l.b16 %v6836
    %v6941 = vunpack.c.h.b16 %v6836
    %v6942 = vunpack.c.l.b16 %v6837
    %v6943 = vunpack.c.h.b16 %v6837
    %v6944 = vunpack.c.l.b16 %v6838
    %v6945 = vunpack.c.h.b16 %v6838
    %v6946 = vunpack.c.l.b16 %v6839
    %v6947 = vunpack.c.h.b16 %v6839
    %v6948 = vpack.c.b16 %v6878, %v6876
    %v6949 = vpack.c.b16 %v6879, %v6877
    %v6950 = vpack.c.b16 %v6882, %v6880
    %v6951 = vpack.c.b16 %v6883, %v6881
    %v6952 = vpack.c.b16 %v6886, %v6884
    %v6953 = vpack.c.b16 %v6887, %v6885
    %v6954 = vpack.c.b16 %v6890, %v6888
    %v6955 = vpack.c.b16 %v6891, %v6889
    %v6956 = vpack.c.b16 %v6894, %v6892
    %v6957 = vpack.c.b16 %v6895, %v6893
    %v6958 = vpack.c.b16 %v6898, %v6896
    %v6959 = vpack.c.b16 %v6899, %v6897
    %v6960 = vpack.c.b16 %v6902, %v6900
    %v6961 = vpack.c.b16 %v6903, %v6901
    %v6962 = vpack.c.b16 %v6906, %v6904
    %v6963 = vpack.c.b16 %v6907, %v6905
    %v6964 = vpack.c.b16 %v6910, %v6908
    %v6965 = vpack.c.b16 %v6911, %v6909
    %v6966 = vpack.c.b16 %v6914, %v6912
    %v6967 = vpack.c.b16 %v6915, %v6913
    %v6968 = vpack.c.b16 %v6918, %v6916
    %v6969 = vpack.c.b16 %v6919, %v6917
    %v6970 = vpack.c.b16 %v6922, %v6920
    %v6971 = vpack.c.b16 %v6923, %v6921
    %v6972 = vpack.c.b16 %v6926, %v6924
    %v6973 = vpack.c.b16 %v6927, %v6925
    %v6974 = vpack.c.b16 %v6930, %v6928
    %v6975 = vpack.c.b16 %v6931, %v6929
    %v6976 = vpack.c.b16 %v6934, %v6932
    %v6977 = vpack.c.b16 %v6935, %v6933
    %v6978 = vpack.c.b16 %v6938, %v6936
    %v6979 = vpack.c.b16 %v6939, %v6937
    %v6980 = vpack.c.b16 %v6942, %v6940
    %v6981 = vpack.c.b16 %v6943, %v6941
    %v6982 = vpack.c.b16 %v6946, %v6944
    %v6983 = vpack.c.b16 %v6947, %v6945
    %v7021 = vsel %vm2077, %v6190, 0
    %7023 = vmatprep.subr.bf16.mxu0 %v6949
    %7024 = vmatpush1.bf16.msra.mxu0 %v6948
    %7025 = vmatprep.subr.bf16.mxu0 %v6951
    %7026 = vmatpush1.bf16.msra.mxu0 %v6950
    %7027 = vmatprep.subr.bf16.mxu0 %v6953
    %7028 = vmatpush1.bf16.msra.mxu0 %v6952
    %7029 = vmatprep.subr.bf16.mxu0 %v6955
    %7030 = vmatpush1.bf16.msra.mxu0 %v6954
    %7031 = vmatprep.subr.bf16.mxu0 %v6957
    %7032 = vmatpush1.bf16.msra.mxu0 %v6956
    %7033 = vmatprep.subr.bf16.mxu0 %v6959
    %7034 = vmatpush1.bf16.msra.mxu0 %v6958
    %7035 = vmatprep.subr.bf16.mxu0 %v6961
    %7036 = vmatpush1.bf16.msra.mxu0 %v6960
    %7037 = vmatprep.subr.bf16.mxu0 %v6963
    %7038 = vmatpush1.bf16.msra.mxu0 %v6962
    %7039 = vmatprep.subr.bf16.mxu0 %v6965
    %7040 = vmatpush1.bf16.msra.mxu0 %v6964
    %7041 = vmatprep.subr.bf16.mxu0 %v6967
    %7042 = vmatpush1.bf16.msra.mxu0 %v6966
    %7043 = vmatprep.subr.bf16.mxu0 %v6969
    %7044 = vmatpush1.bf16.msra.mxu0 %v6968
    %7045 = vmatprep.subr.bf16.mxu0 %v6971
    %7046 = vmatpush1.bf16.msra.mxu0 %v6970
    %7047 = vmatprep.subr.bf16.mxu0 %v6973
    %7048 = vmatpush1.bf16.msra.mxu0 %v6972
    %7049 = vmatprep.subr.bf16.mxu0 %v6975
    %7050 = vmatpush1.bf16.msra.mxu0 %v6974
    %7051 = vmatprep.subr.bf16.mxu0 %v6977
    %7052 = vmatpush1.bf16.msra.mxu0 %v6976
    %7053 = vmatprep.subr.bf16.mxu0 %v6979
    %7054 = vmatpush1.bf16.msra.mxu0 %v6978
    %7055 = vmatprep.mubr.bf16.mxu0 %v6189
    %7056 = vmatmul.mubr.bf16.gmra.mrb[0].mxu0 %v6188
    %v7057 = vpop.f32.mrb[0].mxu0
    %v7058 = vadd.f32 0.0, %v7057
    %v7059 = vpop.f32.mrb[0].mxu0
    %v7060 = vadd.f32 0.0, %v7059
    %v7061 = vpop.f32.mrb[0].mxu0
    %v7062 = vpop.f32.mrb[0].mxu0
    %7063 = vdwg.mxu0
    %7064 = vmatprep.subr.bf16.mxu0 %v6981
    %7065 = vmatpush1.bf16.msra.mxu0 %v6980
    %7066 = vmatprep.subr.bf16.mxu0 %v6983
    %7067 = vmatpush1.bf16.msra.mxu0 %v6982
    %7068 = vmatprep.subr.bf16.mxu0 0
    %7069 = vmatpush1.bf16.msra.mxu0 0
    %7070 = vmatprep.subr.bf16.mxu0 0
    %7071 = vmatpush1.bf16.msra.mxu0 0
    %7072 = vmatprep.subr.bf16.mxu0 0
    %7073 = vmatpush1.bf16.msra.mxu0 0
    %7074 = vmatprep.subr.bf16.mxu0 0
    %7075 = vmatpush1.bf16.msra.mxu0 0
    %7076 = vmatprep.subr.bf16.mxu0 0
    %7077 = vmatpush1.bf16.msra.mxu0 0
    %7078 = vmatprep.subr.bf16.mxu0 0
    %7079 = vmatpush1.bf16.msra.mxu0 0
    %7080 = vmatprep.subr.bf16.mxu0 0
    %7081 = vmatpush1.bf16.msra.mxu0 0
    %7082 = vmatprep.subr.bf16.mxu0 0
    %7083 = vmatpush1.bf16.msra.mxu0 0
    %7084 = vmatprep.subr.bf16.mxu0 0
    %7085 = vmatpush1.bf16.msra.mxu0 0
    %7086 = vmatprep.subr.bf16.mxu0 0
    %7087 = vmatpush1.bf16.msra.mxu0 0
    %7088 = vmatprep.subr.bf16.mxu0 0
    %7089 = vmatpush1.bf16.msra.mxu0 0
    %7090 = vmatprep.subr.bf16.mxu0 0
    %7091 = vmatpush1.bf16.msra.mxu0 0
    %7092 = vmatprep.subr.bf16.mxu0 0
    %7093 = vmatpush1.bf16.msra.mxu0 0
    %7094 = vmatprep.subr.bf16.mxu0 0
    %7095 = vmatpush1.bf16.msra.mxu0 0
    %7096 = vmatprep.mubr.bf16.mxu0 0
    %7097 = vmatmul.mubr.bf16.gmra.mrb[0].mxu0 %v7021
    %v7098 = vpop.f32.mrb[0].mxu0
    %v7099 = vadd.f32 %v7058, %v7098
    %v7100 = vpop.f32.mrb[0].mxu0
    %v7101 = vadd.f32 %v7060, %v7100
    %v7102 = vpop.f32.mrb[0].mxu0
    %v7103 = vpop.f32.mrb[0].mxu0
    %7104 = vdwg.mxu0
    %v7105 = vadd.f32 %v6798, %v7099
    %v7106 = vadd.f32 %v6800, %v7101
    %v7107 = vld [vmem:[%s2732] sm:$0xff]
    %v7108 = vld [vmem:[%s2732 + $0x8] sm:$0xff]
    %v7109 = vld [vmem:[%s2732 + $0x10] sm:$0xff]
    %v7110 = vld [vmem:[%s2732 + $0x18] sm:$0xff]
    %v7111 = vld [vmem:[%s2732 + $0x20] sm:$0xff]
    %v7112 = vld [vmem:[%s2732 + $0x28] sm:$0xff]
    %v7113 = vld [vmem:[%s2732 + $0x30] sm:$0xff]
    %v7114 = vld [vmem:[%s2732 + $0x38] sm:$0xff]
    %v7115 = vld [vmem:[%s2732 + $0x40] sm:$0xff]
    %v7116 = vld [vmem:[%s2732 + $0x48] sm:$0xff]
    %v7117 = vld [vmem:[%s2732 + $0x50] sm:$0xff]
    %v7118 = vld [vmem:[%s2732 + $0x58] sm:$0xff]
    %v7119 = vld [vmem:[%s2732 + $0x60] sm:$0xff]
    %v7120 = vld [vmem:[%s2732 + $0x68] sm:$0xff]
    %v7121 = vld [vmem:[%s2732 + $0x70] sm:$0xff]
    %v7122 = vld [vmem:[%s2732 + $0x78] sm:$0xff]
    %v7123 = vld [vmem:[%s2732 + $0x80] sm:$0xff]
    %v7124 = vld [vmem:[%s2732 + $0x88] sm:$0xff]
    %v7125 = vld [vmem:[%s2732 + $0x90] sm:$0xff]
    %v7126 = vld [vmem:[%s2732 + $0x98] sm:$0xff]
    %v7127 = vld [vmem:[%s2732 + $0xa0] sm:$0xff]
    %v7128 = vld [vmem:[%s2732 + $0xa8] sm:$0xff]
    %v7129 = vld [vmem:[%s2732 + $0xb0] sm:$0xff]
    %v7130 = vld [vmem:[%s2732 + $0xb8] sm:$0xff]
    %v7131 = vld [vmem:[%s2732 + $0xc0] sm:$0xff]
    %v7132 = vld [vmem:[%s2732 + $0xc8] sm:$0xff]
    %v7133 = vld [vmem:[%s2732 + $0xd0] sm:$0xff]
    %v7134 = vld [vmem:[%s2732 + $0xd8] sm:$0xff]
    %v7135 = vld [vmem:[%s2732 + $0xe0] sm:$0xff]
    %v7136 = vld [vmem:[%s2732 + $0xe8] sm:$0xff]
    %v7137 = vld [vmem:[%s2732 + $0xf0] sm:$0xff]
    %v7138 = vld [vmem:[%s2732 + $0xf8] sm:$0xff]
    %v7139 = vld [vmem:[%s2732 + $0x100] sm:$0xff]
    %v7140 = vld [vmem:[%s2732 + $0x108] sm:$0xff]
    %v7141 = vld [vmem:[%s2732 + $0x110] sm:$0xff]
    %v7142 = vld [vmem:[%s2732 + $0x118] sm:$0xff]
    %v7146 = vrot.slane %v6188, 4
    %v7147 = vrot.slane %v6189, 4
    %v7148 = vrot.slane %v6190, 4
    %v7187 = vunpack.c.l.b16 %v7107
    %v7188 = vunpack.c.h.b16 %v7107
    %v7189 = vunpack.c.l.b16 %v7108
    %v7190 = vunpack.c.h.b16 %v7108
    %v7191 = vunpack.c.l.b16 %v7109
    %v7192 = vunpack.c.h.b16 %v7109
    %v7193 = vunpack.c.l.b16 %v7110
    %v7194 = vunpack.c.h.b16 %v7110
    %v7195 = vunpack.c.l.b16 %v7111
    %v7196 = vunpack.c.h.b16 %v7111
    %v7197 = vunpack.c.l.b16 %v7112
    %v7198 = vunpack.c.h.b16 %v7112
    %v7199 = vunpack.c.l.b16 %v7113
    %v7200 = vunpack.c.h.b16 %v7113
    %v7201 = vunpack.c.l.b16 %v7114
    %v7202 = vunpack.c.h.b16 %v7114
    %v7203 = vunpack.c.l.b16 %v7115
    %v7204 = vunpack.c.h.b16 %v7115
    %v7205 = vunpack.c.l.b16 %v7116
    %v7206 = vunpack.c.h.b16 %v7116
    %v7207 = vunpack.c.l.b16 %v7117
    %v7208 = vunpack.c.h.b16 %v7117
    %v7209 = vunpack.c.l.b16 %v7118
    %v7210 = vunpack.c.h.b16 %v7118
    %v7211 = vunpack.c.l.b16 %v7119
    %v7212 = vunpack.c.h.b16 %v7119
    %v7213 = vunpack.c.l.b16 %v7120
    %v7214 = vunpack.c.h.b16 %v7120
    %v7215 = vunpack.c.l.b16 %v7121
    %v7216 = vunpack.c.h.b16 %v7121
    %v7217 = vunpack.c.l.b16 %v7122
    %v7218 = vunpack.c.h.b16 %v7122
    %v7219 = vunpack.c.l.b16 %v7123
    %v7220 = vunpack.c.h.b16 %v7123
    %v7221 = vunpack.c.l.b16 %v7124
    %v7222 = vunpack.c.h.b16 %v7124
    %v7223 = vunpack.c.l.b16 %v7125
    %v7224 = vunpack.c.h.b16 %v7125
    %v7225 = vunpack.c.l.b16 %v7126
    %v7226 = vunpack.c.h.b16 %v7126
    %v7227 = vunpack.c.l.b16 %v7127
    %v7228 = vunpack.c.h.b16 %v7127
    %v7229 = vunpack.c.l.b16 %v7128
    %v7230 = vunpack.c.h.b16 %v7128
    %v7231 = vunpack.c.l.b16 %v7129
    %v7232 = vunpack.c.h.b16 %v7129
    %v7233 = vunpack.c.l.b16 %v7130
    %v7234 = vunpack.c.h.b16 %v7130
    %v7235 = vunpack.c.l.b16 %v7131
    %v7236 = vunpack.c.h.b16 %v7131
    %v7237 = vunpack.c.l.b16 %v7132
    %v7238 = vunpack.c.h.b16 %v7132
    %v7239 = vunpack.c.l.b16 %v7133
    %v7240 = vunpack.c.h.b16 %v7133
    %v7241 = vunpack.c.l.b16 %v7134
    %v7242 = vunpack.c.h.b16 %v7134
    %v7243 = vunpack.c.l.b16 %v7135
    %v7244 = vunpack.c.h.b16 %v7135
    %v7245 = vunpack.c.l.b16 %v7136
    %v7246 = vunpack.c.h.b16 %v7136
    %v7247 = vunpack.c.l.b16 %v7137
    %v7248 = vunpack.c.h.b16 %v7137
    %v7249 = vunpack.c.l.b16 %v7138
    %v7250 = vunpack.c.h.b16 %v7138
    %v7251 = vunpack.c.l.b16 %v7139
    %v7252 = vunpack.c.h.b16 %v7139
    %v7253 = vunpack.c.l.b16 %v7140
    %v7254 = vunpack.c.h.b16 %v7140
    %v7255 = vunpack.c.l.b16 %v7141
    %v7256 = vunpack.c.h.b16 %v7141
    %v7257 = vunpack.c.l.b16 %v7142
    %v7258 = vunpack.c.h.b16 %v7142
    %v7259 = vpack.c.b16 %v7189, %v7187
    %v7260 = vpack.c.b16 %v7190, %v7188
    %v7261 = vpack.c.b16 %v7193, %v7191
    %v7262 = vpack.c.b16 %v7194, %v7192
    %v7263 = vpack.c.b16 %v7197, %v7195
    %v7264 = vpack.c.b16 %v7198, %v7196
    %v7265 = vpack.c.b16 %v7201, %v7199
    %v7266 = vpack.c.b16 %v7202, %v7200
    %v7267 = vpack.c.b16 %v7205, %v7203
    %v7268 = vpack.c.b16 %v7206, %v7204
    %v7269 = vpack.c.b16 %v7209, %v7207
    %v7270 = vpack.c.b16 %v7210, %v7208
    %v7271 = vpack.c.b16 %v7213, %v7211
    %v7272 = vpack.c.b16 %v7214, %v7212
    %v7273 = vpack.c.b16 %v7217, %v7215
    %v7274 = vpack.c.b16 %v7218, %v7216
    %v7275 = vpack.c.b16 %v7221, %v7219
    %v7276 = vpack.c.b16 %v7222, %v7220
    %v7277 = vpack.c.b16 %v7225, %v7223
    %v7278 = vpack.c.b16 %v7226, %v7224
    %v7279 = vpack.c.b16 %v7229, %v7227
    %v7280 = vpack.c.b16 %v7230, %v7228
    %v7281 = vpack.c.b16 %v7233, %v7231
    %v7282 = vpack.c.b16 %v7234, %v7232
    %v7283 = vpack.c.b16 %v7237, %v7235
    %v7284 = vpack.c.b16 %v7238, %v7236
    %v7285 = vpack.c.b16 %v7241, %v7239
    %v7286 = vpack.c.b16 %v7242, %v7240
    %v7287 = vpack.c.b16 %v7245, %v7243
    %v7288 = vpack.c.b16 %v7246, %v7244
    %v7289 = vpack.c.b16 %v7249, %v7247
    %v7290 = vpack.c.b16 %v7250, %v7248
    %v7291 = vpack.c.b16 %v7253, %v7251
    %v7292 = vpack.c.b16 %v7254, %v7252
    %v7293 = vpack.c.b16 %v7257, %v7255
    %v7294 = vpack.c.b16 %v7258, %v7256
    %v7332 = vsel %vm2077, %v7148, 0
    %7334 = vmatprep.subr.bf16.mxu0 %v7260
    %7335 = vmatpush1.bf16.msra.mxu0 %v7259
    %7336 = vmatprep.subr.bf16.mxu0 %v7262
    %7337 = vmatpush1.bf16.msra.mxu0 %v7261
    %7338 = vmatprep.subr.bf16.mxu0 %v7264
    %7339 = vmatpush1.bf16.msra.mxu0 %v7263
    %7340 = vmatprep.subr.bf16.mxu0 %v7266
    %7341 = vmatpush1.bf16.msra.mxu0 %v7265
    %7342 = vmatprep.subr.bf16.mxu0 %v7268
    %7343 = vmatpush1.bf16.msra.mxu0 %v7267
    %7344 = vmatprep.subr.bf16.mxu0 %v7270
    %7345 = vmatpush1.bf16.msra.mxu0 %v7269
    %7346 = vmatprep.subr.bf16.mxu0 %v7272
    %7347 = vmatpush1.bf16.msra.mxu0 %v7271
    %7348 = vmatprep.subr.bf16.mxu0 %v7274
    %7349 = vmatpush1.bf16.msra.mxu0 %v7273
    %7350 = vmatprep.subr.bf16.mxu0 %v7276
    %7351 = vmatpush1.bf16.msra.mxu0 %v7275
    %7352 = vmatprep.subr.bf16.mxu0 %v7278
    %7353 = vmatpush1.bf16.msra.mxu0 %v7277
    %7354 = vmatprep.subr.bf16.mxu0 %v7280
    %7355 = vmatpush1.bf16.msra.mxu0 %v7279
    %7356 = vmatprep.subr.bf16.mxu0 %v7282
    %7357 = vmatpush1.bf16.msra.mxu0 %v7281
    %7358 = vmatprep.subr.bf16.mxu0 %v7284
    %7359 = vmatpush1.bf16.msra.mxu0 %v7283
    %7360 = vmatprep.subr.bf16.mxu0 %v7286
    %7361 = vmatpush1.bf16.msra.mxu0 %v7285
    %7362 = vmatprep.subr.bf16.mxu0 %v7288
    %7363 = vmatpush1.bf16.msra.mxu0 %v7287
    %7364 = vmatprep.subr.bf16.mxu0 %v7290
    %7365 = vmatpush1.bf16.msra.mxu0 %v7289
    %7366 = vmatprep.mubr.bf16.mxu0 %v7147
    %7367 = vmatmul.mubr.bf16.gmra.mrb[0].mxu0 %v7146
    %v7368 = vpop.f32.mrb[0].mxu0
    %v7369 = vadd.f32 0.0, %v7368
    %v7370 = vpop.f32.mrb[0].mxu0
    %v7371 = vadd.f32 0.0, %v7370
    %v7372 = vpop.f32.mrb[0].mxu0
    %v7373 = vpop.f32.mrb[0].mxu0
    %7374 = vdwg.mxu0
    %7375 = vmatprep.subr.bf16.mxu0 %v7292
    %7376 = vmatpush1.bf16.msra.mxu0 %v7291
    %7377 = vmatprep.subr.bf16.mxu0 %v7294
    %7378 = vmatpush1.bf16.msra.mxu0 %v7293
    %7379 = vmatprep.subr.bf16.mxu0 0
    %7380 = vmatpush1.bf16.msra.mxu0 0
    %7381 = vmatprep.subr.bf16.mxu0 0
    %7382 = vmatpush1.bf16.msra.mxu0 0
    %7383 = vmatprep.subr.bf16.mxu0 0
    %7384 = vmatpush1.bf16.msra.mxu0 0
    %7385 = vmatprep.subr.bf16.mxu0 0
    %7386 = vmatpush1.bf16.msra.mxu0 0
    %7387 = vmatprep.subr.bf16.mxu0 0
    %7388 = vmatpush1.bf16.msra.mxu0 0
    %7389 = vmatprep.subr.bf16.mxu0 0
    %7390 = vmatpush1.bf16.msra.mxu0 0
    %7391 = vmatprep.subr.bf16.mxu0 0
    %7392 = vmatpush1.bf16.msra.mxu0 0
    %7393 = vmatprep.subr.bf16.mxu0 0
    %7394 = vmatpush1.bf16.msra.mxu0 0
    %7395 = vmatprep.subr.bf16.mxu0 0
    %7396 = vmatpush1.bf16.msra.mxu0 0
    %7397 = vmatprep.subr.bf16.mxu0 0
    %7398 = vmatpush1.bf16.msra.mxu0 0
    %7399 = vmatprep.subr.bf16.mxu0 0
    %7400 = vmatpush1.bf16.msra.mxu0 0
    %7401 = vmatprep.subr.bf16.mxu0 0
    %7402 = vmatpush1.bf16.msra.mxu0 0
    %7403 = vmatprep.subr.bf16.mxu0 0
    %7404 = vmatpush1.bf16.msra.mxu0 0
    %7405 = vmatprep.subr.bf16.mxu0 0
    %7406 = vmatpush1.bf16.msra.mxu0 0
    %7407 = vmatprep.mubr.bf16.mxu0 0
    %7408 = vmatmul.mubr.bf16.gmra.mrb[0].mxu0 %v7332
    %v7409 = vpop.f32.mrb[0].mxu0
    %v7410 = vadd.f32 %v7369, %v7409
    %v7411 = vpop.f32.mrb[0].mxu0
    %v7412 = vadd.f32 %v7371, %v7411
    %v7413 = vpop.f32.mrb[0].mxu0
    %v7414 = vpop.f32.mrb[0].mxu0
    %7415 = vdwg.mxu0
    %v7416 = vadd.f32 %v7105, %v7410
    %v7417 = vadd.f32 %v7106, %v7412
    %v7418 = vld [vmem:[%s3044] sm:$0xff]
    %v7419 = vld [vmem:[%s3044 + $0x8] sm:$0xff]
    %v7420 = vld [vmem:[%s3044 + $0x10] sm:$0xff]
    %v7421 = vld [vmem:[%s3044 + $0x18] sm:$0xff]
    %v7422 = vld [vmem:[%s3044 + $0x20] sm:$0xff]
    %v7423 = vld [vmem:[%s3044 + $0x28] sm:$0xff]
    %v7424 = vld [vmem:[%s3044 + $0x30] sm:$0xff]
    %v7425 = vld [vmem:[%s3044 + $0x38] sm:$0xff]
    %v7426 = vld [vmem:[%s3044 + $0x40] sm:$0xff]
    %v7427 = vld [vmem:[%s3044 + $0x48] sm:$0xff]
    %v7428 = vld [vmem:[%s3044 + $0x50] sm:$0xff]
    %v7429 = vld [vmem:[%s3044 + $0x58] sm:$0xff]
    %v7430 = vld [vmem:[%s3044 + $0x60] sm:$0xff]
    %v7431 = vld [vmem:[%s3044 + $0x68] sm:$0xff]
    %v7432 = vld [vmem:[%s3044 + $0x70] sm:$0xff]
    %v7433 = vld [vmem:[%s3044 + $0x78] sm:$0xff]
    %v7434 = vld [vmem:[%s3044 + $0x80] sm:$0xff]
    %v7435 = vld [vmem:[%s3044 + $0x88] sm:$0xff]
    %v7436 = vld [vmem:[%s3044 + $0x90] sm:$0xff]
    %v7437 = vld [vmem:[%s3044 + $0x98] sm:$0xff]
    %v7438 = vld [vmem:[%s3044 + $0xa0] sm:$0xff]
    %v7439 = vld [vmem:[%s3044 + $0xa8] sm:$0xff]
    %v7440 = vld [vmem:[%s3044 + $0xb0] sm:$0xff]
    %v7441 = vld [vmem:[%s3044 + $0xb8] sm:$0xff]
    %v7442 = vld [vmem:[%s3044 + $0xc0] sm:$0xff]
    %v7443 = vld [vmem:[%s3044 + $0xc8] sm:$0xff]
    %v7444 = vld [vmem:[%s3044 + $0xd0] sm:$0xff]
    %v7445 = vld [vmem:[%s3044 + $0xd8] sm:$0xff]
    %v7446 = vld [vmem:[%s3044 + $0xe0] sm:$0xff]
    %v7447 = vld [vmem:[%s3044 + $0xe8] sm:$0xff]
    %v7448 = vld [vmem:[%s3044 + $0xf0] sm:$0xff]
    %v7449 = vld [vmem:[%s3044 + $0xf8] sm:$0xff]
    %v7450 = vld [vmem:[%s3044 + $0x100] sm:$0xff]
    %v7451 = vld [vmem:[%s3044 + $0x108] sm:$0xff]
    %v7452 = vld [vmem:[%s3044 + $0x110] sm:$0xff]
    %v7453 = vld [vmem:[%s3044 + $0x118] sm:$0xff]
    %v7490 = vunpack.c.l.b16 %v7418
    %v7491 = vunpack.c.h.b16 %v7418
    %v7492 = vunpack.c.l.b16 %v7419
    %v7493 = vunpack.c.h.b16 %v7419
    %v7494 = vunpack.c.l.b16 %v7420
    %v7495 = vunpack.c.h.b16 %v7420
    %v7496 = vunpack.c.l.b16 %v7421
    %v7497 = vunpack.c.h.b16 %v7421
    %v7498 = vunpack.c.l.b16 %v7422
    %v7499 = vunpack.c.h.b16 %v7422
    %v7500 = vunpack.c.l.b16 %v7423
    %v7501 = vunpack.c.h.b16 %v7423
    %v7502 = vunpack.c.l.b16 %v7424
    %v7503 = vunpack.c.h.b16 %v7424
    %v7504 = vunpack.c.l.b16 %v7425
    %v7505 = vunpack.c.h.b16 %v7425
    %v7506 = vunpack.c.l.b16 %v7426
    %v7507 = vunpack.c.h.b16 %v7426
    %v7508 = vunpack.c.l.b16 %v7427
    %v7509 = vunpack.c.h.b16 %v7427
    %v7510 = vunpack.c.l.b16 %v7428
    %v7511 = vunpack.c.h.b16 %v7428
    %v7512 = vunpack.c.l.b16 %v7429
    %v7513 = vunpack.c.h.b16 %v7429
    %v7514 = vunpack.c.l.b16 %v7430
    %v7515 = vunpack.c.h.b16 %v7430
    %v7516 = vunpack.c.l.b16 %v7431
    %v7517 = vunpack.c.h.b16 %v7431
    %v7518 = vunpack.c.l.b16 %v7432
    %v7519 = vunpack.c.h.b16 %v7432
    %v7520 = vunpack.c.l.b16 %v7433
    %v7521 = vunpack.c.h.b16 %v7433
    %v7522 = vunpack.c.l.b16 %v7434
    %v7523 = vunpack.c.h.b16 %v7434
    %v7524 = vunpack.c.l.b16 %v7435
    %v7525 = vunpack.c.h.b16 %v7435
    %v7526 = vunpack.c.l.b16 %v7436
    %v7527 = vunpack.c.h.b16 %v7436
    %v7528 = vunpack.c.l.b16 %v7437
    %v7529 = vunpack.c.h.b16 %v7437
    %v7530 = vunpack.c.l.b16 %v7438
    %v7531 = vunpack.c.h.b16 %v7438
    %v7532 = vunpack.c.l.b16 %v7439
    %v7533 = vunpack.c.h.b16 %v7439
    %v7534 = vunpack.c.l.b16 %v7440
    %v7535 = vunpack.c.h.b16 %v7440
    %v7536 = vunpack.c.l.b16 %v7441
    %v7537 = vunpack.c.h.b16 %v7441
    %v7538 = vunpack.c.l.b16 %v7442
    %v7539 = vunpack.c.h.b16 %v7442
    %v7540 = vunpack.c.l.b16 %v7443
    %v7541 = vunpack.c.h.b16 %v7443
    %v7542 = vunpack.c.l.b16 %v7444
    %v7543 = vunpack.c.h.b16 %v7444
    %v7544 = vunpack.c.l.b16 %v7445
    %v7545 = vunpack.c.h.b16 %v7445
    %v7546 = vunpack.c.l.b16 %v7446
    %v7547 = vunpack.c.h.b16 %v7446
    %v7548 = vunpack.c.l.b16 %v7447
    %v7549 = vunpack.c.h.b16 %v7447
    %v7550 = vunpack.c.l.b16 %v7448
    %v7551 = vunpack.c.h.b16 %v7448
    %v7552 = vunpack.c.l.b16 %v7449
    %v7553 = vunpack.c.h.b16 %v7449
    %v7554 = vunpack.c.l.b16 %v7450
    %v7555 = vunpack.c.h.b16 %v7450
    %v7556 = vunpack.c.l.b16 %v7451
    %v7557 = vunpack.c.h.b16 %v7451
    %v7558 = vunpack.c.l.b16 %v7452
    %v7559 = vunpack.c.h.b16 %v7452
    %v7560 = vunpack.c.l.b16 %v7453
    %v7561 = vunpack.c.h.b16 %v7453
    %v7562 = vpack.c.b16 %v7492, %v7490
    %v7563 = vpack.c.b16 %v7493, %v7491
    %v7564 = vpack.c.b16 %v7496, %v7494
    %v7565 = vpack.c.b16 %v7497, %v7495
    %v7566 = vpack.c.b16 %v7500, %v7498
    %v7567 = vpack.c.b16 %v7501, %v7499
    %v7568 = vpack.c.b16 %v7504, %v7502
    %v7569 = vpack.c.b16 %v7505, %v7503
    %v7570 = vpack.c.b16 %v7508, %v7506
    %v7571 = vpack.c.b16 %v7509, %v7507
    %v7572 = vpack.c.b16 %v7512, %v7510
    %v7573 = vpack.c.b16 %v7513, %v7511
    %v7574 = vpack.c.b16 %v7516, %v7514
    %v7575 = vpack.c.b16 %v7517, %v7515
    %v7576 = vpack.c.b16 %v7520, %v7518
    %v7577 = vpack.c.b16 %v7521, %v7519
    %v7578 = vpack.c.b16 %v7524, %v7522
    %v7579 = vpack.c.b16 %v7525, %v7523
    %v7580 = vpack.c.b16 %v7528, %v7526
    %v7581 = vpack.c.b16 %v7529, %v7527
    %v7582 = vpack.c.b16 %v7532, %v7530
    %v7583 = vpack.c.b16 %v7533, %v7531
    %v7584 = vpack.c.b16 %v7536, %v7534
    %v7585 = vpack.c.b16 %v7537, %v7535
    %v7586 = vpack.c.b16 %v7540, %v7538
    %v7587 = vpack.c.b16 %v7541, %v7539
    %v7588 = vpack.c.b16 %v7544, %v7542
    %v7589 = vpack.c.b16 %v7545, %v7543
    %v7590 = vpack.c.b16 %v7548, %v7546
    %v7591 = vpack.c.b16 %v7549, %v7547
    %v7592 = vpack.c.b16 %v7552, %v7550
    %v7593 = vpack.c.b16 %v7553, %v7551
    %v7594 = vpack.c.b16 %v7556, %v7554
    %v7595 = vpack.c.b16 %v7557, %v7555
    %v7596 = vpack.c.b16 %v7560, %v7558
    %v7597 = vpack.c.b16 %v7561, %v7559
    %v7635 = vsel %vm2077, %v6193, 0
    %7637 = vmatprep.subr.bf16.mxu0 %v7563
    %7638 = vmatpush1.bf16.msra.mxu0 %v7562
    %7639 = vmatprep.subr.bf16.mxu0 %v7565
    %7640 = vmatpush1.bf16.msra.mxu0 %v7564
    %7641 = vmatprep.subr.bf16.mxu0 %v7567
    %7642 = vmatpush1.bf16.msra.mxu0 %v7566
    %7643 = vmatprep.subr.bf16.mxu0 %v7569
    %7644 = vmatpush1.bf16.msra.mxu0 %v7568
    %7645 = vmatprep.subr.bf16.mxu0 %v7571
    %7646 = vmatpush1.bf16.msra.mxu0 %v7570
    %7647 = vmatprep.subr.bf16.mxu0 %v7573
    %7648 = vmatpush1.bf16.msra.mxu0 %v7572
    %7649 = vmatprep.subr.bf16.mxu0 %v7575
    %7650 = vmatpush1.bf16.msra.mxu0 %v7574
    %7651 = vmatprep.subr.bf16.mxu0 %v7577
    %7652 = vmatpush1.bf16.msra.mxu0 %v7576
    %7653 = vmatprep.subr.bf16.mxu0 %v7579
    %7654 = vmatpush1.bf16.msra.mxu0 %v7578
    %7655 = vmatprep.subr.bf16.mxu0 %v7581
    %7656 = vmatpush1.bf16.msra.mxu0 %v7580
    %7657 = vmatprep.subr.bf16.mxu0 %v7583
    %7658 = vmatpush1.bf16.msra.mxu0 %v7582
    %7659 = vmatprep.subr.bf16.mxu0 %v7585
    %7660 = vmatpush1.bf16.msra.mxu0 %v7584
    %7661 = vmatprep.subr.bf16.mxu0 %v7587
    %7662 = vmatpush1.bf16.msra.mxu0 %v7586
    %7663 = vmatprep.subr.bf16.mxu0 %v7589
    %7664 = vmatpush1.bf16.msra.mxu0 %v7588
    %7665 = vmatprep.subr.bf16.mxu0 %v7591
    %7666 = vmatpush1.bf16.msra.mxu0 %v7590
    %7667 = vmatprep.subr.bf16.mxu0 %v7593
    %7668 = vmatpush1.bf16.msra.mxu0 %v7592
    %7669 = vmatprep.mubr.bf16.mxu0 %v6192
    %7670 = vmatmul.mubr.bf16.gmra.mrb[0].mxu0 %v6191
    %v7671 = vpop.f32.mrb[0].mxu0
    %v7672 = vadd.f32 0.0, %v7671
    %v7673 = vpop.f32.mrb[0].mxu0
    %v7674 = vadd.f32 0.0, %v7673
    %v7675 = vpop.f32.mrb[0].mxu0
    %v7676 = vpop.f32.mrb[0].mxu0
    %7677 = vdwg.mxu0
    %7678 = vmatprep.subr.bf16.mxu0 %v7595
    %7679 = vmatpush1.bf16.msra.mxu0 %v7594
    %7680 = vmatprep.subr.bf16.mxu0 %v7597
    %7681 = vmatpush1.bf16.msra.mxu0 %v7596
    %7682 = vmatprep.subr.bf16.mxu0 0
    %7683 = vmatpush1.bf16.msra.mxu0 0
    %7684 = vmatprep.subr.bf16.mxu0 0
    %7685 = vmatpush1.bf16.msra.mxu0 0
    %7686 = vmatprep.subr.bf16.mxu0 0
    %7687 = vmatpush1.bf16.msra.mxu0 0
    %7688 = vmatprep.subr.bf16.mxu0 0
    %7689 = vmatpush1.bf16.msra.mxu0 0
    %7690 = vmatprep.subr.bf16.mxu0 0
    %7691 = vmatpush1.bf16.msra.mxu0 0
    %7692 = vmatprep.subr.bf16.mxu0 0
    %7693 = vmatpush1.bf16.msra.mxu0 0
    %7694 = vmatprep.subr.bf16.mxu0 0
    %7695 = vmatpush1.bf16.msra.mxu0 0
    %7696 = vmatprep.subr.bf16.mxu0 0
    %7697 = vmatpush1.bf16.msra.mxu0 0
    %7698 = vmatprep.subr.bf16.mxu0 0
    %7699 = vmatpush1.bf16.msra.mxu0 0
    %7700 = vmatprep.subr.bf16.mxu0 0
    %7701 = vmatpush1.bf16.msra.mxu0 0
    %7702 = vmatprep.subr.bf16.mxu0 0
    %7703 = vmatpush1.bf16.msra.mxu0 0
    %7704 = vmatprep.subr.bf16.mxu0 0
    %7705 = vmatpush1.bf16.msra.mxu0 0
    %7706 = vmatprep.subr.bf16.mxu0 0
    %7707 = vmatpush1.bf16.msra.mxu0 0
    %7708 = vmatprep.subr.bf16.mxu0 0
    %7709 = vmatpush1.bf16.msra.mxu0 0
    %7710 = vmatprep.mubr.bf16.mxu0 0
    %7711 = vmatmul.mubr.bf16.gmra.mrb[0].mxu0 %v7635
    %v7712 = vpop.f32.mrb[0].mxu0
    %v7713 = vadd.f32 %v7672, %v7712
    %v7714 = vpop.f32.mrb[0].mxu0
    %v7715 = vadd.f32 %v7674, %v7714
    %v7716 = vpop.f32.mrb[0].mxu0
    %v7717 = vpop.f32.mrb[0].mxu0
    %7718 = vdwg.mxu0
    %v7719 = vadd.f32 %v7416, %v7713
    %v7720 = vadd.f32 %v7417, %v7715
    %v7721 = vld [vmem:[%s6] sm:$0x3]
    %v7723 = vlaneseq
    %v7724 = vshrl.u32 %v7723, 7
    %v7725 = vsub.s32 0, %v7724
    %v7726 = vrot.slane %v7721, %v7725
    %v7727 = vlaneseq
    %v7728 = vshrl.u32 %v7727, 7
    %v7729 = vsub.s32 1, %v7728
    %v7730 = vrot.slane %v7721, %v7729
    %v7733 = vadd.f32 %v7719, %v7726
    %v7734 = vadd.f32 %v7720, %v7730
    %v7735 = vmax.f32 %v7733, 0.0
    %v7736 = vmax.f32 %v7734, 0.0
    %v7737 = vpack.c.bf16 %v7735, %v7735
    %v7738 = vpack.c.bf16 %v7736, %v7736
    %v7739 = vld [vmem:[%s7] sm:$0xf]
    %v7740 = vld [vmem:[%s7 + $0x4] sm:$0xf]
    %v7741 = vld [vmem:[%s7 + $0x8] sm:$0xf]
    %v7742 = vld [vmem:[%s7 + $0xc] sm:$0xf]
    %v7743 = vld [vmem:[%s7 + $0x10] sm:$0xf]
    %v7749 = vunpack.c.l.b16 %v7739
    %v7750 = vunpack.c.l.b16 %v7740
    %v7751 = vunpack.c.l.b16 %v7741
    %v7752 = vunpack.c.l.b16 %v7742
    %v7753 = vunpack.c.l.b16 %v7743
    %v7754 = vpack.c.b16 %v7750, %v7749
    %v7755 = vpack.c.b16 %v7752, %v7751
    %v7756 = vpack.c.b16 %v7753, %v7753
    %v7758 = vsel %vm3384, %v7754, 0
    %v7761 = vsel %vm3384, %v7755, 0
    %v7764 = vsel %vm3384, %v7756, 0
    %v7767 = vsel %vm141, %v7737, 0
    %v7770 = vsel %vm141, %v7738, 0
    %7772 = vmatprep.subr.bf16.mxu0 %v7770
    %7773 = vmatpush1.bf16.msra.mxu0 %v7767
    %7774 = vmatprep.subr.bf16.mxu0 0
    %7775 = vmatpush1.bf16.msra.mxu0 0
    %7776 = vmatprep.subr.bf16.mxu0 0
    %7777 = vmatpush1.bf16.msra.mxu0 0
    %7778 = vmatprep.subr.bf16.mxu0 0
    %7779 = vmatpush1.bf16.msra.mxu0 0
    %7780 = vmatprep.subr.bf16.mxu0 0
    %7781 = vmatpush1.bf16.msra.mxu0 0
    %7782 = vmatprep.subr.bf16.mxu0 0
    %7783 = vmatpush1.bf16.msra.mxu0 0
    %7784 = vmatprep.subr.bf16.mxu0 0
    %7785 = vmatpush1.bf16.msra.mxu0 0
    %7786 = vmatprep.subr.bf16.mxu0 0
    %7787 = vmatpush1.bf16.msra.mxu0 0
    %7788 = vmatprep.subr.bf16.mxu0 0
    %7789 = vmatpush1.bf16.msra.mxu0 0
    %7790 = vmatprep.subr.bf16.mxu0 0
    %7791 = vmatpush1.bf16.msra.mxu0 0
    %7792 = vmatprep.subr.bf16.mxu0 0
    %7793 = vmatpush1.bf16.msra.mxu0 0
    %7794 = vmatprep.subr.bf16.mxu0 0
    %7795 = vmatpush1.bf16.msra.mxu0 0
    %7796 = vmatprep.subr.bf16.mxu0 0
    %7797 = vmatpush1.bf16.msra.mxu0 0
    %7798 = vmatprep.subr.bf16.mxu0 0
    %7799 = vmatpush1.bf16.msra.mxu0 0
    %7800 = vmatprep.subr.bf16.mxu0 0
    %7801 = vmatpush1.bf16.msra.mxu0 0
    %7802 = vmatprep.subr.bf16.mxu0 0
    %7803 = vmatpush1.bf16.msra.mxu0 0
    %7804 = vmatprep.mubr.bf16.mxu0 0
    %7805 = vmatmul.mubr.bf16.gmra.mrb[0].mxu0 %v7758
    %v7806 = vpop.f32.mrb[0].mxu0
    %v7807 = vadd.f32 0.0, %v7806
    %v7808 = vpop.f32.mrb[0].mxu0
    %v7809 = vadd.f32 0.0, %v7808
    %v7810 = vpop.f32.mrb[0].mxu0
    %v7811 = vadd.f32 0.0, %v7810
    %v7812 = vpop.f32.mrb[0].mxu0
    %v7813 = vadd.f32 0.0, %v7812
    %7814 = vmatprep.mubr.bf16.mxu0 0
    %7815 = vmatmul.mubr.bf16.gmra.mrb[0].mxu0 %v7761
    %v7816 = vpop.f32.mrb[0].mxu0
    %v7817 = vadd.f32 0.0, %v7816
    %v7818 = vpop.f32.mrb[0].mxu0
    %v7819 = vadd.f32 0.0, %v7818
    %v7820 = vpop.f32.mrb[0].mxu0
    %v7821 = vadd.f32 0.0, %v7820
    %v7822 = vpop.f32.mrb[0].mxu0
    %v7823 = vadd.f32 0.0, %v7822
    %7824 = vmatprep.mubr.bf16.mxu0 0
    %7825 = vmatmul.mubr.bf16.gmra.mrb[0].mxu0 %v7764
    %v7826 = vpop.f32.mrb[0].mxu0
    %v7827 = vadd.f32 0.0, %v7826
    %v7828 = vpop.f32.mrb[0].mxu0
    %v7829 = vadd.f32 0.0, %v7828
    %v7830 = vpop.f32.mrb[0].mxu0
    %v7831 = vpop.f32.mrb[0].mxu0
    %7832 = vdwg.mxu0
    %v7833 = vpack.c.bf16 %v7811, %v7807
    %v7834 = vpack.c.bf16 %v7813, %v7809
    %v7835 = vpack.c.bf16 %v7821, %v7817
    %v7836 = vpack.c.bf16 %v7823, %v7819
    %v7837 = vpack.c.bf16 %v7827, %v7827
    %v7838 = vpack.c.bf16 %v7829, %v7829
    %v7839 = vld [vmem:[%s8] sm:$0xf]
    %v7840 = vld [vmem:[%s8 + $0x4] sm:$0xf]
    %v7841 = vld [vmem:[%s8 + $0x8] sm:$0xf]
    %v7842 = vld [vmem:[%s8 + $0xc] sm:$0xf]
    %v7843 = vld [vmem:[%s8 + $0x10] sm:$0xf]
    %v7844 = vld [vmem:[%s8 + $0x14] sm:$0xf]
    %v7845 = vld [vmem:[%s8 + $0x18] sm:$0xf]
    %v7846 = vld [vmem:[%s8 + $0x1c] sm:$0xf]
    %v7847 = vld [vmem:[%s8 + $0x20] sm:$0xf]
    %v7848 = vld [vmem:[%s8 + $0x24] sm:$0xf]
    %v7849 = vld [vmem:[%s8 + $0x28] sm:$0xf]
    %v7850 = vld [vmem:[%s8 + $0x2c] sm:$0xf]
    %v7851 = vld [vmem:[%s8 + $0x30] sm:$0xf]
    %v7852 = vld [vmem:[%s8 + $0x34] sm:$0xf]
    %v7853 = vld [vmem:[%s8 + $0x38] sm:$0xf]
    %v7854 = vld [vmem:[%s8 + $0x3c] sm:$0xf]
    %v7855 = vld [vmem:[%s8 + $0x40] sm:$0xf]
    %v7856 = vld [vmem:[%s8 + $0x44] sm:$0xf]
    %v7857 = vld [vmem:[%s8 + $0x48] sm:$0xf]
    %v7858 = vld [vmem:[%s8 + $0x4c] sm:$0xf]
    %v7859 = vld [vmem:[%s8 + $0x50] sm:$0xf]
    %v7860 = vld [vmem:[%s8 + $0x54] sm:$0xf]
    %v7861 = vld [vmem:[%s8 + $0x58] sm:$0xf]
    %v7862 = vld [vmem:[%s8 + $0x5c] sm:$0xf]
    %v7863 = vld [vmem:[%s8 + $0x60] sm:$0xf]
    %v7864 = vld [vmem:[%s8 + $0x64] sm:$0xf]
    %v7865 = vld [vmem:[%s8 + $0x68] sm:$0xf]
    %v7866 = vld [vmem:[%s8 + $0x6c] sm:$0xf]
    %v7867 = vld [vmem:[%s3495] sm:$0xf]
    %v7868 = vld [vmem:[%s3495 + $0x4] sm:$0xf]
    %v7869 = vld [vmem:[%s3495 + $0x8] sm:$0xf]
    %v7870 = vld [vmem:[%s3495 + $0xc] sm:$0xf]
    %v7871 = vld [vmem:[%s3495 + $0x10] sm:$0xf]
    %v7872 = vld [vmem:[%s3495 + $0x14] sm:$0xf]
    %v7873 = vld [vmem:[%s3495 + $0x18] sm:$0xf]
    %v7874 = vld [vmem:[%s3495 + $0x1c] sm:$0xf]
    %v7875 = vld [vmem:[%s3495 + $0x20] sm:$0xf]
    %v7876 = vld [vmem:[%s3495 + $0x24] sm:$0xf]
    %v7877 = vld [vmem:[%s3495 + $0x28] sm:$0xf]
    %v7878 = vld [vmem:[%s3495 + $0x2c] sm:$0xf]
    %v7879 = vld [vmem:[%s3495 + $0x30] sm:$0xf]
    %v7880 = vld [vmem:[%s3495 + $0x34] sm:$0xf]
    %v7881 = vld [vmem:[%s3495 + $0x38] sm:$0xf]
    %v7882 = vld [vmem:[%s3495 + $0x3c] sm:$0xf]
    %v7883 = vld [vmem:[%s3495 + $0x40] sm:$0xf]
    %v7884 = vld [vmem:[%s3495 + $0x44] sm:$0xf]
    %v7885 = vld [vmem:[%s3495 + $0x48] sm:$0xf]
    %v7886 = vld [vmem:[%s3495 + $0x4c] sm:$0xf]
    %v7887 = vld [vmem:[%s3495 + $0x50] sm:$0xf]
    %v7888 = vld [vmem:[%s3495 + $0x54] sm:$0xf]
    %v7889 = vld [vmem:[%s3495 + $0x58] sm:$0xf]
    %v7890 = vld [vmem:[%s3495 + $0x5c] sm:$0xf]
    %v7891 = vld [vmem:[%s3495 + $0x60] sm:$0xf]
    %v7892 = vld [vmem:[%s3495 + $0x64] sm:$0xf]
    %v7893 = vld [vmem:[%s3495 + $0x68] sm:$0xf]
    %v7894 = vld [vmem:[%s3495 + $0x6c] sm:$0xf]
    %v7897 = vrot.slane %v7833, 4
    %v7898 = vrot.slane %v7834, 4
    %v7928 = vunpack.c.l.b16 %v7867
    %v7929 = vunpack.c.l.b16 %v7868
    %v7930 = vunpack.c.l.b16 %v7869
    %v7931 = vunpack.c.l.b16 %v7870
    %v7932 = vunpack.c.l.b16 %v7871
    %v7933 = vunpack.c.l.b16 %v7872
    %v7934 = vunpack.c.l.b16 %v7873
    %v7935 = vunpack.c.l.b16 %v7874
    %v7936 = vunpack.c.l.b16 %v7875
    %v7937 = vunpack.c.l.b16 %v7876
    %v7938 = vunpack.c.l.b16 %v7877
    %v7939 = vunpack.c.l.b16 %v7878
    %v7940 = vunpack.c.l.b16 %v7879
    %v7941 = vunpack.c.l.b16 %v7880
    %v7942 = vunpack.c.l.b16 %v7881
    %v7943 = vunpack.c.l.b16 %v7882
    %v7944 = vunpack.c.l.b16 %v7883
    %v7945 = vunpack.c.l.b16 %v7884
    %v7946 = vunpack.c.l.b16 %v7885
    %v7947 = vunpack.c.l.b16 %v7886
    %v7948 = vunpack.c.l.b16 %v7887
    %v7949 = vunpack.c.l.b16 %v7888
    %v7950 = vunpack.c.l.b16 %v7889
    %v7951 = vunpack.c.l.b16 %v7890
    %v7952 = vunpack.c.l.b16 %v7891
    %v7953 = vunpack.c.l.b16 %v7892
    %v7954 = vunpack.c.l.b16 %v7893
    %v7955 = vunpack.c.l.b16 %v7894
    %v7956 = vpack.c.b16 %v7929, %v7928
    %v7957 = vpack.c.b16 %v7931, %v7930
    %v7958 = vpack.c.b16 %v7933, %v7932
    %v7959 = vpack.c.b16 %v7935, %v7934
    %v7960 = vpack.c.b16 %v7937, %v7936
    %v7961 = vpack.c.b16 %v7939, %v7938
    %v7962 = vpack.c.b16 %v7941, %v7940
    %v7963 = vpack.c.b16 %v7943, %v7942
    %v7964 = vpack.c.b16 %v7945, %v7944
    %v7965 = vpack.c.b16 %v7947, %v7946
    %v7966 = vpack.c.b16 %v7949, %v7948
    %v7967 = vpack.c.b16 %v7951, %v7950
    %v7968 = vpack.c.b16 %v7953, %v7952
    %v7969 = vpack.c.b16 %v7955, %v7954
    %v7985 = vsel %vm3613, %v7898, 0
    %7987 = vmatprep.subr.bf16.mxu0 0
    %7988 = vmatpush1.bf16.msra.mxu0 %v7956
    %7989 = vmatprep.subr.bf16.mxu0 0
    %7990 = vmatpush1.bf16.msra.mxu0 %v7957
    %7991 = vmatprep.subr.bf16.mxu0 0
    %7992 = vmatpush1.bf16.msra.mxu0 %v7958
    %7993 = vmatprep.subr.bf16.mxu0 0
    %7994 = vmatpush1.bf16.msra.mxu0 %v7959
    %7995 = vmatprep.subr.bf16.mxu0 0
    %7996 = vmatpush1.bf16.msra.mxu0 %v7960
    %7997 = vmatprep.subr.bf16.mxu0 0
    %7998 = vmatpush1.bf16.msra.mxu0 %v7961
    %7999 = vmatprep.subr.bf16.mxu0 0
    %8000 = vmatpush1.bf16.msra.mxu0 %v7962
    %8001 = vmatprep.subr.bf16.mxu0 0
    %8002 = vmatpush1.bf16.msra.mxu0 %v7963
    %8003 = vmatprep.subr.bf16.mxu0 0
    %8004 = vmatpush1.bf16.msra.mxu0 %v7964
    %8005 = vmatprep.subr.bf16.mxu0 0
    %8006 = vmatpush1.bf16.msra.mxu0 %v7965
    %8007 = vmatprep.subr.bf16.mxu0 0
    %8008 = vmatpush1.bf16.msra.mxu0 %v7966
    %8009 = vmatprep.subr.bf16.mxu0 0
    %8010 = vmatpush1.bf16.msra.mxu0 %v7967
    %8011 = vmatprep.subr.bf16.mxu0 0
    %8012 = vmatpush1.bf16.msra.mxu0 %v7968
    %8013 = vmatprep.subr.bf16.mxu0 0
    %8014 = vmatpush1.bf16.msra.mxu0 %v7969
    %8015 = vmatprep.subr.bf16.mxu0 0
    %8016 = vmatpush1.bf16.msra.mxu0 0
    %8017 = vmatprep.subr.bf16.mxu0 0
    %8018 = vmatpush1.bf16.msra.mxu0 0
    %8019 = vmatprep.mubr.bf16.mxu0 %v7985
    %8020 = vmatmul.mubr.bf16.gmra.mrb[0].mxu0 %v7897
    %v8021 = vpop.f32.mrb[0].mxu0
    %v8022 = vadd.f32 0.0, %v8021
    %v8023 = vpop.f32.mrb[0].mxu0
    %v8024 = vpop.f32.mrb[0].mxu0
    %v8025 = vpop.f32.mrb[0].mxu0
    %8026 = vdwg.mxu0
    %v8055 = vunpack.c.l.b16 %v7839
    %v8056 = vunpack.c.l.b16 %v7840
    %v8057 = vunpack.c.l.b16 %v7841
    %v8058 = vunpack.c.l.b16 %v7842
    %v8059 = vunpack.c.l.b16 %v7843
    %v8060 = vunpack.c.l.b16 %v7844
    %v8061 = vunpack.c.l.b16 %v7845
    %v8062 = vunpack.c.l.b16 %v7846
    %v8063 = vunpack.c.l.b16 %v7847
    %v8064 = vunpack.c.l.b16 %v7848
    %v8065 = vunpack.c.l.b16 %v7849
    %v8066 = vunpack.c.l.b16 %v7850
    %v8067 = vunpack.c.l.b16 %v7851
    %v8068 = vunpack.c.l.b16 %v7852
    %v8069 = vunpack.c.l.b16 %v7853
    %v8070 = vunpack.c.l.b16 %v7854
    %v8071 = vunpack.c.l.b16 %v7855
    %v8072 = vunpack.c.l.b16 %v7856
    %v8073 = vunpack.c.l.b16 %v7857
    %v8074 = vunpack.c.l.b16 %v7858
    %v8075 = vunpack.c.l.b16 %v7859
    %v8076 = vunpack.c.l.b16 %v7860
    %v8077 = vunpack.c.l.b16 %v7861
    %v8078 = vunpack.c.l.b16 %v7862
    %v8079 = vunpack.c.l.b16 %v7863
    %v8080 = vunpack.c.l.b16 %v7864
    %v8081 = vunpack.c.l.b16 %v7865
    %v8082 = vunpack.c.l.b16 %v7866
    %v8083 = vpack.c.b16 %v8056, %v8055
    %v8084 = vpack.c.b16 %v8058, %v8057
    %v8085 = vpack.c.b16 %v8060, %v8059
    %v8086 = vpack.c.b16 %v8062, %v8061
    %v8087 = vpack.c.b16 %v8064, %v8063
    %v8088 = vpack.c.b16 %v8066, %v8065
    %v8089 = vpack.c.b16 %v8068, %v8067
    %v8090 = vpack.c.b16 %v8070, %v8069
    %v8091 = vpack.c.b16 %v8072, %v8071
    %v8092 = vpack.c.b16 %v8074, %v8073
    %v8093 = vpack.c.b16 %v8076, %v8075
    %v8094 = vpack.c.b16 %v8078, %v8077
    %v8095 = vpack.c.b16 %v8080, %v8079
    %v8096 = vpack.c.b16 %v8082, %v8081
    %v8112 = vsel %vm3613, %v7834, 0
    %8114 = vmatprep.subr.bf16.mxu0 0
    %8115 = vmatpush1.bf16.msra.mxu0 %v8083
    %8116 = vmatprep.subr.bf16.mxu0 0
    %8117 = vmatpush1.bf16.msra.mxu0 %v8084
    %8118 = vmatprep.subr.bf16.mxu0 0
    %8119 = vmatpush1.bf16.msra.mxu0 %v8085
    %8120 = vmatprep.subr.bf16.mxu0 0
    %8121 = vmatpush1.bf16.msra.mxu0 %v8086
    %8122 = vmatprep.subr.bf16.mxu0 0
    %8123 = vmatpush1.bf16.msra.mxu0 %v8087
    %8124 = vmatprep.subr.bf16.mxu0 0
    %8125 = vmatpush1.bf16.msra.mxu0 %v8088
    %8126 = vmatprep.subr.bf16.mxu0 0
    %8127 = vmatpush1.bf16.msra.mxu0 %v8089
    %8128 = vmatprep.subr.bf16.mxu0 0
    %8129 = vmatpush1.bf16.msra.mxu0 %v8090
    %8130 = vmatprep.subr.bf16.mxu0 0
    %8131 = vmatpush1.bf16.msra.mxu0 %v8091
    %8132 = vmatprep.subr.bf16.mxu0 0
    %8133 = vmatpush1.bf16.msra.mxu0 %v8092
    %8134 = vmatprep.subr.bf16.mxu0 0
    %8135 = vmatpush1.bf16.msra.mxu0 %v8093
    %8136 = vmatprep.subr.bf16.mxu0 0
    %8137 = vmatpush1.bf16.msra.mxu0 %v8094
    %8138 = vmatprep.subr.bf16.mxu0 0
    %8139 = vmatpush1.bf16.msra.mxu0 %v8095
    %8140 = vmatprep.subr.bf16.mxu0 0
    %8141 = vmatpush1.bf16.msra.mxu0 %v8096
    %8142 = vmatprep.subr.bf16.mxu0 0
    %8143 = vmatpush1.bf16.msra.mxu0 0
    %8144 = vmatprep.subr.bf16.mxu0 0
    %8145 = vmatpush1.bf16.msra.mxu0 0
    %8146 = vmatprep.mubr.bf16.mxu0 %v8112
    %8147 = vmatmul.mubr.bf16.gmra.mrb[0].mxu0 %v7833
    %v8148 = vpop.f32.mrb[0].mxu0
    %v8149 = vadd.f32 %v8022, %v8148
    %v8150 = vpop.f32.mrb[0].mxu0
    %v8151 = vpop.f32.mrb[0].mxu0
    %v8152 = vpop.f32.mrb[0].mxu0
    %8153 = vdwg.mxu0
    %v8154 = vld [vmem:[%s3784] sm:$0xf]
    %v8155 = vld [vmem:[%s3784 + $0x4] sm:$0xf]
    %v8156 = vld [vmem:[%s3784 + $0x8] sm:$0xf]
    %v8157 = vld [vmem:[%s3784 + $0xc] sm:$0xf]
    %v8158 = vld [vmem:[%s3784 + $0x10] sm:$0xf]
    %v8159 = vld [vmem:[%s3784 + $0x14] sm:$0xf]
    %v8160 = vld [vmem:[%s3784 + $0x18] sm:$0xf]
    %v8161 = vld [vmem:[%s3784 + $0x1c] sm:$0xf]
    %v8162 = vld [vmem:[%s3784 + $0x20] sm:$0xf]
    %v8163 = vld [vmem:[%s3784 + $0x24] sm:$0xf]
    %v8164 = vld [vmem:[%s3784 + $0x28] sm:$0xf]
    %v8165 = vld [vmem:[%s3784 + $0x2c] sm:$0xf]
    %v8166 = vld [vmem:[%s3784 + $0x30] sm:$0xf]
    %v8167 = vld [vmem:[%s3784 + $0x34] sm:$0xf]
    %v8168 = vld [vmem:[%s3784 + $0x38] sm:$0xf]
    %v8169 = vld [vmem:[%s3784 + $0x3c] sm:$0xf]
    %v8170 = vld [vmem:[%s3784 + $0x40] sm:$0xf]
    %v8171 = vld [vmem:[%s3784 + $0x44] sm:$0xf]
    %v8172 = vld [vmem:[%s3784 + $0x48] sm:$0xf]
    %v8173 = vld [vmem:[%s3784 + $0x4c] sm:$0xf]
    %v8174 = vld [vmem:[%s3784 + $0x50] sm:$0xf]
    %v8175 = vld [vmem:[%s3784 + $0x54] sm:$0xf]
    %v8176 = vld [vmem:[%s3784 + $0x58] sm:$0xf]
    %v8177 = vld [vmem:[%s3784 + $0x5c] sm:$0xf]
    %v8178 = vld [vmem:[%s3784 + $0x60] sm:$0xf]
    %v8179 = vld [vmem:[%s3784 + $0x64] sm:$0xf]
    %v8180 = vld [vmem:[%s3784 + $0x68] sm:$0xf]
    %v8181 = vld [vmem:[%s3784 + $0x6c] sm:$0xf]
    %v8210 = vunpack.c.l.b16 %v8154
    %v8211 = vunpack.c.l.b16 %v8155
    %v8212 = vunpack.c.l.b16 %v8156
    %v8213 = vunpack.c.l.b16 %v8157
    %v8214 = vunpack.c.l.b16 %v8158
    %v8215 = vunpack.c.l.b16 %v8159
    %v8216 = vunpack.c.l.b16 %v8160
    %v8217 = vunpack.c.l.b16 %v8161
    %v8218 = vunpack.c.l.b16 %v8162
    %v8219 = vunpack.c.l.b16 %v8163
    %v8220 = vunpack.c.l.b16 %v8164
    %v8221 = vunpack.c.l.b16 %v8165
    %v8222 = vunpack.c.l.b16 %v8166
    %v8223 = vunpack.c.l.b16 %v8167
    %v8224 = vunpack.c.l.b16 %v8168
    %v8225 = vunpack.c.l.b16 %v8169
    %v8226 = vunpack.c.l.b16 %v8170
    %v8227 = vunpack.c.l.b16 %v8171
    %v8228 = vunpack.c.l.b16 %v8172
    %v8229 = vunpack.c.l.b16 %v8173
    %v8230 = vunpack.c.l.b16 %v8174
    %v8231 = vunpack.c.l.b16 %v8175
    %v8232 = vunpack.c.l.b16 %v8176
    %v8233 = vunpack.c.l.b16 %v8177
    %v8234 = vunpack.c.l.b16 %v8178
    %v8235 = vunpack.c.l.b16 %v8179
    %v8236 = vunpack.c.l.b16 %v8180
    %v8237 = vunpack.c.l.b16 %v8181
    %v8238 = vpack.c.b16 %v8211, %v8210
    %v8239 = vpack.c.b16 %v8213, %v8212
    %v8240 = vpack.c.b16 %v8215, %v8214
    %v8241 = vpack.c.b16 %v8217, %v8216
    %v8242 = vpack.c.b16 %v8219, %v8218
    %v8243 = vpack.c.b16 %v8221, %v8220
    %v8244 = vpack.c.b16 %v8223, %v8222
    %v8245 = vpack.c.b16 %v8225, %v8224
    %v8246 = vpack.c.b16 %v8227, %v8226
    %v8247 = vpack.c.b16 %v8229, %v8228
    %v8248 = vpack.c.b16 %v8231, %v8230
    %v8249 = vpack.c.b16 %v8233, %v8232
    %v8250 = vpack.c.b16 %v8235, %v8234
    %v8251 = vpack.c.b16 %v8237, %v8236
    %v8267 = vsel %vm3613, %v7836, 0
    %8269 = vmatprep.subr.bf16.mxu0 0
    %8270 = vmatpush1.bf16.msra.mxu0 %v8238
    %8271 = vmatprep.subr.bf16.mxu0 0
    %8272 = vmatpush1.bf16.msra.mxu0 %v8239
    %8273 = vmatprep.subr.bf16.mxu0 0
    %8274 = vmatpush1.bf16.msra.mxu0 %v8240
    %8275 = vmatprep.subr.bf16.mxu0 0
    %8276 = vmatpush1.bf16.msra.mxu0 %v8241
    %8277 = vmatprep.subr.bf16.mxu0 0
    %8278 = vmatpush1.bf16.msra.mxu0 %v8242
    %8279 = vmatprep.subr.bf16.mxu0 0
    %8280 = vmatpush1.bf16.msra.mxu0 %v8243
    %8281 = vmatprep.subr.bf16.mxu0 0
    %8282 = vmatpush1.bf16.msra.mxu0 %v8244
    %8283 = vmatprep.subr.bf16.mxu0 0
    %8284 = vmatpush1.bf16.msra.mxu0 %v8245
    %8285 = vmatprep.subr.bf16.mxu0 0
    %8286 = vmatpush1.bf16.msra.mxu0 %v8246
    %8287 = vmatprep.subr.bf16.mxu0 0
    %8288 = vmatpush1.bf16.msra.mxu0 %v8247
    %8289 = vmatprep.subr.bf16.mxu0 0
    %8290 = vmatpush1.bf16.msra.mxu0 %v8248
    %8291 = vmatprep.subr.bf16.mxu0 0
    %8292 = vmatpush1.bf16.msra.mxu0 %v8249
    %8293 = vmatprep.subr.bf16.mxu0 0
    %8294 = vmatpush1.bf16.msra.mxu0 %v8250
    %8295 = vmatprep.subr.bf16.mxu0 0
    %8296 = vmatpush1.bf16.msra.mxu0 %v8251
    %8297 = vmatprep.subr.bf16.mxu0 0
    %8298 = vmatpush1.bf16.msra.mxu0 0
    %8299 = vmatprep.subr.bf16.mxu0 0
    %8300 = vmatpush1.bf16.msra.mxu0 0
    %8301 = vmatprep.mubr.bf16.mxu0 %v8267
    %8302 = vmatmul.mubr.bf16.gmra.mrb[0].mxu0 %v7835
    %v8303 = vpop.f32.mrb[0].mxu0
    %v8304 = vadd.f32 0.0, %v8303
    %v8305 = vpop.f32.mrb[0].mxu0
    %v8306 = vpop.f32.mrb[0].mxu0
    %v8307 = vpop.f32.mrb[0].mxu0
    %8308 = vdwg.mxu0
    %v8309 = vadd.f32 %v8149, %v8304
    %v8310 = vld [vmem:[%s3941] sm:$0xf]
    %v8311 = vld [vmem:[%s3941 + $0x4] sm:$0xf]
    %v8312 = vld [vmem:[%s3941 + $0x8] sm:$0xf]
    %v8313 = vld [vmem:[%s3941 + $0xc] sm:$0xf]
    %v8314 = vld [vmem:[%s3941 + $0x10] sm:$0xf]
    %v8315 = vld [vmem:[%s3941 + $0x14] sm:$0xf]
    %v8316 = vld [vmem:[%s3941 + $0x18] sm:$0xf]
    %v8317 = vld [vmem:[%s3941 + $0x1c] sm:$0xf]
    %v8318 = vld [vmem:[%s3941 + $0x20] sm:$0xf]
    %v8319 = vld [vmem:[%s3941 + $0x24] sm:$0xf]
    %v8320 = vld [vmem:[%s3941 + $0x28] sm:$0xf]
    %v8321 = vld [vmem:[%s3941 + $0x2c] sm:$0xf]
    %v8322 = vld [vmem:[%s3941 + $0x30] sm:$0xf]
    %v8323 = vld [vmem:[%s3941 + $0x34] sm:$0xf]
    %v8324 = vld [vmem:[%s3941 + $0x38] sm:$0xf]
    %v8325 = vld [vmem:[%s3941 + $0x3c] sm:$0xf]
    %v8326 = vld [vmem:[%s3941 + $0x40] sm:$0xf]
    %v8327 = vld [vmem:[%s3941 + $0x44] sm:$0xf]
    %v8328 = vld [vmem:[%s3941 + $0x48] sm:$0xf]
    %v8329 = vld [vmem:[%s3941 + $0x4c] sm:$0xf]
    %v8330 = vld [vmem:[%s3941 + $0x50] sm:$0xf]
    %v8331 = vld [vmem:[%s3941 + $0x54] sm:$0xf]
    %v8332 = vld [vmem:[%s3941 + $0x58] sm:$0xf]
    %v8333 = vld [vmem:[%s3941 + $0x5c] sm:$0xf]
    %v8334 = vld [vmem:[%s3941 + $0x60] sm:$0xf]
    %v8335 = vld [vmem:[%s3941 + $0x64] sm:$0xf]
    %v8336 = vld [vmem:[%s3941 + $0x68] sm:$0xf]
    %v8337 = vld [vmem:[%s3941 + $0x6c] sm:$0xf]
    %v8340 = vrot.slane %v7835, 4
    %v8341 = vrot.slane %v7836, 4
    %v8371 = vunpack.c.l.b16 %v8310
    %v8372 = vunpack.c.l.b16 %v8311
    %v8373 = vunpack.c.l.b16 %v8312
    %v8374 = vunpack.c.l.b16 %v8313
    %v8375 = vunpack.c.l.b16 %v8314
    %v8376 = vunpack.c.l.b16 %v8315
    %v8377 = vunpack.c.l.b16 %v8316
    %v8378 = vunpack.c.l.b16 %v8317
    %v8379 = vunpack.c.l.b16 %v8318
    %v8380 = vunpack.c.l.b16 %v8319
    %v8381 = vunpack.c.l.b16 %v8320
    %v8382 = vunpack.c.l.b16 %v8321
    %v8383 = vunpack.c.l.b16 %v8322
    %v8384 = vunpack.c.l.b16 %v8323
    %v8385 = vunpack.c.l.b16 %v8324
    %v8386 = vunpack.c.l.b16 %v8325
    %v8387 = vunpack.c.l.b16 %v8326
    %v8388 = vunpack.c.l.b16 %v8327
    %v8389 = vunpack.c.l.b16 %v8328
    %v8390 = vunpack.c.l.b16 %v8329
    %v8391 = vunpack.c.l.b16 %v8330
    %v8392 = vunpack.c.l.b16 %v8331
    %v8393 = vunpack.c.l.b16 %v8332
    %v8394 = vunpack.c.l.b16 %v8333
    %v8395 = vunpack.c.l.b16 %v8334
    %v8396 = vunpack.c.l.b16 %v8335
    %v8397 = vunpack.c.l.b16 %v8336
    %v8398 = vunpack.c.l.b16 %v8337
    %v8399 = vpack.c.b16 %v8372, %v8371
    %v8400 = vpack.c.b16 %v8374, %v8373
    %v8401 = vpack.c.b16 %v8376, %v8375
    %v8402 = vpack.c.b16 %v8378, %v8377
    %v8403 = vpack.c.b16 %v8380, %v8379
    %v8404 = vpack.c.b16 %v8382, %v8381
    %v8405 = vpack.c.b16 %v8384, %v8383
    %v8406 = vpack.c.b16 %v8386, %v8385
    %v8407 = vpack.c.b16 %v8388, %v8387
    %v8408 = vpack.c.b16 %v8390, %v8389
    %v8409 = vpack.c.b16 %v8392, %v8391
    %v8410 = vpack.c.b16 %v8394, %v8393
    %v8411 = vpack.c.b16 %v8396, %v8395
    %v8412 = vpack.c.b16 %v8398, %v8397
    %v8428 = vsel %vm3613, %v8341, 0
    %8430 = vmatprep.subr.bf16.mxu0 0
    %8431 = vmatpush1.bf16.msra.mxu0 %v8399
    %8432 = vmatprep.subr.bf16.mxu0 0
    %8433 = vmatpush1.bf16.msra.mxu0 %v8400
    %8434 = vmatprep.subr.bf16.mxu0 0
    %8435 = vmatpush1.bf16.msra.mxu0 %v8401
    %8436 = vmatprep.subr.bf16.mxu0 0
    %8437 = vmatpush1.bf16.msra.mxu0 %v8402
    %8438 = vmatprep.subr.bf16.mxu0 0
    %8439 = vmatpush1.bf16.msra.mxu0 %v8403
    %8440 = vmatprep.subr.bf16.mxu0 0
    %8441 = vmatpush1.bf16.msra.mxu0 %v8404
    %8442 = vmatprep.subr.bf16.mxu0 0
    %8443 = vmatpush1.bf16.msra.mxu0 %v8405
    %8444 = vmatprep.subr.bf16.mxu0 0
    %8445 = vmatpush1.bf16.msra.mxu0 %v8406
    %8446 = vmatprep.subr.bf16.mxu0 0
    %8447 = vmatpush1.bf16.msra.mxu0 %v8407
    %8448 = vmatprep.subr.bf16.mxu0 0
    %8449 = vmatpush1.bf16.msra.mxu0 %v8408
    %8450 = vmatprep.subr.bf16.mxu0 0
    %8451 = vmatpush1.bf16.msra.mxu0 %v8409
    %8452 = vmatprep.subr.bf16.mxu0 0
    %8453 = vmatpush1.bf16.msra.mxu0 %v8410
    %8454 = vmatprep.subr.bf16.mxu0 0
    %8455 = vmatpush1.bf16.msra.mxu0 %v8411
    %8456 = vmatprep.subr.bf16.mxu0 0
    %8457 = vmatpush1.bf16.msra.mxu0 %v8412
    %8458 = vmatprep.subr.bf16.mxu0 0
    %8459 = vmatpush1.bf16.msra.mxu0 0
    %8460 = vmatprep.subr.bf16.mxu0 0
    %8461 = vmatpush1.bf16.msra.mxu0 0
    %8462 = vmatprep.mubr.bf16.mxu0 %v8428
    %8463 = vmatmul.mubr.bf16.gmra.mrb[0].mxu0 %v8340
    %v8464 = vpop.f32.mrb[0].mxu0
    %v8465 = vadd.f32 0.0, %v8464
    %v8466 = vpop.f32.mrb[0].mxu0
    %v8467 = vpop.f32.mrb[0].mxu0
    %v8468 = vpop.f32.mrb[0].mxu0
    %8469 = vdwg.mxu0
    %v8470 = vadd.f32 %v8309, %v8465
    %v8471 = vld [vmem:[%s4103] sm:$0xf]
    %v8472 = vld [vmem:[%s4103 + $0x4] sm:$0xf]
    %v8473 = vld [vmem:[%s4103 + $0x8] sm:$0xf]
    %v8474 = vld [vmem:[%s4103 + $0xc] sm:$0xf]
    %v8475 = vld [vmem:[%s4103 + $0x10] sm:$0xf]
    %v8476 = vld [vmem:[%s4103 + $0x14] sm:$0xf]
    %v8477 = vld [vmem:[%s4103 + $0x18] sm:$0xf]
    %v8478 = vld [vmem:[%s4103 + $0x1c] sm:$0xf]
    %v8479 = vld [vmem:[%s4103 + $0x20] sm:$0xf]
    %v8480 = vld [vmem:[%s4103 + $0x24] sm:$0xf]
    %v8481 = vld [vmem:[%s4103 + $0x28] sm:$0xf]
    %v8482 = vld [vmem:[%s4103 + $0x2c] sm:$0xf]
    %v8483 = vld [vmem:[%s4103 + $0x30] sm:$0xf]
    %v8484 = vld [vmem:[%s4103 + $0x34] sm:$0xf]
    %v8485 = vld [vmem:[%s4103 + $0x38] sm:$0xf]
    %v8486 = vld [vmem:[%s4103 + $0x3c] sm:$0xf]
    %v8487 = vld [vmem:[%s4103 + $0x40] sm:$0xf]
    %v8488 = vld [vmem:[%s4103 + $0x44] sm:$0xf]
    %v8489 = vld [vmem:[%s4103 + $0x48] sm:$0xf]
    %v8490 = vld [vmem:[%s4103 + $0x4c] sm:$0xf]
    %v8491 = vld [vmem:[%s4103 + $0x50] sm:$0xf]
    %v8492 = vld [vmem:[%s4103 + $0x54] sm:$0xf]
    %v8493 = vld [vmem:[%s4103 + $0x58] sm:$0xf]
    %v8494 = vld [vmem:[%s4103 + $0x5c] sm:$0xf]
    %v8495 = vld [vmem:[%s4103 + $0x60] sm:$0xf]
    %v8496 = vld [vmem:[%s4103 + $0x64] sm:$0xf]
    %v8497 = vld [vmem:[%s4103 + $0x68] sm:$0xf]
    %v8498 = vld [vmem:[%s4103 + $0x6c] sm:$0xf]
    %v8527 = vunpack.c.l.b16 %v8471
    %v8528 = vunpack.c.l.b16 %v8472
    %v8529 = vunpack.c.l.b16 %v8473
    %v8530 = vunpack.c.l.b16 %v8474
    %v8531 = vunpack.c.l.b16 %v8475
    %v8532 = vunpack.c.l.b16 %v8476
    %v8533 = vunpack.c.l.b16 %v8477
    %v8534 = vunpack.c.l.b16 %v8478
    %v8535 = vunpack.c.l.b16 %v8479
    %v8536 = vunpack.c.l.b16 %v8480
    %v8537 = vunpack.c.l.b16 %v8481
    %v8538 = vunpack.c.l.b16 %v8482
    %v8539 = vunpack.c.l.b16 %v8483
    %v8540 = vunpack.c.l.b16 %v8484
    %v8541 = vunpack.c.l.b16 %v8485
    %v8542 = vunpack.c.l.b16 %v8486
    %v8543 = vunpack.c.l.b16 %v8487
    %v8544 = vunpack.c.l.b16 %v8488
    %v8545 = vunpack.c.l.b16 %v8489
    %v8546 = vunpack.c.l.b16 %v8490
    %v8547 = vunpack.c.l.b16 %v8491
    %v8548 = vunpack.c.l.b16 %v8492
    %v8549 = vunpack.c.l.b16 %v8493
    %v8550 = vunpack.c.l.b16 %v8494
    %v8551 = vunpack.c.l.b16 %v8495
    %v8552 = vunpack.c.l.b16 %v8496
    %v8553 = vunpack.c.l.b16 %v8497
    %v8554 = vunpack.c.l.b16 %v8498
    %v8555 = vpack.c.b16 %v8528, %v8527
    %v8556 = vpack.c.b16 %v8530, %v8529
    %v8557 = vpack.c.b16 %v8532, %v8531
    %v8558 = vpack.c.b16 %v8534, %v8533
    %v8559 = vpack.c.b16 %v8536, %v8535
    %v8560 = vpack.c.b16 %v8538, %v8537
    %v8561 = vpack.c.b16 %v8540, %v8539
    %v8562 = vpack.c.b16 %v8542, %v8541
    %v8563 = vpack.c.b16 %v8544, %v8543
    %v8564 = vpack.c.b16 %v8546, %v8545
    %v8565 = vpack.c.b16 %v8548, %v8547
    %v8566 = vpack.c.b16 %v8550, %v8549
    %v8567 = vpack.c.b16 %v8552, %v8551
    %v8568 = vpack.c.b16 %v8554, %v8553
    %v8584 = vsel %vm3613, %v7838, 0
    %8586 = vmatprep.subr.bf16.mxu0 0
    %8587 = vmatpush1.bf16.msra.mxu0 %v8555
    %8588 = vmatprep.subr.bf16.mxu0 0
    %8589 = vmatpush1.bf16.msra.mxu0 %v8556
    %8590 = vmatprep.subr.bf16.mxu0 0
    %8591 = vmatpush1.bf16.msra.mxu0 %v8557
    %8592 = vmatprep.subr.bf16.mxu0 0
    %8593 = vmatpush1.bf16.msra.mxu0 %v8558
    %8594 = vmatprep.subr.bf16.mxu0 0
    %8595 = vmatpush1.bf16.msra.mxu0 %v8559
    %8596 = vmatprep.subr.bf16.mxu0 0
    %8597 = vmatpush1.bf16.msra.mxu0 %v8560
    %8598 = vmatprep.subr.bf16.mxu0 0
    %8599 = vmatpush1.bf16.msra.mxu0 %v8561
    %8600 = vmatprep.subr.bf16.mxu0 0
    %8601 = vmatpush1.bf16.msra.mxu0 %v8562
    %8602 = vmatprep.subr.bf16.mxu0 0
    %8603 = vmatpush1.bf16.msra.mxu0 %v8563
    %8604 = vmatprep.subr.bf16.mxu0 0
    %8605 = vmatpush1.bf16.msra.mxu0 %v8564
    %8606 = vmatprep.subr.bf16.mxu0 0
    %8607 = vmatpush1.bf16.msra.mxu0 %v8565
    %8608 = vmatprep.subr.bf16.mxu0 0
    %8609 = vmatpush1.bf16.msra.mxu0 %v8566
    %8610 = vmatprep.subr.bf16.mxu0 0
    %8611 = vmatpush1.bf16.msra.mxu0 %v8567
    %8612 = vmatprep.subr.bf16.mxu0 0
    %8613 = vmatpush1.bf16.msra.mxu0 %v8568
    %8614 = vmatprep.subr.bf16.mxu0 0
    %8615 = vmatpush1.bf16.msra.mxu0 0
    %8616 = vmatprep.subr.bf16.mxu0 0
    %8617 = vmatpush1.bf16.msra.mxu0 0
    %8618 = vmatprep.mubr.bf16.mxu0 %v8584
    %8619 = vmatmul.mubr.bf16.gmra.mrb[0].mxu0 %v7837
    %v8620 = vpop.f32.mrb[0].mxu0
    %v8621 = vadd.f32 0.0, %v8620
    %v8622 = vpop.f32.mrb[0].mxu0
    %v8623 = vpop.f32.mrb[0].mxu0
    %v8624 = vpop.f32.mrb[0].mxu0
    %8625 = vdwg.mxu0
    %v8626 = vadd.f32 %v8470, %v8621
    %v8627 = vld [vmem:[%s9] sm:$0x1]
    %v8629 = vlaneseq
    %v8630 = vshrl.u32 %v8629, 7
    %v8631 = vsub.s32 0, %v8630
    %v8632 = vrot.slane %v8627, %v8631
    %v8634 = vadd.f32 %v8626, %v8632
    %v8635 = vmax.f32 %v8634, 0.0
    %v8636 = vpack.c.bf16 %v8635, %v8635
    %v8637 = vld [vmem:[%s11] sm:$0x1]
    %v8638 = vld [vmem:[%s10] sm:$0xf]
    %v8639 = vld [vmem:[%s10 + $0x4] sm:$0xf]
    %v8640 = vld [vmem:[%s10 + $0x8] sm:$0xf]
    %v8641 = vld [vmem:[%s10 + $0xc] sm:$0xf]
    %v8642 = vld [vmem:[%s10 + $0x10] sm:$0xf]
    %v8643 = vld [vmem:[%s10 + $0x14] sm:$0xf]
    %v8644 = vld [vmem:[%s10 + $0x18] sm:$0xf]
    %v8645 = vld [vmem:[%s10 + $0x1c] sm:$0xf]
    %v8654 = vunpack.c.l.b16 %v8638
    %v8655 = vunpack.c.l.b16 %v8639
    %v8656 = vunpack.c.l.b16 %v8640
    %v8657 = vunpack.c.l.b16 %v8641
    %v8658 = vunpack.c.l.b16 %v8642
    %v8659 = vunpack.c.l.b16 %v8643
    %v8660 = vunpack.c.l.b16 %v8644
    %v8661 = vunpack.c.l.b16 %v8645
    %v8662 = vpack.c.b16 %v8655, %v8654
    %v8663 = vpack.c.b16 %v8657, %v8656
    %v8664 = vpack.c.b16 %v8659, %v8658
    %v8665 = vpack.c.b16 %v8661, %v8660
    %v8671 = vsel %vm4303, %v8636, 0
    %8673 = vmatprep.subr.bf16.mxu0 0
    %8674 = vmatpush1.bf16.msra.mxu0 %v8662
    %8675 = vmatprep.subr.bf16.mxu0 0
    %8676 = vmatpush1.bf16.msra.mxu0 %v8663
    %8677 = vmatprep.subr.bf16.mxu0 0
    %8678 = vmatpush1.bf16.msra.mxu0 %v8664
    %8679 = vmatprep.subr.bf16.mxu0 0
    %8680 = vmatpush1.bf16.msra.mxu0 %v8665
    %8681 = vmatprep.subr.bf16.mxu0 0
    %8682 = vmatpush1.bf16.msra.mxu0 0
    %8683 = vmatprep.subr.bf16.mxu0 0
    %8684 = vmatpush1.bf16.msra.mxu0 0
    %8685 = vmatprep.subr.bf16.mxu0 0
    %8686 = vmatpush1.bf16.msra.mxu0 0
    %8687 = vmatprep.subr.bf16.mxu0 0
    %8688 = vmatpush1.bf16.msra.mxu0 0
    %8689 = vmatprep.subr.bf16.mxu0 0
    %8690 = vmatpush1.bf16.msra.mxu0 0
    %8691 = vmatprep.subr.bf16.mxu0 0
    %8692 = vmatpush1.bf16.msra.mxu0 0
    %8693 = vmatprep.subr.bf16.mxu0 0
    %8694 = vmatpush1.bf16.msra.mxu0 0
    %8695 = vmatprep.subr.bf16.mxu0 0
    %8696 = vmatpush1.bf16.msra.mxu0 0
    %8697 = vmatprep.subr.bf16.mxu0 0
    %8698 = vmatpush1.bf16.msra.mxu0 0
    %8699 = vmatprep.subr.bf16.mxu0 0
    %8700 = vmatpush1.bf16.msra.mxu0 0
    %8701 = vmatprep.subr.bf16.mxu0 0
    %8702 = vmatpush1.bf16.msra.mxu0 0
    %8703 = vmatprep.subr.bf16.mxu0 0
    %8704 = vmatpush1.bf16.msra.mxu0 0
    %8705 = vmatprep.mubr.bf16.mxu0 0
    %8706 = vmatmul.mubr.bf16.gmra.mrb[0].mxu0 %v8671
    %v8707 = vpop.f32.mrb[0].mxu0
    %v8708 = vadd.f32 0.0, %v8707
    %v8709 = vpop.f32.mrb[0].mxu0
    %v8710 = vpop.f32.mrb[0].mxu0
    %v8711 = vpop.f32.mrb[0].mxu0
    %8712 = vdwg.mxu0
    %v8713 = vadd.f32 %v8637, %v8708
    %v8714 = vld [vmem:[%s4348] sm:$0xf]
    %v8715 = vld [vmem:[%s4348 + $0x4] sm:$0xf]
    %v8716 = vld [vmem:[%s4348 + $0x8] sm:$0xf]
    %v8717 = vld [vmem:[%s4348 + $0xc] sm:$0xf]
    %v8718 = vld [vmem:[%s4348 + $0x10] sm:$0xf]
    %v8719 = vld [vmem:[%s4348 + $0x14] sm:$0xf]
    %v8720 = vld [vmem:[%s4348 + $0x18] sm:$0xf]
    %v8721 = vld [vmem:[%s4348 + $0x1c] sm:$0xf]
    %v8722 = vshrl.u32 %v8636, 16
    %v8732 = vunpack.c.l.b16 %v8714
    %v8733 = vunpack.c.l.b16 %v8715
    %v8734 = vunpack.c.l.b16 %v8716
    %v8735 = vunpack.c.l.b16 %v8717
    %v8736 = vunpack.c.l.b16 %v8718
    %v8737 = vunpack.c.l.b16 %v8719
    %v8738 = vunpack.c.l.b16 %v8720
    %v8739 = vunpack.c.l.b16 %v8721
    %v8740 = vpack.c.b16 %v8733, %v8732
    %v8741 = vpack.c.b16 %v8735, %v8734
    %v8742 = vpack.c.b16 %v8737, %v8736
    %v8743 = vpack.c.b16 %v8739, %v8738
    %v8749 = vsel %vm4303, %v8722, 0
    %8751 = vmatprep.subr.bf16.mxu0 0
    %8752 = vmatpush1.bf16.msra.mxu0 %v8740
    %8753 = vmatprep.subr.bf16.mxu0 0
    %8754 = vmatpush1.bf16.msra.mxu0 %v8741
    %8755 = vmatprep.subr.bf16.mxu0 0
    %8756 = vmatpush1.bf16.msra.mxu0 %v8742
    %8757 = vmatprep.subr.bf16.mxu0 0
    %8758 = vmatpush1.bf16.msra.mxu0 %v8743
    %8759 = vmatprep.subr.bf16.mxu0 0
    %8760 = vmatpush1.bf16.msra.mxu0 0
    %8761 = vmatprep.subr.bf16.mxu0 0
    %8762 = vmatpush1.bf16.msra.mxu0 0
    %8763 = vmatprep.subr.bf16.mxu0 0
    %8764 = vmatpush1.bf16.msra.mxu0 0
    %8765 = vmatprep.subr.bf16.mxu0 0
    %8766 = vmatpush1.bf16.msra.mxu0 0
    %8767 = vmatprep.subr.bf16.mxu0 0
    %8768 = vmatpush1.bf16.msra.mxu0 0
    %8769 = vmatprep.subr.bf16.mxu0 0
    %8770 = vmatpush1.bf16.msra.mxu0 0
    %8771 = vmatprep.subr.bf16.mxu0 0
    %8772 = vmatpush1.bf16.msra.mxu0 0
    %8773 = vmatprep.subr.bf16.mxu0 0
    %8774 = vmatpush1.bf16.msra.mxu0 0
    %8775 = vmatprep.subr.bf16.mxu0 0
    %8776 = vmatpush1.bf16.msra.mxu0 0
    %8777 = vmatprep.subr.bf16.mxu0 0
    %8778 = vmatpush1.bf16.msra.mxu0 0
    %8779 = vmatprep.subr.bf16.mxu0 0
    %8780 = vmatpush1.bf16.msra.mxu0 0
    %8781 = vmatprep.subr.bf16.mxu0 0
    %8782 = vmatpush1.bf16.msra.mxu0 0
    %8783 = vmatprep.mubr.bf16.mxu0 0
    %8784 = vmatmul.mubr.bf16.gmra.mrb[0].mxu0 %v8749
    %v8785 = vpop.f32.mrb[0].mxu0
    %v8786 = vadd.f32 0.0, %v8785
    %v8787 = vpop.f32.mrb[0].mxu0
    %v8788 = vpop.f32.mrb[0].mxu0
    %v8789 = vpop.f32.mrb[0].mxu0
    %8790 = vdwg.mxu0
    %v8791 = vadd.f32 %v8713, %v8786
    %8792 = vst.msk [vmem:[#allocation2 + $0x1] sm:$0x1] %vm4427, %v8791
    // Predicated region
    $region50: #{dqn_forward.1} parent=1 // pred_check
      _
    $region51: #{dqn_forward.1} parent=1 // pred_check_branch
      %8794 = sbr.rel (0) target = $region53
    $region52: #{dqn_forward.1} parent=1 // pred_region
      %s8796 = ssub.s32 32, 32
      %8797 = vsyncadd [#allocation3], %s8796
      %s8799 = sshll.u32 [#allocation2], 4
      %s8800 = int_to_ptr.vmem [resolvable:$true] %s8799
      %8802 = dma.vmem_to_hbm [thread:$0]  %s8800, 32, %s12, [#allocation3]
    $region53: #{dqn_forward.1} parent=1 // pred_fallthru
      _
    // Predicated region
    $region54: #{dqn_forward.1} parent=1 // pred_check
      _
    $region55: #{dqn_forward.1} parent=1 // pred_check_branch
      %8804 = sbr.rel (0) target = $region57
    $region56: #{dqn_forward.1} parent=1 // pred_region
      %8805 = dma.done [#allocation3], 32
    $region57: #{dqn_forward.1} parent=1 // pred_fallthru
      _
    %8806 = vsyncpa [#allocation3], 1

</llo_original>
